<compile_context>
chip_gen: v7x
topology: tpu7x:2x2x1
jax: 0.10.0
libtpu: 0.0.40
codegen_flags: <defaults>
</compile_context>

<pallas_src>
import functools

import jax
import jax.numpy as jnp
from jax import lax
from jax.experimental import pallas as pl
from jax.experimental.pallas import tpu as pltpu

EPS = 1e-5


def _round_up(n, m):
    return (n + m - 1) // m * m


def _masked_stats(h, tile, n_valid, need_mask):
    """Zero padded rows of h and return (h, per-tile stats block).

    Stats block is (1, 2, F): [sum, sum of squared deviations from the per-tile mean].
    Using per-tile *centered* second moments keeps the whole-batch variance combination
    (_bn_fold, Chan's formula) f32-stable — no E[x^2] - mean^2 cancellation.
    """
    if need_mask:
        rem = n_valid - pl.program_id(0) * tile
        rows = lax.broadcasted_iota(jnp.int32, (tile, 1), 0)
        valid = rows < rem
        h = jnp.where(valid, h, 0.0)
        cnt = jnp.maximum(jnp.minimum(rem, tile), 1).astype(jnp.float32)
    else:
        cnt = float(tile)
    s = jnp.sum(h, axis=0, keepdims=True)                 # (1, F)
    dev = h - s * (1.0 / cnt)                             # deviations from per-tile mean
    if need_mask:
        dev = jnp.where(valid, dev, 0.0)
    m2 = jnp.sum(dev * dev, axis=0, keepdims=True)        # (1, F)
    return h, jnp.concatenate([s, m2], axis=0)[None]      # (1, 2, F)


def _make_stage1_kernel(tile, n_valid, need_mask):
    """Linear(3->128) as 3 VPU broadcast FMAs (K=3 is MXU-hostile) + ReLU + partial stats."""
    def kernel(x_ref, w_ref, b_ref, a_ref, stats_ref):
        x = x_ref[...]                                    # (tile, 3) f32
        h = b_ref[...]                                    # (1, 128)
        for k in range(3):                                # unrolled at trace time
            h = h + x[:, k:k + 1] * w_ref[k:k + 1, :]
        h = jnp.maximum(h, 0.0)
        h, stats = _masked_stats(h, tile, n_valid, need_mask)
        stats_ref[...] = stats
        a_ref[...] = h.astype(a_ref.dtype)                # staged in bf16
    return kernel


def _make_stage2_kernel(tile, n_valid, need_mask):
    """bf16 MXU (128->1024, BN1 folded into W/b) + ReLU + stats + int8 per-feature quant of a2."""
    def kernel(a_ref, w_ref, b_ref, q_ref, scale_ref, stats_ref):
        h = jnp.dot(a_ref[...], w_ref[...], preferred_element_type=jnp.float32)
        h = jnp.maximum(h + b_ref[...], 0.0)              # (tile, 1024) f32
        h, stats = _masked_stats(h, tile, n_valid, need_mask)
        stats_ref[...] = stats                            # BN2 stats from exact f32 h
        # Symmetric per-tile / per-feature int8 quantization (ReLU output is >= 0, so [0,127]).
        # Halves the dominant a2 HBM round trip; quant is free VPU filler under the DMA.
        amax = jnp.max(h, axis=0, keepdims=True)          # (1, 1024)
        scale = jnp.maximum(amax, 1e-6) * (1.0 / 127.0)
        q = jnp.minimum(h * (1.0 / scale) + 0.5, 127.0)   # round-half-up via truncation
        q_ref[...] = q.astype(jnp.int32).astype(jnp.int8)
        scale_ref[...] = scale[None]                      # (1, 1, 1024)
    return kernel


def _make_stage3_kernel(tile, n_valid, need_mask):
    """Dequant int8 a2 -> bf16 MXU (1024->8, BN2 folded into W/b) + ReLU + stats; a3 in bf16."""
    def kernel(q_ref, scale_ref, w_ref, b_ref, o_ref, stats_ref):
        a2 = q_ref[...].astype(jnp.float32) * scale_ref[0]          # (tile, 1024) dequant
        h = jnp.dot(a2.astype(jnp.bfloat16), w_ref[...],
                    preferred_element_type=jnp.float32)
        h = jnp.maximum(h + b_ref[...], 0.0)
        h, stats = _masked_stats(h, tile, n_valid, need_mask)
        stats_ref[...] = stats
        o_ref[...] = h.astype(o_ref.dtype)
    return kernel


def _bn_fold(stats, counts, n, gamma, beta):
    """Combine per-tile (sum, centered-SSQ) partials into whole-batch biased mean/var (Chan's
    parallel formula — numerically stable in f32) and return (scale, shift) such that
    BatchNorm1d(h) == h * scale + shift (gamma/beta folded in)."""
    s = stats[:, 0, :]                                     # (nt, F) per-tile sums
    m2 = stats[:, 1, :]                                    # (nt, F) per-tile centered SSQ
    mean = jnp.sum(s, axis=0) / n                          # (F,)
    delta = s / counts[:, None] - mean                     # per-tile mean - global mean
    var = (jnp.sum(m2, axis=0)
           + jnp.sum(counts[:, None] * delta * delta, axis=0)) / n
    var = jnp.maximum(var, 0.0)                            # biased var, as in PyTorch training BN
    scale = gamma * lax.rsqrt(var + EPS)
    shift = beta - mean * scale
    return scale, shift


@functools.partial(jax.jit, static_argnames=("max_tile",))
def binary_classification_forward(x, params, *, max_tile=2048):
    """x: (N, 3) f32 -> (N, 1) f32 logits with PyTorch training-mode BatchNorm semantics."""
    n = x.shape[0]
    # Tile selection: the net is HBM-bound, so use big batch tiles (2048 default, <=4096 so the
    # stage-2/3 working set stays inside v7x's 64 MiB physical VMEM).  Multiples of 32 rows for
    # int8 sublane packing, and aim for nt >= 2 so both v7x TensorCores get grid programs.
    max_tile = max(32, _round_up(min(max_tile, 4096), 32))
    tile = min(max_tile, max(32, _round_up((n + 1) // 2, 32)))
    n_pad = _round_up(n, tile)
    nt = n_pad // tile
    need_mask = n_pad != n

    x_pad = jnp.pad(x, ((0, n_pad - n), (0, 0))) if need_mask else x

    cparams = pltpu.CompilerParams(
        dimension_semantics=("parallel",),
        # At tile>=2048 the double-buffered I/O plus f32 (tile,1024) intermediates exceed the
        # 16 MiB (v5e) / 32 MiB scoped-VMEM defaults; 48 MiB still fits v7x's 64 MiB physical.
        vmem_limit_bytes=48 * 1024 * 1024,
    )

    def stats_out(f):
        return (jax.ShapeDtypeStruct((nt, 2, f), jnp.float32),
                pl.BlockSpec((1, 2, f), lambda i: (i, 0, 0)))

    # Valid rows per tile (only the last tile can be partial) for the stats combination.
    counts = jnp.clip(n - jnp.arange(nt) * tile, 1, tile).astype(jnp.float32)

    # ---- Stage 1: Linear(3,128) + ReLU (VPU) ---------------------------------------------
    st1_shape, st1_spec = stats_out(128)
    a1, st1 = pl.pallas_call(
        _make_stage1_kernel(tile, n, need_mask),
        grid=(nt,),
        in_specs=[pl.BlockSpec((tile, 3), lambda i: (i, 0)),
                  pl.BlockSpec((3, 128), lambda i: (0, 0)),
                  pl.BlockSpec((1, 128), lambda i: (0, 0))],
        out_specs=[pl.BlockSpec((tile, 128), lambda i: (i, 0)), st1_spec],
        out_shape=(jax.ShapeDtypeStruct((n_pad, 128), jnp.bfloat16), st1_shape),
        compiler_params=cparams,
    )(x_pad, params["w1"], params["b1"])

    # Fold BN1 (whole-batch stats + affine) into layer 2's weights/bias (tiny wrapper ops).
    sc1, sh1 = _bn_fold(st1, counts, n, params["g1"], params["be1"])
    w2f = (sc1[:, None] * params["w2"]).astype(jnp.bfloat16)      # (128, 1024) bf16
    b2f = (sh1 @ params["w2"])[None, :] + params["b2"]            # (1, 1024) f32

    # ---- Stage 2: Linear(128,1024) + ReLU (bf16 MXU, dominant matmul), a2 staged int8 -----
    st2_shape, st2_spec = stats_out(1024)
    a2q, a2s, st2 = pl.pallas_call(
        _make_stage2_kernel(tile, n, need_mask),
        grid=(nt,),
        in_specs=[pl.BlockSpec((tile, 128), lambda i: (i, 0)),
                  pl.BlockSpec((128, 1024), lambda i: (0, 0)),
                  pl.BlockSpec((1, 1024), lambda i: (0, 0))],
        out_specs=[pl.BlockSpec((tile, 1024), lambda i: (i, 0)),
                   pl.BlockSpec((1, 1, 1024), lambda i: (i, 0, 0)),
                   st2_spec],
        out_shape=(jax.ShapeDtypeStruct((n_pad, 1024), jnp.int8),
                   jax.ShapeDtypeStruct((nt, 1, 1024), jnp.float32),
                   st2_shape),
        compiler_params=cparams,
    )(a1, w2f, b2f)

    sc2, sh2 = _bn_fold(st2, counts, n, params["g2"], params["be2"])
    w3f = (sc2[:, None] * params["w3"]).astype(jnp.bfloat16)      # (1024, 8) bf16 (NOT padded)
    b3f = (sh2 @ params["w3"])[None, :] + params["b3"]            # (1, 8) f32

    # ---- Stage 3: dequant a2 + Linear(1024,8) + ReLU (bf16 MXU); a3 staged bf16 ------------
    st3_shape, st3_spec = stats_out(8)
    a3, st3 = pl.pallas_call(
        _make_stage3_kernel(tile, n, need_mask),
        grid=(nt,),
        in_specs=[pl.BlockSpec((tile, 1024), lambda i: (i, 0)),
                  pl.BlockSpec((1, 1, 1024), lambda i: (i, 0, 0)),
                  pl.BlockSpec((1024, 8), lambda i: (0, 0)),
                  pl.BlockSpec((1, 8), lambda i: (0, 0))],
        out_specs=[pl.BlockSpec((tile, 8), lambda i: (i, 0)), st3_spec],
        out_shape=(jax.ShapeDtypeStruct((n_pad, 8), jnp.bfloat16), st3_shape),
        compiler_params=cparams,
    )(a2q, a2s, w3f, b3f)

    sc3, sh3 = _bn_fold(st3, counts, n, params["g3"], params["be3"])
    # Dropout(p=0.0003) treated as identity (see TODO).  BN3 + the 8->1 head are folded into a
    # tiny plain-JAX matmul: a 4th pallas_call would pay nt * ~0.35us step overhead and
    # lane-width-1 masked stores; XLA fuses this with the [:n] slice for free.
    wo_f = sc3[:, None] * params["wo"]                            # (8, 1)
    bo_f = sh3 @ params["wo"] + params["bo"]                      # (1, 1)
    return a3[:n].astype(jnp.float32) @ wo_f + bo_f


def init_params(key):
    """PyTorch-style default init: U(±1/sqrt(fan_in)) for Linear weights/biases,
    gamma=1 / beta=0 for BatchNorm1d.  Weights stored as (in, out): kernels compute x @ W + b."""
    dims = {"1": (3, 128), "2": (128, 1024), "3": (1024, 8), "o": (8, 1)}
    params = {}
    for name, (fan_in, fan_out) in dims.items():
        key, kw, kb = jax.random.split(key, 3)
        bound = 1.0 / (fan_in ** 0.5)
        params[f"w{name}"] = jax.random.uniform(kw, (fan_in, fan_out), jnp.float32, -bound, bound)
        params[f"b{name}"] = jax.random.uniform(kb, (1, fan_out), jnp.float32, -bound, bound)
    for name, width in zip(["1", "2", "3"], [128, 1024, 8]):
        params[f"g{name}"] = jnp.ones((width,), jnp.float32)
        params[f"be{name}"] = jnp.zeros((width,), jnp.float32)
    return params


def forward_reference(x, params):
    """Pure-JAX f32 reference (training-mode BN, dropout as identity)."""
    def bn(h, g, b):
        mu = jnp.mean(h, axis=0)
        var = jnp.mean((h - mu) ** 2, axis=0)
        return (h - mu) * lax.rsqrt(var + EPS) * g + b
    h = bn(jnp.maximum(x @ params["w1"] + params["b1"], 0.0), params["g1"], params["be1"])
    h = bn(jnp.maximum(h @ params["w2"] + params["b2"], 0.0), params["g2"], params["be2"])
    h = bn(jnp.maximum(h @ params["w3"] + params["b3"], 0.0), params["g3"], params["be3"])
    return h @ params["wo"] + params["bo"]


if __name__ == "__main__":
    key = jax.random.PRNGKey(0)
    key_params, key_x = jax.random.split(key)
    params = init_params(key_params)

    batch = 300                      # small demo; exercises nt=2 grid + padded-row masking
    x = jax.random.normal(key_x, (batch, 3), jnp.float32)

    out = binary_classification_forward(x, params)
    out = jax.block_until_ready(out)
    assert out.shape == (batch, 1), out.shape

    ref = forward_reference(x, params)
    max_err = float(jnp.max(jnp.abs(out - ref)))
    # Error budget: bf16 staging of a1/a3, bf16 MXU matmuls, and int8 per-feature staging of a2
    # (<=0.4% of the per-feature max) keep the error well below this tolerance.
    assert max_err < 1e-1, f"max abs error {max_err}"
    print("KERNEL_OK")
</pallas_src>

<mosaic_0001>
module attributes {stable_mosaic.version = 11 : i64} {
  func.func @kernel(%arg0: i32, %arg1: memref<160x3xf32, #tpu.memory_space<vmem>>, %arg2: memref<3x128xf32, #tpu.memory_space<vmem>>, %arg3: memref<1x128xf32, #tpu.memory_space<vmem>>, %arg4: memref<160x128xbf16, #tpu.memory_space<vmem>>, %arg5: memref<1x2x128xf32, #tpu.memory_space<vmem>>) attributes {dimension_semantics = [#tpu.dimension_semantics<parallel>], iteration_bounds = array<i64: 2>, scalar_prefetch = 0 : i64, scratch_operands = 0 : i64, tpu.core_type = #tpu.core_type<tc>, window_params = [{transform_indices = @transform_0, window_bounds = array<i64: 160, 3>}, {pipeline_mode = #tpu.pipeline_mode<synchronous>, transform_indices = @transform_1, window_bounds = array<i64: 3, 128>}, {pipeline_mode = #tpu.pipeline_mode<synchronous>, transform_indices = @transform_2, window_bounds = array<i64: 1, 128>}, {transform_indices = @transform_3, window_bounds = array<i64: 160, 128>}, {transform_indices = @transform_4, window_bounds = array<i64: 1, 2, 128>}]} {
    %c0 = arith.constant 0 : index
    %c0_0 = arith.constant 0 : index
    %0 = vector.load %arg1[%c0, %c0_0] : memref<160x3xf32, #tpu.memory_space<vmem>>, vector<160x3xf32>
    %c0_1 = arith.constant 0 : index
    %c0_2 = arith.constant 0 : index
    %1 = vector.load %arg3[%c0_1, %c0_2] : memref<1x128xf32, #tpu.memory_space<vmem>>, vector<1x128xf32>
    %2 = vector.extract_strided_slice %0 {offsets = [0, 0], sizes = [160, 1], strides = [1, 1]} : vector<160x3xf32> to vector<160x1xf32>
    %c0_3 = arith.constant 0 : index
    %c0_4 = arith.constant 0 : index
    %3 = vector.load %arg2[%c0_3, %c0_4] : memref<3x128xf32, #tpu.memory_space<vmem>>, vector<1x128xf32>
    %4 = vector.broadcast %2 : vector<160x1xf32> to vector<160x128xf32>
    %5 = vector.broadcast %3 : vector<1x128xf32> to vector<160x128xf32>
    %6 = arith.mulf %4, %5 : vector<160x128xf32>
    %7 = vector.broadcast %1 : vector<1x128xf32> to vector<160x128xf32>
    %8 = arith.addf %7, %6 : vector<160x128xf32>
    %9 = vector.extract_strided_slice %0 {offsets = [0, 1], sizes = [160, 1], strides = [1, 1]} : vector<160x3xf32> to vector<160x1xf32>
    %c1 = arith.constant 1 : index
    %c0_5 = arith.constant 0 : index
    %10 = vector.load %arg2[%c1, %c0_5] : memref<3x128xf32, #tpu.memory_space<vmem>>, vector<1x128xf32>
    %11 = vector.broadcast %9 : vector<160x1xf32> to vector<160x128xf32>
    %12 = vector.broadcast %10 : vector<1x128xf32> to vector<160x128xf32>
    %13 = arith.mulf %11, %12 : vector<160x128xf32>
    %14 = arith.addf %8, %13 : vector<160x128xf32>
    %15 = vector.extract_strided_slice %0 {offsets = [0, 2], sizes = [160, 1], strides = [1, 1]} : vector<160x3xf32> to vector<160x1xf32>
    %c2 = arith.constant 2 : index
    %c0_6 = arith.constant 0 : index
    %16 = vector.load %arg2[%c2, %c0_6] : memref<3x128xf32, #tpu.memory_space<vmem>>, vector<1x128xf32>
    %17 = vector.broadcast %15 : vector<160x1xf32> to vector<160x128xf32>
    %18 = vector.broadcast %16 : vector<1x128xf32> to vector<160x128xf32>
    %19 = arith.mulf %17, %18 : vector<160x128xf32>
    %20 = arith.addf %14, %19 : vector<160x128xf32>
    %cst = arith.constant 0.000000e+00 : f32
    %21 = vector.broadcast %cst : f32 to vector<160x128xf32>
    %22 = arith.maximumf %20, %21 : vector<160x128xf32>
    %c160_i32 = arith.constant 160 : i32
    %23 = arith.muli %arg0, %c160_i32 : i32
    %c300_i32 = arith.constant 300 : i32
    %24 = arith.subi %c300_i32, %23 : i32
    %25 = tpu.iota {dimensions = array<i32: 0>} : vector<160x1xi32>
    %26 = vector.broadcast %24 : i32 to vector<160x1xi32>
    %27 = arith.cmpi slt, %25, %26 : vector<160x1xi32>
    %cst_7 = arith.constant 0.000000e+00 : f32
    %28 = vector.shape_cast %27 : vector<160x1xi1> to vector<160x1xi1>
    %29 = vector.broadcast %28 : vector<160x1xi1> to vector<160x128xi1>
    %30 = vector.broadcast %cst_7 : f32 to vector<160x128xf32>
    %31 = arith.select %29, %22, %30 : vector<160x128xi1>, vector<160x128xf32>
    %c160_i32_8 = arith.constant 160 : i32
    %32 = arith.minsi %24, %c160_i32_8 : i32
    %c1_i32 = arith.constant 1 : i32
    %33 = arith.maxsi %32, %c1_i32 : i32
    %34 = arith.sitofp %33 : i32 to f32
    %cst_9 = arith.constant dense<0.000000e+00> : vector<128xf32>
    %35 = vector.multi_reduction <add>, %31, %cst_9 [0] : vector<160x128xf32> to vector<128xf32>
    %36 = vector.shape_cast %35 : vector<128xf32> to vector<1x128xf32>
    %cst_10 = arith.constant 1.000000e+00 : f32
    %37 = arith.divf %cst_10, %34 : f32
    %38 = vector.broadcast %37 : f32 to vector<1x128xf32>
    %39 = arith.mulf %36, %38 : vector<1x128xf32>
    %40 = vector.broadcast %39 : vector<1x128xf32> to vector<160x128xf32>
    %41 = arith.subf %31, %40 : vector<160x128xf32>
    %cst_11 = arith.constant 0.000000e+00 : f32
    %42 = vector.shape_cast %27 : vector<160x1xi1> to vector<160x1xi1>
    %43 = vector.broadcast %42 : vector<160x1xi1> to vector<160x128xi1>
    %44 = vector.broadcast %cst_11 : f32 to vector<160x128xf32>
    %45 = arith.select %43, %41, %44 : vector<160x128xi1>, vector<160x128xf32>
    %46 = arith.mulf %45, %45 : vector<160x128xf32>
    %cst_12 = arith.constant dense<0.000000e+00> : vector<128xf32>
    %47 = vector.multi_reduction <add>, %46, %cst_12 [0] : vector<160x128xf32> to vector<128xf32>
    %48 = vector.shape_cast %47 : vector<128xf32> to vector<1x128xf32>
    %49 = tpu.concatenate %36, %48 in 0 : vector<1x128xf32>, vector<1x128xf32> -> vector<2x128xf32>
    %50 = vector.shape_cast %49 : vector<2x128xf32> to vector<1x2x128xf32>
    %c0_13 = arith.constant 0 : index
    %c0_14 = arith.constant 0 : index
    %c0_15 = arith.constant 0 : index
    %51 = vector.load %arg5[%c0_13, %c0_14, %c0_15] : memref<1x2x128xf32, #tpu.memory_space<vmem>>, vector<1x2x128xf32>
    tpu.vector_store %arg5[%c0_13, %c0_14, %c0_15], %50 {strides = array<i32>} : memref<1x2x128xf32, #tpu.memory_space<vmem>>, vector<1x2x128xf32>,
    %52 = arith.truncf %31 : vector<160x128xf32> to vector<160x128xbf16>
    %c0_16 = arith.constant 0 : index
    %c0_17 = arith.constant 0 : index
    %53 = vector.load %arg4[%c0_16, %c0_17] : memref<160x128xbf16, #tpu.memory_space<vmem>>, vector<160x128xbf16>
    tpu.vector_store %arg4[%c0_16, %c0_17], %52 {strides = array<i32>} : memref<160x128xbf16, #tpu.memory_space<vmem>>, vector<160x128xbf16>,
    return
  }
  func.func @transform_0(%arg0: i32) -> (i32, i32) {
    %c0_i32 = arith.constant 0 : i32
    %c0_i32_0 = arith.constant 0 : i32
    return %arg0, %c0_i32 : i32, i32
  }
  func.func @transform_1(%arg0: i32) -> (i32, i32) {
    %c0_i32 = arith.constant 0 : i32
    %c0_i32_0 = arith.constant 0 : i32
    %c0_i32_1 = arith.constant 0 : i32
    return %c0_i32, %c0_i32_0 : i32, i32
  }
  func.func @transform_2(%arg0: i32) -> (i32, i32) {
    %c0_i32 = arith.constant 0 : i32
    %c0_i32_0 = arith.constant 0 : i32
    %c0_i32_1 = arith.constant 0 : i32
    return %c0_i32, %c0_i32_0 : i32, i32
  }
  func.func @transform_3(%arg0: i32) -> (i32, i32) {
    %c0_i32 = arith.constant 0 : i32
    %c0_i32_0 = arith.constant 0 : i32
    return %arg0, %c0_i32 : i32, i32
  }
  func.func @transform_4(%arg0: i32) -> (i32, i32, i32) {
    %c0_i32 = arith.constant 0 : i32
    %c0_i32_0 = arith.constant 0 : i32
    %c0_i32_1 = arith.constant 0 : i32
    return %arg0, %c0_i32, %c0_i32_0 : i32, i32, i32
  }
}

module attributes {stable_mosaic.version = 11 : i64} {
  func.func @kernel(%arg0: i32, %arg1: memref<160x128xbf16, #tpu.memory_space<vmem>>, %arg2: memref<128x1024xbf16, #tpu.memory_space<vmem>>, %arg3: memref<1x1024xf32, #tpu.memory_space<vmem>>, %arg4: memref<160x1024xi8, #tpu.memory_space<vmem>>, %arg5: memref<1x1x1024xf32, #tpu.memory_space<vmem>>, %arg6: memref<1x2x1024xf32, #tpu.memory_space<vmem>>) attributes {dimension_semantics = [#tpu.dimension_semantics<parallel>], iteration_bounds = array<i64: 2>, scalar_prefetch = 0 : i64, scratch_operands = 0 : i64, tpu.core_type = #tpu.core_type<tc>, window_params = [{transform_indices = @transform_0, window_bounds = array<i64: 160, 128>}, {pipeline_mode = #tpu.pipeline_mode<synchronous>, transform_indices = @transform_1, window_bounds = array<i64: 128, 1024>}, {pipeline_mode = #tpu.pipeline_mode<synchronous>, transform_indices = @transform_2, window_bounds = array<i64: 1, 1024>}, {transform_indices = @transform_3, window_bounds = array<i64: 160, 1024>}, {transform_indices = @transform_4, window_bounds = array<i64: 1, 1, 1024>}, {transform_indices = @transform_5, window_bounds = array<i64: 1, 2, 1024>}]} {
    %c0 = arith.constant 0 : index
    %c0_0 = arith.constant 0 : index
    %0 = vector.load %arg1[%c0, %c0_0] : memref<160x128xbf16, #tpu.memory_space<vmem>>, vector<160x128xbf16>
    %c0_1 = arith.constant 0 : index
    %c0_2 = arith.constant 0 : index
    %1 = vector.load %arg2[%c0_1, %c0_2] : memref<128x1024xbf16, #tpu.memory_space<vmem>>, vector<128x1024xbf16>
    %cst = arith.constant dense<0.000000e+00> : vector<160x1024xf32>
    %2 = tpu.matmul %0, %1, %cst {dimension_numbers = #tpu.dot_dimension_numbers<[1], [0], [0], [1], [0, 0, 1, 1], [], []>} : vector<160x128xbf16>, vector<128x1024xbf16>, vector<160x1024xf32> -> vector<160x1024xf32>
    %c0_3 = arith.constant 0 : index
    %c0_4 = arith.constant 0 : index
    %3 = vector.load %arg3[%c0_3, %c0_4] : memref<1x1024xf32, #tpu.memory_space<vmem>>, vector<1x1024xf32>
    %4 = vector.broadcast %3 : vector<1x1024xf32> to vector<160x1024xf32>
    %5 = arith.addf %2, %4 : vector<160x1024xf32>
    %cst_5 = arith.constant 0.000000e+00 : f32
    %6 = vector.broadcast %cst_5 : f32 to vector<160x1024xf32>
    %7 = arith.maximumf %5, %6 : vector<160x1024xf32>
    %c160_i32 = arith.constant 160 : i32
    %8 = arith.muli %arg0, %c160_i32 : i32
    %c300_i32 = arith.constant 300 : i32
    %9 = arith.subi %c300_i32, %8 : i32
    %10 = tpu.iota {dimensions = array<i32: 0>} : vector<160x1xi32>
    %11 = vector.broadcast %9 : i32 to vector<160x1xi32>
    %12 = arith.cmpi slt, %10, %11 : vector<160x1xi32>
    %cst_6 = arith.constant 0.000000e+00 : f32
    %13 = vector.shape_cast %12 : vector<160x1xi1> to vector<160x1xi1>
    %14 = vector.broadcast %13 : vector<160x1xi1> to vector<160x1024xi1>
    %15 = vector.broadcast %cst_6 : f32 to vector<160x1024xf32>
    %16 = arith.select %14, %7, %15 : vector<160x1024xi1>, vector<160x1024xf32>
    %c160_i32_7 = arith.constant 160 : i32
    %17 = arith.minsi %9, %c160_i32_7 : i32
    %c1_i32 = arith.constant 1 : i32
    %18 = arith.maxsi %17, %c1_i32 : i32
    %19 = arith.sitofp %18 : i32 to f32
    %cst_8 = arith.constant dense<0.000000e+00> : vector<1024xf32>
    %20 = vector.multi_reduction <add>, %16, %cst_8 [0] : vector<160x1024xf32> to vector<1024xf32>
    %21 = vector.shape_cast %20 : vector<1024xf32> to vector<1x1024xf32>
    %cst_9 = arith.constant 1.000000e+00 : f32
    %22 = arith.divf %cst_9, %19 : f32
    %23 = vector.broadcast %22 : f32 to vector<1x1024xf32>
    %24 = arith.mulf %21, %23 : vector<1x1024xf32>
    %25 = vector.broadcast %24 : vector<1x1024xf32> to vector<160x1024xf32>
    %26 = arith.subf %16, %25 : vector<160x1024xf32>
    %cst_10 = arith.constant 0.000000e+00 : f32
    %27 = vector.shape_cast %12 : vector<160x1xi1> to vector<160x1xi1>
    %28 = vector.broadcast %27 : vector<160x1xi1> to vector<160x1024xi1>
    %29 = vector.broadcast %cst_10 : f32 to vector<160x1024xf32>
    %30 = arith.select %28, %26, %29 : vector<160x1024xi1>, vector<160x1024xf32>
    %31 = arith.mulf %30, %30 : vector<160x1024xf32>
    %cst_11 = arith.constant dense<0.000000e+00> : vector<1024xf32>
    %32 = vector.multi_reduction <add>, %31, %cst_11 [0] : vector<160x1024xf32> to vector<1024xf32>
    %33 = vector.shape_cast %32 : vector<1024xf32> to vector<1x1024xf32>
    %34 = tpu.concatenate %21, %33 in 0 : vector<1x1024xf32>, vector<1x1024xf32> -> vector<2x1024xf32>
    %35 = vector.shape_cast %34 : vector<2x1024xf32> to vector<1x2x1024xf32>
    %c0_12 = arith.constant 0 : index
    %c0_13 = arith.constant 0 : index
    %c0_14 = arith.constant 0 : index
    %36 = vector.load %arg6[%c0_12, %c0_13, %c0_14] : memref<1x2x1024xf32, #tpu.memory_space<vmem>>, vector<1x2x1024xf32>
    tpu.vector_store %arg6[%c0_12, %c0_13, %c0_14], %35 {strides = array<i32>} : memref<1x2x1024xf32, #tpu.memory_space<vmem>>, vector<1x2x1024xf32>,
    %cst_15 = arith.constant dense<0xFF800000> : vector<1024xf32>
    %37 = vector.multi_reduction <maximumf>, %16, %cst_15 [0] : vector<160x1024xf32> to vector<1024xf32>
    %38 = vector.shape_cast %37 : vector<1024xf32> to vector<1x1024xf32>
    %cst_16 = arith.constant 9.99999997E-7 : f32
    %39 = vector.broadcast %cst_16 : f32 to vector<1x1024xf32>
    %40 = arith.maximumf %38, %39 : vector<1x1024xf32>
    %cst_17 = arith.constant 0.00787401571 : f32
    %41 = vector.broadcast %cst_17 : f32 to vector<1x1024xf32>
    %42 = arith.mulf %40, %41 : vector<1x1024xf32>
    %cst_18 = arith.constant 1.000000e+00 : f32
    %43 = vector.broadcast %cst_18 : f32 to vector<1x1024xf32>
    %44 = arith.divf %43, %42 : vector<1x1024xf32>
    %45 = vector.broadcast %44 : vector<1x1024xf32> to vector<160x1024xf32>
    %46 = arith.mulf %16, %45 : vector<160x1024xf32>
    %cst_19 = arith.constant 5.000000e-01 : f32
    %47 = vector.broadcast %cst_19 : f32 to vector<160x1024xf32>
    %48 = arith.addf %46, %47 : vector<160x1024xf32>
    %cst_20 = arith.constant 1.270000e+02 : f32
    %49 = vector.broadcast %cst_20 : f32 to vector<160x1024xf32>
    %50 = arith.minimumf %48, %49 : vector<160x1024xf32>
    %51 = arith.fptosi %50 : vector<160x1024xf32> to vector<160x1024xi32>
    %52 = arith.trunci %51 : vector<160x1024xi32> to vector<160x1024xi8>
    %c0_21 = arith.constant 0 : index
    %c0_22 = arith.constant 0 : index
    %53 = vector.load %arg4[%c0_21, %c0_22] : memref<160x1024xi8, #tpu.memory_space<vmem>>, vector<160x1024xi8>
    tpu.vector_store %arg4[%c0_21, %c0_22], %52 {strides = array<i32>} : memref<160x1024xi8, #tpu.memory_space<vmem>>, vector<160x1024xi8>,
    %54 = vector.shape_cast %42 : vector<1x1024xf32> to vector<1x1x1024xf32>
    %c0_23 = arith.constant 0 : index
    %c0_24 = arith.constant 0 : index
    %c0_25 = arith.constant 0 : index
    %55 = vector.load %arg5[%c0_23, %c0_24, %c0_25] : memref<1x1x1024xf32, #tpu.memory_space<vmem>>, vector<1x1x1024xf32>
    tpu.vector_store %arg5[%c0_23, %c0_24, %c0_25], %54 {strides = array<i32>} : memref<1x1x1024xf32, #tpu.memory_space<vmem>>, vector<1x1x1024xf32>,
    return
  }
  func.func @transform_0(%arg0: i32) -> (i32, i32) {
    %c0_i32 = arith.constant 0 : i32
    %c0_i32_0 = arith.constant 0 : i32
    return %arg0, %c0_i32 : i32, i32
  }
  func.func @transform_1(%arg0: i32) -> (i32, i32) {
    %c0_i32 = arith.constant 0 : i32
    %c0_i32_0 = arith.constant 0 : i32
    %c0_i32_1 = arith.constant 0 : i32
    return %c0_i32, %c0_i32_0 : i32, i32
  }
  func.func @transform_2(%arg0: i32) -> (i32, i32) {
    %c0_i32 = arith.constant 0 : i32
    %c0_i32_0 = arith.constant 0 : i32
    %c0_i32_1 = arith.constant 0 : i32
    return %c0_i32, %c0_i32_0 : i32, i32
  }
  func.func @transform_3(%arg0: i32) -> (i32, i32) {
    %c0_i32 = arith.constant 0 : i32
    %c0_i32_0 = arith.constant 0 : i32
    return %arg0, %c0_i32 : i32, i32
  }
  func.func @transform_4(%arg0: i32) -> (i32, i32, i32) {
    %c0_i32 = arith.constant 0 : i32
    %c0_i32_0 = arith.constant 0 : i32
    %c0_i32_1 = arith.constant 0 : i32
    return %arg0, %c0_i32, %c0_i32_0 : i32, i32, i32
  }
  func.func @transform_5(%arg0: i32) -> (i32, i32, i32) {
    %c0_i32 = arith.constant 0 : i32
    %c0_i32_0 = arith.constant 0 : i32
    %c0_i32_1 = arith.constant 0 : i32
    return %arg0, %c0_i32, %c0_i32_0 : i32, i32, i32
  }
}

module attributes {stable_mosaic.version = 11 : i64} {
  func.func @kernel(%arg0: i32, %arg1: memref<160x1024xi8, #tpu.memory_space<vmem>>, %arg2: memref<1x1x1024xf32, #tpu.memory_space<vmem>>, %arg3: memref<1024x8xbf16, #tpu.memory_space<vmem>>, %arg4: memref<1x8xf32, #tpu.memory_space<vmem>>, %arg5: memref<160x8xbf16, #tpu.memory_space<vmem>>, %arg6: memref<1x2x8xf32, #tpu.memory_space<vmem>>) attributes {dimension_semantics = [#tpu.dimension_semantics<parallel>], iteration_bounds = array<i64: 2>, scalar_prefetch = 0 : i64, scratch_operands = 0 : i64, tpu.core_type = #tpu.core_type<tc>, window_params = [{transform_indices = @transform_0, window_bounds = array<i64: 160, 1024>}, {transform_indices = @transform_1, window_bounds = array<i64: 1, 1, 1024>}, {pipeline_mode = #tpu.pipeline_mode<synchronous>, transform_indices = @transform_2, window_bounds = array<i64: 1024, 8>}, {pipeline_mode = #tpu.pipeline_mode<synchronous>, transform_indices = @transform_3, window_bounds = array<i64: 1, 8>}, {transform_indices = @transform_4, window_bounds = array<i64: 160, 8>}, {transform_indices = @transform_5, window_bounds = array<i64: 1, 2, 8>}]} {
    %c0 = arith.constant 0 : index
    %c0_0 = arith.constant 0 : index
    %0 = vector.load %arg1[%c0, %c0_0] : memref<160x1024xi8, #tpu.memory_space<vmem>>, vector<160x1024xi8>
    %1 = arith.sitofp %0 : vector<160x1024xi8> to vector<160x1024xf32>
    %c0_1 = arith.constant 0 : index
    %c0_2 = arith.constant 0 : index
    %c0_3 = arith.constant 0 : index
    %2 = vector.load %arg2[%c0_1, %c0_2, %c0_3] : memref<1x1x1024xf32, #tpu.memory_space<vmem>>, vector<1x1x1024xf32>
    %3 = vector.shape_cast %2 : vector<1x1x1024xf32> to vector<1x1024xf32>
    %4 = vector.broadcast %3 : vector<1x1024xf32> to vector<160x1024xf32>
    %5 = arith.mulf %1, %4 : vector<160x1024xf32>
    %6 = arith.truncf %5 : vector<160x1024xf32> to vector<160x1024xbf16>
    %c0_4 = arith.constant 0 : index
    %c0_5 = arith.constant 0 : index
    %7 = vector.load %arg3[%c0_4, %c0_5] : memref<1024x8xbf16, #tpu.memory_space<vmem>>, vector<1024x8xbf16>
    %cst = arith.constant dense<0.000000e+00> : vector<160x8xf32>
    %8 = tpu.matmul %6, %7, %cst {dimension_numbers = #tpu.dot_dimension_numbers<[1], [0], [0], [1], [0, 0, 1, 1], [], []>} : vector<160x1024xbf16>, vector<1024x8xbf16>, vector<160x8xf32> -> vector<160x8xf32>
    %c0_6 = arith.constant 0 : index
    %c0_7 = arith.constant 0 : index
    %9 = vector.load %arg4[%c0_6, %c0_7] : memref<1x8xf32, #tpu.memory_space<vmem>>, vector<1x8xf32>
    %10 = vector.broadcast %9 : vector<1x8xf32> to vector<160x8xf32>
    %11 = arith.addf %8, %10 : vector<160x8xf32>
    %cst_8 = arith.constant 0.000000e+00 : f32
    %12 = vector.broadcast %cst_8 : f32 to vector<160x8xf32>
    %13 = arith.maximumf %11, %12 : vector<160x8xf32>
    %c160_i32 = arith.constant 160 : i32
    %14 = arith.muli %arg0, %c160_i32 : i32
    %c300_i32 = arith.constant 300 : i32
    %15 = arith.subi %c300_i32, %14 : i32
    %16 = tpu.iota {dimensions = array<i32: 0>} : vector<160x1xi32>
    %17 = vector.broadcast %15 : i32 to vector<160x1xi32>
    %18 = arith.cmpi slt, %16, %17 : vector<160x1xi32>
    %cst_9 = arith.constant 0.000000e+00 : f32
    %19 = vector.shape_cast %18 : vector<160x1xi1> to vector<160x1xi1>
    %20 = vector.broadcast %19 : vector<160x1xi1> to vector<160x8xi1>
    %21 = vector.broadcast %cst_9 : f32 to vector<160x8xf32>
    %22 = arith.select %20, %13, %21 : vector<160x8xi1>, vector<160x8xf32>
    %c160_i32_10 = arith.constant 160 : i32
    %23 = arith.minsi %15, %c160_i32_10 : i32
    %c1_i32 = arith.constant 1 : i32
    %24 = arith.maxsi %23, %c1_i32 : i32
    %25 = arith.sitofp %24 : i32 to f32
    %cst_11 = arith.constant dense<0.000000e+00> : vector<8xf32>
    %26 = vector.multi_reduction <add>, %22, %cst_11 [0] : vector<160x8xf32> to vector<8xf32>
    %27 = vector.shape_cast %26 : vector<8xf32> to vector<1x8xf32>
    %cst_12 = arith.constant 1.000000e+00 : f32
    %28 = arith.divf %cst_12, %25 : f32
    %29 = vector.broadcast %28 : f32 to vector<1x8xf32>
    %30 = arith.mulf %27, %29 : vector<1x8xf32>
    %31 = vector.broadcast %30 : vector<1x8xf32> to vector<160x8xf32>
    %32 = arith.subf %22, %31 : vector<160x8xf32>
    %cst_13 = arith.constant 0.000000e+00 : f32
    %33 = vector.shape_cast %18 : vector<160x1xi1> to vector<160x1xi1>
    %34 = vector.broadcast %33 : vector<160x1xi1> to vector<160x8xi1>
    %35 = vector.broadcast %cst_13 : f32 to vector<160x8xf32>
    %36 = arith.select %34, %32, %35 : vector<160x8xi1>, vector<160x8xf32>
    %37 = arith.mulf %36, %36 : vector<160x8xf32>
    %cst_14 = arith.constant dense<0.000000e+00> : vector<8xf32>
    %38 = vector.multi_reduction <add>, %37, %cst_14 [0] : vector<160x8xf32> to vector<8xf32>
    %39 = vector.shape_cast %38 : vector<8xf32> to vector<1x8xf32>
    %40 = tpu.concatenate %27, %39 in 0 : vector<1x8xf32>, vector<1x8xf32> -> vector<2x8xf32>
    %41 = vector.shape_cast %40 : vector<2x8xf32> to vector<1x2x8xf32>
    %c0_15 = arith.constant 0 : index
    %c0_16 = arith.constant 0 : index
    %c0_17 = arith.constant 0 : index
    %42 = vector.load %arg6[%c0_15, %c0_16, %c0_17] : memref<1x2x8xf32, #tpu.memory_space<vmem>>, vector<1x2x8xf32>
    tpu.vector_store %arg6[%c0_15, %c0_16, %c0_17], %41 {strides = array<i32>} : memref<1x2x8xf32, #tpu.memory_space<vmem>>, vector<1x2x8xf32>,
    %43 = arith.truncf %22 : vector<160x8xf32> to vector<160x8xbf16>
    %c0_18 = arith.constant 0 : index
    %c0_19 = arith.constant 0 : index
    %44 = vector.load %arg5[%c0_18, %c0_19] : memref<160x8xbf16, #tpu.memory_space<vmem>>, vector<160x8xbf16>
    tpu.vector_store %arg5[%c0_18, %c0_19], %43 {strides = array<i32>} : memref<160x8xbf16, #tpu.memory_space<vmem>>, vector<160x8xbf16>,
    return
  }
  func.func @transform_0(%arg0: i32) -> (i32, i32) {
    %c0_i32 = arith.constant 0 : i32
    %c0_i32_0 = arith.constant 0 : i32
    return %arg0, %c0_i32 : i32, i32
  }
  func.func @transform_1(%arg0: i32) -> (i32, i32, i32) {
    %c0_i32 = arith.constant 0 : i32
    %c0_i32_0 = arith.constant 0 : i32
    %c0_i32_1 = arith.constant 0 : i32
    return %arg0, %c0_i32, %c0_i32_0 : i32, i32, i32
  }
  func.func @transform_2(%arg0: i32) -> (i32, i32) {
    %c0_i32 = arith.constant 0 : i32
    %c0_i32_0 = arith.constant 0 : i32
    %c0_i32_1 = arith.constant 0 : i32
    return %c0_i32, %c0_i32_0 : i32, i32
  }
  func.func @transform_3(%arg0: i32) -> (i32, i32) {
    %c0_i32 = arith.constant 0 : i32
    %c0_i32_0 = arith.constant 0 : i32
    %c0_i32_1 = arith.constant 0 : i32
    return %c0_i32, %c0_i32_0 : i32, i32
  }
  func.func @transform_4(%arg0: i32) -> (i32, i32) {
    %c0_i32 = arith.constant 0 : i32
    %c0_i32_0 = arith.constant 0 : i32
    return %arg0, %c0_i32 : i32, i32
  }
  func.func @transform_5(%arg0: i32) -> (i32, i32, i32) {
    %c0_i32 = arith.constant 0 : i32
    %c0_i32_0 = arith.constant 0 : i32
    %c0_i32_1 = arith.constant 0 : i32
    return %arg0, %c0_i32, %c0_i32_0 : i32, i32, i32
  }
}

</mosaic_0001>

<llo_original>
// kernel: binary_classification_forward.3
$region0: #{binary_classification_forward.3}
  #allocation0 [shape = 'u32[]', space=smem, size = 0x4, offset = 0x4, fixed_abs, tag = 'smem constant byte address 0x4 - core index']
  #allocation1 [shape = 'u32[144,128]{1,0:T(1,128)}', space=vmem, size = 0x12000, scoped, tag = 'internal scratch']
  %s0 = inlined_call_operand.vmem [shape: f32[320,3], index: 0, kind: input, shape index: {}]
  %s1 = inlined_call_operand.vmem [shape: f32[3,128], index: 1, kind: input, shape index: {}]
  %s2 = inlined_call_operand.vmem [shape: f32[1,128], index: 2, kind: input, shape index: {}]
  %s3 = inlined_call_operand.vmem [shape: bf16[320,128], index: 3, kind: output, shape index: {0}]
  %s4 = inlined_call_operand.vmem [shape: f32[2,2,128], index: 4, kind: output, shape index: {1}]
  %5 = xla_tuple %s3, %s4
  %s6 = sld [smem:[#allocation0]]
  $region53: #{binary_classification_forward.3} parent=0
    _
  %s8 = ssub.s32 1, %s6
  %s9 = scalar_select 0, %s8, %s6
  loop: start=0, step=1, limit=4
  $region2: #{binary_classification_forward.3} parent=0 // loop_pre_header
    _
  $region3: #{binary_classification_forward.3} parent=0 // loop_header
    %s11 = sphi 0, %s15
    %p12 = scmp.ge.s32.totalorder %s11, 4
    %s21 = sphi 0, %s23
    %s24 = sphi 0, %s21
    %s25 = sphi 0, %s24
    %s41 = sphi 0, %s25
    %s45 = sphi 0, %s45
    %s47 = sphi 0, %s45
    %s48 = sphi 0, %s47
    %s62 = sphi 0, %s48
    %s66 = sphi 0, %s66
    %s68 = sphi 0, %s66
    %s69 = sphi 0, %s68
    %s83 = sphi 0, %s69
    %s89 = sphi 0, %s91
    %s92 = sphi 0, %s89
    %s93 = sphi 0, %s92
    %s109 = sphi 0, %s93
    %s115 = sphi 0, %s117
    %s118 = sphi 0, %s115
    %s119 = sphi 0, %s118
    %s135 = sphi 0, %s119
  $region4: #{binary_classification_forward.3} parent=0 // loop_header_branch
    %14 = sbr.rel (%p12) target = $region8
  $region5: #{binary_classification_forward.3} parent=0 // loop_body
    %s16 = ssub.s32 %s11, 1
    %s17 = ssub.s32 %s11, 2
    %s18 = sadd.s32 %s11, 1
    %s19 = ssub.s32 %s11, %s18
    %p20 = scmp.eq.s32.totalorder %s19, 0
    %s22 = sadd.s32 %s21, 1
    %s23 = scalar_select %p20, %s21, %s22
    %p26 = pneg %p20
    %p27 = scmp.eq.s32.totalorder %s11, 1
    %p28 = por %p26, %p27
    %p29 = scmp.ne.s32.totalorder %s21, %s24
    %p30 = scmp.eq.s32.totalorder %s11, 0
    %p31 = por %p29, %p30
    %p32 = scmp.ne.s32.totalorder %s21, %s24
    %p33 = scmp.eq.s32.totalorder %s16, 1
    %p34 = por %p32, %p33
    %p35 = scmp.ne.s32.totalorder %s24, %s25
    %p36 = scmp.eq.s32.totalorder %s16, 0
    %p37 = por %p35, %p36
    %p38 = scmp.ne.s32.totalorder %s24, %s25
    %p39 = scmp.eq.s32.totalorder %s17, 1
    %p40 = por %p38, %p39
    %p42 = scmp.ne.s32.totalorder %s25, %s41
    %p43 = scmp.eq.s32.totalorder %s17, 0
    %p44 = por %p42, %p43
    %s46 = sadd.s32 %s45, 1
    %p49 = scmp.eq.s32.totalorder %s11, 1
    %p50 = scmp.ne.s32.totalorder %s45, %s47
    %p51 = scmp.eq.s32.totalorder %s11, 0
    %p52 = por %p50, %p51
    %p53 = scmp.ne.s32.totalorder %s45, %s47
    %p54 = scmp.eq.s32.totalorder %s16, 1
    %p55 = por %p53, %p54
    %p56 = scmp.ne.s32.totalorder %s47, %s48
    %p57 = scmp.eq.s32.totalorder %s16, 0
    %p58 = por %p56, %p57
    %p59 = scmp.ne.s32.totalorder %s47, %s48
    %p60 = scmp.eq.s32.totalorder %s17, 1
    %p61 = por %p59, %p60
    %p63 = scmp.ne.s32.totalorder %s48, %s62
    %p64 = scmp.eq.s32.totalorder %s17, 0
    %p65 = por %p63, %p64
    %s67 = sadd.s32 %s66, 1
    %p70 = scmp.eq.s32.totalorder %s11, 1
    %p71 = scmp.ne.s32.totalorder %s66, %s68
    %p72 = scmp.eq.s32.totalorder %s11, 0
    %p73 = por %p71, %p72
    %p74 = scmp.ne.s32.totalorder %s66, %s68
    %p75 = scmp.eq.s32.totalorder %s16, 1
    %p76 = por %p74, %p75
    %p77 = scmp.ne.s32.totalorder %s68, %s69
    %p78 = scmp.eq.s32.totalorder %s16, 0
    %p79 = por %p77, %p78
    %p80 = scmp.ne.s32.totalorder %s68, %s69
    %p81 = scmp.eq.s32.totalorder %s17, 1
    %p82 = por %p80, %p81
    %p84 = scmp.ne.s32.totalorder %s69, %s83
    %p85 = scmp.eq.s32.totalorder %s17, 0
    %p86 = por %p84, %p85
    %s87 = ssub.s32 %s11, %s18
    %p88 = scmp.eq.s32.totalorder %s87, 0
    %s90 = sadd.s32 %s89, 1
    %s91 = scalar_select %p88, %s89, %s90
    %p94 = pneg %p88
    %p95 = scmp.eq.s32.totalorder %s11, 1
    %p96 = por %p94, %p95
    %p97 = scmp.ne.s32.totalorder %s89, %s92
    %p98 = scmp.eq.s32.totalorder %s11, 0
    %p99 = por %p97, %p98
    %p100 = scmp.ne.s32.totalorder %s89, %s92
    %p101 = scmp.eq.s32.totalorder %s16, 1
    %p102 = por %p100, %p101
    %p103 = scmp.ne.s32.totalorder %s92, %s93
    %p104 = scmp.eq.s32.totalorder %s16, 0
    %p105 = por %p103, %p104
    %p106 = scmp.ne.s32.totalorder %s92, %s93
    %p107 = scmp.eq.s32.totalorder %s17, 1
    %p108 = por %p106, %p107
    %p110 = scmp.ne.s32.totalorder %s93, %s109
    %p111 = scmp.eq.s32.totalorder %s17, 0
    %p112 = por %p110, %p111
    %s113 = ssub.s32 %s11, %s18
    %p114 = scmp.eq.s32.totalorder %s113, 0
    %s116 = sadd.s32 %s115, 1
    %s117 = scalar_select %p114, %s115, %s116
    %p120 = pneg %p114
    %p121 = scmp.eq.s32.totalorder %s11, 1
    %p122 = por %p120, %p121
    %p123 = scmp.ne.s32.totalorder %s115, %s118
    %p124 = scmp.eq.s32.totalorder %s11, 0
    %p125 = por %p123, %p124
    %p126 = scmp.ne.s32.totalorder %s115, %s118
    %p127 = scmp.eq.s32.totalorder %s16, 1
    %p128 = por %p126, %p127
    %p129 = scmp.ne.s32.totalorder %s118, %s119
    %p130 = scmp.eq.s32.totalorder %s16, 0
    %p131 = por %p129, %p130
    %p132 = scmp.ne.s32.totalorder %s118, %s119
    %p133 = scmp.eq.s32.totalorder %s17, 1
    %p134 = por %p132, %p133
    %p136 = scmp.ne.s32.totalorder %s119, %s135
    %p137 = scmp.eq.s32.totalorder %s17, 0
    %p138 = por %p136, %p137
    %p139 = scmp.le.s32.totalorder 1, %s11
    %p140 = scmp.lt.s32.totalorder %s11, 3
    %p141 = pnand %p139, %p140
    %p142 = pneg %p141
    // Predicated region
    $region9: #{binary_classification_forward.3} parent=5 // pred_check
      _
    $region10: #{binary_classification_forward.3} parent=5 // pred_check_branch
      %144 = sbr.rel (%p141) target = $region12
    $region11: #{binary_classification_forward.3} parent=5 // pred_region
      %s145 = ssub.s32 %s11, 1
      // Predicated region
      $region13: #{binary_classification_forward.3} parent=11 // pred_check
        %p146 = pneg %p58
      $region14: #{binary_classification_forward.3} parent=11 // pred_check_branch
        %148 = sbr.rel (%p146) target = $region16
      $region15: #{binary_classification_forward.3} parent=11 // pred_region
        _
      $region16: #{binary_classification_forward.3} parent=11 // pred_fallthru
        _
      // Predicated region
      $region17: #{binary_classification_forward.3} parent=11 // pred_check
        %p149 = pneg %p79
      $region18: #{binary_classification_forward.3} parent=11 // pred_check_branch
        %151 = sbr.rel (%p149) target = $region20
      $region19: #{binary_classification_forward.3} parent=11 // pred_region
        _
      $region20: #{binary_classification_forward.3} parent=11 // pred_fallthru
        _
    $region12: #{binary_classification_forward.3} parent=5 // pred_fallthru
      _
    %p152 = scmp.lt.s32.totalorder %s11, 2
    // Predicated region
    $region21: #{binary_classification_forward.3} parent=5 // pred_check
      %p153 = pneg %p152
    $region22: #{binary_classification_forward.3} parent=5 // pred_check_branch
      %155 = sbr.rel (%p153) target = $region24
    $region23: #{binary_classification_forward.3} parent=5 // pred_region
      // Predicated region
      $region25: #{binary_classification_forward.3} parent=23 // pred_check
        %p156 = pneg %p31
      $region26: #{binary_classification_forward.3} parent=23 // pred_check_branch
        %158 = sbr.rel (%p156) target = $region28
      $region27: #{binary_classification_forward.3} parent=23 // pred_region
        %s159 = smul.u32 20, %s11
        %p160 = scmp.lt.s32.totalorder %s159, 39
        %s161 = scalar_select %p160, %s159, 39
        %s162 = smul.addr %s161, 8
        %s163 = scalar_lea.vmem %s0, %s162
        %s164 = smul.u32 20, %s11
      $region28: #{binary_classification_forward.3} parent=23 // pred_fallthru
        _
    $region24: #{binary_classification_forward.3} parent=5 // pred_fallthru
      _
    %p165 = scmp.le.s32.totalorder 1, %s11
    %p166 = scmp.lt.s32.totalorder %s11, 3
    %p167 = pnand %p165, %p166
    %p168 = pneg %p167
    // Predicated region
    $region29: #{binary_classification_forward.3} parent=5 // pred_check
      _
    $region30: #{binary_classification_forward.3} parent=5 // pred_check_branch
      %170 = sbr.rel (%p167) target = $region32
    $region31: #{binary_classification_forward.3} parent=5 // pred_region
      %s171 = ssub.s32 %s11, 1
      %s172 = smul.u32 20, %s16
      %p173 = scmp.lt.s32.totalorder %s172, 39
      %s174 = scalar_select %p173, %s172, 39
      %s175 = smul.addr %s174, 8
      %s176 = scalar_lea.vmem %s0, %s175
      %p177 = pneg %p37
      %p178 = pneg %p34
      %p179 = pneg %p58
      %p180 = pneg %p55
      %p181 = pneg %p79
      %p182 = pneg %p76
      %p183 = pneg %p105
      %p184 = pneg %p102
      %s185 = smul.u32 20, %s16
      %p186 = scmp.lt.s32.totalorder %s185, 39
      %s187 = scalar_select %p186, %s185, 39
      %s188 = smul.addr %s187, 4
      %s189 = scalar_lea.vmem %s3, %s188
      %p190 = pneg %p131
      %p191 = pneg %p128
      %p192 = scmp.lt.s32.totalorder %s16, 1
      %s193 = scalar_select %p192, %s16, 1
      %s194 = smul.addr %s193, 2
      %s195 = scalar_lea.vmem %s4, %s194
      %s196 = smul.u32 20, %s16
      %p197 = scmp.lt.s32.totalorder %s196, 39
      %s198 = scalar_select %p197, %s196, 39
      %s199 = smul.addr %s198, 8
      %s200 = scalar_lea.vmem %s0, %s199
      %s201 = smul.u32 20, %s16
      %s202 = smul.u32 20, %s16
      %p203 = scmp.lt.s32.totalorder %s202, 39
      %s204 = scalar_select %p203, %s202, 39
      %s205 = smul.addr %s204, 4
      %s206 = scalar_lea.vmem %s3, %s205
      %s207 = smul.u32 20, %s16
      %p208 = scmp.lt.s32.totalorder %s16, 1
      %s209 = scalar_select %p208, %s16, 1
      %s210 = smul.addr %s209, 2
      %s211 = scalar_lea.vmem %s4, %s210
      %v212 = vld [vmem:[%s200] sm:$0xff]
      %v213 = vld [vmem:[%s200 + $0x8] sm:$0xff]
      %v214 = vld [vmem:[%s200 + $0x10] sm:$0xff]
      %v215 = vld [vmem:[%s200 + $0x18] sm:$0xff]
      %v216 = vld [vmem:[%s200 + $0x20] sm:$0xff]
      %v217 = vld [vmem:[%s200 + $0x28] sm:$0xff]
      %v218 = vld [vmem:[%s200 + $0x30] sm:$0xff]
      %v219 = vld [vmem:[%s200 + $0x38] sm:$0xff]
      %v220 = vld [vmem:[%s200 + $0x40] sm:$0xff]
      %v221 = vld [vmem:[%s200 + $0x48] sm:$0xff]
      %v222 = vld [vmem:[%s200 + $0x50] sm:$0xff]
      %v223 = vld [vmem:[%s200 + $0x58] sm:$0xff]
      %v224 = vld [vmem:[%s200 + $0x60] sm:$0xff]
      %v225 = vld [vmem:[%s200 + $0x68] sm:$0xff]
      %v226 = vld [vmem:[%s200 + $0x70] sm:$0xff]
      %v227 = vld [vmem:[%s200 + $0x78] sm:$0xff]
      %v228 = vld [vmem:[%s200 + $0x80] sm:$0xff]
      %v229 = vld [vmem:[%s200 + $0x88] sm:$0xff]
      %v230 = vld [vmem:[%s200 + $0x90] sm:$0xff]
      %v231 = vld [vmem:[%s200 + $0x98] sm:$0xff]
      %v232 = vld [vmem:[%s2] sm:$0x1]
      %v233 = vld [vmem:[%s1] sm:$0x1]
      %235 = vset.pattern.permute.xlu0 0
      %236 = vperm.xlu0 %235, %v212
      %v237 = vpop.permute.xlu0 %236
      %240 = vset.pattern.permute.xlu0 0
      %241 = vperm.xlu0 %240, %v213
      %v242 = vpop.permute.xlu0 %241
      %245 = vset.pattern.permute.xlu0 0
      %246 = vperm.xlu0 %245, %v214
      %v247 = vpop.permute.xlu0 %246
      %250 = vset.pattern.permute.xlu0 0
      %251 = vperm.xlu0 %250, %v215
      %v252 = vpop.permute.xlu0 %251
      %255 = vset.pattern.permute.xlu0 0
      %256 = vperm.xlu0 %255, %v216
      %v257 = vpop.permute.xlu0 %256
      %260 = vset.pattern.permute.xlu0 0
      %261 = vperm.xlu0 %260, %v217
      %v262 = vpop.permute.xlu0 %261
      %265 = vset.pattern.permute.xlu0 0
      %266 = vperm.xlu0 %265, %v218
      %v267 = vpop.permute.xlu0 %266
      %270 = vset.pattern.permute.xlu0 0
      %271 = vperm.xlu0 %270, %v219
      %v272 = vpop.permute.xlu0 %271
      %275 = vset.pattern.permute.xlu0 0
      %276 = vperm.xlu0 %275, %v220
      %v277 = vpop.permute.xlu0 %276
      %280 = vset.pattern.permute.xlu0 0
      %281 = vperm.xlu0 %280, %v221
      %v282 = vpop.permute.xlu0 %281
      %285 = vset.pattern.permute.xlu0 0
      %286 = vperm.xlu0 %285, %v222
      %v287 = vpop.permute.xlu0 %286
      %290 = vset.pattern.permute.xlu0 0
      %291 = vperm.xlu0 %290, %v223
      %v292 = vpop.permute.xlu0 %291
      %295 = vset.pattern.permute.xlu0 0
      %296 = vperm.xlu0 %295, %v224
      %v297 = vpop.permute.xlu0 %296
      %300 = vset.pattern.permute.xlu0 0
      %301 = vperm.xlu0 %300, %v225
      %v302 = vpop.permute.xlu0 %301
      %305 = vset.pattern.permute.xlu0 0
      %306 = vperm.xlu0 %305, %v226
      %v307 = vpop.permute.xlu0 %306
      %310 = vset.pattern.permute.xlu0 0
      %311 = vperm.xlu0 %310, %v227
      %v312 = vpop.permute.xlu0 %311
      %315 = vset.pattern.permute.xlu0 0
      %316 = vperm.xlu0 %315, %v228
      %v317 = vpop.permute.xlu0 %316
      %320 = vset.pattern.permute.xlu0 0
      %321 = vperm.xlu0 %320, %v229
      %v322 = vpop.permute.xlu0 %321
      %325 = vset.pattern.permute.xlu0 0
      %326 = vperm.xlu0 %325, %v230
      %v327 = vpop.permute.xlu0 %326
      %330 = vset.pattern.permute.xlu0 0
      %331 = vperm.xlu0 %330, %v231
      %v332 = vpop.permute.xlu0 %331
      %v334 = vlaneseq
      %v335 = vshrl.u32 %v334, 7
      %v336 = vsub.s32 0, %v335
      %v337 = vrot.slane %v233, %v336
      %v338 = vmul.f32 %v237, %v337
      %v339 = vmul.f32 %v242, %v337
      %v340 = vmul.f32 %v247, %v337
      %v341 = vmul.f32 %v252, %v337
      %v342 = vmul.f32 %v257, %v337
      %v343 = vmul.f32 %v262, %v337
      %v344 = vmul.f32 %v267, %v337
      %v345 = vmul.f32 %v272, %v337
      %v346 = vmul.f32 %v277, %v337
      %v347 = vmul.f32 %v282, %v337
      %v348 = vmul.f32 %v287, %v337
      %v349 = vmul.f32 %v292, %v337
      %v350 = vmul.f32 %v297, %v337
      %v351 = vmul.f32 %v302, %v337
      %v352 = vmul.f32 %v307, %v337
      %v353 = vmul.f32 %v312, %v337
      %v354 = vmul.f32 %v317, %v337
      %v355 = vmul.f32 %v322, %v337
      %v356 = vmul.f32 %v327, %v337
      %v357 = vmul.f32 %v332, %v337
      %v359 = vlaneseq
      %v360 = vshrl.u32 %v359, 7
      %v361 = vsub.s32 0, %v360
      %v362 = vrot.slane %v232, %v361
      %v364 = vadd.f32 %v362, %v338
      %v365 = vadd.f32 %v362, %v339
      %v366 = vadd.f32 %v362, %v340
      %v367 = vadd.f32 %v362, %v341
      %v368 = vadd.f32 %v362, %v342
      %v369 = vadd.f32 %v362, %v343
      %v370 = vadd.f32 %v362, %v344
      %v371 = vadd.f32 %v362, %v345
      %v372 = vadd.f32 %v362, %v346
      %v373 = vadd.f32 %v362, %v347
      %v374 = vadd.f32 %v362, %v348
      %v375 = vadd.f32 %v362, %v349
      %v376 = vadd.f32 %v362, %v350
      %v377 = vadd.f32 %v362, %v351
      %v378 = vadd.f32 %v362, %v352
      %v379 = vadd.f32 %v362, %v353
      %v380 = vadd.f32 %v362, %v354
      %v381 = vadd.f32 %v362, %v355
      %v382 = vadd.f32 %v362, %v356
      %v383 = vadd.f32 %v362, %v357
      %v384 = vld [vmem:[%s1 + $0x1] sm:$0x1]
      %385 = vset.pattern.permute.xlu0 1
      %386 = vperm.xlu0 %385, %v212
      %v387 = vpop.permute.xlu0 %386
      %389 = vset.pattern.permute.xlu0 1
      %390 = vperm.xlu0 %389, %v213
      %v391 = vpop.permute.xlu0 %390
      %393 = vset.pattern.permute.xlu0 1
      %394 = vperm.xlu0 %393, %v214
      %v395 = vpop.permute.xlu0 %394
      %397 = vset.pattern.permute.xlu0 1
      %398 = vperm.xlu0 %397, %v215
      %v399 = vpop.permute.xlu0 %398
      %401 = vset.pattern.permute.xlu0 1
      %402 = vperm.xlu0 %401, %v216
      %v403 = vpop.permute.xlu0 %402
      %405 = vset.pattern.permute.xlu0 1
      %406 = vperm.xlu0 %405, %v217
      %v407 = vpop.permute.xlu0 %406
      %409 = vset.pattern.permute.xlu0 1
      %410 = vperm.xlu0 %409, %v218
      %v411 = vpop.permute.xlu0 %410
      %413 = vset.pattern.permute.xlu0 1
      %414 = vperm.xlu0 %413, %v219
      %v415 = vpop.permute.xlu0 %414
      %417 = vset.pattern.permute.xlu0 1
      %418 = vperm.xlu0 %417, %v220
      %v419 = vpop.permute.xlu0 %418
      %421 = vset.pattern.permute.xlu0 1
      %422 = vperm.xlu0 %421, %v221
      %v423 = vpop.permute.xlu0 %422
      %425 = vset.pattern.permute.xlu0 1
      %426 = vperm.xlu0 %425, %v222
      %v427 = vpop.permute.xlu0 %426
      %429 = vset.pattern.permute.xlu0 1
      %430 = vperm.xlu0 %429, %v223
      %v431 = vpop.permute.xlu0 %430
      %433 = vset.pattern.permute.xlu0 1
      %434 = vperm.xlu0 %433, %v224
      %v435 = vpop.permute.xlu0 %434
      %437 = vset.pattern.permute.xlu0 1
      %438 = vperm.xlu0 %437, %v225
      %v439 = vpop.permute.xlu0 %438
      %441 = vset.pattern.permute.xlu0 1
      %442 = vperm.xlu0 %441, %v226
      %v443 = vpop.permute.xlu0 %442
      %445 = vset.pattern.permute.xlu0 1
      %446 = vperm.xlu0 %445, %v227
      %v447 = vpop.permute.xlu0 %446
      %449 = vset.pattern.permute.xlu0 1
      %450 = vperm.xlu0 %449, %v228
      %v451 = vpop.permute.xlu0 %450
      %453 = vset.pattern.permute.xlu0 1
      %454 = vperm.xlu0 %453, %v229
      %v455 = vpop.permute.xlu0 %454
      %457 = vset.pattern.permute.xlu0 1
      %458 = vperm.xlu0 %457, %v230
      %v459 = vpop.permute.xlu0 %458
      %461 = vset.pattern.permute.xlu0 1
      %462 = vperm.xlu0 %461, %v231
      %v463 = vpop.permute.xlu0 %462
      %v465 = vlaneseq
      %v466 = vshrl.u32 %v465, 7
      %v467 = vsub.s32 0, %v466
      %v468 = vrot.slane %v384, %v467
      %v469 = vmul.f32 %v387, %v468
      %v470 = vmul.f32 %v391, %v468
      %v471 = vmul.f32 %v395, %v468
      %v472 = vmul.f32 %v399, %v468
      %v473 = vmul.f32 %v403, %v468
      %v474 = vmul.f32 %v407, %v468
      %v475 = vmul.f32 %v411, %v468
      %v476 = vmul.f32 %v415, %v468
      %v477 = vmul.f32 %v419, %v468
      %v478 = vmul.f32 %v423, %v468
      %v479 = vmul.f32 %v427, %v468
      %v480 = vmul.f32 %v431, %v468
      %v481 = vmul.f32 %v435, %v468
      %v482 = vmul.f32 %v439, %v468
      %v483 = vmul.f32 %v443, %v468
      %v484 = vmul.f32 %v447, %v468
      %v485 = vmul.f32 %v451, %v468
      %v486 = vmul.f32 %v455, %v468
      %v487 = vmul.f32 %v459, %v468
      %v488 = vmul.f32 %v463, %v468
      %v489 = vadd.f32 %v364, %v469
      %v490 = vadd.f32 %v365, %v470
      %v491 = vadd.f32 %v366, %v471
      %v492 = vadd.f32 %v367, %v472
      %v493 = vadd.f32 %v368, %v473
      %v494 = vadd.f32 %v369, %v474
      %v495 = vadd.f32 %v370, %v475
      %v496 = vadd.f32 %v371, %v476
      %v497 = vadd.f32 %v372, %v477
      %v498 = vadd.f32 %v373, %v478
      %v499 = vadd.f32 %v374, %v479
      %v500 = vadd.f32 %v375, %v480
      %v501 = vadd.f32 %v376, %v481
      %v502 = vadd.f32 %v377, %v482
      %v503 = vadd.f32 %v378, %v483
      %v504 = vadd.f32 %v379, %v484
      %v505 = vadd.f32 %v380, %v485
      %v506 = vadd.f32 %v381, %v486
      %v507 = vadd.f32 %v382, %v487
      %v508 = vadd.f32 %v383, %v488
      %v509 = vld [vmem:[%s1 + $0x2] sm:$0x1]
      %510 = vset.pattern.permute.xlu0 2
      %511 = vperm.xlu0 %510, %v212
      %v512 = vpop.permute.xlu0 %511
      %514 = vset.pattern.permute.xlu0 2
      %515 = vperm.xlu0 %514, %v213
      %v516 = vpop.permute.xlu0 %515
      %518 = vset.pattern.permute.xlu0 2
      %519 = vperm.xlu0 %518, %v214
      %v520 = vpop.permute.xlu0 %519
      %522 = vset.pattern.permute.xlu0 2
      %523 = vperm.xlu0 %522, %v215
      %v524 = vpop.permute.xlu0 %523
      %526 = vset.pattern.permute.xlu0 2
      %527 = vperm.xlu0 %526, %v216
      %v528 = vpop.permute.xlu0 %527
      %530 = vset.pattern.permute.xlu0 2
      %531 = vperm.xlu0 %530, %v217
      %v532 = vpop.permute.xlu0 %531
      %534 = vset.pattern.permute.xlu0 2
      %535 = vperm.xlu0 %534, %v218
      %v536 = vpop.permute.xlu0 %535
      %538 = vset.pattern.permute.xlu0 2
      %539 = vperm.xlu0 %538, %v219
      %v540 = vpop.permute.xlu0 %539
      %542 = vset.pattern.permute.xlu0 2
      %543 = vperm.xlu0 %542, %v220
      %v544 = vpop.permute.xlu0 %543
      %546 = vset.pattern.permute.xlu0 2
      %547 = vperm.xlu0 %546, %v221
      %v548 = vpop.permute.xlu0 %547
      %550 = vset.pattern.permute.xlu0 2
      %551 = vperm.xlu0 %550, %v222
      %v552 = vpop.permute.xlu0 %551
      %554 = vset.pattern.permute.xlu0 2
      %555 = vperm.xlu0 %554, %v223
      %v556 = vpop.permute.xlu0 %555
      %558 = vset.pattern.permute.xlu0 2
      %559 = vperm.xlu0 %558, %v224
      %v560 = vpop.permute.xlu0 %559
      %562 = vset.pattern.permute.xlu0 2
      %563 = vperm.xlu0 %562, %v225
      %v564 = vpop.permute.xlu0 %563
      %566 = vset.pattern.permute.xlu0 2
      %567 = vperm.xlu0 %566, %v226
      %v568 = vpop.permute.xlu0 %567
      %570 = vset.pattern.permute.xlu0 2
      %571 = vperm.xlu0 %570, %v227
      %v572 = vpop.permute.xlu0 %571
      %574 = vset.pattern.permute.xlu0 2
      %575 = vperm.xlu0 %574, %v228
      %v576 = vpop.permute.xlu0 %575
      %578 = vset.pattern.permute.xlu0 2
      %579 = vperm.xlu0 %578, %v229
      %v580 = vpop.permute.xlu0 %579
      %582 = vset.pattern.permute.xlu0 2
      %583 = vperm.xlu0 %582, %v230
      %v584 = vpop.permute.xlu0 %583
      %586 = vset.pattern.permute.xlu0 2
      %587 = vperm.xlu0 %586, %v231
      %v588 = vpop.permute.xlu0 %587
      %v590 = vlaneseq
      %v591 = vshrl.u32 %v590, 7
      %v592 = vsub.s32 0, %v591
      %v593 = vrot.slane %v509, %v592
      %v594 = vmul.f32 %v512, %v593
      %v595 = vmul.f32 %v516, %v593
      %v596 = vmul.f32 %v520, %v593
      %v597 = vmul.f32 %v524, %v593
      %v598 = vmul.f32 %v528, %v593
      %v599 = vmul.f32 %v532, %v593
      %v600 = vmul.f32 %v536, %v593
      %v601 = vmul.f32 %v540, %v593
      %v602 = vmul.f32 %v544, %v593
      %v603 = vmul.f32 %v548, %v593
      %v604 = vmul.f32 %v552, %v593
      %v605 = vmul.f32 %v556, %v593
      %v606 = vmul.f32 %v560, %v593
      %v607 = vmul.f32 %v564, %v593
      %v608 = vmul.f32 %v568, %v593
      %v609 = vmul.f32 %v572, %v593
      %v610 = vmul.f32 %v576, %v593
      %v611 = vmul.f32 %v580, %v593
      %v612 = vmul.f32 %v584, %v593
      %v613 = vmul.f32 %v588, %v593
      %v614 = vadd.f32 %v489, %v594
      %v615 = vadd.f32 %v490, %v595
      %v616 = vadd.f32 %v491, %v596
      %v617 = vadd.f32 %v492, %v597
      %v618 = vadd.f32 %v493, %v598
      %v619 = vadd.f32 %v494, %v599
      %v620 = vadd.f32 %v495, %v600
      %v621 = vadd.f32 %v496, %v601
      %v622 = vadd.f32 %v497, %v602
      %v623 = vadd.f32 %v498, %v603
      %v624 = vadd.f32 %v499, %v604
      %v625 = vadd.f32 %v500, %v605
      %v626 = vadd.f32 %v501, %v606
      %v627 = vadd.f32 %v502, %v607
      %v628 = vadd.f32 %v503, %v608
      %v629 = vadd.f32 %v504, %v609
      %v630 = vadd.f32 %v505, %v610
      %v631 = vadd.f32 %v506, %v611
      %v632 = vadd.f32 %v507, %v612
      %v633 = vadd.f32 %v508, %v613
      %v634 = vmax.f32 %v614, 0.0
      %v635 = vmax.f32 %v615, 0.0
      %v636 = vmax.f32 %v616, 0.0
      %v637 = vmax.f32 %v617, 0.0
      %v638 = vmax.f32 %v618, 0.0
      %v639 = vmax.f32 %v619, 0.0
      %v640 = vmax.f32 %v620, 0.0
      %v641 = vmax.f32 %v621, 0.0
      %v642 = vmax.f32 %v622, 0.0
      %v643 = vmax.f32 %v623, 0.0
      %v644 = vmax.f32 %v624, 0.0
      %v645 = vmax.f32 %v625, 0.0
      %v646 = vmax.f32 %v626, 0.0
      %v647 = vmax.f32 %v627, 0.0
      %v648 = vmax.f32 %v628, 0.0
      %v649 = vmax.f32 %v629, 0.0
      %v650 = vmax.f32 %v630, 0.0
      %v651 = vmax.f32 %v631, 0.0
      %v652 = vmax.f32 %v632, 0.0
      %v653 = vmax.f32 %v633, 0.0
      %s654 = smul.u32 %s16, 160
      %s655 = ssub.s32 300, %s654
      %v656 = vlaneseq
      %v657 = vshrl.u32 %v656, 7
      %v658 = vadd.s32 %v657, 8
      %v659 = vadd.s32 %v657, 16
      %v660 = vadd.s32 %v657, 24
      %v661 = vadd.s32 %v657, 32
      %v662 = vadd.s32 %v657, 40
      %v663 = vadd.s32 %v657, 48
      %v664 = vadd.s32 %v657, 56
      %v665 = vadd.s32 %v657, 64
      %v666 = vadd.s32 %v657, 72
      %v667 = vadd.s32 %v657, 80
      %v668 = vadd.s32 %v657, 88
      %v669 = vadd.s32 %v657, 96
      %v670 = vadd.s32 %v657, 104
      %v671 = vadd.s32 %v657, 112
      %v672 = vadd.s32 %v657, 120
      %v673 = vadd.s32 %v657, 128
      %v674 = vadd.s32 %v657, 136
      %v675 = vadd.s32 %v657, 144
      %v676 = vadd.s32 %v657, 152
      %v677 = vstv %s655
      %vm678 = vcmp.lt.s32.totalorder %v657, %v677
      %vm679 = vcmp.lt.s32.totalorder %v658, %v677
      %vm680 = vcmp.lt.s32.totalorder %v659, %v677
      %vm681 = vcmp.lt.s32.totalorder %v660, %v677
      %vm682 = vcmp.lt.s32.totalorder %v661, %v677
      %vm683 = vcmp.lt.s32.totalorder %v662, %v677
      %vm684 = vcmp.lt.s32.totalorder %v663, %v677
      %vm685 = vcmp.lt.s32.totalorder %v664, %v677
      %vm686 = vcmp.lt.s32.totalorder %v665, %v677
      %vm687 = vcmp.lt.s32.totalorder %v666, %v677
      %vm688 = vcmp.lt.s32.totalorder %v667, %v677
      %vm689 = vcmp.lt.s32.totalorder %v668, %v677
      %vm690 = vcmp.lt.s32.totalorder %v669, %v677
      %vm691 = vcmp.lt.s32.totalorder %v670, %v677
      %vm692 = vcmp.lt.s32.totalorder %v671, %v677
      %vm693 = vcmp.lt.s32.totalorder %v672, %v677
      %vm694 = vcmp.lt.s32.totalorder %v673, %v677
      %vm695 = vcmp.lt.s32.totalorder %v674, %v677
      %vm696 = vcmp.lt.s32.totalorder %v675, %v677
      %vm697 = vcmp.lt.s32.totalorder %v676, %v677
      %v698 = vsel %vm678, 1, 0
      %v699 = vsel %vm679, 1, 0
      %v700 = vsel %vm680, 1, 0
      %v701 = vsel %vm681, 1, 0
      %v702 = vsel %vm682, 1, 0
      %v703 = vsel %vm683, 1, 0
      %v704 = vsel %vm684, 1, 0
      %v705 = vsel %vm685, 1, 0
      %v706 = vsel %vm686, 1, 0
      %v707 = vsel %vm687, 1, 0
      %v708 = vsel %vm688, 1, 0
      %v709 = vsel %vm689, 1, 0
      %v710 = vsel %vm690, 1, 0
      %v711 = vsel %vm691, 1, 0
      %v712 = vsel %vm692, 1, 0
      %v713 = vsel %vm693, 1, 0
      %v714 = vsel %vm694, 1, 0
      %v715 = vsel %vm695, 1, 0
      %v716 = vsel %vm696, 1, 0
      %v717 = vsel %vm697, 1, 0
      %vm718 = vcmp.eq.s32.totalorder %v698, 1
      %vm719 = vcmp.eq.s32.totalorder %v699, 1
      %vm720 = vcmp.eq.s32.totalorder %v700, 1
      %vm721 = vcmp.eq.s32.totalorder %v701, 1
      %vm722 = vcmp.eq.s32.totalorder %v702, 1
      %vm723 = vcmp.eq.s32.totalorder %v703, 1
      %vm724 = vcmp.eq.s32.totalorder %v704, 1
      %vm725 = vcmp.eq.s32.totalorder %v705, 1
      %vm726 = vcmp.eq.s32.totalorder %v706, 1
      %vm727 = vcmp.eq.s32.totalorder %v707, 1
      %vm728 = vcmp.eq.s32.totalorder %v708, 1
      %vm729 = vcmp.eq.s32.totalorder %v709, 1
      %vm730 = vcmp.eq.s32.totalorder %v710, 1
      %vm731 = vcmp.eq.s32.totalorder %v711, 1
      %vm732 = vcmp.eq.s32.totalorder %v712, 1
      %vm733 = vcmp.eq.s32.totalorder %v713, 1
      %vm734 = vcmp.eq.s32.totalorder %v714, 1
      %vm735 = vcmp.eq.s32.totalorder %v715, 1
      %vm736 = vcmp.eq.s32.totalorder %v716, 1
      %vm737 = vcmp.eq.s32.totalorder %v717, 1
      %v738 = vsel %vm718, %v634, 0.0
      %v739 = vsel %vm719, %v635, 0.0
      %v740 = vsel %vm720, %v636, 0.0
      %v741 = vsel %vm721, %v637, 0.0
      %v742 = vsel %vm722, %v638, 0.0
      %v743 = vsel %vm723, %v639, 0.0
      %v744 = vsel %vm724, %v640, 0.0
      %v745 = vsel %vm725, %v641, 0.0
      %v746 = vsel %vm726, %v642, 0.0
      %v747 = vsel %vm727, %v643, 0.0
      %v748 = vsel %vm728, %v644, 0.0
      %v749 = vsel %vm729, %v645, 0.0
      %v750 = vsel %vm730, %v646, 0.0
      %v751 = vsel %vm731, %v647, 0.0
      %v752 = vsel %vm732, %v648, 0.0
      %v753 = vsel %vm733, %v649, 0.0
      %v754 = vsel %vm734, %v650, 0.0
      %v755 = vsel %vm735, %v651, 0.0
      %v756 = vsel %vm736, %v652, 0.0
      %v757 = vsel %vm737, %v653, 0.0
      %p758 = scmp.lt.s32.totalorder %s655, 160
      %s759 = scalar_select %p758, %s655, 160
      %p760 = scmp.gt.s32.totalorder %s759, 1
      %s761 = scalar_select %p760, %s759, 1
      %s762 = scvt.s32.f32 %s761
      %v763 = vadd.f32 %v738, %v739
      %v764 = vadd.f32 %v763, %v740
      %v765 = vadd.f32 %v764, %v741
      %v766 = vadd.f32 %v765, %v742
      %v767 = vadd.f32 %v766, %v743
      %v768 = vadd.f32 %v767, %v744
      %v769 = vadd.f32 %v768, %v745
      %v770 = vadd.f32 %v769, %v746
      %v771 = vadd.f32 %v770, %v747
      %v772 = vadd.f32 %v771, %v748
      %v773 = vadd.f32 %v772, %v749
      %v774 = vadd.f32 %v773, %v750
      %v775 = vadd.f32 %v774, %v751
      %v776 = vadd.f32 %v775, %v752
      %v777 = vadd.f32 %v776, %v753
      %v778 = vadd.f32 %v777, %v754
      %v779 = vadd.f32 %v778, %v755
      %v780 = vadd.f32 %v779, %v756
      %v781 = vadd.f32 %v780, %v757
      %v782 = vrot.slane %v781, 4
      %v783 = vadd.f32 %v781, %v782
      %v784 = vrot.slane %v783, 2
      %v785 = vadd.f32 %v783, %v784
      %v786 = vrot.slane %v785, 1
      %v787 = vadd.f32 %v785, %v786
      %v788 = vstv %s762
      %v789 = vrcp.pop %v788
      %s790 = vtos %v789
      %v791 = vstv %s790
      %v792 = vmul.f32 %v787, %v791
      %v793 = vsub.f32 %v738, %v792
      %v794 = vsub.f32 %v739, %v792
      %v795 = vsub.f32 %v740, %v792
      %v796 = vsub.f32 %v741, %v792
      %v797 = vsub.f32 %v742, %v792
      %v798 = vsub.f32 %v743, %v792
      %v799 = vsub.f32 %v744, %v792
      %v800 = vsub.f32 %v745, %v792
      %v801 = vsub.f32 %v746, %v792
      %v802 = vsub.f32 %v747, %v792
      %v803 = vsub.f32 %v748, %v792
      %v804 = vsub.f32 %v749, %v792
      %v805 = vsub.f32 %v750, %v792
      %v806 = vsub.f32 %v751, %v792
      %v807 = vsub.f32 %v752, %v792
      %v808 = vsub.f32 %v753, %v792
      %v809 = vsub.f32 %v754, %v792
      %v810 = vsub.f32 %v755, %v792
      %v811 = vsub.f32 %v756, %v792
      %v812 = vsub.f32 %v757, %v792
      %v813 = vsel %vm718, %v793, 0.0
      %v814 = vsel %vm719, %v794, 0.0
      %v815 = vsel %vm720, %v795, 0.0
      %v816 = vsel %vm721, %v796, 0.0
      %v817 = vsel %vm722, %v797, 0.0
      %v818 = vsel %vm723, %v798, 0.0
      %v819 = vsel %vm724, %v799, 0.0
      %v820 = vsel %vm725, %v800, 0.0
      %v821 = vsel %vm726, %v801, 0.0
      %v822 = vsel %vm727, %v802, 0.0
      %v823 = vsel %vm728, %v803, 0.0
      %v824 = vsel %vm729, %v804, 0.0
      %v825 = vsel %vm730, %v805, 0.0
      %v826 = vsel %vm731, %v806, 0.0
      %v827 = vsel %vm732, %v807, 0.0
      %v828 = vsel %vm733, %v808, 0.0
      %v829 = vsel %vm734, %v809, 0.0
      %v830 = vsel %vm735, %v810, 0.0
      %v831 = vsel %vm736, %v811, 0.0
      %v832 = vsel %vm737, %v812, 0.0
      %v833 = vmul.f32 %v813, %v813
      %v834 = vmul.f32 %v814, %v814
      %v835 = vmul.f32 %v815, %v815
      %v836 = vmul.f32 %v816, %v816
      %v837 = vmul.f32 %v817, %v817
      %v838 = vmul.f32 %v818, %v818
      %v839 = vmul.f32 %v819, %v819
      %v840 = vmul.f32 %v820, %v820
      %v841 = vmul.f32 %v821, %v821
      %v842 = vmul.f32 %v822, %v822
      %v843 = vmul.f32 %v823, %v823
      %v844 = vmul.f32 %v824, %v824
      %v845 = vmul.f32 %v825, %v825
      %v846 = vmul.f32 %v826, %v826
      %v847 = vmul.f32 %v827, %v827
      %v848 = vmul.f32 %v828, %v828
      %v849 = vmul.f32 %v829, %v829
      %v850 = vmul.f32 %v830, %v830
      %v851 = vmul.f32 %v831, %v831
      %v852 = vmul.f32 %v832, %v832
      %v853 = vadd.f32 %v833, %v834
      %v854 = vadd.f32 %v853, %v835
      %v855 = vadd.f32 %v854, %v836
      %v856 = vadd.f32 %v855, %v837
      %v857 = vadd.f32 %v856, %v838
      %v858 = vadd.f32 %v857, %v839
      %v859 = vadd.f32 %v858, %v840
      %v860 = vadd.f32 %v859, %v841
      %v861 = vadd.f32 %v860, %v842
      %v862 = vadd.f32 %v861, %v843
      %v863 = vadd.f32 %v862, %v844
      %v864 = vadd.f32 %v863, %v845
      %v865 = vadd.f32 %v864, %v846
      %v866 = vadd.f32 %v865, %v847
      %v867 = vadd.f32 %v866, %v848
      %v868 = vadd.f32 %v867, %v849
      %v869 = vadd.f32 %v868, %v850
      %v870 = vadd.f32 %v869, %v851
      %v871 = vadd.f32 %v870, %v852
      %v872 = vrot.slane %v871, 4
      %v873 = vadd.f32 %v871, %v872
      %v874 = vrot.slane %v873, 2
      %v875 = vadd.f32 %v873, %v874
      %v876 = vrot.slane %v875, 1
      %v877 = vadd.f32 %v875, %v876
      %vm878 = vcmask 1040384
      %v879 = vsel %vm878, %v787, %v877
      %880 = vst [vmem:[%s211] sm:$0x3] %v879
      %v881 = vpack.c.bf16 %v739, %v738
      %v882 = vpack.c.bf16 %v741, %v740
      %v883 = vpack.c.bf16 %v743, %v742
      %v884 = vpack.c.bf16 %v745, %v744
      %v885 = vpack.c.bf16 %v747, %v746
      %v886 = vpack.c.bf16 %v749, %v748
      %v887 = vpack.c.bf16 %v751, %v750
      %v888 = vpack.c.bf16 %v753, %v752
      %v889 = vpack.c.bf16 %v755, %v754
      %v890 = vpack.c.bf16 %v757, %v756
      %v901 = vunpack.c.l.b16 %v881
      %v902 = vunpack.c.h.b16 %v881
      %v903 = vunpack.c.l.b16 %v882
      %v904 = vunpack.c.h.b16 %v882
      %v905 = vunpack.c.l.b16 %v883
      %v906 = vunpack.c.h.b16 %v883
      %v907 = vunpack.c.l.b16 %v884
      %v908 = vunpack.c.h.b16 %v884
      %v909 = vunpack.c.l.b16 %v885
      %v910 = vunpack.c.h.b16 %v885
      %v911 = vunpack.c.l.b16 %v886
      %v912 = vunpack.c.h.b16 %v886
      %v913 = vunpack.c.l.b16 %v887
      %v914 = vunpack.c.h.b16 %v887
      %v915 = vunpack.c.l.b16 %v888
      %v916 = vunpack.c.h.b16 %v888
      %v917 = vunpack.c.l.b16 %v889
      %v918 = vunpack.c.h.b16 %v889
      %v919 = vunpack.c.l.b16 %v890
      %v920 = vunpack.c.h.b16 %v890
      %v921 = vpack.c.b16 %v901, %v901
      %v922 = vpack.c.b16 %v902, %v902
      %v923 = vpack.c.b16 %v903, %v903
      %v924 = vpack.c.b16 %v904, %v904
      %v925 = vpack.c.b16 %v905, %v905
      %v926 = vpack.c.b16 %v906, %v906
      %v927 = vpack.c.b16 %v907, %v907
      %v928 = vpack.c.b16 %v908, %v908
      %v929 = vpack.c.b16 %v909, %v909
      %v930 = vpack.c.b16 %v910, %v910
      %v931 = vpack.c.b16 %v911, %v911
      %v932 = vpack.c.b16 %v912, %v912
      %v933 = vpack.c.b16 %v913, %v913
      %v934 = vpack.c.b16 %v914, %v914
      %v935 = vpack.c.b16 %v915, %v915
      %v936 = vpack.c.b16 %v916, %v916
      %v937 = vpack.c.b16 %v917, %v917
      %v938 = vpack.c.b16 %v918, %v918
      %v939 = vpack.c.b16 %v919, %v919
      %v940 = vpack.c.b16 %v920, %v920
      %961 = vst [vmem:[%s206] sm:$0xf] %v921
      %962 = vst [vmem:[%s206 + $0x4] sm:$0xf] %v922
      %963 = vst [vmem:[%s206 + $0x8] sm:$0xf] %v923
      %964 = vst [vmem:[%s206 + $0xc] sm:$0xf] %v924
      %965 = vst [vmem:[%s206 + $0x10] sm:$0xf] %v925
      %966 = vst [vmem:[%s206 + $0x14] sm:$0xf] %v926
      %967 = vst [vmem:[%s206 + $0x18] sm:$0xf] %v927
      %968 = vst [vmem:[%s206 + $0x1c] sm:$0xf] %v928
      %969 = vst [vmem:[%s206 + $0x20] sm:$0xf] %v929
      %970 = vst [vmem:[%s206 + $0x24] sm:$0xf] %v930
      %971 = vst [vmem:[%s206 + $0x28] sm:$0xf] %v931
      %972 = vst [vmem:[%s206 + $0x2c] sm:$0xf] %v932
      %973 = vst [vmem:[%s206 + $0x30] sm:$0xf] %v933
      %974 = vst [vmem:[%s206 + $0x34] sm:$0xf] %v934
      %975 = vst [vmem:[%s206 + $0x38] sm:$0xf] %v935
      %976 = vst [vmem:[%s206 + $0x3c] sm:$0xf] %v936
      %977 = vst [vmem:[%s206 + $0x40] sm:$0xf] %v937
      %978 = vst [vmem:[%s206 + $0x44] sm:$0xf] %v938
      %979 = vst [vmem:[%s206 + $0x48] sm:$0xf] %v939
      %980 = vst [vmem:[%s206 + $0x4c] sm:$0xf] %v940
      %s981 = smul.u32 20, %s16
      %p982 = scmp.lt.s32.totalorder %s981, 39
      %s983 = scalar_select %p982, %s981, 39
      %s984 = smul.addr %s983, 4
      %s985 = scalar_lea.vmem %s3, %s984
      %p986 = scmp.lt.s32.totalorder %s16, 1
      %s987 = scalar_select %p986, %s16, 1
      %s988 = smul.addr %s987, 2
      %s989 = scalar_lea.vmem %s4, %s988
      // Predicated region
      $region33: #{binary_classification_forward.3} parent=31 // pred_check
        %p990 = pneg %p102
      $region34: #{binary_classification_forward.3} parent=31 // pred_check_branch
        %992 = sbr.rel (%p990) target = $region36
      $region35: #{binary_classification_forward.3} parent=31 // pred_region
        %s993 = smul.u32 20, %s16
      $region36: #{binary_classification_forward.3} parent=31 // pred_fallthru
        _
      // Predicated region
      $region37: #{binary_classification_forward.3} parent=31 // pred_check
        %p994 = pneg %p128
      $region38: #{binary_classification_forward.3} parent=31 // pred_check_branch
        %996 = sbr.rel (%p994) target = $region40
      $region39: #{binary_classification_forward.3} parent=31 // pred_region
        _
      $region40: #{binary_classification_forward.3} parent=31 // pred_fallthru
        _
    $region32: #{binary_classification_forward.3} parent=5 // pred_fallthru
      _
    %p997 = scmp.le.s32.totalorder 2, %s11
    // Predicated region
    $region41: #{binary_classification_forward.3} parent=5 // pred_check
      %p998 = pneg %p997
    $region42: #{binary_classification_forward.3} parent=5 // pred_check_branch
      %1000 = sbr.rel (%p998) target = $region44
    $region43: #{binary_classification_forward.3} parent=5 // pred_region
      %s1001 = ssub.s32 %s11, 2
      // Predicated region
      $region45: #{binary_classification_forward.3} parent=43 // pred_check
        %p1002 = pneg %p108
      $region46: #{binary_classification_forward.3} parent=43 // pred_check_branch
        %1004 = sbr.rel (%p1002) target = $region48
      $region47: #{binary_classification_forward.3} parent=43 // pred_region
        %s1005 = smul.u32 20, %s17
        %p1006 = scmp.lt.s32.totalorder %s1005, 39
        %s1007 = scalar_select %p1006, %s1005, 39
        %s1008 = smul.addr %s1007, 4
        %s1009 = scalar_lea.vmem %s3, %s1008
      $region48: #{binary_classification_forward.3} parent=43 // pred_fallthru
        _
      // Predicated region
      $region49: #{binary_classification_forward.3} parent=43 // pred_check
        %p1010 = pneg %p134
      $region50: #{binary_classification_forward.3} parent=43 // pred_check_branch
        %1012 = sbr.rel (%p1010) target = $region52
      $region51: #{binary_classification_forward.3} parent=43 // pred_region
        %p1013 = scmp.lt.s32.totalorder %s17, 1
        %s1014 = scalar_select %p1013, %s17, 1
        %s1015 = smul.addr %s1014, 2
        %s1016 = scalar_lea.vmem %s4, %s1015
      $region52: #{binary_classification_forward.3} parent=43 // pred_fallthru
        _
    $region44: #{binary_classification_forward.3} parent=5 // pred_fallthru
      _
  $region6: #{binary_classification_forward.3} parent=0 // loop_footer
    %s15 = sadd.s32 1, %s11
  $region7: #{binary_classification_forward.3} parent=0 // loop_footer_branch
    %10 = sbr.rel target = $region3
  $region8: #{binary_classification_forward.3} parent=0 // loop_exit
    _

// kernel: binary_classification_forward.4
$region0: #{binary_classification_forward.4}
  #allocation0 [shape = 'u32[]', space=smem, size = 0x4, offset = 0x4, fixed_abs, tag = 'smem constant byte address 0x4 - core index']
  #allocation1 [shape = 'u32[144,128]{1,0:T(1,128)}', space=vmem, size = 0x12000, scoped, tag = 'internal scratch']
  %s0 = inlined_call_operand.vmem [shape: bf16[320,128], index: 0, kind: input, shape index: {}]
  %s1 = inlined_call_operand.vmem [shape: bf16[128,1024], index: 1, kind: input, shape index: {}]
  %s2 = inlined_call_operand.vmem [shape: f32[1,1024], index: 2, kind: input, shape index: {}]
  %s3 = inlined_call_operand.vmem [shape: s8[320,1024], index: 3, kind: output, shape index: {0}]
  %s4 = inlined_call_operand.vmem [shape: f32[2,1,1024], index: 4, kind: output, shape index: {1}]
  %s5 = inlined_call_operand.vmem [shape: f32[2,2,1024], index: 5, kind: output, shape index: {2}]
  %6 = xla_tuple %s3, %s4, %s5
  %s7 = sld [smem:[#allocation0]]
  $region61: #{binary_classification_forward.4} parent=0
    _
  %s9 = ssub.s32 1, %s7
  %s10 = scalar_select 0, %s9, %s7
  loop: start=0, step=1, limit=4
  $region2: #{binary_classification_forward.4} parent=0 // loop_pre_header
    _
  $region3: #{binary_classification_forward.4} parent=0 // loop_header
    %s12 = sphi 0, %s16
    %p13 = scmp.ge.s32.totalorder %s12, 4
    %s22 = sphi 0, %s24
    %s25 = sphi 0, %s22
    %s26 = sphi 0, %s25
    %s42 = sphi 0, %s26
    %s46 = sphi 0, %s46
    %s48 = sphi 0, %s46
    %s49 = sphi 0, %s48
    %s63 = sphi 0, %s49
    %s67 = sphi 0, %s67
    %s69 = sphi 0, %s67
    %s70 = sphi 0, %s69
    %s84 = sphi 0, %s70
    %s90 = sphi 0, %s92
    %s93 = sphi 0, %s90
    %s94 = sphi 0, %s93
    %s110 = sphi 0, %s94
    %s116 = sphi 0, %s118
    %s119 = sphi 0, %s116
    %s120 = sphi 0, %s119
    %s136 = sphi 0, %s120
    %s142 = sphi 0, %s144
    %s145 = sphi 0, %s142
    %s146 = sphi 0, %s145
    %s162 = sphi 0, %s146
  $region4: #{binary_classification_forward.4} parent=0 // loop_header_branch
    %15 = sbr.rel (%p13) target = $region8
  $region5: #{binary_classification_forward.4} parent=0 // loop_body
    %s17 = ssub.s32 %s12, 1
    %s18 = ssub.s32 %s12, 2
    %s19 = sadd.s32 %s12, 1
    %s20 = ssub.s32 %s12, %s19
    %p21 = scmp.eq.s32.totalorder %s20, 0
    %s23 = sadd.s32 %s22, 1
    %s24 = scalar_select %p21, %s22, %s23
    %p27 = pneg %p21
    %p28 = scmp.eq.s32.totalorder %s12, 1
    %p29 = por %p27, %p28
    %p30 = scmp.ne.s32.totalorder %s22, %s25
    %p31 = scmp.eq.s32.totalorder %s12, 0
    %p32 = por %p30, %p31
    %p33 = scmp.ne.s32.totalorder %s22, %s25
    %p34 = scmp.eq.s32.totalorder %s17, 1
    %p35 = por %p33, %p34
    %p36 = scmp.ne.s32.totalorder %s25, %s26
    %p37 = scmp.eq.s32.totalorder %s17, 0
    %p38 = por %p36, %p37
    %p39 = scmp.ne.s32.totalorder %s25, %s26
    %p40 = scmp.eq.s32.totalorder %s18, 1
    %p41 = por %p39, %p40
    %p43 = scmp.ne.s32.totalorder %s26, %s42
    %p44 = scmp.eq.s32.totalorder %s18, 0
    %p45 = por %p43, %p44
    %s47 = sadd.s32 %s46, 1
    %p50 = scmp.eq.s32.totalorder %s12, 1
    %p51 = scmp.ne.s32.totalorder %s46, %s48
    %p52 = scmp.eq.s32.totalorder %s12, 0
    %p53 = por %p51, %p52
    %p54 = scmp.ne.s32.totalorder %s46, %s48
    %p55 = scmp.eq.s32.totalorder %s17, 1
    %p56 = por %p54, %p55
    %p57 = scmp.ne.s32.totalorder %s48, %s49
    %p58 = scmp.eq.s32.totalorder %s17, 0
    %p59 = por %p57, %p58
    %p60 = scmp.ne.s32.totalorder %s48, %s49
    %p61 = scmp.eq.s32.totalorder %s18, 1
    %p62 = por %p60, %p61
    %p64 = scmp.ne.s32.totalorder %s49, %s63
    %p65 = scmp.eq.s32.totalorder %s18, 0
    %p66 = por %p64, %p65
    %s68 = sadd.s32 %s67, 1
    %p71 = scmp.eq.s32.totalorder %s12, 1
    %p72 = scmp.ne.s32.totalorder %s67, %s69
    %p73 = scmp.eq.s32.totalorder %s12, 0
    %p74 = por %p72, %p73
    %p75 = scmp.ne.s32.totalorder %s67, %s69
    %p76 = scmp.eq.s32.totalorder %s17, 1
    %p77 = por %p75, %p76
    %p78 = scmp.ne.s32.totalorder %s69, %s70
    %p79 = scmp.eq.s32.totalorder %s17, 0
    %p80 = por %p78, %p79
    %p81 = scmp.ne.s32.totalorder %s69, %s70
    %p82 = scmp.eq.s32.totalorder %s18, 1
    %p83 = por %p81, %p82
    %p85 = scmp.ne.s32.totalorder %s70, %s84
    %p86 = scmp.eq.s32.totalorder %s18, 0
    %p87 = por %p85, %p86
    %s88 = ssub.s32 %s12, %s19
    %p89 = scmp.eq.s32.totalorder %s88, 0
    %s91 = sadd.s32 %s90, 1
    %s92 = scalar_select %p89, %s90, %s91
    %p95 = pneg %p89
    %p96 = scmp.eq.s32.totalorder %s12, 1
    %p97 = por %p95, %p96
    %p98 = scmp.ne.s32.totalorder %s90, %s93
    %p99 = scmp.eq.s32.totalorder %s12, 0
    %p100 = por %p98, %p99
    %p101 = scmp.ne.s32.totalorder %s90, %s93
    %p102 = scmp.eq.s32.totalorder %s17, 1
    %p103 = por %p101, %p102
    %p104 = scmp.ne.s32.totalorder %s93, %s94
    %p105 = scmp.eq.s32.totalorder %s17, 0
    %p106 = por %p104, %p105
    %p107 = scmp.ne.s32.totalorder %s93, %s94
    %p108 = scmp.eq.s32.totalorder %s18, 1
    %p109 = por %p107, %p108
    %p111 = scmp.ne.s32.totalorder %s94, %s110
    %p112 = scmp.eq.s32.totalorder %s18, 0
    %p113 = por %p111, %p112
    %s114 = ssub.s32 %s12, %s19
    %p115 = scmp.eq.s32.totalorder %s114, 0
    %s117 = sadd.s32 %s116, 1
    %s118 = scalar_select %p115, %s116, %s117
    %p121 = pneg %p115
    %p122 = scmp.eq.s32.totalorder %s12, 1
    %p123 = por %p121, %p122
    %p124 = scmp.ne.s32.totalorder %s116, %s119
    %p125 = scmp.eq.s32.totalorder %s12, 0
    %p126 = por %p124, %p125
    %p127 = scmp.ne.s32.totalorder %s116, %s119
    %p128 = scmp.eq.s32.totalorder %s17, 1
    %p129 = por %p127, %p128
    %p130 = scmp.ne.s32.totalorder %s119, %s120
    %p131 = scmp.eq.s32.totalorder %s17, 0
    %p132 = por %p130, %p131
    %p133 = scmp.ne.s32.totalorder %s119, %s120
    %p134 = scmp.eq.s32.totalorder %s18, 1
    %p135 = por %p133, %p134
    %p137 = scmp.ne.s32.totalorder %s120, %s136
    %p138 = scmp.eq.s32.totalorder %s18, 0
    %p139 = por %p137, %p138
    %s140 = ssub.s32 %s12, %s19
    %p141 = scmp.eq.s32.totalorder %s140, 0
    %s143 = sadd.s32 %s142, 1
    %s144 = scalar_select %p141, %s142, %s143
    %p147 = pneg %p141
    %p148 = scmp.eq.s32.totalorder %s12, 1
    %p149 = por %p147, %p148
    %p150 = scmp.ne.s32.totalorder %s142, %s145
    %p151 = scmp.eq.s32.totalorder %s12, 0
    %p152 = por %p150, %p151
    %p153 = scmp.ne.s32.totalorder %s142, %s145
    %p154 = scmp.eq.s32.totalorder %s17, 1
    %p155 = por %p153, %p154
    %p156 = scmp.ne.s32.totalorder %s145, %s146
    %p157 = scmp.eq.s32.totalorder %s17, 0
    %p158 = por %p156, %p157
    %p159 = scmp.ne.s32.totalorder %s145, %s146
    %p160 = scmp.eq.s32.totalorder %s18, 1
    %p161 = por %p159, %p160
    %p163 = scmp.ne.s32.totalorder %s146, %s162
    %p164 = scmp.eq.s32.totalorder %s18, 0
    %p165 = por %p163, %p164
    %p166 = scmp.le.s32.totalorder 1, %s12
    %p167 = scmp.lt.s32.totalorder %s12, 3
    %p168 = pnand %p166, %p167
    %p169 = pneg %p168
    // Predicated region
    $region9: #{binary_classification_forward.4} parent=5 // pred_check
      _
    $region10: #{binary_classification_forward.4} parent=5 // pred_check_branch
      %171 = sbr.rel (%p168) target = $region12
    $region11: #{binary_classification_forward.4} parent=5 // pred_region
      %s172 = ssub.s32 %s12, 1
      // Predicated region
      $region13: #{binary_classification_forward.4} parent=11 // pred_check
        %p173 = pneg %p59
      $region14: #{binary_classification_forward.4} parent=11 // pred_check_branch
        %175 = sbr.rel (%p173) target = $region16
      $region15: #{binary_classification_forward.4} parent=11 // pred_region
        _
      $region16: #{binary_classification_forward.4} parent=11 // pred_fallthru
        _
      // Predicated region
      $region17: #{binary_classification_forward.4} parent=11 // pred_check
        %p176 = pneg %p80
      $region18: #{binary_classification_forward.4} parent=11 // pred_check_branch
        %178 = sbr.rel (%p176) target = $region20
      $region19: #{binary_classification_forward.4} parent=11 // pred_region
        _
      $region20: #{binary_classification_forward.4} parent=11 // pred_fallthru
        _
    $region12: #{binary_classification_forward.4} parent=5 // pred_fallthru
      _
    %p179 = scmp.lt.s32.totalorder %s12, 2
    // Predicated region
    $region21: #{binary_classification_forward.4} parent=5 // pred_check
      %p180 = pneg %p179
    $region22: #{binary_classification_forward.4} parent=5 // pred_check_branch
      %182 = sbr.rel (%p180) target = $region24
    $region23: #{binary_classification_forward.4} parent=5 // pred_region
      // Predicated region
      $region25: #{binary_classification_forward.4} parent=23 // pred_check
        %p183 = pneg %p32
      $region26: #{binary_classification_forward.4} parent=23 // pred_check_branch
        %185 = sbr.rel (%p183) target = $region28
      $region27: #{binary_classification_forward.4} parent=23 // pred_region
        %s186 = smul.u32 20, %s12
        %p187 = scmp.lt.s32.totalorder %s186, 39
        %s188 = scalar_select %p187, %s186, 39
        %s189 = smul.addr %s188, 4
        %s190 = scalar_lea.vmem %s0, %s189
        %s191 = smul.u32 20, %s12
      $region28: #{binary_classification_forward.4} parent=23 // pred_fallthru
        _
    $region24: #{binary_classification_forward.4} parent=5 // pred_fallthru
      _
    %p192 = scmp.le.s32.totalorder 1, %s12
    %p193 = scmp.lt.s32.totalorder %s12, 3
    %p194 = pnand %p192, %p193
    %p195 = pneg %p194
    // Predicated region
    $region29: #{binary_classification_forward.4} parent=5 // pred_check
      _
    $region30: #{binary_classification_forward.4} parent=5 // pred_check_branch
      %197 = sbr.rel (%p194) target = $region32
    $region31: #{binary_classification_forward.4} parent=5 // pred_region
      %s198 = ssub.s32 %s12, 1
      %s199 = smul.u32 20, %s17
      %p200 = scmp.lt.s32.totalorder %s199, 39
      %s201 = scalar_select %p200, %s199, 39
      %s202 = smul.addr %s201, 4
      %s203 = scalar_lea.vmem %s0, %s202
      %p204 = pneg %p38
      %p205 = pneg %p35
      %p206 = pneg %p59
      %p207 = pneg %p56
      %p208 = pneg %p80
      %p209 = pneg %p77
      %p210 = pneg %p106
      %p211 = pneg %p103
      %s212 = smul.u32 5, %s17
      %p213 = scmp.lt.s32.totalorder %s212, 9
      %s214 = scalar_select %p213, %s212, 9
      %s215 = smul.addr %s214, 8
      %s216 = smul.addr %s215, 8
      %s217 = scalar_lea.vmem %s3, %s216
      %p218 = pneg %p132
      %p219 = pneg %p129
      %p220 = scmp.lt.s32.totalorder %s17, 1
      %s221 = scalar_select %p220, %s17, 1
      %s222 = smul.addr %s221, 8
      %s223 = scalar_lea.vmem %s4, %s222
      %p224 = pneg %p158
      %p225 = pneg %p155
      %p226 = scmp.lt.s32.totalorder %s17, 1
      %s227 = scalar_select %p226, %s17, 1
      %s228 = smul.addr %s227, 8
      %s229 = smul.addr %s228, 2
      %s230 = scalar_lea.vmem %s5, %s229
      %s231 = smul.u32 20, %s17
      %p232 = scmp.lt.s32.totalorder %s231, 39
      %s233 = scalar_select %p232, %s231, 39
      %s234 = smul.addr %s233, 4
      %s235 = scalar_lea.vmem %s0, %s234
      %s236 = smul.u32 20, %s17
      %s237 = smul.u32 5, %s17
      %p238 = scmp.lt.s32.totalorder %s237, 9
      %s239 = scalar_select %p238, %s237, 9
      %s240 = smul.addr %s239, 8
      %s241 = smul.addr %s240, 8
      %s242 = scalar_lea.vmem %s3, %s241
      %s243 = smul.u32 5, %s17
      %p244 = scmp.lt.s32.totalorder %s17, 1
      %s245 = scalar_select %p244, %s17, 1
      %s246 = smul.addr %s245, 8
      %s247 = scalar_lea.vmem %s4, %s246
      %p248 = scmp.lt.s32.totalorder %s17, 1
      %s249 = scalar_select %p248, %s17, 1
      %s250 = smul.addr %s249, 8
      %s251 = smul.addr %s250, 2
      %s252 = scalar_lea.vmem %s5, %s251
      %v254 = vld [vmem:[%s235] sm:$0xf]
      %v255 = vld [vmem:[%s235 + $0x4] sm:$0xf]
      %v256 = vld [vmem:[%s235 + $0x8] sm:$0xf]
      %v257 = vld [vmem:[%s235 + $0xc] sm:$0xf]
      %v258 = vld [vmem:[%s235 + $0x10] sm:$0xf]
      %v259 = vld [vmem:[%s235 + $0x14] sm:$0xf]
      %v260 = vld [vmem:[%s235 + $0x18] sm:$0xf]
      %v261 = vld [vmem:[%s235 + $0x1c] sm:$0xf]
      %v262 = vld [vmem:[%s235 + $0x20] sm:$0xf]
      %v263 = vld [vmem:[%s235 + $0x24] sm:$0xf]
      %v264 = vld [vmem:[%s235 + $0x28] sm:$0xf]
      %v265 = vld [vmem:[%s235 + $0x2c] sm:$0xf]
      %v266 = vld [vmem:[%s235 + $0x30] sm:$0xf]
      %v267 = vld [vmem:[%s235 + $0x34] sm:$0xf]
      %v268 = vld [vmem:[%s235 + $0x38] sm:$0xf]
      %v269 = vld [vmem:[%s235 + $0x3c] sm:$0xf]
      %v270 = vld [vmem:[%s235 + $0x40] sm:$0xf]
      %v271 = vld [vmem:[%s235 + $0x44] sm:$0xf]
      %v272 = vld [vmem:[%s235 + $0x48] sm:$0xf]
      %v273 = vld [vmem:[%s235 + $0x4c] sm:$0xf]
      %v274 = vld [vmem:[%s1] sm:$0xff]
      %v275 = vld [vmem:[%s1 + $0x8] sm:$0xff]
      %v276 = vld [vmem:[%s1 + $0x10] sm:$0xff]
      %v277 = vld [vmem:[%s1 + $0x18] sm:$0xff]
      %v278 = vld [vmem:[%s1 + $0x20] sm:$0xff]
      %v279 = vld [vmem:[%s1 + $0x28] sm:$0xff]
      %v280 = vld [vmem:[%s1 + $0x30] sm:$0xff]
      %v281 = vld [vmem:[%s1 + $0x38] sm:$0xff]
      %v282 = vld [vmem:[%s1 + $0x40] sm:$0xff]
      %v283 = vld [vmem:[%s1 + $0x48] sm:$0xff]
      %v284 = vld [vmem:[%s1 + $0x50] sm:$0xff]
      %v285 = vld [vmem:[%s1 + $0x58] sm:$0xff]
      %v286 = vld [vmem:[%s1 + $0x60] sm:$0xff]
      %v287 = vld [vmem:[%s1 + $0x68] sm:$0xff]
      %v288 = vld [vmem:[%s1 + $0x70] sm:$0xff]
      %v289 = vld [vmem:[%s1 + $0x78] sm:$0xff]
      %v290 = vld [vmem:[%s1 + $0x80] sm:$0xff]
      %v291 = vld [vmem:[%s1 + $0x88] sm:$0xff]
      %v292 = vld [vmem:[%s1 + $0x90] sm:$0xff]
      %v293 = vld [vmem:[%s1 + $0x98] sm:$0xff]
      %v294 = vld [vmem:[%s1 + $0xa0] sm:$0xff]
      %v295 = vld [vmem:[%s1 + $0xa8] sm:$0xff]
      %v296 = vld [vmem:[%s1 + $0xb0] sm:$0xff]
      %v297 = vld [vmem:[%s1 + $0xb8] sm:$0xff]
      %v298 = vld [vmem:[%s1 + $0xc0] sm:$0xff]
      %v299 = vld [vmem:[%s1 + $0xc8] sm:$0xff]
      %v300 = vld [vmem:[%s1 + $0xd0] sm:$0xff]
      %v301 = vld [vmem:[%s1 + $0xd8] sm:$0xff]
      %v302 = vld [vmem:[%s1 + $0xe0] sm:$0xff]
      %v303 = vld [vmem:[%s1 + $0xe8] sm:$0xff]
      %v304 = vld [vmem:[%s1 + $0xf0] sm:$0xff]
      %v305 = vld [vmem:[%s1 + $0xf8] sm:$0xff]
      %v306 = vld [vmem:[%s1 + $0x100] sm:$0xff]
      %v307 = vld [vmem:[%s1 + $0x108] sm:$0xff]
      %v308 = vld [vmem:[%s1 + $0x110] sm:$0xff]
      %v309 = vld [vmem:[%s1 + $0x118] sm:$0xff]
      %v310 = vld [vmem:[%s1 + $0x120] sm:$0xff]
      %v311 = vld [vmem:[%s1 + $0x128] sm:$0xff]
      %v312 = vld [vmem:[%s1 + $0x130] sm:$0xff]
      %v313 = vld [vmem:[%s1 + $0x138] sm:$0xff]
      %v314 = vld [vmem:[%s1 + $0x140] sm:$0xff]
      %v315 = vld [vmem:[%s1 + $0x148] sm:$0xff]
      %v316 = vld [vmem:[%s1 + $0x150] sm:$0xff]
      %v317 = vld [vmem:[%s1 + $0x158] sm:$0xff]
      %v318 = vld [vmem:[%s1 + $0x160] sm:$0xff]
      %v319 = vld [vmem:[%s1 + $0x168] sm:$0xff]
      %v320 = vld [vmem:[%s1 + $0x170] sm:$0xff]
      %v321 = vld [vmem:[%s1 + $0x178] sm:$0xff]
      %v322 = vld [vmem:[%s1 + $0x180] sm:$0xff]
      %v323 = vld [vmem:[%s1 + $0x188] sm:$0xff]
      %v324 = vld [vmem:[%s1 + $0x190] sm:$0xff]
      %v325 = vld [vmem:[%s1 + $0x198] sm:$0xff]
      %v326 = vld [vmem:[%s1 + $0x1a0] sm:$0xff]
      %v327 = vld [vmem:[%s1 + $0x1a8] sm:$0xff]
      %v328 = vld [vmem:[%s1 + $0x1b0] sm:$0xff]
      %v329 = vld [vmem:[%s1 + $0x1b8] sm:$0xff]
      %v330 = vld [vmem:[%s1 + $0x1c0] sm:$0xff]
      %v331 = vld [vmem:[%s1 + $0x1c8] sm:$0xff]
      %v332 = vld [vmem:[%s1 + $0x1d0] sm:$0xff]
      %v333 = vld [vmem:[%s1 + $0x1d8] sm:$0xff]
      %v334 = vld [vmem:[%s1 + $0x1e0] sm:$0xff]
      %v335 = vld [vmem:[%s1 + $0x1e8] sm:$0xff]
      %v336 = vld [vmem:[%s1 + $0x1f0] sm:$0xff]
      %v337 = vld [vmem:[%s1 + $0x1f8] sm:$0xff]
      %v338 = vld [vmem:[%s2] sm:$0xff]
      %v340 = vlaneseq
      %v341 = vshrl.u32 %v340, 7
      %v342 = vsub.s32 0, %v341
      %v343 = vrot.slane %v338, %v342
      %v344 = vlaneseq
      %v345 = vshrl.u32 %v344, 7
      %v346 = vsub.s32 1, %v345
      %v347 = vrot.slane %v338, %v346
      %v348 = vlaneseq
      %v349 = vshrl.u32 %v348, 7
      %v350 = vsub.s32 2, %v349
      %v351 = vrot.slane %v338, %v350
      %v352 = vlaneseq
      %v353 = vshrl.u32 %v352, 7
      %v354 = vsub.s32 3, %v353
      %v355 = vrot.slane %v338, %v354
      %v356 = vlaneseq
      %v357 = vshrl.u32 %v356, 7
      %v358 = vsub.s32 4, %v357
      %v359 = vrot.slane %v338, %v358
      %v360 = vlaneseq
      %v361 = vshrl.u32 %v360, 7
      %v362 = vsub.s32 5, %v361
      %v363 = vrot.slane %v338, %v362
      %v364 = vlaneseq
      %v365 = vshrl.u32 %v364, 7
      %v366 = vsub.s32 6, %v365
      %v367 = vrot.slane %v338, %v366
      %v368 = vlaneseq
      %v369 = vshrl.u32 %v368, 7
      %v370 = vsub.s32 7, %v369
      %v371 = vrot.slane %v338, %v370
      %v400 = vunpack.c.l.b16 %v254
      %v401 = vunpack.c.l.b16 %v255
      %v402 = vunpack.c.l.b16 %v256
      %v403 = vunpack.c.l.b16 %v257
      %v404 = vunpack.c.l.b16 %v258
      %v405 = vunpack.c.l.b16 %v259
      %v406 = vunpack.c.l.b16 %v260
      %v407 = vunpack.c.l.b16 %v261
      %v408 = vunpack.c.l.b16 %v262
      %v409 = vunpack.c.l.b16 %v263
      %v410 = vunpack.c.l.b16 %v264
      %v411 = vunpack.c.l.b16 %v265
      %v412 = vunpack.c.l.b16 %v266
      %v413 = vunpack.c.l.b16 %v267
      %v414 = vunpack.c.l.b16 %v268
      %v415 = vunpack.c.l.b16 %v269
      %v416 = vunpack.c.l.b16 %v270
      %v417 = vunpack.c.l.b16 %v271
      %v418 = vunpack.c.l.b16 %v272
      %v419 = vunpack.c.l.b16 %v273
      %v420 = vpack.c.b16 %v401, %v400
      %v421 = vpack.c.b16 %v403, %v402
      %v422 = vpack.c.b16 %v405, %v404
      %v423 = vpack.c.b16 %v407, %v406
      %v424 = vpack.c.b16 %v409, %v408
      %v425 = vpack.c.b16 %v411, %v410
      %v426 = vpack.c.b16 %v413, %v412
      %v427 = vpack.c.b16 %v415, %v414
      %v428 = vpack.c.b16 %v417, %v416
      %v429 = vpack.c.b16 %v419, %v418
      %v504 = vunpack.c.l.b16 %v274
      %v505 = vunpack.c.h.b16 %v274
      %v506 = vunpack.c.l.b16 %v275
      %v507 = vunpack.c.h.b16 %v275
      %v508 = vunpack.c.l.b16 %v276
      %v509 = vunpack.c.h.b16 %v276
      %v510 = vunpack.c.l.b16 %v277
      %v511 = vunpack.c.h.b16 %v277
      %v512 = vunpack.c.l.b16 %v278
      %v513 = vunpack.c.h.b16 %v278
      %v514 = vunpack.c.l.b16 %v279
      %v515 = vunpack.c.h.b16 %v279
      %v516 = vunpack.c.l.b16 %v280
      %v517 = vunpack.c.h.b16 %v280
      %v518 = vunpack.c.l.b16 %v281
      %v519 = vunpack.c.h.b16 %v281
      %v520 = vunpack.c.l.b16 %v282
      %v521 = vunpack.c.h.b16 %v282
      %v522 = vunpack.c.l.b16 %v283
      %v523 = vunpack.c.h.b16 %v283
      %v524 = vunpack.c.l.b16 %v284
      %v525 = vunpack.c.h.b16 %v284
      %v526 = vunpack.c.l.b16 %v285
      %v527 = vunpack.c.h.b16 %v285
      %v528 = vunpack.c.l.b16 %v286
      %v529 = vunpack.c.h.b16 %v286
      %v530 = vunpack.c.l.b16 %v287
      %v531 = vunpack.c.h.b16 %v287
      %v532 = vunpack.c.l.b16 %v288
      %v533 = vunpack.c.h.b16 %v288
      %v534 = vunpack.c.l.b16 %v289
      %v535 = vunpack.c.h.b16 %v289
      %v536 = vunpack.c.l.b16 %v290
      %v537 = vunpack.c.h.b16 %v290
      %v538 = vunpack.c.l.b16 %v291
      %v539 = vunpack.c.h.b16 %v291
      %v540 = vunpack.c.l.b16 %v292
      %v541 = vunpack.c.h.b16 %v292
      %v542 = vunpack.c.l.b16 %v293
      %v543 = vunpack.c.h.b16 %v293
      %v544 = vunpack.c.l.b16 %v294
      %v545 = vunpack.c.h.b16 %v294
      %v546 = vunpack.c.l.b16 %v295
      %v547 = vunpack.c.h.b16 %v295
      %v548 = vunpack.c.l.b16 %v296
      %v549 = vunpack.c.h.b16 %v296
      %v550 = vunpack.c.l.b16 %v297
      %v551 = vunpack.c.h.b16 %v297
      %v552 = vunpack.c.l.b16 %v298
      %v553 = vunpack.c.h.b16 %v298
      %v554 = vunpack.c.l.b16 %v299
      %v555 = vunpack.c.h.b16 %v299
      %v556 = vunpack.c.l.b16 %v300
      %v557 = vunpack.c.h.b16 %v300
      %v558 = vunpack.c.l.b16 %v301
      %v559 = vunpack.c.h.b16 %v301
      %v560 = vunpack.c.l.b16 %v302
      %v561 = vunpack.c.h.b16 %v302
      %v562 = vunpack.c.l.b16 %v303
      %v563 = vunpack.c.h.b16 %v303
      %v564 = vunpack.c.l.b16 %v304
      %v565 = vunpack.c.h.b16 %v304
      %v566 = vunpack.c.l.b16 %v305
      %v567 = vunpack.c.h.b16 %v305
      %v568 = vunpack.c.l.b16 %v306
      %v569 = vunpack.c.h.b16 %v306
      %v570 = vunpack.c.l.b16 %v307
      %v571 = vunpack.c.h.b16 %v307
      %v572 = vunpack.c.l.b16 %v308
      %v573 = vunpack.c.h.b16 %v308
      %v574 = vunpack.c.l.b16 %v309
      %v575 = vunpack.c.h.b16 %v309
      %v576 = vunpack.c.l.b16 %v310
      %v577 = vunpack.c.h.b16 %v310
      %v578 = vunpack.c.l.b16 %v311
      %v579 = vunpack.c.h.b16 %v311
      %v580 = vunpack.c.l.b16 %v312
      %v581 = vunpack.c.h.b16 %v312
      %v582 = vunpack.c.l.b16 %v313
      %v583 = vunpack.c.h.b16 %v313
      %v584 = vunpack.c.l.b16 %v314
      %v585 = vunpack.c.h.b16 %v314
      %v586 = vunpack.c.l.b16 %v315
      %v587 = vunpack.c.h.b16 %v315
      %v588 = vunpack.c.l.b16 %v316
      %v589 = vunpack.c.h.b16 %v316
      %v590 = vunpack.c.l.b16 %v317
      %v591 = vunpack.c.h.b16 %v317
      %v592 = vunpack.c.l.b16 %v318
      %v593 = vunpack.c.h.b16 %v318
      %v594 = vunpack.c.l.b16 %v319
      %v595 = vunpack.c.h.b16 %v319
      %v596 = vunpack.c.l.b16 %v320
      %v597 = vunpack.c.h.b16 %v320
      %v598 = vunpack.c.l.b16 %v321
      %v599 = vunpack.c.h.b16 %v321
      %v600 = vunpack.c.l.b16 %v322
      %v601 = vunpack.c.h.b16 %v322
      %v602 = vunpack.c.l.b16 %v323
      %v603 = vunpack.c.h.b16 %v323
      %v604 = vunpack.c.l.b16 %v324
      %v605 = vunpack.c.h.b16 %v324
      %v606 = vunpack.c.l.b16 %v325
      %v607 = vunpack.c.h.b16 %v325
      %v608 = vunpack.c.l.b16 %v326
      %v609 = vunpack.c.h.b16 %v326
      %v610 = vunpack.c.l.b16 %v327
      %v611 = vunpack.c.h.b16 %v327
      %v612 = vunpack.c.l.b16 %v328
      %v613 = vunpack.c.h.b16 %v328
      %v614 = vunpack.c.l.b16 %v329
      %v615 = vunpack.c.h.b16 %v329
      %v616 = vunpack.c.l.b16 %v330
      %v617 = vunpack.c.h.b16 %v330
      %v618 = vunpack.c.l.b16 %v331
      %v619 = vunpack.c.h.b16 %v331
      %v620 = vunpack.c.l.b16 %v332
      %v621 = vunpack.c.h.b16 %v332
      %v622 = vunpack.c.l.b16 %v333
      %v623 = vunpack.c.h.b16 %v333
      %v624 = vunpack.c.l.b16 %v334
      %v625 = vunpack.c.h.b16 %v334
      %v626 = vunpack.c.l.b16 %v335
      %v627 = vunpack.c.h.b16 %v335
      %v628 = vunpack.c.l.b16 %v336
      %v629 = vunpack.c.h.b16 %v336
      %v630 = vunpack.c.l.b16 %v337
      %v631 = vunpack.c.h.b16 %v337
      %v632 = vpack.c.b16 %v512, %v504
      %v633 = vpack.c.b16 %v513, %v505
      %v634 = vpack.c.b16 %v514, %v506
      %v635 = vpack.c.b16 %v515, %v507
      %v636 = vpack.c.b16 %v516, %v508
      %v637 = vpack.c.b16 %v517, %v509
      %v638 = vpack.c.b16 %v518, %v510
      %v639 = vpack.c.b16 %v519, %v511
      %v640 = vpack.c.b16 %v528, %v520
      %v641 = vpack.c.b16 %v529, %v521
      %v642 = vpack.c.b16 %v530, %v522
      %v643 = vpack.c.b16 %v531, %v523
      %v644 = vpack.c.b16 %v532, %v524
      %v645 = vpack.c.b16 %v533, %v525
      %v646 = vpack.c.b16 %v534, %v526
      %v647 = vpack.c.b16 %v535, %v527
      %v648 = vpack.c.b16 %v544, %v536
      %v649 = vpack.c.b16 %v545, %v537
      %v650 = vpack.c.b16 %v546, %v538
      %v651 = vpack.c.b16 %v547, %v539
      %v652 = vpack.c.b16 %v548, %v540
      %v653 = vpack.c.b16 %v549, %v541
      %v654 = vpack.c.b16 %v550, %v542
      %v655 = vpack.c.b16 %v551, %v543
      %v656 = vpack.c.b16 %v560, %v552
      %v657 = vpack.c.b16 %v561, %v553
      %v658 = vpack.c.b16 %v562, %v554
      %v659 = vpack.c.b16 %v563, %v555
      %v660 = vpack.c.b16 %v564, %v556
      %v661 = vpack.c.b16 %v565, %v557
      %v662 = vpack.c.b16 %v566, %v558
      %v663 = vpack.c.b16 %v567, %v559
      %v664 = vpack.c.b16 %v576, %v568
      %v665 = vpack.c.b16 %v577, %v569
      %v666 = vpack.c.b16 %v578, %v570
      %v667 = vpack.c.b16 %v579, %v571
      %v668 = vpack.c.b16 %v580, %v572
      %v669 = vpack.c.b16 %v581, %v573
      %v670 = vpack.c.b16 %v582, %v574
      %v671 = vpack.c.b16 %v583, %v575
      %v672 = vpack.c.b16 %v592, %v584
      %v673 = vpack.c.b16 %v593, %v585
      %v674 = vpack.c.b16 %v594, %v586
      %v675 = vpack.c.b16 %v595, %v587
      %v676 = vpack.c.b16 %v596, %v588
      %v677 = vpack.c.b16 %v597, %v589
      %v678 = vpack.c.b16 %v598, %v590
      %v679 = vpack.c.b16 %v599, %v591
      %v680 = vpack.c.b16 %v608, %v600
      %v681 = vpack.c.b16 %v609, %v601
      %v682 = vpack.c.b16 %v610, %v602
      %v683 = vpack.c.b16 %v611, %v603
      %v684 = vpack.c.b16 %v612, %v604
      %v685 = vpack.c.b16 %v613, %v605
      %v686 = vpack.c.b16 %v614, %v606
      %v687 = vpack.c.b16 %v615, %v607
      %v688 = vpack.c.b16 %v624, %v616
      %v689 = vpack.c.b16 %v625, %v617
      %v690 = vpack.c.b16 %v626, %v618
      %v691 = vpack.c.b16 %v627, %v619
      %v692 = vpack.c.b16 %v628, %v620
      %v693 = vpack.c.b16 %v629, %v621
      %v694 = vpack.c.b16 %v630, %v622
      %v695 = vpack.c.b16 %v631, %v623
      %760 = vmatprep.subr.bf16.mxu0 %v633
      %761 = vmatpush1.bf16.msra.mxu0 %v632
      %762 = vmatprep.subr.bf16.mxu0 %v641
      %763 = vmatpush1.bf16.msra.mxu0 %v640
      %764 = vmatprep.subr.bf16.mxu0 %v649
      %765 = vmatpush1.bf16.msra.mxu0 %v648
      %766 = vmatprep.subr.bf16.mxu0 %v657
      %767 = vmatpush1.bf16.msra.mxu0 %v656
      %768 = vmatprep.subr.bf16.mxu0 %v665
      %769 = vmatpush1.bf16.msra.mxu0 %v664
      %770 = vmatprep.subr.bf16.mxu0 %v673
      %771 = vmatpush1.bf16.msra.mxu0 %v672
      %772 = vmatprep.subr.bf16.mxu0 %v681
      %773 = vmatpush1.bf16.msra.mxu0 %v680
      %774 = vmatprep.subr.bf16.mxu0 %v689
      %775 = vmatpush1.bf16.msra.mxu0 %v688
      %776 = vmatprep.subr.bf16.mxu0 0
      %777 = vmatpush1.bf16.msra.mxu0 0
      %778 = vmatprep.subr.bf16.mxu0 0
      %779 = vmatpush1.bf16.msra.mxu0 0
      %780 = vmatprep.subr.bf16.mxu0 0
      %781 = vmatpush1.bf16.msra.mxu0 0
      %782 = vmatprep.subr.bf16.mxu0 0
      %783 = vmatpush1.bf16.msra.mxu0 0
      %784 = vmatprep.subr.bf16.mxu0 0
      %785 = vmatpush1.bf16.msra.mxu0 0
      %786 = vmatprep.subr.bf16.mxu0 0
      %787 = vmatpush1.bf16.msra.mxu0 0
      %788 = vmatprep.subr.bf16.mxu0 0
      %789 = vmatpush1.bf16.msra.mxu0 0
      %790 = vmatprep.subr.bf16.mxu0 0
      %791 = vmatpush1.bf16.msra.mxu0 0
      %792 = vmatprep.mubr.bf16.mxu0 0
      %793 = vmatmul.mubr.bf16.gmra.mrb[0].mxu0 %v420
      %v794 = vpop.f32.mrb[0].mxu0
      %v795 = vadd.f32 %v343, %v794
      %v796 = vpop.f32.mrb[0].mxu0
      %v797 = vadd.f32 %v347, %v796
      %v798 = vpop.f32.mrb[0].mxu0
      %v799 = vadd.f32 %v343, %v798
      %v800 = vpop.f32.mrb[0].mxu0
      %v801 = vadd.f32 %v347, %v800
      %802 = vmatprep.mubr.bf16.mxu0 0
      %803 = vmatmul.mubr.bf16.gmra.mrb[0].mxu0 %v421
      %v804 = vpop.f32.mrb[0].mxu0
      %v805 = vadd.f32 %v343, %v804
      %v806 = vpop.f32.mrb[0].mxu0
      %v807 = vadd.f32 %v347, %v806
      %v808 = vpop.f32.mrb[0].mxu0
      %v809 = vadd.f32 %v343, %v808
      %v810 = vpop.f32.mrb[0].mxu0
      %v811 = vadd.f32 %v347, %v810
      %812 = vmatprep.mubr.bf16.mxu0 0
      %813 = vmatmul.mubr.bf16.gmra.mrb[0].mxu0 %v422
      %v814 = vpop.f32.mrb[0].mxu0
      %v815 = vadd.f32 %v343, %v814
      %v816 = vpop.f32.mrb[0].mxu0
      %v817 = vadd.f32 %v347, %v816
      %v818 = vpop.f32.mrb[0].mxu0
      %v819 = vadd.f32 %v343, %v818
      %v820 = vpop.f32.mrb[0].mxu0
      %v821 = vadd.f32 %v347, %v820
      %822 = vmatprep.mubr.bf16.mxu0 0
      %823 = vmatmul.mubr.bf16.gmra.mrb[0].mxu0 %v423
      %v824 = vpop.f32.mrb[0].mxu0
      %v825 = vadd.f32 %v343, %v824
      %v826 = vpop.f32.mrb[0].mxu0
      %v827 = vadd.f32 %v347, %v826
      %v828 = vpop.f32.mrb[0].mxu0
      %v829 = vadd.f32 %v343, %v828
      %v830 = vpop.f32.mrb[0].mxu0
      %v831 = vadd.f32 %v347, %v830
      %832 = vmatprep.mubr.bf16.mxu0 0
      %833 = vmatmul.mubr.bf16.gmra.mrb[0].mxu0 %v424
      %v834 = vpop.f32.mrb[0].mxu0
      %v835 = vadd.f32 %v343, %v834
      %v836 = vpop.f32.mrb[0].mxu0
      %v837 = vadd.f32 %v347, %v836
      %v838 = vpop.f32.mrb[0].mxu0
      %v839 = vadd.f32 %v343, %v838
      %v840 = vpop.f32.mrb[0].mxu0
      %v841 = vadd.f32 %v347, %v840
      %842 = vmatprep.mubr.bf16.mxu0 0
      %843 = vmatmul.mubr.bf16.gmra.mrb[0].mxu0 %v425
      %v844 = vpop.f32.mrb[0].mxu0
      %v845 = vadd.f32 %v343, %v844
      %v846 = vpop.f32.mrb[0].mxu0
      %v847 = vadd.f32 %v347, %v846
      %v848 = vpop.f32.mrb[0].mxu0
      %v849 = vadd.f32 %v343, %v848
      %v850 = vpop.f32.mrb[0].mxu0
      %v851 = vadd.f32 %v347, %v850
      %852 = vmatprep.mubr.bf16.mxu0 0
      %853 = vmatmul.mubr.bf16.gmra.mrb[0].mxu0 %v426
      %v854 = vpop.f32.mrb[0].mxu0
      %v855 = vadd.f32 %v343, %v854
      %v856 = vpop.f32.mrb[0].mxu0
      %v857 = vadd.f32 %v347, %v856
      %v858 = vpop.f32.mrb[0].mxu0
      %v859 = vadd.f32 %v343, %v858
      %v860 = vpop.f32.mrb[0].mxu0
      %v861 = vadd.f32 %v347, %v860
      %862 = vmatprep.mubr.bf16.mxu0 0
      %863 = vmatmul.mubr.bf16.gmra.mrb[0].mxu0 %v427
      %v864 = vpop.f32.mrb[0].mxu0
      %v865 = vadd.f32 %v343, %v864
      %v866 = vpop.f32.mrb[0].mxu0
      %v867 = vadd.f32 %v347, %v866
      %v868 = vpop.f32.mrb[0].mxu0
      %v869 = vadd.f32 %v343, %v868
      %v870 = vpop.f32.mrb[0].mxu0
      %v871 = vadd.f32 %v347, %v870
      %872 = vmatprep.mubr.bf16.mxu0 0
      %873 = vmatmul.mubr.bf16.gmra.mrb[0].mxu0 %v428
      %v874 = vpop.f32.mrb[0].mxu0
      %v875 = vadd.f32 %v343, %v874
      %v876 = vpop.f32.mrb[0].mxu0
      %v877 = vadd.f32 %v347, %v876
      %v878 = vpop.f32.mrb[0].mxu0
      %v879 = vadd.f32 %v343, %v878
      %v880 = vpop.f32.mrb[0].mxu0
      %v881 = vadd.f32 %v347, %v880
      %882 = vmatprep.mubr.bf16.mxu0 0
      %883 = vmatmul.mubr.bf16.gmra.mrb[0].mxu0 %v429
      %v884 = vpop.f32.mrb[0].mxu0
      %v885 = vadd.f32 %v343, %v884
      %v886 = vpop.f32.mrb[0].mxu0
      %v887 = vadd.f32 %v347, %v886
      %v888 = vpop.f32.mrb[0].mxu0
      %v889 = vadd.f32 %v343, %v888
      %v890 = vpop.f32.mrb[0].mxu0
      %v891 = vadd.f32 %v347, %v890
      %892 = vdwg.mxu0
      %893 = vmatprep.subr.bf16.mxu0 %v635
      %894 = vmatpush1.bf16.msra.mxu0 %v634
      %895 = vmatprep.subr.bf16.mxu0 %v643
      %896 = vmatpush1.bf16.msra.mxu0 %v642
      %897 = vmatprep.subr.bf16.mxu0 %v651
      %898 = vmatpush1.bf16.msra.mxu0 %v650
      %899 = vmatprep.subr.bf16.mxu0 %v659
      %900 = vmatpush1.bf16.msra.mxu0 %v658
      %901 = vmatprep.subr.bf16.mxu0 %v667
      %902 = vmatpush1.bf16.msra.mxu0 %v666
      %903 = vmatprep.subr.bf16.mxu0 %v675
      %904 = vmatpush1.bf16.msra.mxu0 %v674
      %905 = vmatprep.subr.bf16.mxu0 %v683
      %906 = vmatpush1.bf16.msra.mxu0 %v682
      %907 = vmatprep.subr.bf16.mxu0 %v691
      %908 = vmatpush1.bf16.msra.mxu0 %v690
      %909 = vmatprep.subr.bf16.mxu0 0
      %910 = vmatpush1.bf16.msra.mxu0 0
      %911 = vmatprep.subr.bf16.mxu0 0
      %912 = vmatpush1.bf16.msra.mxu0 0
      %913 = vmatprep.subr.bf16.mxu0 0
      %914 = vmatpush1.bf16.msra.mxu0 0
      %915 = vmatprep.subr.bf16.mxu0 0
      %916 = vmatpush1.bf16.msra.mxu0 0
      %917 = vmatprep.subr.bf16.mxu0 0
      %918 = vmatpush1.bf16.msra.mxu0 0
      %919 = vmatprep.subr.bf16.mxu0 0
      %920 = vmatpush1.bf16.msra.mxu0 0
      %921 = vmatprep.subr.bf16.mxu0 0
      %922 = vmatpush1.bf16.msra.mxu0 0
      %923 = vmatprep.subr.bf16.mxu0 0
      %924 = vmatpush1.bf16.msra.mxu0 0
      %925 = vmatprep.mubr.bf16.mxu0 0
      %926 = vmatmul.mubr.bf16.gmra.mrb[0].mxu0 %v420
      %v927 = vpop.f32.mrb[0].mxu0
      %v928 = vadd.f32 %v351, %v927
      %v929 = vpop.f32.mrb[0].mxu0
      %v930 = vadd.f32 %v355, %v929
      %v931 = vpop.f32.mrb[0].mxu0
      %v932 = vadd.f32 %v351, %v931
      %v933 = vpop.f32.mrb[0].mxu0
      %v934 = vadd.f32 %v355, %v933
      %935 = vmatprep.mubr.bf16.mxu0 0
      %936 = vmatmul.mubr.bf16.gmra.mrb[0].mxu0 %v421
      %v937 = vpop.f32.mrb[0].mxu0
      %v938 = vadd.f32 %v351, %v937
      %v939 = vpop.f32.mrb[0].mxu0
      %v940 = vadd.f32 %v355, %v939
      %v941 = vpop.f32.mrb[0].mxu0
      %v942 = vadd.f32 %v351, %v941
      %v943 = vpop.f32.mrb[0].mxu0
      %v944 = vadd.f32 %v355, %v943
      %945 = vmatprep.mubr.bf16.mxu0 0
      %946 = vmatmul.mubr.bf16.gmra.mrb[0].mxu0 %v422
      %v947 = vpop.f32.mrb[0].mxu0
      %v948 = vadd.f32 %v351, %v947
      %v949 = vpop.f32.mrb[0].mxu0
      %v950 = vadd.f32 %v355, %v949
      %v951 = vpop.f32.mrb[0].mxu0
      %v952 = vadd.f32 %v351, %v951
      %v953 = vpop.f32.mrb[0].mxu0
      %v954 = vadd.f32 %v355, %v953
      %955 = vmatprep.mubr.bf16.mxu0 0
      %956 = vmatmul.mubr.bf16.gmra.mrb[0].mxu0 %v423
      %v957 = vpop.f32.mrb[0].mxu0
      %v958 = vadd.f32 %v351, %v957
      %v959 = vpop.f32.mrb[0].mxu0
      %v960 = vadd.f32 %v355, %v959
      %v961 = vpop.f32.mrb[0].mxu0
      %v962 = vadd.f32 %v351, %v961
      %v963 = vpop.f32.mrb[0].mxu0
      %v964 = vadd.f32 %v355, %v963
      %965 = vmatprep.mubr.bf16.mxu0 0
      %966 = vmatmul.mubr.bf16.gmra.mrb[0].mxu0 %v424
      %v967 = vpop.f32.mrb[0].mxu0
      %v968 = vadd.f32 %v351, %v967
      %v969 = vpop.f32.mrb[0].mxu0
      %v970 = vadd.f32 %v355, %v969
      %v971 = vpop.f32.mrb[0].mxu0
      %v972 = vadd.f32 %v351, %v971
      %v973 = vpop.f32.mrb[0].mxu0
      %v974 = vadd.f32 %v355, %v973
      %975 = vmatprep.mubr.bf16.mxu0 0
      %976 = vmatmul.mubr.bf16.gmra.mrb[0].mxu0 %v425
      %v977 = vpop.f32.mrb[0].mxu0
      %v978 = vadd.f32 %v351, %v977
      %v979 = vpop.f32.mrb[0].mxu0
      %v980 = vadd.f32 %v355, %v979
      %v981 = vpop.f32.mrb[0].mxu0
      %v982 = vadd.f32 %v351, %v981
      %v983 = vpop.f32.mrb[0].mxu0
      %v984 = vadd.f32 %v355, %v983
      %985 = vmatprep.mubr.bf16.mxu0 0
      %986 = vmatmul.mubr.bf16.gmra.mrb[0].mxu0 %v426
      %v987 = vpop.f32.mrb[0].mxu0
      %v988 = vadd.f32 %v351, %v987
      %v989 = vpop.f32.mrb[0].mxu0
      %v990 = vadd.f32 %v355, %v989
      %v991 = vpop.f32.mrb[0].mxu0
      %v992 = vadd.f32 %v351, %v991
      %v993 = vpop.f32.mrb[0].mxu0
      %v994 = vadd.f32 %v355, %v993
      %995 = vmatprep.mubr.bf16.mxu0 0
      %996 = vmatmul.mubr.bf16.gmra.mrb[0].mxu0 %v427
      %v997 = vpop.f32.mrb[0].mxu0
      %v998 = vadd.f32 %v351, %v997
      %v999 = vpop.f32.mrb[0].mxu0
      %v1000 = vadd.f32 %v355, %v999
      %v1001 = vpop.f32.mrb[0].mxu0
      %v1002 = vadd.f32 %v351, %v1001
      %v1003 = vpop.f32.mrb[0].mxu0
      %v1004 = vadd.f32 %v355, %v1003
      %1005 = vmatprep.mubr.bf16.mxu0 0
      %1006 = vmatmul.mubr.bf16.gmra.mrb[0].mxu0 %v428
      %v1007 = vpop.f32.mrb[0].mxu0
      %v1008 = vadd.f32 %v351, %v1007
      %v1009 = vpop.f32.mrb[0].mxu0
      %v1010 = vadd.f32 %v355, %v1009
      %v1011 = vpop.f32.mrb[0].mxu0
      %v1012 = vadd.f32 %v351, %v1011
      %v1013 = vpop.f32.mrb[0].mxu0
      %v1014 = vadd.f32 %v355, %v1013
      %1015 = vmatprep.mubr.bf16.mxu0 0
      %1016 = vmatmul.mubr.bf16.gmra.mrb[0].mxu0 %v429
      %v1017 = vpop.f32.mrb[0].mxu0
      %v1018 = vadd.f32 %v351, %v1017
      %v1019 = vpop.f32.mrb[0].mxu0
      %v1020 = vadd.f32 %v355, %v1019
      %v1021 = vpop.f32.mrb[0].mxu0
      %v1022 = vadd.f32 %v351, %v1021
      %v1023 = vpop.f32.mrb[0].mxu0
      %v1024 = vadd.f32 %v355, %v1023
      %1025 = vdwg.mxu0
      %1026 = vmatprep.subr.bf16.mxu0 %v637
      %1027 = vmatpush1.bf16.msra.mxu0 %v636
      %1028 = vmatprep.subr.bf16.mxu0 %v645
      %1029 = vmatpush1.bf16.msra.mxu0 %v644
      %1030 = vmatprep.subr.bf16.mxu0 %v653
      %1031 = vmatpush1.bf16.msra.mxu0 %v652
      %1032 = vmatprep.subr.bf16.mxu0 %v661
      %1033 = vmatpush1.bf16.msra.mxu0 %v660
      %1034 = vmatprep.subr.bf16.mxu0 %v669
      %1035 = vmatpush1.bf16.msra.mxu0 %v668
      %1036 = vmatprep.subr.bf16.mxu0 %v677
      %1037 = vmatpush1.bf16.msra.mxu0 %v676
      %1038 = vmatprep.subr.bf16.mxu0 %v685
      %1039 = vmatpush1.bf16.msra.mxu0 %v684
      %1040 = vmatprep.subr.bf16.mxu0 %v693
      %1041 = vmatpush1.bf16.msra.mxu0 %v692
      %1042 = vmatprep.subr.bf16.mxu0 0
      %1043 = vmatpush1.bf16.msra.mxu0 0
      %1044 = vmatprep.subr.bf16.mxu0 0
      %1045 = vmatpush1.bf16.msra.mxu0 0
      %1046 = vmatprep.subr.bf16.mxu0 0
      %1047 = vmatpush1.bf16.msra.mxu0 0
      %1048 = vmatprep.subr.bf16.mxu0 0
      %1049 = vmatpush1.bf16.msra.mxu0 0
      %1050 = vmatprep.subr.bf16.mxu0 0
      %1051 = vmatpush1.bf16.msra.mxu0 0
      %1052 = vmatprep.subr.bf16.mxu0 0
      %1053 = vmatpush1.bf16.msra.mxu0 0
      %1054 = vmatprep.subr.bf16.mxu0 0
      %1055 = vmatpush1.bf16.msra.mxu0 0
      %1056 = vmatprep.subr.bf16.mxu0 0
      %1057 = vmatpush1.bf16.msra.mxu0 0
      %1058 = vmatprep.mubr.bf16.mxu0 0
      %1059 = vmatmul.mubr.bf16.gmra.mrb[0].mxu0 %v420
      %v1060 = vpop.f32.mrb[0].mxu0
      %v1061 = vadd.f32 %v359, %v1060
      %v1062 = vpop.f32.mrb[0].mxu0
      %v1063 = vadd.f32 %v363, %v1062
      %v1064 = vpop.f32.mrb[0].mxu0
      %v1065 = vadd.f32 %v359, %v1064
      %v1066 = vpop.f32.mrb[0].mxu0
      %v1067 = vadd.f32 %v363, %v1066
      %1068 = vmatprep.mubr.bf16.mxu0 0
      %1069 = vmatmul.mubr.bf16.gmra.mrb[0].mxu0 %v421
      %v1070 = vpop.f32.mrb[0].mxu0
      %v1071 = vadd.f32 %v359, %v1070
      %v1072 = vpop.f32.mrb[0].mxu0
      %v1073 = vadd.f32 %v363, %v1072
      %v1074 = vpop.f32.mrb[0].mxu0
      %v1075 = vadd.f32 %v359, %v1074
      %v1076 = vpop.f32.mrb[0].mxu0
      %v1077 = vadd.f32 %v363, %v1076
      %1078 = vmatprep.mubr.bf16.mxu0 0
      %1079 = vmatmul.mubr.bf16.gmra.mrb[0].mxu0 %v422
      %v1080 = vpop.f32.mrb[0].mxu0
      %v1081 = vadd.f32 %v359, %v1080
      %v1082 = vpop.f32.mrb[0].mxu0
      %v1083 = vadd.f32 %v363, %v1082
      %v1084 = vpop.f32.mrb[0].mxu0
      %v1085 = vadd.f32 %v359, %v1084
      %v1086 = vpop.f32.mrb[0].mxu0
      %v1087 = vadd.f32 %v363, %v1086
      %1088 = vmatprep.mubr.bf16.mxu0 0
      %1089 = vmatmul.mubr.bf16.gmra.mrb[0].mxu0 %v423
      %v1090 = vpop.f32.mrb[0].mxu0
      %v1091 = vadd.f32 %v359, %v1090
      %v1092 = vpop.f32.mrb[0].mxu0
      %v1093 = vadd.f32 %v363, %v1092
      %v1094 = vpop.f32.mrb[0].mxu0
      %v1095 = vadd.f32 %v359, %v1094
      %v1096 = vpop.f32.mrb[0].mxu0
      %v1097 = vadd.f32 %v363, %v1096
      %1098 = vmatprep.mubr.bf16.mxu0 0
      %1099 = vmatmul.mubr.bf16.gmra.mrb[0].mxu0 %v424
      %v1100 = vpop.f32.mrb[0].mxu0
      %v1101 = vadd.f32 %v359, %v1100
      %v1102 = vpop.f32.mrb[0].mxu0
      %v1103 = vadd.f32 %v363, %v1102
      %v1104 = vpop.f32.mrb[0].mxu0
      %v1105 = vadd.f32 %v359, %v1104
      %v1106 = vpop.f32.mrb[0].mxu0
      %v1107 = vadd.f32 %v363, %v1106
      %1108 = vmatprep.mubr.bf16.mxu0 0
      %1109 = vmatmul.mubr.bf16.gmra.mrb[0].mxu0 %v425
      %v1110 = vpop.f32.mrb[0].mxu0
      %v1111 = vadd.f32 %v359, %v1110
      %v1112 = vpop.f32.mrb[0].mxu0
      %v1113 = vadd.f32 %v363, %v1112
      %v1114 = vpop.f32.mrb[0].mxu0
      %v1115 = vadd.f32 %v359, %v1114
      %v1116 = vpop.f32.mrb[0].mxu0
      %v1117 = vadd.f32 %v363, %v1116
      %1118 = vmatprep.mubr.bf16.mxu0 0
      %1119 = vmatmul.mubr.bf16.gmra.mrb[0].mxu0 %v426
      %v1120 = vpop.f32.mrb[0].mxu0
      %v1121 = vadd.f32 %v359, %v1120
      %v1122 = vpop.f32.mrb[0].mxu0
      %v1123 = vadd.f32 %v363, %v1122
      %v1124 = vpop.f32.mrb[0].mxu0
      %v1125 = vadd.f32 %v359, %v1124
      %v1126 = vpop.f32.mrb[0].mxu0
      %v1127 = vadd.f32 %v363, %v1126
      %1128 = vmatprep.mubr.bf16.mxu0 0
      %1129 = vmatmul.mubr.bf16.gmra.mrb[0].mxu0 %v427
      %v1130 = vpop.f32.mrb[0].mxu0
      %v1131 = vadd.f32 %v359, %v1130
      %v1132 = vpop.f32.mrb[0].mxu0
      %v1133 = vadd.f32 %v363, %v1132
      %v1134 = vpop.f32.mrb[0].mxu0
      %v1135 = vadd.f32 %v359, %v1134
      %v1136 = vpop.f32.mrb[0].mxu0
      %v1137 = vadd.f32 %v363, %v1136
      %1138 = vmatprep.mubr.bf16.mxu0 0
      %1139 = vmatmul.mubr.bf16.gmra.mrb[0].mxu0 %v428
      %v1140 = vpop.f32.mrb[0].mxu0
      %v1141 = vadd.f32 %v359, %v1140
      %v1142 = vpop.f32.mrb[0].mxu0
      %v1143 = vadd.f32 %v363, %v1142
      %v1144 = vpop.f32.mrb[0].mxu0
      %v1145 = vadd.f32 %v359, %v1144
      %v1146 = vpop.f32.mrb[0].mxu0
      %v1147 = vadd.f32 %v363, %v1146
      %1148 = vmatprep.mubr.bf16.mxu0 0
      %1149 = vmatmul.mubr.bf16.gmra.mrb[0].mxu0 %v429
      %v1150 = vpop.f32.mrb[0].mxu0
      %v1151 = vadd.f32 %v359, %v1150
      %v1152 = vpop.f32.mrb[0].mxu0
      %v1153 = vadd.f32 %v363, %v1152
      %v1154 = vpop.f32.mrb[0].mxu0
      %v1155 = vadd.f32 %v359, %v1154
      %v1156 = vpop.f32.mrb[0].mxu0
      %v1157 = vadd.f32 %v363, %v1156
      %1158 = vdwg.mxu0
      %1159 = vmatprep.subr.bf16.mxu0 %v639
      %1160 = vmatpush1.bf16.msra.mxu0 %v638
      %1161 = vmatprep.subr.bf16.mxu0 %v647
      %1162 = vmatpush1.bf16.msra.mxu0 %v646
      %1163 = vmatprep.subr.bf16.mxu0 %v655
      %1164 = vmatpush1.bf16.msra.mxu0 %v654
      %1165 = vmatprep.subr.bf16.mxu0 %v663
      %1166 = vmatpush1.bf16.msra.mxu0 %v662
      %1167 = vmatprep.subr.bf16.mxu0 %v671
      %1168 = vmatpush1.bf16.msra.mxu0 %v670
      %1169 = vmatprep.subr.bf16.mxu0 %v679
      %1170 = vmatpush1.bf16.msra.mxu0 %v678
      %1171 = vmatprep.subr.bf16.mxu0 %v687
      %1172 = vmatpush1.bf16.msra.mxu0 %v686
      %1173 = vmatprep.subr.bf16.mxu0 %v695
      %1174 = vmatpush1.bf16.msra.mxu0 %v694
      %1175 = vmatprep.subr.bf16.mxu0 0
      %1176 = vmatpush1.bf16.msra.mxu0 0
      %1177 = vmatprep.subr.bf16.mxu0 0
      %1178 = vmatpush1.bf16.msra.mxu0 0
      %1179 = vmatprep.subr.bf16.mxu0 0
      %1180 = vmatpush1.bf16.msra.mxu0 0
      %1181 = vmatprep.subr.bf16.mxu0 0
      %1182 = vmatpush1.bf16.msra.mxu0 0
      %1183 = vmatprep.subr.bf16.mxu0 0
      %1184 = vmatpush1.bf16.msra.mxu0 0
      %1185 = vmatprep.subr.bf16.mxu0 0
      %1186 = vmatpush1.bf16.msra.mxu0 0
      %1187 = vmatprep.subr.bf16.mxu0 0
      %1188 = vmatpush1.bf16.msra.mxu0 0
      %1189 = vmatprep.subr.bf16.mxu0 0
      %1190 = vmatpush1.bf16.msra.mxu0 0
      %1191 = vmatprep.mubr.bf16.mxu0 0
      %1192 = vmatmul.mubr.bf16.gmra.mrb[0].mxu0 %v420
      %v1193 = vpop.f32.mrb[0].mxu0
      %v1194 = vadd.f32 %v367, %v1193
      %v1195 = vpop.f32.mrb[0].mxu0
      %v1196 = vadd.f32 %v371, %v1195
      %v1197 = vpop.f32.mrb[0].mxu0
      %v1198 = vadd.f32 %v367, %v1197
      %v1199 = vpop.f32.mrb[0].mxu0
      %v1200 = vadd.f32 %v371, %v1199
      %1201 = vmatprep.mubr.bf16.mxu0 0
      %1202 = vmatmul.mubr.bf16.gmra.mrb[0].mxu0 %v421
      %v1203 = vpop.f32.mrb[0].mxu0
      %v1204 = vadd.f32 %v367, %v1203
      %v1205 = vpop.f32.mrb[0].mxu0
      %v1206 = vadd.f32 %v371, %v1205
      %v1207 = vpop.f32.mrb[0].mxu0
      %v1208 = vadd.f32 %v367, %v1207
      %v1209 = vpop.f32.mrb[0].mxu0
      %v1210 = vadd.f32 %v371, %v1209
      %1211 = vmatprep.mubr.bf16.mxu0 0
      %1212 = vmatmul.mubr.bf16.gmra.mrb[0].mxu0 %v422
      %v1213 = vpop.f32.mrb[0].mxu0
      %v1214 = vadd.f32 %v367, %v1213
      %v1215 = vpop.f32.mrb[0].mxu0
      %v1216 = vadd.f32 %v371, %v1215
      %v1217 = vpop.f32.mrb[0].mxu0
      %v1218 = vadd.f32 %v367, %v1217
      %v1219 = vpop.f32.mrb[0].mxu0
      %v1220 = vadd.f32 %v371, %v1219
      %1221 = vmatprep.mubr.bf16.mxu0 0
      %1222 = vmatmul.mubr.bf16.gmra.mrb[0].mxu0 %v423
      %v1223 = vpop.f32.mrb[0].mxu0
      %v1224 = vadd.f32 %v367, %v1223
      %v1225 = vpop.f32.mrb[0].mxu0
      %v1226 = vadd.f32 %v371, %v1225
      %v1227 = vpop.f32.mrb[0].mxu0
      %v1228 = vadd.f32 %v367, %v1227
      %v1229 = vpop.f32.mrb[0].mxu0
      %v1230 = vadd.f32 %v371, %v1229
      %1231 = vmatprep.mubr.bf16.mxu0 0
      %1232 = vmatmul.mubr.bf16.gmra.mrb[0].mxu0 %v424
      %v1233 = vpop.f32.mrb[0].mxu0
      %v1234 = vadd.f32 %v367, %v1233
      %v1235 = vpop.f32.mrb[0].mxu0
      %v1236 = vadd.f32 %v371, %v1235
      %v1237 = vpop.f32.mrb[0].mxu0
      %v1238 = vadd.f32 %v367, %v1237
      %v1239 = vpop.f32.mrb[0].mxu0
      %v1240 = vadd.f32 %v371, %v1239
      %1241 = vmatprep.mubr.bf16.mxu0 0
      %1242 = vmatmul.mubr.bf16.gmra.mrb[0].mxu0 %v425
      %v1243 = vpop.f32.mrb[0].mxu0
      %v1244 = vadd.f32 %v367, %v1243
      %v1245 = vpop.f32.mrb[0].mxu0
      %v1246 = vadd.f32 %v371, %v1245
      %v1247 = vpop.f32.mrb[0].mxu0
      %v1248 = vadd.f32 %v367, %v1247
      %v1249 = vpop.f32.mrb[0].mxu0
      %v1250 = vadd.f32 %v371, %v1249
      %1251 = vmatprep.mubr.bf16.mxu0 0
      %1252 = vmatmul.mubr.bf16.gmra.mrb[0].mxu0 %v426
      %v1253 = vpop.f32.mrb[0].mxu0
      %v1254 = vadd.f32 %v367, %v1253
      %v1255 = vpop.f32.mrb[0].mxu0
      %v1256 = vadd.f32 %v371, %v1255
      %v1257 = vpop.f32.mrb[0].mxu0
      %v1258 = vadd.f32 %v367, %v1257
      %v1259 = vpop.f32.mrb[0].mxu0
      %v1260 = vadd.f32 %v371, %v1259
      %1261 = vmatprep.mubr.bf16.mxu0 0
      %1262 = vmatmul.mubr.bf16.gmra.mrb[0].mxu0 %v427
      %v1263 = vpop.f32.mrb[0].mxu0
      %v1264 = vadd.f32 %v367, %v1263
      %v1265 = vpop.f32.mrb[0].mxu0
      %v1266 = vadd.f32 %v371, %v1265
      %v1267 = vpop.f32.mrb[0].mxu0
      %v1268 = vadd.f32 %v367, %v1267
      %v1269 = vpop.f32.mrb[0].mxu0
      %v1270 = vadd.f32 %v371, %v1269
      %1271 = vmatprep.mubr.bf16.mxu0 0
      %1272 = vmatmul.mubr.bf16.gmra.mrb[0].mxu0 %v428
      %v1273 = vpop.f32.mrb[0].mxu0
      %v1274 = vadd.f32 %v367, %v1273
      %v1275 = vpop.f32.mrb[0].mxu0
      %v1276 = vadd.f32 %v371, %v1275
      %v1277 = vpop.f32.mrb[0].mxu0
      %v1278 = vadd.f32 %v367, %v1277
      %v1279 = vpop.f32.mrb[0].mxu0
      %v1280 = vadd.f32 %v371, %v1279
      %1281 = vmatprep.mubr.bf16.mxu0 0
      %1282 = vmatmul.mubr.bf16.gmra.mrb[0].mxu0 %v429
      %v1283 = vpop.f32.mrb[0].mxu0
      %v1284 = vadd.f32 %v367, %v1283
      %v1285 = vpop.f32.mrb[0].mxu0
      %v1286 = vadd.f32 %v371, %v1285
      %v1287 = vpop.f32.mrb[0].mxu0
      %v1288 = vadd.f32 %v367, %v1287
      %v1289 = vpop.f32.mrb[0].mxu0
      %v1290 = vadd.f32 %v371, %v1289
      %1291 = vdwg.mxu0
      %v1292 = vmax.f32 %v795, 0.0
      %v1293 = vmax.f32 %v797, 0.0
      %v1294 = vmax.f32 %v928, 0.0
      %v1295 = vmax.f32 %v930, 0.0
      %v1296 = vmax.f32 %v1061, 0.0
      %v1297 = vmax.f32 %v1063, 0.0
      %v1298 = vmax.f32 %v1194, 0.0
      %v1299 = vmax.f32 %v1196, 0.0
      %v1300 = vmax.f32 %v799, 0.0
      %v1301 = vmax.f32 %v801, 0.0
      %v1302 = vmax.f32 %v932, 0.0
      %v1303 = vmax.f32 %v934, 0.0
      %v1304 = vmax.f32 %v1065, 0.0
      %v1305 = vmax.f32 %v1067, 0.0
      %v1306 = vmax.f32 %v1198, 0.0
      %v1307 = vmax.f32 %v1200, 0.0
      %v1308 = vmax.f32 %v805, 0.0
      %v1309 = vmax.f32 %v807, 0.0
      %v1310 = vmax.f32 %v938, 0.0
      %v1311 = vmax.f32 %v940, 0.0
      %v1312 = vmax.f32 %v1071, 0.0
      %v1313 = vmax.f32 %v1073, 0.0
      %v1314 = vmax.f32 %v1204, 0.0
      %v1315 = vmax.f32 %v1206, 0.0
      %v1316 = vmax.f32 %v809, 0.0
      %v1317 = vmax.f32 %v811, 0.0
      %v1318 = vmax.f32 %v942, 0.0
      %v1319 = vmax.f32 %v944, 0.0
      %v1320 = vmax.f32 %v1075, 0.0
      %v1321 = vmax.f32 %v1077, 0.0
      %v1322 = vmax.f32 %v1208, 0.0
      %v1323 = vmax.f32 %v1210, 0.0
      %v1324 = vmax.f32 %v815, 0.0
      %v1325 = vmax.f32 %v817, 0.0
      %v1326 = vmax.f32 %v948, 0.0
      %v1327 = vmax.f32 %v950, 0.0
      %v1328 = vmax.f32 %v1081, 0.0
      %v1329 = vmax.f32 %v1083, 0.0
      %v1330 = vmax.f32 %v1214, 0.0
      %v1331 = vmax.f32 %v1216, 0.0
      %v1332 = vmax.f32 %v819, 0.0
      %v1333 = vmax.f32 %v821, 0.0
      %v1334 = vmax.f32 %v952, 0.0
      %v1335 = vmax.f32 %v954, 0.0
      %v1336 = vmax.f32 %v1085, 0.0
      %v1337 = vmax.f32 %v1087, 0.0
      %v1338 = vmax.f32 %v1218, 0.0
      %v1339 = vmax.f32 %v1220, 0.0
      %v1340 = vmax.f32 %v825, 0.0
      %v1341 = vmax.f32 %v827, 0.0
      %v1342 = vmax.f32 %v958, 0.0
      %v1343 = vmax.f32 %v960, 0.0
      %v1344 = vmax.f32 %v1091, 0.0
      %v1345 = vmax.f32 %v1093, 0.0
      %v1346 = vmax.f32 %v1224, 0.0
      %v1347 = vmax.f32 %v1226, 0.0
      %v1348 = vmax.f32 %v829, 0.0
      %v1349 = vmax.f32 %v831, 0.0
      %v1350 = vmax.f32 %v962, 0.0
      %v1351 = vmax.f32 %v964, 0.0
      %v1352 = vmax.f32 %v1095, 0.0
      %v1353 = vmax.f32 %v1097, 0.0
      %v1354 = vmax.f32 %v1228, 0.0
      %v1355 = vmax.f32 %v1230, 0.0
      %v1356 = vmax.f32 %v835, 0.0
      %v1357 = vmax.f32 %v837, 0.0
      %v1358 = vmax.f32 %v968, 0.0
      %v1359 = vmax.f32 %v970, 0.0
      %v1360 = vmax.f32 %v1101, 0.0
      %v1361 = vmax.f32 %v1103, 0.0
      %v1362 = vmax.f32 %v1234, 0.0
      %v1363 = vmax.f32 %v1236, 0.0
      %v1364 = vmax.f32 %v839, 0.0
      %v1365 = vmax.f32 %v841, 0.0
      %v1366 = vmax.f32 %v972, 0.0
      %v1367 = vmax.f32 %v974, 0.0
      %v1368 = vmax.f32 %v1105, 0.0
      %v1369 = vmax.f32 %v1107, 0.0
      %v1370 = vmax.f32 %v1238, 0.0
      %v1371 = vmax.f32 %v1240, 0.0
      %v1372 = vmax.f32 %v845, 0.0
      %v1373 = vmax.f32 %v847, 0.0
      %v1374 = vmax.f32 %v978, 0.0
      %v1375 = vmax.f32 %v980, 0.0
      %v1376 = vmax.f32 %v1111, 0.0
      %v1377 = vmax.f32 %v1113, 0.0
      %v1378 = vmax.f32 %v1244, 0.0
      %v1379 = vmax.f32 %v1246, 0.0
      %v1380 = vmax.f32 %v849, 0.0
      %v1381 = vmax.f32 %v851, 0.0
      %v1382 = vmax.f32 %v982, 0.0
      %v1383 = vmax.f32 %v984, 0.0
      %v1384 = vmax.f32 %v1115, 0.0
      %v1385 = vmax.f32 %v1117, 0.0
      %v1386 = vmax.f32 %v1248, 0.0
      %v1387 = vmax.f32 %v1250, 0.0
      %v1388 = vmax.f32 %v855, 0.0
      %v1389 = vmax.f32 %v857, 0.0
      %v1390 = vmax.f32 %v988, 0.0
      %v1391 = vmax.f32 %v990, 0.0
      %v1392 = vmax.f32 %v1121, 0.0
      %v1393 = vmax.f32 %v1123, 0.0
      %v1394 = vmax.f32 %v1254, 0.0
      %v1395 = vmax.f32 %v1256, 0.0
      %v1396 = vmax.f32 %v859, 0.0
      %v1397 = vmax.f32 %v861, 0.0
      %v1398 = vmax.f32 %v992, 0.0
      %v1399 = vmax.f32 %v994, 0.0
      %v1400 = vmax.f32 %v1125, 0.0
      %v1401 = vmax.f32 %v1127, 0.0
      %v1402 = vmax.f32 %v1258, 0.0
      %v1403 = vmax.f32 %v1260, 0.0
      %v1404 = vmax.f32 %v865, 0.0
      %v1405 = vmax.f32 %v867, 0.0
      %v1406 = vmax.f32 %v998, 0.0
      %v1407 = vmax.f32 %v1000, 0.0
      %v1408 = vmax.f32 %v1131, 0.0
      %v1409 = vmax.f32 %v1133, 0.0
      %v1410 = vmax.f32 %v1264, 0.0
      %v1411 = vmax.f32 %v1266, 0.0
      %v1412 = vmax.f32 %v869, 0.0
      %v1413 = vmax.f32 %v871, 0.0
      %v1414 = vmax.f32 %v1002, 0.0
      %v1415 = vmax.f32 %v1004, 0.0
      %v1416 = vmax.f32 %v1135, 0.0
      %v1417 = vmax.f32 %v1137, 0.0
      %v1418 = vmax.f32 %v1268, 0.0
      %v1419 = vmax.f32 %v1270, 0.0
      %v1420 = vmax.f32 %v875, 0.0
      %v1421 = vmax.f32 %v877, 0.0
      %v1422 = vmax.f32 %v1008, 0.0
      %v1423 = vmax.f32 %v1010, 0.0
      %v1424 = vmax.f32 %v1141, 0.0
      %v1425 = vmax.f32 %v1143, 0.0
      %v1426 = vmax.f32 %v1274, 0.0
      %v1427 = vmax.f32 %v1276, 0.0
      %v1428 = vmax.f32 %v879, 0.0
      %v1429 = vmax.f32 %v881, 0.0
      %v1430 = vmax.f32 %v1012, 0.0
      %v1431 = vmax.f32 %v1014, 0.0
      %v1432 = vmax.f32 %v1145, 0.0
      %v1433 = vmax.f32 %v1147, 0.0
      %v1434 = vmax.f32 %v1278, 0.0
      %v1435 = vmax.f32 %v1280, 0.0
      %v1436 = vmax.f32 %v885, 0.0
      %v1437 = vmax.f32 %v887, 0.0
      %v1438 = vmax.f32 %v1018, 0.0
      %v1439 = vmax.f32 %v1020, 0.0
      %v1440 = vmax.f32 %v1151, 0.0
      %v1441 = vmax.f32 %v1153, 0.0
      %v1442 = vmax.f32 %v1284, 0.0
      %v1443 = vmax.f32 %v1286, 0.0
      %v1444 = vmax.f32 %v889, 0.0
      %v1445 = vmax.f32 %v891, 0.0
      %v1446 = vmax.f32 %v1022, 0.0
      %v1447 = vmax.f32 %v1024, 0.0
      %v1448 = vmax.f32 %v1155, 0.0
      %v1449 = vmax.f32 %v1157, 0.0
      %v1450 = vmax.f32 %v1288, 0.0
      %v1451 = vmax.f32 %v1290, 0.0
      %s1452 = smul.u32 %s17, 160
      %s1453 = ssub.s32 300, %s1452
      %v1454 = vlaneseq
      %v1455 = vshrl.u32 %v1454, 7
      %v1456 = vadd.s32 %v1455, 8
      %v1457 = vadd.s32 %v1455, 16
      %v1458 = vadd.s32 %v1455, 24
      %v1459 = vadd.s32 %v1455, 32
      %v1460 = vadd.s32 %v1455, 40
      %v1461 = vadd.s32 %v1455, 48
      %v1462 = vadd.s32 %v1455, 56
      %v1463 = vadd.s32 %v1455, 64
      %v1464 = vadd.s32 %v1455, 72
      %v1465 = vadd.s32 %v1455, 80
      %v1466 = vadd.s32 %v1455, 88
      %v1467 = vadd.s32 %v1455, 96
      %v1468 = vadd.s32 %v1455, 104
      %v1469 = vadd.s32 %v1455, 112
      %v1470 = vadd.s32 %v1455, 120
      %v1471 = vadd.s32 %v1455, 128
      %v1472 = vadd.s32 %v1455, 136
      %v1473 = vadd.s32 %v1455, 144
      %v1474 = vadd.s32 %v1455, 152
      %v1475 = vstv %s1453
      %vm1476 = vcmp.lt.s32.totalorder %v1455, %v1475
      %vm1477 = vcmp.lt.s32.totalorder %v1456, %v1475
      %vm1478 = vcmp.lt.s32.totalorder %v1457, %v1475
      %vm1479 = vcmp.lt.s32.totalorder %v1458, %v1475
      %vm1480 = vcmp.lt.s32.totalorder %v1459, %v1475
      %vm1481 = vcmp.lt.s32.totalorder %v1460, %v1475
      %vm1482 = vcmp.lt.s32.totalorder %v1461, %v1475
      %vm1483 = vcmp.lt.s32.totalorder %v1462, %v1475
      %vm1484 = vcmp.lt.s32.totalorder %v1463, %v1475
      %vm1485 = vcmp.lt.s32.totalorder %v1464, %v1475
      %vm1486 = vcmp.lt.s32.totalorder %v1465, %v1475
      %vm1487 = vcmp.lt.s32.totalorder %v1466, %v1475
      %vm1488 = vcmp.lt.s32.totalorder %v1467, %v1475
      %vm1489 = vcmp.lt.s32.totalorder %v1468, %v1475
      %vm1490 = vcmp.lt.s32.totalorder %v1469, %v1475
      %vm1491 = vcmp.lt.s32.totalorder %v1470, %v1475
      %vm1492 = vcmp.lt.s32.totalorder %v1471, %v1475
      %vm1493 = vcmp.lt.s32.totalorder %v1472, %v1475
      %vm1494 = vcmp.lt.s32.totalorder %v1473, %v1475
      %vm1495 = vcmp.lt.s32.totalorder %v1474, %v1475
      %v1496 = vsel %vm1476, 1, 0
      %v1497 = vsel %vm1477, 1, 0
      %v1498 = vsel %vm1478, 1, 0
      %v1499 = vsel %vm1479, 1, 0
      %v1500 = vsel %vm1480, 1, 0
      %v1501 = vsel %vm1481, 1, 0
      %v1502 = vsel %vm1482, 1, 0
      %v1503 = vsel %vm1483, 1, 0
      %v1504 = vsel %vm1484, 1, 0
      %v1505 = vsel %vm1485, 1, 0
      %v1506 = vsel %vm1486, 1, 0
      %v1507 = vsel %vm1487, 1, 0
      %v1508 = vsel %vm1488, 1, 0
      %v1509 = vsel %vm1489, 1, 0
      %v1510 = vsel %vm1490, 1, 0
      %v1511 = vsel %vm1491, 1, 0
      %v1512 = vsel %vm1492, 1, 0
      %v1513 = vsel %vm1493, 1, 0
      %v1514 = vsel %vm1494, 1, 0
      %v1515 = vsel %vm1495, 1, 0
      %vm1516 = vcmp.eq.s32.totalorder %v1496, 1
      %vm1517 = vcmp.eq.s32.totalorder %v1497, 1
      %vm1518 = vcmp.eq.s32.totalorder %v1498, 1
      %vm1519 = vcmp.eq.s32.totalorder %v1499, 1
      %vm1520 = vcmp.eq.s32.totalorder %v1500, 1
      %vm1521 = vcmp.eq.s32.totalorder %v1501, 1
      %vm1522 = vcmp.eq.s32.totalorder %v1502, 1
      %vm1523 = vcmp.eq.s32.totalorder %v1503, 1
      %vm1524 = vcmp.eq.s32.totalorder %v1504, 1
      %vm1525 = vcmp.eq.s32.totalorder %v1505, 1
      %vm1526 = vcmp.eq.s32.totalorder %v1506, 1
      %vm1527 = vcmp.eq.s32.totalorder %v1507, 1
      %vm1528 = vcmp.eq.s32.totalorder %v1508, 1
      %vm1529 = vcmp.eq.s32.totalorder %v1509, 1
      %vm1530 = vcmp.eq.s32.totalorder %v1510, 1
      %vm1531 = vcmp.eq.s32.totalorder %v1511, 1
      %vm1532 = vcmp.eq.s32.totalorder %v1512, 1
      %vm1533 = vcmp.eq.s32.totalorder %v1513, 1
      %vm1534 = vcmp.eq.s32.totalorder %v1514, 1
      %vm1535 = vcmp.eq.s32.totalorder %v1515, 1
      %v1536 = vsel %vm1516, %v1292, 0.0
      %v1537 = vsel %vm1516, %v1293, 0.0
      %v1538 = vsel %vm1516, %v1294, 0.0
      %v1539 = vsel %vm1516, %v1295, 0.0
      %v1540 = vsel %vm1516, %v1296, 0.0
      %v1541 = vsel %vm1516, %v1297, 0.0
      %v1542 = vsel %vm1516, %v1298, 0.0
      %v1543 = vsel %vm1516, %v1299, 0.0
      %v1544 = vsel %vm1517, %v1300, 0.0
      %v1545 = vsel %vm1517, %v1301, 0.0
      %v1546 = vsel %vm1517, %v1302, 0.0
      %v1547 = vsel %vm1517, %v1303, 0.0
      %v1548 = vsel %vm1517, %v1304, 0.0
      %v1549 = vsel %vm1517, %v1305, 0.0
      %v1550 = vsel %vm1517, %v1306, 0.0
      %v1551 = vsel %vm1517, %v1307, 0.0
      %v1552 = vsel %vm1518, %v1308, 0.0
      %v1553 = vsel %vm1518, %v1309, 0.0
      %v1554 = vsel %vm1518, %v1310, 0.0
      %v1555 = vsel %vm1518, %v1311, 0.0
      %v1556 = vsel %vm1518, %v1312, 0.0
      %v1557 = vsel %vm1518, %v1313, 0.0
      %v1558 = vsel %vm1518, %v1314, 0.0
      %v1559 = vsel %vm1518, %v1315, 0.0
      %v1560 = vsel %vm1519, %v1316, 0.0
      %v1561 = vsel %vm1519, %v1317, 0.0
      %v1562 = vsel %vm1519, %v1318, 0.0
      %v1563 = vsel %vm1519, %v1319, 0.0
      %v1564 = vsel %vm1519, %v1320, 0.0
      %v1565 = vsel %vm1519, %v1321, 0.0
      %v1566 = vsel %vm1519, %v1322, 0.0
      %v1567 = vsel %vm1519, %v1323, 0.0
      %v1568 = vsel %vm1520, %v1324, 0.0
      %v1569 = vsel %vm1520, %v1325, 0.0
      %v1570 = vsel %vm1520, %v1326, 0.0
      %v1571 = vsel %vm1520, %v1327, 0.0
      %v1572 = vsel %vm1520, %v1328, 0.0
      %v1573 = vsel %vm1520, %v1329, 0.0
      %v1574 = vsel %vm1520, %v1330, 0.0
      %v1575 = vsel %vm1520, %v1331, 0.0
      %v1576 = vsel %vm1521, %v1332, 0.0
      %v1577 = vsel %vm1521, %v1333, 0.0
      %v1578 = vsel %vm1521, %v1334, 0.0
      %v1579 = vsel %vm1521, %v1335, 0.0
      %v1580 = vsel %vm1521, %v1336, 0.0
      %v1581 = vsel %vm1521, %v1337, 0.0
      %v1582 = vsel %vm1521, %v1338, 0.0
      %v1583 = vsel %vm1521, %v1339, 0.0
      %v1584 = vsel %vm1522, %v1340, 0.0
      %v1585 = vsel %vm1522, %v1341, 0.0
      %v1586 = vsel %vm1522, %v1342, 0.0
      %v1587 = vsel %vm1522, %v1343, 0.0
      %v1588 = vsel %vm1522, %v1344, 0.0
      %v1589 = vsel %vm1522, %v1345, 0.0
      %v1590 = vsel %vm1522, %v1346, 0.0
      %v1591 = vsel %vm1522, %v1347, 0.0
      %v1592 = vsel %vm1523, %v1348, 0.0
      %v1593 = vsel %vm1523, %v1349, 0.0
      %v1594 = vsel %vm1523, %v1350, 0.0
      %v1595 = vsel %vm1523, %v1351, 0.0
      %v1596 = vsel %vm1523, %v1352, 0.0
      %v1597 = vsel %vm1523, %v1353, 0.0
      %v1598 = vsel %vm1523, %v1354, 0.0
      %v1599 = vsel %vm1523, %v1355, 0.0
      %v1600 = vsel %vm1524, %v1356, 0.0
      %v1601 = vsel %vm1524, %v1357, 0.0
      %v1602 = vsel %vm1524, %v1358, 0.0
      %v1603 = vsel %vm1524, %v1359, 0.0
      %v1604 = vsel %vm1524, %v1360, 0.0
      %v1605 = vsel %vm1524, %v1361, 0.0
      %v1606 = vsel %vm1524, %v1362, 0.0
      %v1607 = vsel %vm1524, %v1363, 0.0
      %v1608 = vsel %vm1525, %v1364, 0.0
      %v1609 = vsel %vm1525, %v1365, 0.0
      %v1610 = vsel %vm1525, %v1366, 0.0
      %v1611 = vsel %vm1525, %v1367, 0.0
      %v1612 = vsel %vm1525, %v1368, 0.0
      %v1613 = vsel %vm1525, %v1369, 0.0
      %v1614 = vsel %vm1525, %v1370, 0.0
      %v1615 = vsel %vm1525, %v1371, 0.0
      %v1616 = vsel %vm1526, %v1372, 0.0
      %v1617 = vsel %vm1526, %v1373, 0.0
      %v1618 = vsel %vm1526, %v1374, 0.0
      %v1619 = vsel %vm1526, %v1375, 0.0
      %v1620 = vsel %vm1526, %v1376, 0.0
      %v1621 = vsel %vm1526, %v1377, 0.0
      %v1622 = vsel %vm1526, %v1378, 0.0
      %v1623 = vsel %vm1526, %v1379, 0.0
      %v1624 = vsel %vm1527, %v1380, 0.0
      %v1625 = vsel %vm1527, %v1381, 0.0
      %v1626 = vsel %vm1527, %v1382, 0.0
      %v1627 = vsel %vm1527, %v1383, 0.0
      %v1628 = vsel %vm1527, %v1384, 0.0
      %v1629 = vsel %vm1527, %v1385, 0.0
      %v1630 = vsel %vm1527, %v1386, 0.0
      %v1631 = vsel %vm1527, %v1387, 0.0
      %v1632 = vsel %vm1528, %v1388, 0.0
      %v1633 = vsel %vm1528, %v1389, 0.0
      %v1634 = vsel %vm1528, %v1390, 0.0
      %v1635 = vsel %vm1528, %v1391, 0.0
      %v1636 = vsel %vm1528, %v1392, 0.0
      %v1637 = vsel %vm1528, %v1393, 0.0
      %v1638 = vsel %vm1528, %v1394, 0.0
      %v1639 = vsel %vm1528, %v1395, 0.0
      %v1640 = vsel %vm1529, %v1396, 0.0
      %v1641 = vsel %vm1529, %v1397, 0.0
      %v1642 = vsel %vm1529, %v1398, 0.0
      %v1643 = vsel %vm1529, %v1399, 0.0
      %v1644 = vsel %vm1529, %v1400, 0.0
      %v1645 = vsel %vm1529, %v1401, 0.0
      %v1646 = vsel %vm1529, %v1402, 0.0
      %v1647 = vsel %vm1529, %v1403, 0.0
      %v1648 = vsel %vm1530, %v1404, 0.0
      %v1649 = vsel %vm1530, %v1405, 0.0
      %v1650 = vsel %vm1530, %v1406, 0.0
      %v1651 = vsel %vm1530, %v1407, 0.0
      %v1652 = vsel %vm1530, %v1408, 0.0
      %v1653 = vsel %vm1530, %v1409, 0.0
      %v1654 = vsel %vm1530, %v1410, 0.0
      %v1655 = vsel %vm1530, %v1411, 0.0
      %v1656 = vsel %vm1531, %v1412, 0.0
      %v1657 = vsel %vm1531, %v1413, 0.0
      %v1658 = vsel %vm1531, %v1414, 0.0
      %v1659 = vsel %vm1531, %v1415, 0.0
      %v1660 = vsel %vm1531, %v1416, 0.0
      %v1661 = vsel %vm1531, %v1417, 0.0
      %v1662 = vsel %vm1531, %v1418, 0.0
      %v1663 = vsel %vm1531, %v1419, 0.0
      %v1664 = vsel %vm1532, %v1420, 0.0
      %v1665 = vsel %vm1532, %v1421, 0.0
      %v1666 = vsel %vm1532, %v1422, 0.0
      %v1667 = vsel %vm1532, %v1423, 0.0
      %v1668 = vsel %vm1532, %v1424, 0.0
      %v1669 = vsel %vm1532, %v1425, 0.0
      %v1670 = vsel %vm1532, %v1426, 0.0
      %v1671 = vsel %vm1532, %v1427, 0.0
      %v1672 = vsel %vm1533, %v1428, 0.0
      %v1673 = vsel %vm1533, %v1429, 0.0
      %v1674 = vsel %vm1533, %v1430, 0.0
      %v1675 = vsel %vm1533, %v1431, 0.0
      %v1676 = vsel %vm1533, %v1432, 0.0
      %v1677 = vsel %vm1533, %v1433, 0.0
      %v1678 = vsel %vm1533, %v1434, 0.0
      %v1679 = vsel %vm1533, %v1435, 0.0
      %v1680 = vsel %vm1534, %v1436, 0.0
      %v1681 = vsel %vm1534, %v1437, 0.0
      %v1682 = vsel %vm1534, %v1438, 0.0
      %v1683 = vsel %vm1534, %v1439, 0.0
      %v1684 = vsel %vm1534, %v1440, 0.0
      %v1685 = vsel %vm1534, %v1441, 0.0
      %v1686 = vsel %vm1534, %v1442, 0.0
      %v1687 = vsel %vm1534, %v1443, 0.0
      %v1688 = vsel %vm1535, %v1444, 0.0
      %v1689 = vsel %vm1535, %v1445, 0.0
      %v1690 = vsel %vm1535, %v1446, 0.0
      %v1691 = vsel %vm1535, %v1447, 0.0
      %v1692 = vsel %vm1535, %v1448, 0.0
      %v1693 = vsel %vm1535, %v1449, 0.0
      %v1694 = vsel %vm1535, %v1450, 0.0
      %v1695 = vsel %vm1535, %v1451, 0.0
      %p1696 = scmp.lt.s32.totalorder %s1453, 160
      %s1697 = scalar_select %p1696, %s1453, 160
      %p1698 = scmp.gt.s32.totalorder %s1697, 1
      %s1699 = scalar_select %p1698, %s1697, 1
      %s1700 = scvt.s32.f32 %s1699
      %v1701 = vadd.f32 %v1536, %v1544
      %v1702 = vadd.f32 %v1701, %v1552
      %v1703 = vadd.f32 %v1702, %v1560
      %v1704 = vadd.f32 %v1703, %v1568
      %v1705 = vadd.f32 %v1704, %v1576
      %v1706 = vadd.f32 %v1705, %v1584
      %v1707 = vadd.f32 %v1706, %v1592
      %v1708 = vadd.f32 %v1707, %v1600
      %v1709 = vadd.f32 %v1708, %v1608
      %v1710 = vadd.f32 %v1709, %v1616
      %v1711 = vadd.f32 %v1710, %v1624
      %v1712 = vadd.f32 %v1711, %v1632
      %v1713 = vadd.f32 %v1712, %v1640
      %v1714 = vadd.f32 %v1713, %v1648
      %v1715 = vadd.f32 %v1714, %v1656
      %v1716 = vadd.f32 %v1715, %v1664
      %v1717 = vadd.f32 %v1716, %v1672
      %v1718 = vadd.f32 %v1717, %v1680
      %v1719 = vadd.f32 %v1718, %v1688
      %v1720 = vrot.slane %v1719, 4
      %v1721 = vadd.f32 %v1719, %v1720
      %v1722 = vrot.slane %v1721, 2
      %v1723 = vadd.f32 %v1721, %v1722
      %v1724 = vrot.slane %v1723, 1
      %v1725 = vadd.f32 %v1723, %v1724
      %v1726 = vadd.f32 %v1537, %v1545
      %v1727 = vadd.f32 %v1726, %v1553
      %v1728 = vadd.f32 %v1727, %v1561
      %v1729 = vadd.f32 %v1728, %v1569
      %v1730 = vadd.f32 %v1729, %v1577
      %v1731 = vadd.f32 %v1730, %v1585
      %v1732 = vadd.f32 %v1731, %v1593
      %v1733 = vadd.f32 %v1732, %v1601
      %v1734 = vadd.f32 %v1733, %v1609
      %v1735 = vadd.f32 %v1734, %v1617
      %v1736 = vadd.f32 %v1735, %v1625
      %v1737 = vadd.f32 %v1736, %v1633
      %v1738 = vadd.f32 %v1737, %v1641
      %v1739 = vadd.f32 %v1738, %v1649
      %v1740 = vadd.f32 %v1739, %v1657
      %v1741 = vadd.f32 %v1740, %v1665
      %v1742 = vadd.f32 %v1741, %v1673
      %v1743 = vadd.f32 %v1742, %v1681
      %v1744 = vadd.f32 %v1743, %v1689
      %v1745 = vrot.slane %v1744, 4
      %v1746 = vadd.f32 %v1744, %v1745
      %v1747 = vrot.slane %v1746, 2
      %v1748 = vadd.f32 %v1746, %v1747
      %v1749 = vrot.slane %v1748, 1
      %v1750 = vadd.f32 %v1748, %v1749
      %v1751 = vadd.f32 %v1538, %v1546
      %v1752 = vadd.f32 %v1751, %v1554
      %v1753 = vadd.f32 %v1752, %v1562
      %v1754 = vadd.f32 %v1753, %v1570
      %v1755 = vadd.f32 %v1754, %v1578
      %v1756 = vadd.f32 %v1755, %v1586
      %v1757 = vadd.f32 %v1756, %v1594
      %v1758 = vadd.f32 %v1757, %v1602
      %v1759 = vadd.f32 %v1758, %v1610
      %v1760 = vadd.f32 %v1759, %v1618
      %v1761 = vadd.f32 %v1760, %v1626
      %v1762 = vadd.f32 %v1761, %v1634
      %v1763 = vadd.f32 %v1762, %v1642
      %v1764 = vadd.f32 %v1763, %v1650
      %v1765 = vadd.f32 %v1764, %v1658
      %v1766 = vadd.f32 %v1765, %v1666
      %v1767 = vadd.f32 %v1766, %v1674
      %v1768 = vadd.f32 %v1767, %v1682
      %v1769 = vadd.f32 %v1768, %v1690
      %v1770 = vrot.slane %v1769, 4
      %v1771 = vadd.f32 %v1769, %v1770
      %v1772 = vrot.slane %v1771, 2
      %v1773 = vadd.f32 %v1771, %v1772
      %v1774 = vrot.slane %v1773, 1
      %v1775 = vadd.f32 %v1773, %v1774
      %v1776 = vadd.f32 %v1539, %v1547
      %v1777 = vadd.f32 %v1776, %v1555
      %v1778 = vadd.f32 %v1777, %v1563
      %v1779 = vadd.f32 %v1778, %v1571
      %v1780 = vadd.f32 %v1779, %v1579
      %v1781 = vadd.f32 %v1780, %v1587
      %v1782 = vadd.f32 %v1781, %v1595
      %v1783 = vadd.f32 %v1782, %v1603
      %v1784 = vadd.f32 %v1783, %v1611
      %v1785 = vadd.f32 %v1784, %v1619
      %v1786 = vadd.f32 %v1785, %v1627
      %v1787 = vadd.f32 %v1786, %v1635
      %v1788 = vadd.f32 %v1787, %v1643
      %v1789 = vadd.f32 %v1788, %v1651
      %v1790 = vadd.f32 %v1789, %v1659
      %v1791 = vadd.f32 %v1790, %v1667
      %v1792 = vadd.f32 %v1791, %v1675
      %v1793 = vadd.f32 %v1792, %v1683
      %v1794 = vadd.f32 %v1793, %v1691
      %v1795 = vrot.slane %v1794, 4
      %v1796 = vadd.f32 %v1794, %v1795
      %v1797 = vrot.slane %v1796, 2
      %v1798 = vadd.f32 %v1796, %v1797
      %v1799 = vrot.slane %v1798, 1
      %v1800 = vadd.f32 %v1798, %v1799
      %v1801 = vadd.f32 %v1540, %v1548
      %v1802 = vadd.f32 %v1801, %v1556
      %v1803 = vadd.f32 %v1802, %v1564
      %v1804 = vadd.f32 %v1803, %v1572
      %v1805 = vadd.f32 %v1804, %v1580
      %v1806 = vadd.f32 %v1805, %v1588
      %v1807 = vadd.f32 %v1806, %v1596
      %v1808 = vadd.f32 %v1807, %v1604
      %v1809 = vadd.f32 %v1808, %v1612
      %v1810 = vadd.f32 %v1809, %v1620
      %v1811 = vadd.f32 %v1810, %v1628
      %v1812 = vadd.f32 %v1811, %v1636
      %v1813 = vadd.f32 %v1812, %v1644
      %v1814 = vadd.f32 %v1813, %v1652
      %v1815 = vadd.f32 %v1814, %v1660
      %v1816 = vadd.f32 %v1815, %v1668
      %v1817 = vadd.f32 %v1816, %v1676
      %v1818 = vadd.f32 %v1817, %v1684
      %v1819 = vadd.f32 %v1818, %v1692
      %v1820 = vrot.slane %v1819, 4
      %v1821 = vadd.f32 %v1819, %v1820
      %v1822 = vrot.slane %v1821, 2
      %v1823 = vadd.f32 %v1821, %v1822
      %v1824 = vrot.slane %v1823, 1
      %v1825 = vadd.f32 %v1823, %v1824
      %v1826 = vadd.f32 %v1541, %v1549
      %v1827 = vadd.f32 %v1826, %v1557
      %v1828 = vadd.f32 %v1827, %v1565
      %v1829 = vadd.f32 %v1828, %v1573
      %v1830 = vadd.f32 %v1829, %v1581
      %v1831 = vadd.f32 %v1830, %v1589
      %v1832 = vadd.f32 %v1831, %v1597
      %v1833 = vadd.f32 %v1832, %v1605
      %v1834 = vadd.f32 %v1833, %v1613
      %v1835 = vadd.f32 %v1834, %v1621
      %v1836 = vadd.f32 %v1835, %v1629
      %v1837 = vadd.f32 %v1836, %v1637
      %v1838 = vadd.f32 %v1837, %v1645
      %v1839 = vadd.f32 %v1838, %v1653
      %v1840 = vadd.f32 %v1839, %v1661
      %v1841 = vadd.f32 %v1840, %v1669
      %v1842 = vadd.f32 %v1841, %v1677
      %v1843 = vadd.f32 %v1842, %v1685
      %v1844 = vadd.f32 %v1843, %v1693
      %v1845 = vrot.slane %v1844, 4
      %v1846 = vadd.f32 %v1844, %v1845
      %v1847 = vrot.slane %v1846, 2
      %v1848 = vadd.f32 %v1846, %v1847
      %v1849 = vrot.slane %v1848, 1
      %v1850 = vadd.f32 %v1848, %v1849
      %v1851 = vadd.f32 %v1542, %v1550
      %v1852 = vadd.f32 %v1851, %v1558
      %v1853 = vadd.f32 %v1852, %v1566
      %v1854 = vadd.f32 %v1853, %v1574
      %v1855 = vadd.f32 %v1854, %v1582
      %v1856 = vadd.f32 %v1855, %v1590
      %v1857 = vadd.f32 %v1856, %v1598
      %v1858 = vadd.f32 %v1857, %v1606
      %v1859 = vadd.f32 %v1858, %v1614
      %v1860 = vadd.f32 %v1859, %v1622
      %v1861 = vadd.f32 %v1860, %v1630
      %v1862 = vadd.f32 %v1861, %v1638
      %v1863 = vadd.f32 %v1862, %v1646
      %v1864 = vadd.f32 %v1863, %v1654
      %v1865 = vadd.f32 %v1864, %v1662
      %v1866 = vadd.f32 %v1865, %v1670
      %v1867 = vadd.f32 %v1866, %v1678
      %v1868 = vadd.f32 %v1867, %v1686
      %v1869 = vadd.f32 %v1868, %v1694
      %v1870 = vrot.slane %v1869, 4
      %v1871 = vadd.f32 %v1869, %v1870
      %v1872 = vrot.slane %v1871, 2
      %v1873 = vadd.f32 %v1871, %v1872
      %v1874 = vrot.slane %v1873, 1
      %v1875 = vadd.f32 %v1873, %v1874
      %v1876 = vadd.f32 %v1543, %v1551
      %v1877 = vadd.f32 %v1876, %v1559
      %v1878 = vadd.f32 %v1877, %v1567
      %v1879 = vadd.f32 %v1878, %v1575
      %v1880 = vadd.f32 %v1879, %v1583
      %v1881 = vadd.f32 %v1880, %v1591
      %v1882 = vadd.f32 %v1881, %v1599
      %v1883 = vadd.f32 %v1882, %v1607
      %v1884 = vadd.f32 %v1883, %v1615
      %v1885 = vadd.f32 %v1884, %v1623
      %v1886 = vadd.f32 %v1885, %v1631
      %v1887 = vadd.f32 %v1886, %v1639
      %v1888 = vadd.f32 %v1887, %v1647
      %v1889 = vadd.f32 %v1888, %v1655
      %v1890 = vadd.f32 %v1889, %v1663
      %v1891 = vadd.f32 %v1890, %v1671
      %v1892 = vadd.f32 %v1891, %v1679
      %v1893 = vadd.f32 %v1892, %v1687
      %v1894 = vadd.f32 %v1893, %v1695
      %v1895 = vrot.slane %v1894, 4
      %v1896 = vadd.f32 %v1894, %v1895
      %v1897 = vrot.slane %v1896, 2
      %v1898 = vadd.f32 %v1896, %v1897
      %v1899 = vrot.slane %v1898, 1
      %v1900 = vadd.f32 %v1898, %v1899
      %v1901 = vstv %s1700
      %v1902 = vrcp.pop %v1901
      %s1903 = vtos %v1902
      %v1904 = vstv %s1903
      %v1905 = vmul.f32 %v1725, %v1904
      %v1906 = vmul.f32 %v1750, %v1904
      %v1907 = vmul.f32 %v1775, %v1904
      %v1908 = vmul.f32 %v1800, %v1904
      %v1909 = vmul.f32 %v1825, %v1904
      %v1910 = vmul.f32 %v1850, %v1904
      %v1911 = vmul.f32 %v1875, %v1904
      %v1912 = vmul.f32 %v1900, %v1904
      %v1913 = vsub.f32 %v1536, %v1905
      %v1914 = vsub.f32 %v1537, %v1906
      %v1915 = vsub.f32 %v1538, %v1907
      %v1916 = vsub.f32 %v1539, %v1908
      %v1917 = vsub.f32 %v1540, %v1909
      %v1918 = vsub.f32 %v1541, %v1910
      %v1919 = vsub.f32 %v1542, %v1911
      %v1920 = vsub.f32 %v1543, %v1912
      %v1921 = vsub.f32 %v1544, %v1905
      %v1922 = vsub.f32 %v1545, %v1906
      %v1923 = vsub.f32 %v1546, %v1907
      %v1924 = vsub.f32 %v1547, %v1908
      %v1925 = vsub.f32 %v1548, %v1909
      %v1926 = vsub.f32 %v1549, %v1910
      %v1927 = vsub.f32 %v1550, %v1911
      %v1928 = vsub.f32 %v1551, %v1912
      %v1929 = vsub.f32 %v1552, %v1905
      %v1930 = vsub.f32 %v1553, %v1906
      %v1931 = vsub.f32 %v1554, %v1907
      %v1932 = vsub.f32 %v1555, %v1908
      %v1933 = vsub.f32 %v1556, %v1909
      %v1934 = vsub.f32 %v1557, %v1910
      %v1935 = vsub.f32 %v1558, %v1911
      %v1936 = vsub.f32 %v1559, %v1912
      %v1937 = vsub.f32 %v1560, %v1905
      %v1938 = vsub.f32 %v1561, %v1906
      %v1939 = vsub.f32 %v1562, %v1907
      %v1940 = vsub.f32 %v1563, %v1908
      %v1941 = vsub.f32 %v1564, %v1909
      %v1942 = vsub.f32 %v1565, %v1910
      %v1943 = vsub.f32 %v1566, %v1911
      %v1944 = vsub.f32 %v1567, %v1912
      %v1945 = vsub.f32 %v1568, %v1905
      %v1946 = vsub.f32 %v1569, %v1906
      %v1947 = vsub.f32 %v1570, %v1907
      %v1948 = vsub.f32 %v1571, %v1908
      %v1949 = vsub.f32 %v1572, %v1909
      %v1950 = vsub.f32 %v1573, %v1910
      %v1951 = vsub.f32 %v1574, %v1911
      %v1952 = vsub.f32 %v1575, %v1912
      %v1953 = vsub.f32 %v1576, %v1905
      %v1954 = vsub.f32 %v1577, %v1906
      %v1955 = vsub.f32 %v1578, %v1907
      %v1956 = vsub.f32 %v1579, %v1908
      %v1957 = vsub.f32 %v1580, %v1909
      %v1958 = vsub.f32 %v1581, %v1910
      %v1959 = vsub.f32 %v1582, %v1911
      %v1960 = vsub.f32 %v1583, %v1912
      %v1961 = vsub.f32 %v1584, %v1905
      %v1962 = vsub.f32 %v1585, %v1906
      %v1963 = vsub.f32 %v1586, %v1907
      %v1964 = vsub.f32 %v1587, %v1908
      %v1965 = vsub.f32 %v1588, %v1909
      %v1966 = vsub.f32 %v1589, %v1910
      %v1967 = vsub.f32 %v1590, %v1911
      %v1968 = vsub.f32 %v1591, %v1912
      %v1969 = vsub.f32 %v1592, %v1905
      %v1970 = vsub.f32 %v1593, %v1906
      %v1971 = vsub.f32 %v1594, %v1907
      %v1972 = vsub.f32 %v1595, %v1908
      %v1973 = vsub.f32 %v1596, %v1909
      %v1974 = vsub.f32 %v1597, %v1910
      %v1975 = vsub.f32 %v1598, %v1911
      %v1976 = vsub.f32 %v1599, %v1912
      %v1977 = vsub.f32 %v1600, %v1905
      %v1978 = vsub.f32 %v1601, %v1906
      %v1979 = vsub.f32 %v1602, %v1907
      %v1980 = vsub.f32 %v1603, %v1908
      %v1981 = vsub.f32 %v1604, %v1909
      %v1982 = vsub.f32 %v1605, %v1910
      %v1983 = vsub.f32 %v1606, %v1911
      %v1984 = vsub.f32 %v1607, %v1912
      %v1985 = vsub.f32 %v1608, %v1905
      %v1986 = vsub.f32 %v1609, %v1906
      %v1987 = vsub.f32 %v1610, %v1907
      %v1988 = vsub.f32 %v1611, %v1908
      %v1989 = vsub.f32 %v1612, %v1909
      %v1990 = vsub.f32 %v1613, %v1910
      %v1991 = vsub.f32 %v1614, %v1911
      %v1992 = vsub.f32 %v1615, %v1912
      %v1993 = vsub.f32 %v1616, %v1905
      %v1994 = vsub.f32 %v1617, %v1906
      %v1995 = vsub.f32 %v1618, %v1907
      %v1996 = vsub.f32 %v1619, %v1908
      %v1997 = vsub.f32 %v1620, %v1909
      %v1998 = vsub.f32 %v1621, %v1910
      %v1999 = vsub.f32 %v1622, %v1911
      %v2000 = vsub.f32 %v1623, %v1912
      %v2001 = vsub.f32 %v1624, %v1905
      %v2002 = vsub.f32 %v1625, %v1906
      %v2003 = vsub.f32 %v1626, %v1907
      %v2004 = vsub.f32 %v1627, %v1908
      %v2005 = vsub.f32 %v1628, %v1909
      %v2006 = vsub.f32 %v1629, %v1910
      %v2007 = vsub.f32 %v1630, %v1911
      %v2008 = vsub.f32 %v1631, %v1912
      %v2009 = vsub.f32 %v1632, %v1905
      %v2010 = vsub.f32 %v1633, %v1906
      %v2011 = vsub.f32 %v1634, %v1907
      %v2012 = vsub.f32 %v1635, %v1908
      %v2013 = vsub.f32 %v1636, %v1909
      %v2014 = vsub.f32 %v1637, %v1910
      %v2015 = vsub.f32 %v1638, %v1911
      %v2016 = vsub.f32 %v1639, %v1912
      %v2017 = vsub.f32 %v1640, %v1905
      %v2018 = vsub.f32 %v1641, %v1906
      %v2019 = vsub.f32 %v1642, %v1907
      %v2020 = vsub.f32 %v1643, %v1908
      %v2021 = vsub.f32 %v1644, %v1909
      %v2022 = vsub.f32 %v1645, %v1910
      %v2023 = vsub.f32 %v1646, %v1911
      %v2024 = vsub.f32 %v1647, %v1912
      %v2025 = vsub.f32 %v1648, %v1905
      %v2026 = vsub.f32 %v1649, %v1906
      %v2027 = vsub.f32 %v1650, %v1907
      %v2028 = vsub.f32 %v1651, %v1908
      %v2029 = vsub.f32 %v1652, %v1909
      %v2030 = vsub.f32 %v1653, %v1910
      %v2031 = vsub.f32 %v1654, %v1911
      %v2032 = vsub.f32 %v1655, %v1912
      %v2033 = vsub.f32 %v1656, %v1905
      %v2034 = vsub.f32 %v1657, %v1906
      %v2035 = vsub.f32 %v1658, %v1907
      %v2036 = vsub.f32 %v1659, %v1908
      %v2037 = vsub.f32 %v1660, %v1909
      %v2038 = vsub.f32 %v1661, %v1910
      %v2039 = vsub.f32 %v1662, %v1911
      %v2040 = vsub.f32 %v1663, %v1912
      %v2041 = vsub.f32 %v1664, %v1905
      %v2042 = vsub.f32 %v1665, %v1906
      %v2043 = vsub.f32 %v1666, %v1907
      %v2044 = vsub.f32 %v1667, %v1908
      %v2045 = vsub.f32 %v1668, %v1909
      %v2046 = vsub.f32 %v1669, %v1910
      %v2047 = vsub.f32 %v1670, %v1911
      %v2048 = vsub.f32 %v1671, %v1912
      %v2049 = vsub.f32 %v1672, %v1905
      %v2050 = vsub.f32 %v1673, %v1906
      %v2051 = vsub.f32 %v1674, %v1907
      %v2052 = vsub.f32 %v1675, %v1908
      %v2053 = vsub.f32 %v1676, %v1909
      %v2054 = vsub.f32 %v1677, %v1910
      %v2055 = vsub.f32 %v1678, %v1911
      %v2056 = vsub.f32 %v1679, %v1912
      %v2057 = vsub.f32 %v1680, %v1905
      %v2058 = vsub.f32 %v1681, %v1906
      %v2059 = vsub.f32 %v1682, %v1907
      %v2060 = vsub.f32 %v1683, %v1908
      %v2061 = vsub.f32 %v1684, %v1909
      %v2062 = vsub.f32 %v1685, %v1910
      %v2063 = vsub.f32 %v1686, %v1911
      %v2064 = vsub.f32 %v1687, %v1912
      %v2065 = vsub.f32 %v1688, %v1905
      %v2066 = vsub.f32 %v1689, %v1906
      %v2067 = vsub.f32 %v1690, %v1907
      %v2068 = vsub.f32 %v1691, %v1908
      %v2069 = vsub.f32 %v1692, %v1909
      %v2070 = vsub.f32 %v1693, %v1910
      %v2071 = vsub.f32 %v1694, %v1911
      %v2072 = vsub.f32 %v1695, %v1912
      %v2073 = vsel %vm1516, %v1913, 0.0
      %v2074 = vsel %vm1516, %v1914, 0.0
      %v2075 = vsel %vm1516, %v1915, 0.0
      %v2076 = vsel %vm1516, %v1916, 0.0
      %v2077 = vsel %vm1516, %v1917, 0.0
      %v2078 = vsel %vm1516, %v1918, 0.0
      %v2079 = vsel %vm1516, %v1919, 0.0
      %v2080 = vsel %vm1516, %v1920, 0.0
      %v2081 = vsel %vm1517, %v1921, 0.0
      %v2082 = vsel %vm1517, %v1922, 0.0
      %v2083 = vsel %vm1517, %v1923, 0.0
      %v2084 = vsel %vm1517, %v1924, 0.0
      %v2085 = vsel %vm1517, %v1925, 0.0
      %v2086 = vsel %vm1517, %v1926, 0.0
      %v2087 = vsel %vm1517, %v1927, 0.0
      %v2088 = vsel %vm1517, %v1928, 0.0
      %v2089 = vsel %vm1518, %v1929, 0.0
      %v2090 = vsel %vm1518, %v1930, 0.0
      %v2091 = vsel %vm1518, %v1931, 0.0
      %v2092 = vsel %vm1518, %v1932, 0.0
      %v2093 = vsel %vm1518, %v1933, 0.0
      %v2094 = vsel %vm1518, %v1934, 0.0
      %v2095 = vsel %vm1518, %v1935, 0.0
      %v2096 = vsel %vm1518, %v1936, 0.0
      %v2097 = vsel %vm1519, %v1937, 0.0
      %v2098 = vsel %vm1519, %v1938, 0.0
      %v2099 = vsel %vm1519, %v1939, 0.0
      %v2100 = vsel %vm1519, %v1940, 0.0
      %v2101 = vsel %vm1519, %v1941, 0.0
      %v2102 = vsel %vm1519, %v1942, 0.0
      %v2103 = vsel %vm1519, %v1943, 0.0
      %v2104 = vsel %vm1519, %v1944, 0.0
      %v2105 = vsel %vm1520, %v1945, 0.0
      %v2106 = vsel %vm1520, %v1946, 0.0
      %v2107 = vsel %vm1520, %v1947, 0.0
      %v2108 = vsel %vm1520, %v1948, 0.0
      %v2109 = vsel %vm1520, %v1949, 0.0
      %v2110 = vsel %vm1520, %v1950, 0.0
      %v2111 = vsel %vm1520, %v1951, 0.0
      %v2112 = vsel %vm1520, %v1952, 0.0
      %v2113 = vsel %vm1521, %v1953, 0.0
      %v2114 = vsel %vm1521, %v1954, 0.0
      %v2115 = vsel %vm1521, %v1955, 0.0
      %v2116 = vsel %vm1521, %v1956, 0.0
      %v2117 = vsel %vm1521, %v1957, 0.0
      %v2118 = vsel %vm1521, %v1958, 0.0
      %v2119 = vsel %vm1521, %v1959, 0.0
      %v2120 = vsel %vm1521, %v1960, 0.0
      %v2121 = vsel %vm1522, %v1961, 0.0
      %v2122 = vsel %vm1522, %v1962, 0.0
      %v2123 = vsel %vm1522, %v1963, 0.0
      %v2124 = vsel %vm1522, %v1964, 0.0
      %v2125 = vsel %vm1522, %v1965, 0.0
      %v2126 = vsel %vm1522, %v1966, 0.0
      %v2127 = vsel %vm1522, %v1967, 0.0
      %v2128 = vsel %vm1522, %v1968, 0.0
      %v2129 = vsel %vm1523, %v1969, 0.0
      %v2130 = vsel %vm1523, %v1970, 0.0
      %v2131 = vsel %vm1523, %v1971, 0.0
      %v2132 = vsel %vm1523, %v1972, 0.0
      %v2133 = vsel %vm1523, %v1973, 0.0
      %v2134 = vsel %vm1523, %v1974, 0.0
      %v2135 = vsel %vm1523, %v1975, 0.0
      %v2136 = vsel %vm1523, %v1976, 0.0
      %v2137 = vsel %vm1524, %v1977, 0.0
      %v2138 = vsel %vm1524, %v1978, 0.0
      %v2139 = vsel %vm1524, %v1979, 0.0
      %v2140 = vsel %vm1524, %v1980, 0.0
      %v2141 = vsel %vm1524, %v1981, 0.0
      %v2142 = vsel %vm1524, %v1982, 0.0
      %v2143 = vsel %vm1524, %v1983, 0.0
      %v2144 = vsel %vm1524, %v1984, 0.0
      %v2145 = vsel %vm1525, %v1985, 0.0
      %v2146 = vsel %vm1525, %v1986, 0.0
      %v2147 = vsel %vm1525, %v1987, 0.0
      %v2148 = vsel %vm1525, %v1988, 0.0
      %v2149 = vsel %vm1525, %v1989, 0.0
      %v2150 = vsel %vm1525, %v1990, 0.0
      %v2151 = vsel %vm1525, %v1991, 0.0
      %v2152 = vsel %vm1525, %v1992, 0.0
      %v2153 = vsel %vm1526, %v1993, 0.0
      %v2154 = vsel %vm1526, %v1994, 0.0
      %v2155 = vsel %vm1526, %v1995, 0.0
      %v2156 = vsel %vm1526, %v1996, 0.0
      %v2157 = vsel %vm1526, %v1997, 0.0
      %v2158 = vsel %vm1526, %v1998, 0.0
      %v2159 = vsel %vm1526, %v1999, 0.0
      %v2160 = vsel %vm1526, %v2000, 0.0
      %v2161 = vsel %vm1527, %v2001, 0.0
      %v2162 = vsel %vm1527, %v2002, 0.0
      %v2163 = vsel %vm1527, %v2003, 0.0
      %v2164 = vsel %vm1527, %v2004, 0.0
      %v2165 = vsel %vm1527, %v2005, 0.0
      %v2166 = vsel %vm1527, %v2006, 0.0
      %v2167 = vsel %vm1527, %v2007, 0.0
      %v2168 = vsel %vm1527, %v2008, 0.0
      %v2169 = vsel %vm1528, %v2009, 0.0
      %v2170 = vsel %vm1528, %v2010, 0.0
      %v2171 = vsel %vm1528, %v2011, 0.0
      %v2172 = vsel %vm1528, %v2012, 0.0
      %v2173 = vsel %vm1528, %v2013, 0.0
      %v2174 = vsel %vm1528, %v2014, 0.0
      %v2175 = vsel %vm1528, %v2015, 0.0
      %v2176 = vsel %vm1528, %v2016, 0.0
      %v2177 = vsel %vm1529, %v2017, 0.0
      %v2178 = vsel %vm1529, %v2018, 0.0
      %v2179 = vsel %vm1529, %v2019, 0.0
      %v2180 = vsel %vm1529, %v2020, 0.0
      %v2181 = vsel %vm1529, %v2021, 0.0
      %v2182 = vsel %vm1529, %v2022, 0.0
      %v2183 = vsel %vm1529, %v2023, 0.0
      %v2184 = vsel %vm1529, %v2024, 0.0
      %v2185 = vsel %vm1530, %v2025, 0.0
      %v2186 = vsel %vm1530, %v2026, 0.0
      %v2187 = vsel %vm1530, %v2027, 0.0
      %v2188 = vsel %vm1530, %v2028, 0.0
      %v2189 = vsel %vm1530, %v2029, 0.0
      %v2190 = vsel %vm1530, %v2030, 0.0
      %v2191 = vsel %vm1530, %v2031, 0.0
      %v2192 = vsel %vm1530, %v2032, 0.0
      %v2193 = vsel %vm1531, %v2033, 0.0
      %v2194 = vsel %vm1531, %v2034, 0.0
      %v2195 = vsel %vm1531, %v2035, 0.0
      %v2196 = vsel %vm1531, %v2036, 0.0
      %v2197 = vsel %vm1531, %v2037, 0.0
      %v2198 = vsel %vm1531, %v2038, 0.0
      %v2199 = vsel %vm1531, %v2039, 0.0
      %v2200 = vsel %vm1531, %v2040, 0.0
      %v2201 = vsel %vm1532, %v2041, 0.0
      %v2202 = vsel %vm1532, %v2042, 0.0
      %v2203 = vsel %vm1532, %v2043, 0.0
      %v2204 = vsel %vm1532, %v2044, 0.0
      %v2205 = vsel %vm1532, %v2045, 0.0
      %v2206 = vsel %vm1532, %v2046, 0.0
      %v2207 = vsel %vm1532, %v2047, 0.0
      %v2208 = vsel %vm1532, %v2048, 0.0
      %v2209 = vsel %vm1533, %v2049, 0.0
      %v2210 = vsel %vm1533, %v2050, 0.0
      %v2211 = vsel %vm1533, %v2051, 0.0
      %v2212 = vsel %vm1533, %v2052, 0.0
      %v2213 = vsel %vm1533, %v2053, 0.0
      %v2214 = vsel %vm1533, %v2054, 0.0
      %v2215 = vsel %vm1533, %v2055, 0.0
      %v2216 = vsel %vm1533, %v2056, 0.0
      %v2217 = vsel %vm1534, %v2057, 0.0
      %v2218 = vsel %vm1534, %v2058, 0.0
      %v2219 = vsel %vm1534, %v2059, 0.0
      %v2220 = vsel %vm1534, %v2060, 0.0
      %v2221 = vsel %vm1534, %v2061, 0.0
      %v2222 = vsel %vm1534, %v2062, 0.0
      %v2223 = vsel %vm1534, %v2063, 0.0
      %v2224 = vsel %vm1534, %v2064, 0.0
      %v2225 = vsel %vm1535, %v2065, 0.0
      %v2226 = vsel %vm1535, %v2066, 0.0
      %v2227 = vsel %vm1535, %v2067, 0.0
      %v2228 = vsel %vm1535, %v2068, 0.0
      %v2229 = vsel %vm1535, %v2069, 0.0
      %v2230 = vsel %vm1535, %v2070, 0.0
      %v2231 = vsel %vm1535, %v2071, 0.0
      %v2232 = vsel %vm1535, %v2072, 0.0
      %v2233 = vmul.f32 %v2073, %v2073
      %v2234 = vmul.f32 %v2074, %v2074
      %v2235 = vmul.f32 %v2075, %v2075
      %v2236 = vmul.f32 %v2076, %v2076
      %v2237 = vmul.f32 %v2077, %v2077
      %v2238 = vmul.f32 %v2078, %v2078
      %v2239 = vmul.f32 %v2079, %v2079
      %v2240 = vmul.f32 %v2080, %v2080
      %v2241 = vmul.f32 %v2081, %v2081
      %v2242 = vmul.f32 %v2082, %v2082
      %v2243 = vmul.f32 %v2083, %v2083
      %v2244 = vmul.f32 %v2084, %v2084
      %v2245 = vmul.f32 %v2085, %v2085
      %v2246 = vmul.f32 %v2086, %v2086
      %v2247 = vmul.f32 %v2087, %v2087
      %v2248 = vmul.f32 %v2088, %v2088
      %v2249 = vmul.f32 %v2089, %v2089
      %v2250 = vmul.f32 %v2090, %v2090
      %v2251 = vmul.f32 %v2091, %v2091
      %v2252 = vmul.f32 %v2092, %v2092
      %v2253 = vmul.f32 %v2093, %v2093
      %v2254 = vmul.f32 %v2094, %v2094
      %v2255 = vmul.f32 %v2095, %v2095
      %v2256 = vmul.f32 %v2096, %v2096
      %v2257 = vmul.f32 %v2097, %v2097
      %v2258 = vmul.f32 %v2098, %v2098
      %v2259 = vmul.f32 %v2099, %v2099
      %v2260 = vmul.f32 %v2100, %v2100
      %v2261 = vmul.f32 %v2101, %v2101
      %v2262 = vmul.f32 %v2102, %v2102
      %v2263 = vmul.f32 %v2103, %v2103
      %v2264 = vmul.f32 %v2104, %v2104
      %v2265 = vmul.f32 %v2105, %v2105
      %v2266 = vmul.f32 %v2106, %v2106
      %v2267 = vmul.f32 %v2107, %v2107
      %v2268 = vmul.f32 %v2108, %v2108
      %v2269 = vmul.f32 %v2109, %v2109
      %v2270 = vmul.f32 %v2110, %v2110
      %v2271 = vmul.f32 %v2111, %v2111
      %v2272 = vmul.f32 %v2112, %v2112
      %v2273 = vmul.f32 %v2113, %v2113
      %v2274 = vmul.f32 %v2114, %v2114
      %v2275 = vmul.f32 %v2115, %v2115
      %v2276 = vmul.f32 %v2116, %v2116
      %v2277 = vmul.f32 %v2117, %v2117
      %v2278 = vmul.f32 %v2118, %v2118
      %v2279 = vmul.f32 %v2119, %v2119
      %v2280 = vmul.f32 %v2120, %v2120
      %v2281 = vmul.f32 %v2121, %v2121
      %v2282 = vmul.f32 %v2122, %v2122
      %v2283 = vmul.f32 %v2123, %v2123
      %v2284 = vmul.f32 %v2124, %v2124
      %v2285 = vmul.f32 %v2125, %v2125
      %v2286 = vmul.f32 %v2126, %v2126
      %v2287 = vmul.f32 %v2127, %v2127
      %v2288 = vmul.f32 %v2128, %v2128
      %v2289 = vmul.f32 %v2129, %v2129
      %v2290 = vmul.f32 %v2130, %v2130
      %v2291 = vmul.f32 %v2131, %v2131
      %v2292 = vmul.f32 %v2132, %v2132
      %v2293 = vmul.f32 %v2133, %v2133
      %v2294 = vmul.f32 %v2134, %v2134
      %v2295 = vmul.f32 %v2135, %v2135
      %v2296 = vmul.f32 %v2136, %v2136
      %v2297 = vmul.f32 %v2137, %v2137
      %v2298 = vmul.f32 %v2138, %v2138
      %v2299 = vmul.f32 %v2139, %v2139
      %v2300 = vmul.f32 %v2140, %v2140
      %v2301 = vmul.f32 %v2141, %v2141
      %v2302 = vmul.f32 %v2142, %v2142
      %v2303 = vmul.f32 %v2143, %v2143
      %v2304 = vmul.f32 %v2144, %v2144
      %v2305 = vmul.f32 %v2145, %v2145
      %v2306 = vmul.f32 %v2146, %v2146
      %v2307 = vmul.f32 %v2147, %v2147
      %v2308 = vmul.f32 %v2148, %v2148
      %v2309 = vmul.f32 %v2149, %v2149
      %v2310 = vmul.f32 %v2150, %v2150
      %v2311 = vmul.f32 %v2151, %v2151
      %v2312 = vmul.f32 %v2152, %v2152
      %v2313 = vmul.f32 %v2153, %v2153
      %v2314 = vmul.f32 %v2154, %v2154
      %v2315 = vmul.f32 %v2155, %v2155
      %v2316 = vmul.f32 %v2156, %v2156
      %v2317 = vmul.f32 %v2157, %v2157
      %v2318 = vmul.f32 %v2158, %v2158
      %v2319 = vmul.f32 %v2159, %v2159
      %v2320 = vmul.f32 %v2160, %v2160
      %v2321 = vmul.f32 %v2161, %v2161
      %v2322 = vmul.f32 %v2162, %v2162
      %v2323 = vmul.f32 %v2163, %v2163
      %v2324 = vmul.f32 %v2164, %v2164
      %v2325 = vmul.f32 %v2165, %v2165
      %v2326 = vmul.f32 %v2166, %v2166
      %v2327 = vmul.f32 %v2167, %v2167
      %v2328 = vmul.f32 %v2168, %v2168
      %v2329 = vmul.f32 %v2169, %v2169
      %v2330 = vmul.f32 %v2170, %v2170
      %v2331 = vmul.f32 %v2171, %v2171
      %v2332 = vmul.f32 %v2172, %v2172
      %v2333 = vmul.f32 %v2173, %v2173
      %v2334 = vmul.f32 %v2174, %v2174
      %v2335 = vmul.f32 %v2175, %v2175
      %v2336 = vmul.f32 %v2176, %v2176
      %v2337 = vmul.f32 %v2177, %v2177
      %v2338 = vmul.f32 %v2178, %v2178
      %v2339 = vmul.f32 %v2179, %v2179
      %v2340 = vmul.f32 %v2180, %v2180
      %v2341 = vmul.f32 %v2181, %v2181
      %v2342 = vmul.f32 %v2182, %v2182
      %v2343 = vmul.f32 %v2183, %v2183
      %v2344 = vmul.f32 %v2184, %v2184
      %v2345 = vmul.f32 %v2185, %v2185
      %v2346 = vmul.f32 %v2186, %v2186
      %v2347 = vmul.f32 %v2187, %v2187
      %v2348 = vmul.f32 %v2188, %v2188
      %v2349 = vmul.f32 %v2189, %v2189
      %v2350 = vmul.f32 %v2190, %v2190
      %v2351 = vmul.f32 %v2191, %v2191
      %v2352 = vmul.f32 %v2192, %v2192
      %v2353 = vmul.f32 %v2193, %v2193
      %v2354 = vmul.f32 %v2194, %v2194
      %v2355 = vmul.f32 %v2195, %v2195
      %v2356 = vmul.f32 %v2196, %v2196
      %v2357 = vmul.f32 %v2197, %v2197
      %v2358 = vmul.f32 %v2198, %v2198
      %v2359 = vmul.f32 %v2199, %v2199
      %v2360 = vmul.f32 %v2200, %v2200
      %v2361 = vmul.f32 %v2201, %v2201
      %v2362 = vmul.f32 %v2202, %v2202
      %v2363 = vmul.f32 %v2203, %v2203
      %v2364 = vmul.f32 %v2204, %v2204
      %v2365 = vmul.f32 %v2205, %v2205
      %v2366 = vmul.f32 %v2206, %v2206
      %v2367 = vmul.f32 %v2207, %v2207
      %v2368 = vmul.f32 %v2208, %v2208
      %v2369 = vmul.f32 %v2209, %v2209
      %v2370 = vmul.f32 %v2210, %v2210
      %v2371 = vmul.f32 %v2211, %v2211
      %v2372 = vmul.f32 %v2212, %v2212
      %v2373 = vmul.f32 %v2213, %v2213
      %v2374 = vmul.f32 %v2214, %v2214
      %v2375 = vmul.f32 %v2215, %v2215
      %v2376 = vmul.f32 %v2216, %v2216
      %v2377 = vmul.f32 %v2217, %v2217
      %v2378 = vmul.f32 %v2218, %v2218
      %v2379 = vmul.f32 %v2219, %v2219
      %v2380 = vmul.f32 %v2220, %v2220
      %v2381 = vmul.f32 %v2221, %v2221
      %v2382 = vmul.f32 %v2222, %v2222
      %v2383 = vmul.f32 %v2223, %v2223
      %v2384 = vmul.f32 %v2224, %v2224
      %v2385 = vmul.f32 %v2225, %v2225
      %v2386 = vmul.f32 %v2226, %v2226
      %v2387 = vmul.f32 %v2227, %v2227
      %v2388 = vmul.f32 %v2228, %v2228
      %v2389 = vmul.f32 %v2229, %v2229
      %v2390 = vmul.f32 %v2230, %v2230
      %v2391 = vmul.f32 %v2231, %v2231
      %v2392 = vmul.f32 %v2232, %v2232
      %v2393 = vadd.f32 %v2233, %v2241
      %v2394 = vadd.f32 %v2393, %v2249
      %v2395 = vadd.f32 %v2394, %v2257
      %v2396 = vadd.f32 %v2395, %v2265
      %v2397 = vadd.f32 %v2396, %v2273
      %v2398 = vadd.f32 %v2397, %v2281
      %v2399 = vadd.f32 %v2398, %v2289
      %v2400 = vadd.f32 %v2399, %v2297
      %v2401 = vadd.f32 %v2400, %v2305
      %v2402 = vadd.f32 %v2401, %v2313
      %v2403 = vadd.f32 %v2402, %v2321
      %v2404 = vadd.f32 %v2403, %v2329
      %v2405 = vadd.f32 %v2404, %v2337
      %v2406 = vadd.f32 %v2405, %v2345
      %v2407 = vadd.f32 %v2406, %v2353
      %v2408 = vadd.f32 %v2407, %v2361
      %v2409 = vadd.f32 %v2408, %v2369
      %v2410 = vadd.f32 %v2409, %v2377
      %v2411 = vadd.f32 %v2410, %v2385
      %v2412 = vrot.slane %v2411, 4
      %v2413 = vadd.f32 %v2411, %v2412
      %v2414 = vrot.slane %v2413, 2
      %v2415 = vadd.f32 %v2413, %v2414
      %v2416 = vrot.slane %v2415, 1
      %v2417 = vadd.f32 %v2415, %v2416
      %v2418 = vadd.f32 %v2234, %v2242
      %v2419 = vadd.f32 %v2418, %v2250
      %v2420 = vadd.f32 %v2419, %v2258
      %v2421 = vadd.f32 %v2420, %v2266
      %v2422 = vadd.f32 %v2421, %v2274
      %v2423 = vadd.f32 %v2422, %v2282
      %v2424 = vadd.f32 %v2423, %v2290
      %v2425 = vadd.f32 %v2424, %v2298
      %v2426 = vadd.f32 %v2425, %v2306
      %v2427 = vadd.f32 %v2426, %v2314
      %v2428 = vadd.f32 %v2427, %v2322
      %v2429 = vadd.f32 %v2428, %v2330
      %v2430 = vadd.f32 %v2429, %v2338
      %v2431 = vadd.f32 %v2430, %v2346
      %v2432 = vadd.f32 %v2431, %v2354
      %v2433 = vadd.f32 %v2432, %v2362
      %v2434 = vadd.f32 %v2433, %v2370
      %v2435 = vadd.f32 %v2434, %v2378
      %v2436 = vadd.f32 %v2435, %v2386
      %v2437 = vrot.slane %v2436, 4
      %v2438 = vadd.f32 %v2436, %v2437
      %v2439 = vrot.slane %v2438, 2
      %v2440 = vadd.f32 %v2438, %v2439
      %v2441 = vrot.slane %v2440, 1
      %v2442 = vadd.f32 %v2440, %v2441
      %v2443 = vadd.f32 %v2235, %v2243
      %v2444 = vadd.f32 %v2443, %v2251
      %v2445 = vadd.f32 %v2444, %v2259
      %v2446 = vadd.f32 %v2445, %v2267
      %v2447 = vadd.f32 %v2446, %v2275
      %v2448 = vadd.f32 %v2447, %v2283
      %v2449 = vadd.f32 %v2448, %v2291
      %v2450 = vadd.f32 %v2449, %v2299
      %v2451 = vadd.f32 %v2450, %v2307
      %v2452 = vadd.f32 %v2451, %v2315
      %v2453 = vadd.f32 %v2452, %v2323
      %v2454 = vadd.f32 %v2453, %v2331
      %v2455 = vadd.f32 %v2454, %v2339
      %v2456 = vadd.f32 %v2455, %v2347
      %v2457 = vadd.f32 %v2456, %v2355
      %v2458 = vadd.f32 %v2457, %v2363
      %v2459 = vadd.f32 %v2458, %v2371
      %v2460 = vadd.f32 %v2459, %v2379
      %v2461 = vadd.f32 %v2460, %v2387
      %v2462 = vrot.slane %v2461, 4
      %v2463 = vadd.f32 %v2461, %v2462
      %v2464 = vrot.slane %v2463, 2
      %v2465 = vadd.f32 %v2463, %v2464
      %v2466 = vrot.slane %v2465, 1
      %v2467 = vadd.f32 %v2465, %v2466
      %v2468 = vadd.f32 %v2236, %v2244
      %v2469 = vadd.f32 %v2468, %v2252
      %v2470 = vadd.f32 %v2469, %v2260
      %v2471 = vadd.f32 %v2470, %v2268
      %v2472 = vadd.f32 %v2471, %v2276
      %v2473 = vadd.f32 %v2472, %v2284
      %v2474 = vadd.f32 %v2473, %v2292
      %v2475 = vadd.f32 %v2474, %v2300
      %v2476 = vadd.f32 %v2475, %v2308
      %v2477 = vadd.f32 %v2476, %v2316
      %v2478 = vadd.f32 %v2477, %v2324
      %v2479 = vadd.f32 %v2478, %v2332
      %v2480 = vadd.f32 %v2479, %v2340
      %v2481 = vadd.f32 %v2480, %v2348
      %v2482 = vadd.f32 %v2481, %v2356
      %v2483 = vadd.f32 %v2482, %v2364
      %v2484 = vadd.f32 %v2483, %v2372
      %v2485 = vadd.f32 %v2484, %v2380
      %v2486 = vadd.f32 %v2485, %v2388
      %v2487 = vrot.slane %v2486, 4
      %v2488 = vadd.f32 %v2486, %v2487
      %v2489 = vrot.slane %v2488, 2
      %v2490 = vadd.f32 %v2488, %v2489
      %v2491 = vrot.slane %v2490, 1
      %v2492 = vadd.f32 %v2490, %v2491
      %v2493 = vadd.f32 %v2237, %v2245
      %v2494 = vadd.f32 %v2493, %v2253
      %v2495 = vadd.f32 %v2494, %v2261
      %v2496 = vadd.f32 %v2495, %v2269
      %v2497 = vadd.f32 %v2496, %v2277
      %v2498 = vadd.f32 %v2497, %v2285
      %v2499 = vadd.f32 %v2498, %v2293
      %v2500 = vadd.f32 %v2499, %v2301
      %v2501 = vadd.f32 %v2500, %v2309
      %v2502 = vadd.f32 %v2501, %v2317
      %v2503 = vadd.f32 %v2502, %v2325
      %v2504 = vadd.f32 %v2503, %v2333
      %v2505 = vadd.f32 %v2504, %v2341
      %v2506 = vadd.f32 %v2505, %v2349
      %v2507 = vadd.f32 %v2506, %v2357
      %v2508 = vadd.f32 %v2507, %v2365
      %v2509 = vadd.f32 %v2508, %v2373
      %v2510 = vadd.f32 %v2509, %v2381
      %v2511 = vadd.f32 %v2510, %v2389
      %v2512 = vrot.slane %v2511, 4
      %v2513 = vadd.f32 %v2511, %v2512
      %v2514 = vrot.slane %v2513, 2
      %v2515 = vadd.f32 %v2513, %v2514
      %v2516 = vrot.slane %v2515, 1
      %v2517 = vadd.f32 %v2515, %v2516
      %v2518 = vadd.f32 %v2238, %v2246
      %v2519 = vadd.f32 %v2518, %v2254
      %v2520 = vadd.f32 %v2519, %v2262
      %v2521 = vadd.f32 %v2520, %v2270
      %v2522 = vadd.f32 %v2521, %v2278
      %v2523 = vadd.f32 %v2522, %v2286
      %v2524 = vadd.f32 %v2523, %v2294
      %v2525 = vadd.f32 %v2524, %v2302
      %v2526 = vadd.f32 %v2525, %v2310
      %v2527 = vadd.f32 %v2526, %v2318
      %v2528 = vadd.f32 %v2527, %v2326
      %v2529 = vadd.f32 %v2528, %v2334
      %v2530 = vadd.f32 %v2529, %v2342
      %v2531 = vadd.f32 %v2530, %v2350
      %v2532 = vadd.f32 %v2531, %v2358
      %v2533 = vadd.f32 %v2532, %v2366
      %v2534 = vadd.f32 %v2533, %v2374
      %v2535 = vadd.f32 %v2534, %v2382
      %v2536 = vadd.f32 %v2535, %v2390
      %v2537 = vrot.slane %v2536, 4
      %v2538 = vadd.f32 %v2536, %v2537
      %v2539 = vrot.slane %v2538, 2
      %v2540 = vadd.f32 %v2538, %v2539
      %v2541 = vrot.slane %v2540, 1
      %v2542 = vadd.f32 %v2540, %v2541
      %v2543 = vadd.f32 %v2239, %v2247
      %v2544 = vadd.f32 %v2543, %v2255
      %v2545 = vadd.f32 %v2544, %v2263
      %v2546 = vadd.f32 %v2545, %v2271
      %v2547 = vadd.f32 %v2546, %v2279
      %v2548 = vadd.f32 %v2547, %v2287
      %v2549 = vadd.f32 %v2548, %v2295
      %v2550 = vadd.f32 %v2549, %v2303
      %v2551 = vadd.f32 %v2550, %v2311
      %v2552 = vadd.f32 %v2551, %v2319
      %v2553 = vadd.f32 %v2552, %v2327
      %v2554 = vadd.f32 %v2553, %v2335
      %v2555 = vadd.f32 %v2554, %v2343
      %v2556 = vadd.f32 %v2555, %v2351
      %v2557 = vadd.f32 %v2556, %v2359
      %v2558 = vadd.f32 %v2557, %v2367
      %v2559 = vadd.f32 %v2558, %v2375
      %v2560 = vadd.f32 %v2559, %v2383
      %v2561 = vadd.f32 %v2560, %v2391
      %v2562 = vrot.slane %v2561, 4
      %v2563 = vadd.f32 %v2561, %v2562
      %v2564 = vrot.slane %v2563, 2
      %v2565 = vadd.f32 %v2563, %v2564
      %v2566 = vrot.slane %v2565, 1
      %v2567 = vadd.f32 %v2565, %v2566
      %v2568 = vadd.f32 %v2240, %v2248
      %v2569 = vadd.f32 %v2568, %v2256
      %v2570 = vadd.f32 %v2569, %v2264
      %v2571 = vadd.f32 %v2570, %v2272
      %v2572 = vadd.f32 %v2571, %v2280
      %v2573 = vadd.f32 %v2572, %v2288
      %v2574 = vadd.f32 %v2573, %v2296
      %v2575 = vadd.f32 %v2574, %v2304
      %v2576 = vadd.f32 %v2575, %v2312
      %v2577 = vadd.f32 %v2576, %v2320
      %v2578 = vadd.f32 %v2577, %v2328
      %v2579 = vadd.f32 %v2578, %v2336
      %v2580 = vadd.f32 %v2579, %v2344
      %v2581 = vadd.f32 %v2580, %v2352
      %v2582 = vadd.f32 %v2581, %v2360
      %v2583 = vadd.f32 %v2582, %v2368
      %v2584 = vadd.f32 %v2583, %v2376
      %v2585 = vadd.f32 %v2584, %v2384
      %v2586 = vadd.f32 %v2585, %v2392
      %v2587 = vrot.slane %v2586, 4
      %v2588 = vadd.f32 %v2586, %v2587
      %v2589 = vrot.slane %v2588, 2
      %v2590 = vadd.f32 %v2588, %v2589
      %v2591 = vrot.slane %v2590, 1
      %v2592 = vadd.f32 %v2590, %v2591
      %vm2593 = vcmask 1040384
      %v2594 = vsel %vm2593, %v1725, %v2417
      %v2595 = vsel %vm2593, %v1750, %v2442
      %v2596 = vsel %vm2593, %v1775, %v2467
      %v2597 = vsel %vm2593, %v1800, %v2492
      %v2598 = vsel %vm2593, %v1825, %v2517
      %v2599 = vsel %vm2593, %v1850, %v2542
      %v2600 = vsel %vm2593, %v1875, %v2567
      %v2601 = vsel %vm2593, %v1900, %v2592
      %v2610 = vcombine.low %v2594, %v2595
      %v2611 = vcombine.low %v2596, %v2597
      %v2613 = vunpack.c.l.s4 1983009808
      %v2614 = vunpack.c.0.s8 %v2613
      %v2615 = vlaneseq
      %v2616 = vshrl.u32 %v2615, 7
      %v2617 = vsub.s32 %v2614, %v2616
      %v2618 = vrot.slane %v2610, %v2617
      %v2620 = vunpack.c.l.s4 1983009808
      %v2621 = vunpack.c.0.s8 %v2620
      %v2622 = vlaneseq
      %v2623 = vshrl.u32 %v2622, 7
      %v2624 = vsub.s32 %v2621, %v2623
      %v2625 = vrot.slane %v2611, %v2624
      %v2626 = vcombine.low %v2618, %v2625
      %v2627 = vcombine.low %v2598, %v2599
      %v2628 = vcombine.low %v2600, %v2601
      %v2630 = vunpack.c.l.s4 1983009808
      %v2631 = vunpack.c.0.s8 %v2630
      %v2632 = vlaneseq
      %v2633 = vshrl.u32 %v2632, 7
      %v2634 = vsub.s32 %v2631, %v2633
      %v2635 = vrot.slane %v2627, %v2634
      %v2637 = vunpack.c.l.s4 1983009808
      %v2638 = vunpack.c.0.s8 %v2637
      %v2639 = vlaneseq
      %v2640 = vshrl.u32 %v2639, 7
      %v2641 = vsub.s32 %v2638, %v2640
      %v2642 = vrot.slane %v2628, %v2641
      %v2643 = vcombine.low %v2635, %v2642
      %2646 = vst [vmem:[%s252] sm:$0xff] %v2626
      %2647 = vst [vmem:[%s252 + $0x8] sm:$0xff] %v2643
      %v2648 = vmax.f32 %v1536, %v1544
      %v2649 = vmax.f32 %v2648, %v1552
      %v2650 = vmax.f32 %v2649, %v1560
      %v2651 = vmax.f32 %v2650, %v1568
      %v2652 = vmax.f32 %v2651, %v1576
      %v2653 = vmax.f32 %v2652, %v1584
      %v2654 = vmax.f32 %v2653, %v1592
      %v2655 = vmax.f32 %v2654, %v1600
      %v2656 = vmax.f32 %v2655, %v1608
      %v2657 = vmax.f32 %v2656, %v1616
      %v2658 = vmax.f32 %v2657, %v1624
      %v2659 = vmax.f32 %v2658, %v1632
      %v2660 = vmax.f32 %v2659, %v1640
      %v2661 = vmax.f32 %v2660, %v1648
      %v2662 = vmax.f32 %v2661, %v1656
      %v2663 = vmax.f32 %v2662, %v1664
      %v2664 = vmax.f32 %v2663, %v1672
      %v2665 = vmax.f32 %v2664, %v1680
      %v2666 = vmax.f32 %v2665, %v1688
      %v2667 = vrot.slane %v2666, 4
      %v2668 = vmax.f32 %v2666, %v2667
      %v2669 = vrot.slane %v2668, 2
      %v2670 = vmax.f32 %v2668, %v2669
      %v2671 = vrot.slane %v2670, 1
      %v2672 = vmax.f32 %v2670, %v2671
      %v2673 = vmax.f32 %v1537, %v1545
      %v2674 = vmax.f32 %v2673, %v1553
      %v2675 = vmax.f32 %v2674, %v1561
      %v2676 = vmax.f32 %v2675, %v1569
      %v2677 = vmax.f32 %v2676, %v1577
      %v2678 = vmax.f32 %v2677, %v1585
      %v2679 = vmax.f32 %v2678, %v1593
      %v2680 = vmax.f32 %v2679, %v1601
      %v2681 = vmax.f32 %v2680, %v1609
      %v2682 = vmax.f32 %v2681, %v1617
      %v2683 = vmax.f32 %v2682, %v1625
      %v2684 = vmax.f32 %v2683, %v1633
      %v2685 = vmax.f32 %v2684, %v1641
      %v2686 = vmax.f32 %v2685, %v1649
      %v2687 = vmax.f32 %v2686, %v1657
      %v2688 = vmax.f32 %v2687, %v1665
      %v2689 = vmax.f32 %v2688, %v1673
      %v2690 = vmax.f32 %v2689, %v1681
      %v2691 = vmax.f32 %v2690, %v1689
      %v2692 = vrot.slane %v2691, 4
      %v2693 = vmax.f32 %v2691, %v2692
      %v2694 = vrot.slane %v2693, 2
      %v2695 = vmax.f32 %v2693, %v2694
      %v2696 = vrot.slane %v2695, 1
      %v2697 = vmax.f32 %v2695, %v2696
      %v2698 = vmax.f32 %v1538, %v1546
      %v2699 = vmax.f32 %v2698, %v1554
      %v2700 = vmax.f32 %v2699, %v1562
      %v2701 = vmax.f32 %v2700, %v1570
      %v2702 = vmax.f32 %v2701, %v1578
      %v2703 = vmax.f32 %v2702, %v1586
      %v2704 = vmax.f32 %v2703, %v1594
      %v2705 = vmax.f32 %v2704, %v1602
      %v2706 = vmax.f32 %v2705, %v1610
      %v2707 = vmax.f32 %v2706, %v1618
      %v2708 = vmax.f32 %v2707, %v1626
      %v2709 = vmax.f32 %v2708, %v1634
      %v2710 = vmax.f32 %v2709, %v1642
      %v2711 = vmax.f32 %v2710, %v1650
      %v2712 = vmax.f32 %v2711, %v1658
      %v2713 = vmax.f32 %v2712, %v1666
      %v2714 = vmax.f32 %v2713, %v1674
      %v2715 = vmax.f32 %v2714, %v1682
      %v2716 = vmax.f32 %v2715, %v1690
      %v2717 = vrot.slane %v2716, 4
      %v2718 = vmax.f32 %v2716, %v2717
      %v2719 = vrot.slane %v2718, 2
      %v2720 = vmax.f32 %v2718, %v2719
      %v2721 = vrot.slane %v2720, 1
      %v2722 = vmax.f32 %v2720, %v2721
      %v2723 = vmax.f32 %v1539, %v1547
      %v2724 = vmax.f32 %v2723, %v1555
      %v2725 = vmax.f32 %v2724, %v1563
      %v2726 = vmax.f32 %v2725, %v1571
      %v2727 = vmax.f32 %v2726, %v1579
      %v2728 = vmax.f32 %v2727, %v1587
      %v2729 = vmax.f32 %v2728, %v1595
      %v2730 = vmax.f32 %v2729, %v1603
      %v2731 = vmax.f32 %v2730, %v1611
      %v2732 = vmax.f32 %v2731, %v1619
      %v2733 = vmax.f32 %v2732, %v1627
      %v2734 = vmax.f32 %v2733, %v1635
      %v2735 = vmax.f32 %v2734, %v1643
      %v2736 = vmax.f32 %v2735, %v1651
      %v2737 = vmax.f32 %v2736, %v1659
      %v2738 = vmax.f32 %v2737, %v1667
      %v2739 = vmax.f32 %v2738, %v1675
      %v2740 = vmax.f32 %v2739, %v1683
      %v2741 = vmax.f32 %v2740, %v1691
      %v2742 = vrot.slane %v2741, 4
      %v2743 = vmax.f32 %v2741, %v2742
      %v2744 = vrot.slane %v2743, 2
      %v2745 = vmax.f32 %v2743, %v2744
      %v2746 = vrot.slane %v2745, 1
      %v2747 = vmax.f32 %v2745, %v2746
      %v2748 = vmax.f32 %v1540, %v1548
      %v2749 = vmax.f32 %v2748, %v1556
      %v2750 = vmax.f32 %v2749, %v1564
      %v2751 = vmax.f32 %v2750, %v1572
      %v2752 = vmax.f32 %v2751, %v1580
      %v2753 = vmax.f32 %v2752, %v1588
      %v2754 = vmax.f32 %v2753, %v1596
      %v2755 = vmax.f32 %v2754, %v1604
      %v2756 = vmax.f32 %v2755, %v1612
      %v2757 = vmax.f32 %v2756, %v1620
      %v2758 = vmax.f32 %v2757, %v1628
      %v2759 = vmax.f32 %v2758, %v1636
      %v2760 = vmax.f32 %v2759, %v1644
      %v2761 = vmax.f32 %v2760, %v1652
      %v2762 = vmax.f32 %v2761, %v1660
      %v2763 = vmax.f32 %v2762, %v1668
      %v2764 = vmax.f32 %v2763, %v1676
      %v2765 = vmax.f32 %v2764, %v1684
      %v2766 = vmax.f32 %v2765, %v1692
      %v2767 = vrot.slane %v2766, 4
      %v2768 = vmax.f32 %v2766, %v2767
      %v2769 = vrot.slane %v2768, 2
      %v2770 = vmax.f32 %v2768, %v2769
      %v2771 = vrot.slane %v2770, 1
      %v2772 = vmax.f32 %v2770, %v2771
      %v2773 = vmax.f32 %v1541, %v1549
      %v2774 = vmax.f32 %v2773, %v1557
      %v2775 = vmax.f32 %v2774, %v1565
      %v2776 = vmax.f32 %v2775, %v1573
      %v2777 = vmax.f32 %v2776, %v1581
      %v2778 = vmax.f32 %v2777, %v1589
      %v2779 = vmax.f32 %v2778, %v1597
      %v2780 = vmax.f32 %v2779, %v1605
      %v2781 = vmax.f32 %v2780, %v1613
      %v2782 = vmax.f32 %v2781, %v1621
      %v2783 = vmax.f32 %v2782, %v1629
      %v2784 = vmax.f32 %v2783, %v1637
      %v2785 = vmax.f32 %v2784, %v1645
      %v2786 = vmax.f32 %v2785, %v1653
      %v2787 = vmax.f32 %v2786, %v1661
      %v2788 = vmax.f32 %v2787, %v1669
      %v2789 = vmax.f32 %v2788, %v1677
      %v2790 = vmax.f32 %v2789, %v1685
      %v2791 = vmax.f32 %v2790, %v1693
      %v2792 = vrot.slane %v2791, 4
      %v2793 = vmax.f32 %v2791, %v2792
      %v2794 = vrot.slane %v2793, 2
      %v2795 = vmax.f32 %v2793, %v2794
      %v2796 = vrot.slane %v2795, 1
      %v2797 = vmax.f32 %v2795, %v2796
      %v2798 = vmax.f32 %v1542, %v1550
      %v2799 = vmax.f32 %v2798, %v1558
      %v2800 = vmax.f32 %v2799, %v1566
      %v2801 = vmax.f32 %v2800, %v1574
      %v2802 = vmax.f32 %v2801, %v1582
      %v2803 = vmax.f32 %v2802, %v1590
      %v2804 = vmax.f32 %v2803, %v1598
      %v2805 = vmax.f32 %v2804, %v1606
      %v2806 = vmax.f32 %v2805, %v1614
      %v2807 = vmax.f32 %v2806, %v1622
      %v2808 = vmax.f32 %v2807, %v1630
      %v2809 = vmax.f32 %v2808, %v1638
      %v2810 = vmax.f32 %v2809, %v1646
      %v2811 = vmax.f32 %v2810, %v1654
      %v2812 = vmax.f32 %v2811, %v1662
      %v2813 = vmax.f32 %v2812, %v1670
      %v2814 = vmax.f32 %v2813, %v1678
      %v2815 = vmax.f32 %v2814, %v1686
      %v2816 = vmax.f32 %v2815, %v1694
      %v2817 = vrot.slane %v2816, 4
      %v2818 = vmax.f32 %v2816, %v2817
      %v2819 = vrot.slane %v2818, 2
      %v2820 = vmax.f32 %v2818, %v2819
      %v2821 = vrot.slane %v2820, 1
      %v2822 = vmax.f32 %v2820, %v2821
      %v2823 = vmax.f32 %v1543, %v1551
      %v2824 = vmax.f32 %v2823, %v1559
      %v2825 = vmax.f32 %v2824, %v1567
      %v2826 = vmax.f32 %v2825, %v1575
      %v2827 = vmax.f32 %v2826, %v1583
      %v2828 = vmax.f32 %v2827, %v1591
      %v2829 = vmax.f32 %v2828, %v1599
      %v2830 = vmax.f32 %v2829, %v1607
      %v2831 = vmax.f32 %v2830, %v1615
      %v2832 = vmax.f32 %v2831, %v1623
      %v2833 = vmax.f32 %v2832, %v1631
      %v2834 = vmax.f32 %v2833, %v1639
      %v2835 = vmax.f32 %v2834, %v1647
      %v2836 = vmax.f32 %v2835, %v1655
      %v2837 = vmax.f32 %v2836, %v1663
      %v2838 = vmax.f32 %v2837, %v1671
      %v2839 = vmax.f32 %v2838, %v1679
      %v2840 = vmax.f32 %v2839, %v1687
      %v2841 = vmax.f32 %v2840, %v1695
      %v2842 = vrot.slane %v2841, 4
      %v2843 = vmax.f32 %v2841, %v2842
      %v2844 = vrot.slane %v2843, 2
      %v2845 = vmax.f32 %v2843, %v2844
      %v2846 = vrot.slane %v2845, 1
      %v2847 = vmax.f32 %v2845, %v2846
      %v2848 = vmax.f32 %v2672, 1e-06
      %v2849 = vmax.f32 %v2697, 1e-06
      %v2850 = vmax.f32 %v2722, 1e-06
      %v2851 = vmax.f32 %v2747, 1e-06
      %v2852 = vmax.f32 %v2772, 1e-06
      %v2853 = vmax.f32 %v2797, 1e-06
      %v2854 = vmax.f32 %v2822, 1e-06
      %v2855 = vmax.f32 %v2847, 1e-06
      %v2856 = vmul.f32 %v2848, 0.007874016
      %v2857 = vmul.f32 %v2849, 0.007874016
      %v2858 = vmul.f32 %v2850, 0.007874016
      %v2859 = vmul.f32 %v2851, 0.007874016
      %v2860 = vmul.f32 %v2852, 0.007874016
      %v2861 = vmul.f32 %v2853, 0.007874016
      %v2862 = vmul.f32 %v2854, 0.007874016
      %v2863 = vmul.f32 %v2855, 0.007874016
      %v2864 = vrcp.pop %v2856
      %v2865 = vmul.f32 1.0, %v2864
      %v2866 = vrcp.pop %v2857
      %v2867 = vmul.f32 1.0, %v2866
      %v2868 = vrcp.pop %v2858
      %v2869 = vmul.f32 1.0, %v2868
      %v2870 = vrcp.pop %v2859
      %v2871 = vmul.f32 1.0, %v2870
      %v2872 = vrcp.pop %v2860
      %v2873 = vmul.f32 1.0, %v2872
      %v2874 = vrcp.pop %v2861
      %v2875 = vmul.f32 1.0, %v2874
      %v2876 = vrcp.pop %v2862
      %v2877 = vmul.f32 1.0, %v2876
      %v2878 = vrcp.pop %v2863
      %v2879 = vmul.f32 1.0, %v2878
      %v2880 = vmul.f32 %v1536, %v2865
      %v2881 = vmul.f32 %v1537, %v2867
      %v2882 = vmul.f32 %v1538, %v2869
      %v2883 = vmul.f32 %v1539, %v2871
      %v2884 = vmul.f32 %v1540, %v2873
      %v2885 = vmul.f32 %v1541, %v2875
      %v2886 = vmul.f32 %v1542, %v2877
      %v2887 = vmul.f32 %v1543, %v2879
      %v2888 = vmul.f32 %v1544, %v2865
      %v2889 = vmul.f32 %v1545, %v2867
      %v2890 = vmul.f32 %v1546, %v2869
      %v2891 = vmul.f32 %v1547, %v2871
      %v2892 = vmul.f32 %v1548, %v2873
      %v2893 = vmul.f32 %v1549, %v2875
      %v2894 = vmul.f32 %v1550, %v2877
      %v2895 = vmul.f32 %v1551, %v2879
      %v2896 = vmul.f32 %v1552, %v2865
      %v2897 = vmul.f32 %v1553, %v2867
      %v2898 = vmul.f32 %v1554, %v2869
      %v2899 = vmul.f32 %v1555, %v2871
      %v2900 = vmul.f32 %v1556, %v2873
      %v2901 = vmul.f32 %v1557, %v2875
      %v2902 = vmul.f32 %v1558, %v2877
      %v2903 = vmul.f32 %v1559, %v2879
      %v2904 = vmul.f32 %v1560, %v2865
      %v2905 = vmul.f32 %v1561, %v2867
      %v2906 = vmul.f32 %v1562, %v2869
      %v2907 = vmul.f32 %v1563, %v2871
      %v2908 = vmul.f32 %v1564, %v2873
      %v2909 = vmul.f32 %v1565, %v2875
      %v2910 = vmul.f32 %v1566, %v2877
      %v2911 = vmul.f32 %v1567, %v2879
      %v2912 = vmul.f32 %v1568, %v2865
      %v2913 = vmul.f32 %v1569, %v2867
      %v2914 = vmul.f32 %v1570, %v2869
      %v2915 = vmul.f32 %v1571, %v2871
      %v2916 = vmul.f32 %v1572, %v2873
      %v2917 = vmul.f32 %v1573, %v2875
      %v2918 = vmul.f32 %v1574, %v2877
      %v2919 = vmul.f32 %v1575, %v2879
      %v2920 = vmul.f32 %v1576, %v2865
      %v2921 = vmul.f32 %v1577, %v2867
      %v2922 = vmul.f32 %v1578, %v2869
      %v2923 = vmul.f32 %v1579, %v2871
      %v2924 = vmul.f32 %v1580, %v2873
      %v2925 = vmul.f32 %v1581, %v2875
      %v2926 = vmul.f32 %v1582, %v2877
      %v2927 = vmul.f32 %v1583, %v2879
      %v2928 = vmul.f32 %v1584, %v2865
      %v2929 = vmul.f32 %v1585, %v2867
      %v2930 = vmul.f32 %v1586, %v2869
      %v2931 = vmul.f32 %v1587, %v2871
      %v2932 = vmul.f32 %v1588, %v2873
      %v2933 = vmul.f32 %v1589, %v2875
      %v2934 = vmul.f32 %v1590, %v2877
      %v2935 = vmul.f32 %v1591, %v2879
      %v2936 = vmul.f32 %v1592, %v2865
      %v2937 = vmul.f32 %v1593, %v2867
      %v2938 = vmul.f32 %v1594, %v2869
      %v2939 = vmul.f32 %v1595, %v2871
      %v2940 = vmul.f32 %v1596, %v2873
      %v2941 = vmul.f32 %v1597, %v2875
      %v2942 = vmul.f32 %v1598, %v2877
      %v2943 = vmul.f32 %v1599, %v2879
      %v2944 = vmul.f32 %v1600, %v2865
      %v2945 = vmul.f32 %v1601, %v2867
      %v2946 = vmul.f32 %v1602, %v2869
      %v2947 = vmul.f32 %v1603, %v2871
      %v2948 = vmul.f32 %v1604, %v2873
      %v2949 = vmul.f32 %v1605, %v2875
      %v2950 = vmul.f32 %v1606, %v2877
      %v2951 = vmul.f32 %v1607, %v2879
      %v2952 = vmul.f32 %v1608, %v2865
      %v2953 = vmul.f32 %v1609, %v2867
      %v2954 = vmul.f32 %v1610, %v2869
      %v2955 = vmul.f32 %v1611, %v2871
      %v2956 = vmul.f32 %v1612, %v2873
      %v2957 = vmul.f32 %v1613, %v2875
      %v2958 = vmul.f32 %v1614, %v2877
      %v2959 = vmul.f32 %v1615, %v2879
      %v2960 = vmul.f32 %v1616, %v2865
      %v2961 = vmul.f32 %v1617, %v2867
      %v2962 = vmul.f32 %v1618, %v2869
      %v2963 = vmul.f32 %v1619, %v2871
      %v2964 = vmul.f32 %v1620, %v2873
      %v2965 = vmul.f32 %v1621, %v2875
      %v2966 = vmul.f32 %v1622, %v2877
      %v2967 = vmul.f32 %v1623, %v2879
      %v2968 = vmul.f32 %v1624, %v2865
      %v2969 = vmul.f32 %v1625, %v2867
      %v2970 = vmul.f32 %v1626, %v2869
      %v2971 = vmul.f32 %v1627, %v2871
      %v2972 = vmul.f32 %v1628, %v2873
      %v2973 = vmul.f32 %v1629, %v2875
      %v2974 = vmul.f32 %v1630, %v2877
      %v2975 = vmul.f32 %v1631, %v2879
      %v2976 = vmul.f32 %v1632, %v2865
      %v2977 = vmul.f32 %v1633, %v2867
      %v2978 = vmul.f32 %v1634, %v2869
      %v2979 = vmul.f32 %v1635, %v2871
      %v2980 = vmul.f32 %v1636, %v2873
      %v2981 = vmul.f32 %v1637, %v2875
      %v2982 = vmul.f32 %v1638, %v2877
      %v2983 = vmul.f32 %v1639, %v2879
      %v2984 = vmul.f32 %v1640, %v2865
      %v2985 = vmul.f32 %v1641, %v2867
      %v2986 = vmul.f32 %v1642, %v2869
      %v2987 = vmul.f32 %v1643, %v2871
      %v2988 = vmul.f32 %v1644, %v2873
      %v2989 = vmul.f32 %v1645, %v2875
      %v2990 = vmul.f32 %v1646, %v2877
      %v2991 = vmul.f32 %v1647, %v2879
      %v2992 = vmul.f32 %v1648, %v2865
      %v2993 = vmul.f32 %v1649, %v2867
      %v2994 = vmul.f32 %v1650, %v2869
      %v2995 = vmul.f32 %v1651, %v2871
      %v2996 = vmul.f32 %v1652, %v2873
      %v2997 = vmul.f32 %v1653, %v2875
      %v2998 = vmul.f32 %v1654, %v2877
      %v2999 = vmul.f32 %v1655, %v2879
      %v3000 = vmul.f32 %v1656, %v2865
      %v3001 = vmul.f32 %v1657, %v2867
      %v3002 = vmul.f32 %v1658, %v2869
      %v3003 = vmul.f32 %v1659, %v2871
      %v3004 = vmul.f32 %v1660, %v2873
      %v3005 = vmul.f32 %v1661, %v2875
      %v3006 = vmul.f32 %v1662, %v2877
      %v3007 = vmul.f32 %v1663, %v2879
      %v3008 = vmul.f32 %v1664, %v2865
      %v3009 = vmul.f32 %v1665, %v2867
      %v3010 = vmul.f32 %v1666, %v2869
      %v3011 = vmul.f32 %v1667, %v2871
      %v3012 = vmul.f32 %v1668, %v2873
      %v3013 = vmul.f32 %v1669, %v2875
      %v3014 = vmul.f32 %v1670, %v2877
      %v3015 = vmul.f32 %v1671, %v2879
      %v3016 = vmul.f32 %v1672, %v2865
      %v3017 = vmul.f32 %v1673, %v2867
      %v3018 = vmul.f32 %v1674, %v2869
      %v3019 = vmul.f32 %v1675, %v2871
      %v3020 = vmul.f32 %v1676, %v2873
      %v3021 = vmul.f32 %v1677, %v2875
      %v3022 = vmul.f32 %v1678, %v2877
      %v3023 = vmul.f32 %v1679, %v2879
      %v3024 = vmul.f32 %v1680, %v2865
      %v3025 = vmul.f32 %v1681, %v2867
      %v3026 = vmul.f32 %v1682, %v2869
      %v3027 = vmul.f32 %v1683, %v2871
      %v3028 = vmul.f32 %v1684, %v2873
      %v3029 = vmul.f32 %v1685, %v2875
      %v3030 = vmul.f32 %v1686, %v2877
      %v3031 = vmul.f32 %v1687, %v2879
      %v3032 = vmul.f32 %v1688, %v2865
      %v3033 = vmul.f32 %v1689, %v2867
      %v3034 = vmul.f32 %v1690, %v2869
      %v3035 = vmul.f32 %v1691, %v2871
      %v3036 = vmul.f32 %v1692, %v2873
      %v3037 = vmul.f32 %v1693, %v2875
      %v3038 = vmul.f32 %v1694, %v2877
      %v3039 = vmul.f32 %v1695, %v2879
      %v3040 = vadd.f32 %v2880, 0.5
      %v3041 = vadd.f32 %v2881, 0.5
      %v3042 = vadd.f32 %v2882, 0.5
      %v3043 = vadd.f32 %v2883, 0.5
      %v3044 = vadd.f32 %v2884, 0.5
      %v3045 = vadd.f32 %v2885, 0.5
      %v3046 = vadd.f32 %v2886, 0.5
      %v3047 = vadd.f32 %v2887, 0.5
      %v3048 = vadd.f32 %v2888, 0.5
      %v3049 = vadd.f32 %v2889, 0.5
      %v3050 = vadd.f32 %v2890, 0.5
      %v3051 = vadd.f32 %v2891, 0.5
      %v3052 = vadd.f32 %v2892, 0.5
      %v3053 = vadd.f32 %v2893, 0.5
      %v3054 = vadd.f32 %v2894, 0.5
      %v3055 = vadd.f32 %v2895, 0.5
      %v3056 = vadd.f32 %v2896, 0.5
      %v3057 = vadd.f32 %v2897, 0.5
      %v3058 = vadd.f32 %v2898, 0.5
      %v3059 = vadd.f32 %v2899, 0.5
      %v3060 = vadd.f32 %v2900, 0.5
      %v3061 = vadd.f32 %v2901, 0.5
      %v3062 = vadd.f32 %v2902, 0.5
      %v3063 = vadd.f32 %v2903, 0.5
      %v3064 = vadd.f32 %v2904, 0.5
      %v3065 = vadd.f32 %v2905, 0.5
      %v3066 = vadd.f32 %v2906, 0.5
      %v3067 = vadd.f32 %v2907, 0.5
      %v3068 = vadd.f32 %v2908, 0.5
      %v3069 = vadd.f32 %v2909, 0.5
      %v3070 = vadd.f32 %v2910, 0.5
      %v3071 = vadd.f32 %v2911, 0.5
      %v3072 = vadd.f32 %v2912, 0.5
      %v3073 = vadd.f32 %v2913, 0.5
      %v3074 = vadd.f32 %v2914, 0.5
      %v3075 = vadd.f32 %v2915, 0.5
      %v3076 = vadd.f32 %v2916, 0.5
      %v3077 = vadd.f32 %v2917, 0.5
      %v3078 = vadd.f32 %v2918, 0.5
      %v3079 = vadd.f32 %v2919, 0.5
      %v3080 = vadd.f32 %v2920, 0.5
      %v3081 = vadd.f32 %v2921, 0.5
      %v3082 = vadd.f32 %v2922, 0.5
      %v3083 = vadd.f32 %v2923, 0.5
      %v3084 = vadd.f32 %v2924, 0.5
      %v3085 = vadd.f32 %v2925, 0.5
      %v3086 = vadd.f32 %v2926, 0.5
      %v3087 = vadd.f32 %v2927, 0.5
      %v3088 = vadd.f32 %v2928, 0.5
      %v3089 = vadd.f32 %v2929, 0.5
      %v3090 = vadd.f32 %v2930, 0.5
      %v3091 = vadd.f32 %v2931, 0.5
      %v3092 = vadd.f32 %v2932, 0.5
      %v3093 = vadd.f32 %v2933, 0.5
      %v3094 = vadd.f32 %v2934, 0.5
      %v3095 = vadd.f32 %v2935, 0.5
      %v3096 = vadd.f32 %v2936, 0.5
      %v3097 = vadd.f32 %v2937, 0.5
      %v3098 = vadd.f32 %v2938, 0.5
      %v3099 = vadd.f32 %v2939, 0.5
      %v3100 = vadd.f32 %v2940, 0.5
      %v3101 = vadd.f32 %v2941, 0.5
      %v3102 = vadd.f32 %v2942, 0.5
      %v3103 = vadd.f32 %v2943, 0.5
      %v3104 = vadd.f32 %v2944, 0.5
      %v3105 = vadd.f32 %v2945, 0.5
      %v3106 = vadd.f32 %v2946, 0.5
      %v3107 = vadd.f32 %v2947, 0.5
      %v3108 = vadd.f32 %v2948, 0.5
      %v3109 = vadd.f32 %v2949, 0.5
      %v3110 = vadd.f32 %v2950, 0.5
      %v3111 = vadd.f32 %v2951, 0.5
      %v3112 = vadd.f32 %v2952, 0.5
      %v3113 = vadd.f32 %v2953, 0.5
      %v3114 = vadd.f32 %v2954, 0.5
      %v3115 = vadd.f32 %v2955, 0.5
      %v3116 = vadd.f32 %v2956, 0.5
      %v3117 = vadd.f32 %v2957, 0.5
      %v3118 = vadd.f32 %v2958, 0.5
      %v3119 = vadd.f32 %v2959, 0.5
      %v3120 = vadd.f32 %v2960, 0.5
      %v3121 = vadd.f32 %v2961, 0.5
      %v3122 = vadd.f32 %v2962, 0.5
      %v3123 = vadd.f32 %v2963, 0.5
      %v3124 = vadd.f32 %v2964, 0.5
      %v3125 = vadd.f32 %v2965, 0.5
      %v3126 = vadd.f32 %v2966, 0.5
      %v3127 = vadd.f32 %v2967, 0.5
      %v3128 = vadd.f32 %v2968, 0.5
      %v3129 = vadd.f32 %v2969, 0.5
      %v3130 = vadd.f32 %v2970, 0.5
      %v3131 = vadd.f32 %v2971, 0.5
      %v3132 = vadd.f32 %v2972, 0.5
      %v3133 = vadd.f32 %v2973, 0.5
      %v3134 = vadd.f32 %v2974, 0.5
      %v3135 = vadd.f32 %v2975, 0.5
      %v3136 = vadd.f32 %v2976, 0.5
      %v3137 = vadd.f32 %v2977, 0.5
      %v3138 = vadd.f32 %v2978, 0.5
      %v3139 = vadd.f32 %v2979, 0.5
      %v3140 = vadd.f32 %v2980, 0.5
      %v3141 = vadd.f32 %v2981, 0.5
      %v3142 = vadd.f32 %v2982, 0.5
      %v3143 = vadd.f32 %v2983, 0.5
      %v3144 = vadd.f32 %v2984, 0.5
      %v3145 = vadd.f32 %v2985, 0.5
      %v3146 = vadd.f32 %v2986, 0.5
      %v3147 = vadd.f32 %v2987, 0.5
      %v3148 = vadd.f32 %v2988, 0.5
      %v3149 = vadd.f32 %v2989, 0.5
      %v3150 = vadd.f32 %v2990, 0.5
      %v3151 = vadd.f32 %v2991, 0.5
      %v3152 = vadd.f32 %v2992, 0.5
      %v3153 = vadd.f32 %v2993, 0.5
      %v3154 = vadd.f32 %v2994, 0.5
      %v3155 = vadd.f32 %v2995, 0.5
      %v3156 = vadd.f32 %v2996, 0.5
      %v3157 = vadd.f32 %v2997, 0.5
      %v3158 = vadd.f32 %v2998, 0.5
      %v3159 = vadd.f32 %v2999, 0.5
      %v3160 = vadd.f32 %v3000, 0.5
      %v3161 = vadd.f32 %v3001, 0.5
      %v3162 = vadd.f32 %v3002, 0.5
      %v3163 = vadd.f32 %v3003, 0.5
      %v3164 = vadd.f32 %v3004, 0.5
      %v3165 = vadd.f32 %v3005, 0.5
      %v3166 = vadd.f32 %v3006, 0.5
      %v3167 = vadd.f32 %v3007, 0.5
      %v3168 = vadd.f32 %v3008, 0.5
      %v3169 = vadd.f32 %v3009, 0.5
      %v3170 = vadd.f32 %v3010, 0.5
      %v3171 = vadd.f32 %v3011, 0.5
      %v3172 = vadd.f32 %v3012, 0.5
      %v3173 = vadd.f32 %v3013, 0.5
      %v3174 = vadd.f32 %v3014, 0.5
      %v3175 = vadd.f32 %v3015, 0.5
      %v3176 = vadd.f32 %v3016, 0.5
      %v3177 = vadd.f32 %v3017, 0.5
      %v3178 = vadd.f32 %v3018, 0.5
      %v3179 = vadd.f32 %v3019, 0.5
      %v3180 = vadd.f32 %v3020, 0.5
      %v3181 = vadd.f32 %v3021, 0.5
      %v3182 = vadd.f32 %v3022, 0.5
      %v3183 = vadd.f32 %v3023, 0.5
      %v3184 = vadd.f32 %v3024, 0.5
      %v3185 = vadd.f32 %v3025, 0.5
      %v3186 = vadd.f32 %v3026, 0.5
      %v3187 = vadd.f32 %v3027, 0.5
      %v3188 = vadd.f32 %v3028, 0.5
      %v3189 = vadd.f32 %v3029, 0.5
      %v3190 = vadd.f32 %v3030, 0.5
      %v3191 = vadd.f32 %v3031, 0.5
      %v3192 = vadd.f32 %v3032, 0.5
      %v3193 = vadd.f32 %v3033, 0.5
      %v3194 = vadd.f32 %v3034, 0.5
      %v3195 = vadd.f32 %v3035, 0.5
      %v3196 = vadd.f32 %v3036, 0.5
      %v3197 = vadd.f32 %v3037, 0.5
      %v3198 = vadd.f32 %v3038, 0.5
      %v3199 = vadd.f32 %v3039, 0.5
      %v3200 = vmin.f32 %v3040, 127.0
      %v3201 = vmin.f32 %v3041, 127.0
      %v3202 = vmin.f32 %v3042, 127.0
      %v3203 = vmin.f32 %v3043, 127.0
      %v3204 = vmin.f32 %v3044, 127.0
      %v3205 = vmin.f32 %v3045, 127.0
      %v3206 = vmin.f32 %v3046, 127.0
      %v3207 = vmin.f32 %v3047, 127.0
      %v3208 = vmin.f32 %v3048, 127.0
      %v3209 = vmin.f32 %v3049, 127.0
      %v3210 = vmin.f32 %v3050, 127.0
      %v3211 = vmin.f32 %v3051, 127.0
      %v3212 = vmin.f32 %v3052, 127.0
      %v3213 = vmin.f32 %v3053, 127.0
      %v3214 = vmin.f32 %v3054, 127.0
      %v3215 = vmin.f32 %v3055, 127.0
      %v3216 = vmin.f32 %v3056, 127.0
      %v3217 = vmin.f32 %v3057, 127.0
      %v3218 = vmin.f32 %v3058, 127.0
      %v3219 = vmin.f32 %v3059, 127.0
      %v3220 = vmin.f32 %v3060, 127.0
      %v3221 = vmin.f32 %v3061, 127.0
      %v3222 = vmin.f32 %v3062, 127.0
      %v3223 = vmin.f32 %v3063, 127.0
      %v3224 = vmin.f32 %v3064, 127.0
      %v3225 = vmin.f32 %v3065, 127.0
      %v3226 = vmin.f32 %v3066, 127.0
      %v3227 = vmin.f32 %v3067, 127.0
      %v3228 = vmin.f32 %v3068, 127.0
      %v3229 = vmin.f32 %v3069, 127.0
      %v3230 = vmin.f32 %v3070, 127.0
      %v3231 = vmin.f32 %v3071, 127.0
      %v3232 = vmin.f32 %v3072, 127.0
      %v3233 = vmin.f32 %v3073, 127.0
      %v3234 = vmin.f32 %v3074, 127.0
      %v3235 = vmin.f32 %v3075, 127.0
      %v3236 = vmin.f32 %v3076, 127.0
      %v3237 = vmin.f32 %v3077, 127.0
      %v3238 = vmin.f32 %v3078, 127.0
      %v3239 = vmin.f32 %v3079, 127.0
      %v3240 = vmin.f32 %v3080, 127.0
      %v3241 = vmin.f32 %v3081, 127.0
      %v3242 = vmin.f32 %v3082, 127.0
      %v3243 = vmin.f32 %v3083, 127.0
      %v3244 = vmin.f32 %v3084, 127.0
      %v3245 = vmin.f32 %v3085, 127.0
      %v3246 = vmin.f32 %v3086, 127.0
      %v3247 = vmin.f32 %v3087, 127.0
      %v3248 = vmin.f32 %v3088, 127.0
      %v3249 = vmin.f32 %v3089, 127.0
      %v3250 = vmin.f32 %v3090, 127.0
      %v3251 = vmin.f32 %v3091, 127.0
      %v3252 = vmin.f32 %v3092, 127.0
      %v3253 = vmin.f32 %v3093, 127.0
      %v3254 = vmin.f32 %v3094, 127.0
      %v3255 = vmin.f32 %v3095, 127.0
      %v3256 = vmin.f32 %v3096, 127.0
      %v3257 = vmin.f32 %v3097, 127.0
      %v3258 = vmin.f32 %v3098, 127.0
      %v3259 = vmin.f32 %v3099, 127.0
      %v3260 = vmin.f32 %v3100, 127.0
      %v3261 = vmin.f32 %v3101, 127.0
      %v3262 = vmin.f32 %v3102, 127.0
      %v3263 = vmin.f32 %v3103, 127.0
      %v3264 = vmin.f32 %v3104, 127.0
      %v3265 = vmin.f32 %v3105, 127.0
      %v3266 = vmin.f32 %v3106, 127.0
      %v3267 = vmin.f32 %v3107, 127.0
      %v3268 = vmin.f32 %v3108, 127.0
      %v3269 = vmin.f32 %v3109, 127.0
      %v3270 = vmin.f32 %v3110, 127.0
      %v3271 = vmin.f32 %v3111, 127.0
      %v3272 = vmin.f32 %v3112, 127.0
      %v3273 = vmin.f32 %v3113, 127.0
      %v3274 = vmin.f32 %v3114, 127.0
      %v3275 = vmin.f32 %v3115, 127.0
      %v3276 = vmin.f32 %v3116, 127.0
      %v3277 = vmin.f32 %v3117, 127.0
      %v3278 = vmin.f32 %v3118, 127.0
      %v3279 = vmin.f32 %v3119, 127.0
      %v3280 = vmin.f32 %v3120, 127.0
      %v3281 = vmin.f32 %v3121, 127.0
      %v3282 = vmin.f32 %v3122, 127.0
      %v3283 = vmin.f32 %v3123, 127.0
      %v3284 = vmin.f32 %v3124, 127.0
      %v3285 = vmin.f32 %v3125, 127.0
      %v3286 = vmin.f32 %v3126, 127.0
      %v3287 = vmin.f32 %v3127, 127.0
      %v3288 = vmin.f32 %v3128, 127.0
      %v3289 = vmin.f32 %v3129, 127.0
      %v3290 = vmin.f32 %v3130, 127.0
      %v3291 = vmin.f32 %v3131, 127.0
      %v3292 = vmin.f32 %v3132, 127.0
      %v3293 = vmin.f32 %v3133, 127.0
      %v3294 = vmin.f32 %v3134, 127.0
      %v3295 = vmin.f32 %v3135, 127.0
      %v3296 = vmin.f32 %v3136, 127.0
      %v3297 = vmin.f32 %v3137, 127.0
      %v3298 = vmin.f32 %v3138, 127.0
      %v3299 = vmin.f32 %v3139, 127.0
      %v3300 = vmin.f32 %v3140, 127.0
      %v3301 = vmin.f32 %v3141, 127.0
      %v3302 = vmin.f32 %v3142, 127.0
      %v3303 = vmin.f32 %v3143, 127.0
      %v3304 = vmin.f32 %v3144, 127.0
      %v3305 = vmin.f32 %v3145, 127.0
      %v3306 = vmin.f32 %v3146, 127.0
      %v3307 = vmin.f32 %v3147, 127.0
      %v3308 = vmin.f32 %v3148, 127.0
      %v3309 = vmin.f32 %v3149, 127.0
      %v3310 = vmin.f32 %v3150, 127.0
      %v3311 = vmin.f32 %v3151, 127.0
      %v3312 = vmin.f32 %v3152, 127.0
      %v3313 = vmin.f32 %v3153, 127.0
      %v3314 = vmin.f32 %v3154, 127.0
      %v3315 = vmin.f32 %v3155, 127.0
      %v3316 = vmin.f32 %v3156, 127.0
      %v3317 = vmin.f32 %v3157, 127.0
      %v3318 = vmin.f32 %v3158, 127.0
      %v3319 = vmin.f32 %v3159, 127.0
      %v3320 = vmin.f32 %v3160, 127.0
      %v3321 = vmin.f32 %v3161, 127.0
      %v3322 = vmin.f32 %v3162, 127.0
      %v3323 = vmin.f32 %v3163, 127.0
      %v3324 = vmin.f32 %v3164, 127.0
      %v3325 = vmin.f32 %v3165, 127.0
      %v3326 = vmin.f32 %v3166, 127.0
      %v3327 = vmin.f32 %v3167, 127.0
      %v3328 = vmin.f32 %v3168, 127.0
      %v3329 = vmin.f32 %v3169, 127.0
      %v3330 = vmin.f32 %v3170, 127.0
      %v3331 = vmin.f32 %v3171, 127.0
      %v3332 = vmin.f32 %v3172, 127.0
      %v3333 = vmin.f32 %v3173, 127.0
      %v3334 = vmin.f32 %v3174, 127.0
      %v3335 = vmin.f32 %v3175, 127.0
      %v3336 = vmin.f32 %v3176, 127.0
      %v3337 = vmin.f32 %v3177, 127.0
      %v3338 = vmin.f32 %v3178, 127.0
      %v3339 = vmin.f32 %v3179, 127.0
      %v3340 = vmin.f32 %v3180, 127.0
      %v3341 = vmin.f32 %v3181, 127.0
      %v3342 = vmin.f32 %v3182, 127.0
      %v3343 = vmin.f32 %v3183, 127.0
      %v3344 = vmin.f32 %v3184, 127.0
      %v3345 = vmin.f32 %v3185, 127.0
      %v3346 = vmin.f32 %v3186, 127.0
      %v3347 = vmin.f32 %v3187, 127.0
      %v3348 = vmin.f32 %v3188, 127.0
      %v3349 = vmin.f32 %v3189, 127.0
      %v3350 = vmin.f32 %v3190, 127.0
      %v3351 = vmin.f32 %v3191, 127.0
      %v3352 = vmin.f32 %v3192, 127.0
      %v3353 = vmin.f32 %v3193, 127.0
      %v3354 = vmin.f32 %v3194, 127.0
      %v3355 = vmin.f32 %v3195, 127.0
      %v3356 = vmin.f32 %v3196, 127.0
      %v3357 = vmin.f32 %v3197, 127.0
      %v3358 = vmin.f32 %v3198, 127.0
      %v3359 = vmin.f32 %v3199, 127.0
      %v3360 = vcvt.f32.s32.to.zero.pseudo %v3200
      %v3361 = vcvt.f32.s32.to.zero.pseudo %v3201
      %v3362 = vcvt.f32.s32.to.zero.pseudo %v3202
      %v3363 = vcvt.f32.s32.to.zero.pseudo %v3203
      %v3364 = vcvt.f32.s32.to.zero.pseudo %v3204
      %v3365 = vcvt.f32.s32.to.zero.pseudo %v3205
      %v3366 = vcvt.f32.s32.to.zero.pseudo %v3206
      %v3367 = vcvt.f32.s32.to.zero.pseudo %v3207
      %v3368 = vcvt.f32.s32.to.zero.pseudo %v3208
      %v3369 = vcvt.f32.s32.to.zero.pseudo %v3209
      %v3370 = vcvt.f32.s32.to.zero.pseudo %v3210
      %v3371 = vcvt.f32.s32.to.zero.pseudo %v3211
      %v3372 = vcvt.f32.s32.to.zero.pseudo %v3212
      %v3373 = vcvt.f32.s32.to.zero.pseudo %v3213
      %v3374 = vcvt.f32.s32.to.zero.pseudo %v3214
      %v3375 = vcvt.f32.s32.to.zero.pseudo %v3215
      %v3376 = vcvt.f32.s32.to.zero.pseudo %v3216
      %v3377 = vcvt.f32.s32.to.zero.pseudo %v3217
      %v3378 = vcvt.f32.s32.to.zero.pseudo %v3218
      %v3379 = vcvt.f32.s32.to.zero.pseudo %v3219
      %v3380 = vcvt.f32.s32.to.zero.pseudo %v3220
      %v3381 = vcvt.f32.s32.to.zero.pseudo %v3221
      %v3382 = vcvt.f32.s32.to.zero.pseudo %v3222
      %v3383 = vcvt.f32.s32.to.zero.pseudo %v3223
      %v3384 = vcvt.f32.s32.to.zero.pseudo %v3224
      %v3385 = vcvt.f32.s32.to.zero.pseudo %v3225
      %v3386 = vcvt.f32.s32.to.zero.pseudo %v3226
      %v3387 = vcvt.f32.s32.to.zero.pseudo %v3227
      %v3388 = vcvt.f32.s32.to.zero.pseudo %v3228
      %v3389 = vcvt.f32.s32.to.zero.pseudo %v3229
      %v3390 = vcvt.f32.s32.to.zero.pseudo %v3230
      %v3391 = vcvt.f32.s32.to.zero.pseudo %v3231
      %v3392 = vcvt.f32.s32.to.zero.pseudo %v3232
      %v3393 = vcvt.f32.s32.to.zero.pseudo %v3233
      %v3394 = vcvt.f32.s32.to.zero.pseudo %v3234
      %v3395 = vcvt.f32.s32.to.zero.pseudo %v3235
      %v3396 = vcvt.f32.s32.to.zero.pseudo %v3236
      %v3397 = vcvt.f32.s32.to.zero.pseudo %v3237
      %v3398 = vcvt.f32.s32.to.zero.pseudo %v3238
      %v3399 = vcvt.f32.s32.to.zero.pseudo %v3239
      %v3400 = vcvt.f32.s32.to.zero.pseudo %v3240
      %v3401 = vcvt.f32.s32.to.zero.pseudo %v3241
      %v3402 = vcvt.f32.s32.to.zero.pseudo %v3242
      %v3403 = vcvt.f32.s32.to.zero.pseudo %v3243
      %v3404 = vcvt.f32.s32.to.zero.pseudo %v3244
      %v3405 = vcvt.f32.s32.to.zero.pseudo %v3245
      %v3406 = vcvt.f32.s32.to.zero.pseudo %v3246
      %v3407 = vcvt.f32.s32.to.zero.pseudo %v3247
      %v3408 = vcvt.f32.s32.to.zero.pseudo %v3248
      %v3409 = vcvt.f32.s32.to.zero.pseudo %v3249
      %v3410 = vcvt.f32.s32.to.zero.pseudo %v3250
      %v3411 = vcvt.f32.s32.to.zero.pseudo %v3251
      %v3412 = vcvt.f32.s32.to.zero.pseudo %v3252
      %v3413 = vcvt.f32.s32.to.zero.pseudo %v3253
      %v3414 = vcvt.f32.s32.to.zero.pseudo %v3254
      %v3415 = vcvt.f32.s32.to.zero.pseudo %v3255
      %v3416 = vcvt.f32.s32.to.zero.pseudo %v3256
      %v3417 = vcvt.f32.s32.to.zero.pseudo %v3257
      %v3418 = vcvt.f32.s32.to.zero.pseudo %v3258
      %v3419 = vcvt.f32.s32.to.zero.pseudo %v3259
      %v3420 = vcvt.f32.s32.to.zero.pseudo %v3260
      %v3421 = vcvt.f32.s32.to.zero.pseudo %v3261
      %v3422 = vcvt.f32.s32.to.zero.pseudo %v3262
      %v3423 = vcvt.f32.s32.to.zero.pseudo %v3263
      %v3424 = vcvt.f32.s32.to.zero.pseudo %v3264
      %v3425 = vcvt.f32.s32.to.zero.pseudo %v3265
      %v3426 = vcvt.f32.s32.to.zero.pseudo %v3266
      %v3427 = vcvt.f32.s32.to.zero.pseudo %v3267
      %v3428 = vcvt.f32.s32.to.zero.pseudo %v3268
      %v3429 = vcvt.f32.s32.to.zero.pseudo %v3269
      %v3430 = vcvt.f32.s32.to.zero.pseudo %v3270
      %v3431 = vcvt.f32.s32.to.zero.pseudo %v3271
      %v3432 = vcvt.f32.s32.to.zero.pseudo %v3272
      %v3433 = vcvt.f32.s32.to.zero.pseudo %v3273
      %v3434 = vcvt.f32.s32.to.zero.pseudo %v3274
      %v3435 = vcvt.f32.s32.to.zero.pseudo %v3275
      %v3436 = vcvt.f32.s32.to.zero.pseudo %v3276
      %v3437 = vcvt.f32.s32.to.zero.pseudo %v3277
      %v3438 = vcvt.f32.s32.to.zero.pseudo %v3278
      %v3439 = vcvt.f32.s32.to.zero.pseudo %v3279
      %v3440 = vcvt.f32.s32.to.zero.pseudo %v3280
      %v3441 = vcvt.f32.s32.to.zero.pseudo %v3281
      %v3442 = vcvt.f32.s32.to.zero.pseudo %v3282
      %v3443 = vcvt.f32.s32.to.zero.pseudo %v3283
      %v3444 = vcvt.f32.s32.to.zero.pseudo %v3284
      %v3445 = vcvt.f32.s32.to.zero.pseudo %v3285
      %v3446 = vcvt.f32.s32.to.zero.pseudo %v3286
      %v3447 = vcvt.f32.s32.to.zero.pseudo %v3287
      %v3448 = vcvt.f32.s32.to.zero.pseudo %v3288
      %v3449 = vcvt.f32.s32.to.zero.pseudo %v3289
      %v3450 = vcvt.f32.s32.to.zero.pseudo %v3290
      %v3451 = vcvt.f32.s32.to.zero.pseudo %v3291
      %v3452 = vcvt.f32.s32.to.zero.pseudo %v3292
      %v3453 = vcvt.f32.s32.to.zero.pseudo %v3293
      %v3454 = vcvt.f32.s32.to.zero.pseudo %v3294
      %v3455 = vcvt.f32.s32.to.zero.pseudo %v3295
      %v3456 = vcvt.f32.s32.to.zero.pseudo %v3296
      %v3457 = vcvt.f32.s32.to.zero.pseudo %v3297
      %v3458 = vcvt.f32.s32.to.zero.pseudo %v3298
      %v3459 = vcvt.f32.s32.to.zero.pseudo %v3299
      %v3460 = vcvt.f32.s32.to.zero.pseudo %v3300
      %v3461 = vcvt.f32.s32.to.zero.pseudo %v3301
      %v3462 = vcvt.f32.s32.to.zero.pseudo %v3302
      %v3463 = vcvt.f32.s32.to.zero.pseudo %v3303
      %v3464 = vcvt.f32.s32.to.zero.pseudo %v3304
      %v3465 = vcvt.f32.s32.to.zero.pseudo %v3305
      %v3466 = vcvt.f32.s32.to.zero.pseudo %v3306
      %v3467 = vcvt.f32.s32.to.zero.pseudo %v3307
      %v3468 = vcvt.f32.s32.to.zero.pseudo %v3308
      %v3469 = vcvt.f32.s32.to.zero.pseudo %v3309
      %v3470 = vcvt.f32.s32.to.zero.pseudo %v3310
      %v3471 = vcvt.f32.s32.to.zero.pseudo %v3311
      %v3472 = vcvt.f32.s32.to.zero.pseudo %v3312
      %v3473 = vcvt.f32.s32.to.zero.pseudo %v3313
      %v3474 = vcvt.f32.s32.to.zero.pseudo %v3314
      %v3475 = vcvt.f32.s32.to.zero.pseudo %v3315
      %v3476 = vcvt.f32.s32.to.zero.pseudo %v3316
      %v3477 = vcvt.f32.s32.to.zero.pseudo %v3317
      %v3478 = vcvt.f32.s32.to.zero.pseudo %v3318
      %v3479 = vcvt.f32.s32.to.zero.pseudo %v3319
      %v3480 = vcvt.f32.s32.to.zero.pseudo %v3320
      %v3481 = vcvt.f32.s32.to.zero.pseudo %v3321
      %v3482 = vcvt.f32.s32.to.zero.pseudo %v3322
      %v3483 = vcvt.f32.s32.to.zero.pseudo %v3323
      %v3484 = vcvt.f32.s32.to.zero.pseudo %v3324
      %v3485 = vcvt.f32.s32.to.zero.pseudo %v3325
      %v3486 = vcvt.f32.s32.to.zero.pseudo %v3326
      %v3487 = vcvt.f32.s32.to.zero.pseudo %v3327
      %v3488 = vcvt.f32.s32.to.zero.pseudo %v3328
      %v3489 = vcvt.f32.s32.to.zero.pseudo %v3329
      %v3490 = vcvt.f32.s32.to.zero.pseudo %v3330
      %v3491 = vcvt.f32.s32.to.zero.pseudo %v3331
      %v3492 = vcvt.f32.s32.to.zero.pseudo %v3332
      %v3493 = vcvt.f32.s32.to.zero.pseudo %v3333
      %v3494 = vcvt.f32.s32.to.zero.pseudo %v3334
      %v3495 = vcvt.f32.s32.to.zero.pseudo %v3335
      %v3496 = vcvt.f32.s32.to.zero.pseudo %v3336
      %v3497 = vcvt.f32.s32.to.zero.pseudo %v3337
      %v3498 = vcvt.f32.s32.to.zero.pseudo %v3338
      %v3499 = vcvt.f32.s32.to.zero.pseudo %v3339
      %v3500 = vcvt.f32.s32.to.zero.pseudo %v3340
      %v3501 = vcvt.f32.s32.to.zero.pseudo %v3341
      %v3502 = vcvt.f32.s32.to.zero.pseudo %v3342
      %v3503 = vcvt.f32.s32.to.zero.pseudo %v3343
      %v3504 = vcvt.f32.s32.to.zero.pseudo %v3344
      %v3505 = vcvt.f32.s32.to.zero.pseudo %v3345
      %v3506 = vcvt.f32.s32.to.zero.pseudo %v3346
      %v3507 = vcvt.f32.s32.to.zero.pseudo %v3347
      %v3508 = vcvt.f32.s32.to.zero.pseudo %v3348
      %v3509 = vcvt.f32.s32.to.zero.pseudo %v3349
      %v3510 = vcvt.f32.s32.to.zero.pseudo %v3350
      %v3511 = vcvt.f32.s32.to.zero.pseudo %v3351
      %v3512 = vcvt.f32.s32.to.zero.pseudo %v3352
      %v3513 = vcvt.f32.s32.to.zero.pseudo %v3353
      %v3514 = vcvt.f32.s32.to.zero.pseudo %v3354
      %v3515 = vcvt.f32.s32.to.zero.pseudo %v3355
      %v3516 = vcvt.f32.s32.to.zero.pseudo %v3356
      %v3517 = vcvt.f32.s32.to.zero.pseudo %v3357
      %v3518 = vcvt.f32.s32.to.zero.pseudo %v3358
      %v3519 = vcvt.f32.s32.to.zero.pseudo %v3359
      %v3520 = vpack.c.b16 %v3368, %v3360
      %v3521 = vpack.c.b16 %v3384, %v3376
      %v3522 = vpack.c.b8 %v3521, %v3520
      %v3523 = vpack.c.b16 %v3369, %v3361
      %v3524 = vpack.c.b16 %v3385, %v3377
      %v3525 = vpack.c.b8 %v3524, %v3523
      %v3526 = vpack.c.b16 %v3370, %v3362
      %v3527 = vpack.c.b16 %v3386, %v3378
      %v3528 = vpack.c.b8 %v3527, %v3526
      %v3529 = vpack.c.b16 %v3371, %v3363
      %v3530 = vpack.c.b16 %v3387, %v3379
      %v3531 = vpack.c.b8 %v3530, %v3529
      %v3532 = vpack.c.b16 %v3372, %v3364
      %v3533 = vpack.c.b16 %v3388, %v3380
      %v3534 = vpack.c.b8 %v3533, %v3532
      %v3535 = vpack.c.b16 %v3373, %v3365
      %v3536 = vpack.c.b16 %v3389, %v3381
      %v3537 = vpack.c.b8 %v3536, %v3535
      %v3538 = vpack.c.b16 %v3374, %v3366
      %v3539 = vpack.c.b16 %v3390, %v3382
      %v3540 = vpack.c.b8 %v3539, %v3538
      %v3541 = vpack.c.b16 %v3375, %v3367
      %v3542 = vpack.c.b16 %v3391, %v3383
      %v3543 = vpack.c.b8 %v3542, %v3541
      %v3544 = vpack.c.b16 %v3400, %v3392
      %v3545 = vpack.c.b16 %v3416, %v3408
      %v3546 = vpack.c.b8 %v3545, %v3544
      %v3547 = vpack.c.b16 %v3401, %v3393
      %v3548 = vpack.c.b16 %v3417, %v3409
      %v3549 = vpack.c.b8 %v3548, %v3547
      %v3550 = vpack.c.b16 %v3402, %v3394
      %v3551 = vpack.c.b16 %v3418, %v3410
      %v3552 = vpack.c.b8 %v3551, %v3550
      %v3553 = vpack.c.b16 %v3403, %v3395
      %v3554 = vpack.c.b16 %v3419, %v3411
      %v3555 = vpack.c.b8 %v3554, %v3553
      %v3556 = vpack.c.b16 %v3404, %v3396
      %v3557 = vpack.c.b16 %v3420, %v3412
      %v3558 = vpack.c.b8 %v3557, %v3556
      %v3559 = vpack.c.b16 %v3405, %v3397
      %v3560 = vpack.c.b16 %v3421, %v3413
      %v3561 = vpack.c.b8 %v3560, %v3559
      %v3562 = vpack.c.b16 %v3406, %v3398
      %v3563 = vpack.c.b16 %v3422, %v3414
      %v3564 = vpack.c.b8 %v3563, %v3562
      %v3565 = vpack.c.b16 %v3407, %v3399
      %v3566 = vpack.c.b16 %v3423, %v3415
      %v3567 = vpack.c.b8 %v3566, %v3565
      %v3568 = vpack.c.b16 %v3432, %v3424
      %v3569 = vpack.c.b16 %v3448, %v3440
      %v3570 = vpack.c.b8 %v3569, %v3568
      %v3571 = vpack.c.b16 %v3433, %v3425
      %v3572 = vpack.c.b16 %v3449, %v3441
      %v3573 = vpack.c.b8 %v3572, %v3571
      %v3574 = vpack.c.b16 %v3434, %v3426
      %v3575 = vpack.c.b16 %v3450, %v3442
      %v3576 = vpack.c.b8 %v3575, %v3574
      %v3577 = vpack.c.b16 %v3435, %v3427
      %v3578 = vpack.c.b16 %v3451, %v3443
      %v3579 = vpack.c.b8 %v3578, %v3577
      %v3580 = vpack.c.b16 %v3436, %v3428
      %v3581 = vpack.c.b16 %v3452, %v3444
      %v3582 = vpack.c.b8 %v3581, %v3580
      %v3583 = vpack.c.b16 %v3437, %v3429
      %v3584 = vpack.c.b16 %v3453, %v3445
      %v3585 = vpack.c.b8 %v3584, %v3583
      %v3586 = vpack.c.b16 %v3438, %v3430
      %v3587 = vpack.c.b16 %v3454, %v3446
      %v3588 = vpack.c.b8 %v3587, %v3586
      %v3589 = vpack.c.b16 %v3439, %v3431
      %v3590 = vpack.c.b16 %v3455, %v3447
      %v3591 = vpack.c.b8 %v3590, %v3589
      %v3592 = vpack.c.b16 %v3464, %v3456
      %v3593 = vpack.c.b16 %v3480, %v3472
      %v3594 = vpack.c.b8 %v3593, %v3592
      %v3595 = vpack.c.b16 %v3465, %v3457
      %v3596 = vpack.c.b16 %v3481, %v3473
      %v3597 = vpack.c.b8 %v3596, %v3595
      %v3598 = vpack.c.b16 %v3466, %v3458
      %v3599 = vpack.c.b16 %v3482, %v3474
      %v3600 = vpack.c.b8 %v3599, %v3598
      %v3601 = vpack.c.b16 %v3467, %v3459
      %v3602 = vpack.c.b16 %v3483, %v3475
      %v3603 = vpack.c.b8 %v3602, %v3601
      %v3604 = vpack.c.b16 %v3468, %v3460
      %v3605 = vpack.c.b16 %v3484, %v3476
      %v3606 = vpack.c.b8 %v3605, %v3604
      %v3607 = vpack.c.b16 %v3469, %v3461
      %v3608 = vpack.c.b16 %v3485, %v3477
      %v3609 = vpack.c.b8 %v3608, %v3607
      %v3610 = vpack.c.b16 %v3470, %v3462
      %v3611 = vpack.c.b16 %v3486, %v3478
      %v3612 = vpack.c.b8 %v3611, %v3610
      %v3613 = vpack.c.b16 %v3471, %v3463
      %v3614 = vpack.c.b16 %v3487, %v3479
      %v3615 = vpack.c.b8 %v3614, %v3613
      %v3616 = vpack.c.b16 %v3496, %v3488
      %v3617 = vpack.c.b16 %v3512, %v3504
      %v3618 = vpack.c.b8 %v3617, %v3616
      %v3619 = vpack.c.b16 %v3497, %v3489
      %v3620 = vpack.c.b16 %v3513, %v3505
      %v3621 = vpack.c.b8 %v3620, %v3619
      %v3622 = vpack.c.b16 %v3498, %v3490
      %v3623 = vpack.c.b16 %v3514, %v3506
      %v3624 = vpack.c.b8 %v3623, %v3622
      %v3625 = vpack.c.b16 %v3499, %v3491
      %v3626 = vpack.c.b16 %v3515, %v3507
      %v3627 = vpack.c.b8 %v3626, %v3625
      %v3628 = vpack.c.b16 %v3500, %v3492
      %v3629 = vpack.c.b16 %v3516, %v3508
      %v3630 = vpack.c.b8 %v3629, %v3628
      %v3631 = vpack.c.b16 %v3501, %v3493
      %v3632 = vpack.c.b16 %v3517, %v3509
      %v3633 = vpack.c.b8 %v3632, %v3631
      %v3634 = vpack.c.b16 %v3502, %v3494
      %v3635 = vpack.c.b16 %v3518, %v3510
      %v3636 = vpack.c.b8 %v3635, %v3634
      %v3637 = vpack.c.b16 %v3503, %v3495
      %v3638 = vpack.c.b16 %v3519, %v3511
      %v3639 = vpack.c.b8 %v3638, %v3637
      %3640 = vst [vmem:[%s242] sm:$0xff] %v3522
      %3641 = vst [vmem:[%s242 + $0x8] sm:$0xff] %v3525
      %3642 = vst [vmem:[%s242 + $0x10] sm:$0xff] %v3528
      %3643 = vst [vmem:[%s242 + $0x18] sm:$0xff] %v3531
      %3644 = vst [vmem:[%s242 + $0x20] sm:$0xff] %v3534
      %3645 = vst [vmem:[%s242 + $0x28] sm:$0xff] %v3537
      %3646 = vst [vmem:[%s242 + $0x30] sm:$0xff] %v3540
      %3647 = vst [vmem:[%s242 + $0x38] sm:$0xff] %v3543
      %3648 = vst [vmem:[%s242 + $0x40] sm:$0xff] %v3546
      %3649 = vst [vmem:[%s242 + $0x48] sm:$0xff] %v3549
      %3650 = vst [vmem:[%s242 + $0x50] sm:$0xff] %v3552
      %3651 = vst [vmem:[%s242 + $0x58] sm:$0xff] %v3555
      %3652 = vst [vmem:[%s242 + $0x60] sm:$0xff] %v3558
      %3653 = vst [vmem:[%s242 + $0x68] sm:$0xff] %v3561
      %3654 = vst [vmem:[%s242 + $0x70] sm:$0xff] %v3564
      %3655 = vst [vmem:[%s242 + $0x78] sm:$0xff] %v3567
      %3656 = vst [vmem:[%s242 + $0x80] sm:$0xff] %v3570
      %3657 = vst [vmem:[%s242 + $0x88] sm:$0xff] %v3573
      %3658 = vst [vmem:[%s242 + $0x90] sm:$0xff] %v3576
      %3659 = vst [vmem:[%s242 + $0x98] sm:$0xff] %v3579
      %3660 = vst [vmem:[%s242 + $0xa0] sm:$0xff] %v3582
      %3661 = vst [vmem:[%s242 + $0xa8] sm:$0xff] %v3585
      %3662 = vst [vmem:[%s242 + $0xb0] sm:$0xff] %v3588
      %3663 = vst [vmem:[%s242 + $0xb8] sm:$0xff] %v3591
      %3664 = vst [vmem:[%s242 + $0xc0] sm:$0xff] %v3594
      %3665 = vst [vmem:[%s242 + $0xc8] sm:$0xff] %v3597
      %3666 = vst [vmem:[%s242 + $0xd0] sm:$0xff] %v3600
      %3667 = vst [vmem:[%s242 + $0xd8] sm:$0xff] %v3603
      %3668 = vst [vmem:[%s242 + $0xe0] sm:$0xff] %v3606
      %3669 = vst [vmem:[%s242 + $0xe8] sm:$0xff] %v3609
      %3670 = vst [vmem:[%s242 + $0xf0] sm:$0xff] %v3612
      %3671 = vst [vmem:[%s242 + $0xf8] sm:$0xff] %v3615
      %3672 = vst [vmem:[%s242 + $0x100] sm:$0xff] %v3618
      %3673 = vst [vmem:[%s242 + $0x108] sm:$0xff] %v3621
      %3674 = vst [vmem:[%s242 + $0x110] sm:$0xff] %v3624
      %3675 = vst [vmem:[%s242 + $0x118] sm:$0xff] %v3627
      %3676 = vst [vmem:[%s242 + $0x120] sm:$0xff] %v3630
      %3677 = vst [vmem:[%s242 + $0x128] sm:$0xff] %v3633
      %3678 = vst [vmem:[%s242 + $0x130] sm:$0xff] %v3636
      %3679 = vst [vmem:[%s242 + $0x138] sm:$0xff] %v3639
      %v3688 = vcombine.low %v2856, %v2857
      %v3689 = vcombine.low %v2858, %v2859
      %v3690 = vcombine.low %v2860, %v2861
      %v3691 = vcombine.low %v2862, %v2863
      %v3693 = vunpack.c.l.s4 1966171168
      %v3694 = vunpack.c.0.s8 %v3693
      %v3695 = vlaneseq
      %v3696 = vshrl.u32 %v3695, 7
      %v3697 = vsub.s32 %v3694, %v3696
      %v3698 = vrot.slane %v3688, %v3697
      %v3700 = vunpack.c.l.s4 1966171168
      %v3701 = vunpack.c.0.s8 %v3700
      %v3702 = vlaneseq
      %v3703 = vshrl.u32 %v3702, 7
      %v3704 = vsub.s32 %v3701, %v3703
      %v3705 = vrot.slane %v3689, %v3704
      %v3707 = vunpack.c.l.s4 1966171168
      %v3708 = vunpack.c.0.s8 %v3707
      %v3709 = vlaneseq
      %v3710 = vshrl.u32 %v3709, 7
      %v3711 = vsub.s32 %v3708, %v3710
      %v3712 = vrot.slane %v3690, %v3711
      %v3714 = vunpack.c.l.s4 1966171168
      %v3715 = vunpack.c.0.s8 %v3714
      %v3716 = vlaneseq
      %v3717 = vshrl.u32 %v3716, 7
      %v3718 = vsub.s32 %v3715, %v3717
      %v3719 = vrot.slane %v3691, %v3718
      %v3720 = vcombine.low %v3698, %v3705
      %v3721 = vcombine.low %v3712, %v3719
      %v3723 = vunpack.c.l.s4 1966171168
      %v3724 = vunpack.c.0.s8 %v3723
      %v3725 = vlaneseq
      %v3726 = vshrl.u32 %v3725, 7
      %v3727 = vsub.s32 %v3724, %v3726
      %v3728 = vrot.slane %v3720, %v3727
      %v3730 = vunpack.c.l.s4 1966171168
      %v3731 = vunpack.c.0.s8 %v3730
      %v3732 = vlaneseq
      %v3733 = vshrl.u32 %v3732, 7
      %v3734 = vsub.s32 %v3731, %v3733
      %v3735 = vrot.slane %v3721, %v3734
      %v3736 = vcombine.low %v3728, %v3735
      %3738 = vst [vmem:[%s247] sm:$0xff] %v3736
      %s3739 = smul.u32 5, %s17
      %p3740 = scmp.lt.s32.totalorder %s3739, 9
      %s3741 = scalar_select %p3740, %s3739, 9
      %s3742 = smul.addr %s3741, 8
      %s3743 = smul.addr %s3742, 8
      %s3744 = scalar_lea.vmem %s3, %s3743
      %p3745 = scmp.lt.s32.totalorder %s17, 1
      %s3746 = scalar_select %p3745, %s17, 1
      %s3747 = smul.addr %s3746, 8
      %s3748 = scalar_lea.vmem %s4, %s3747
      %p3749 = scmp.lt.s32.totalorder %s17, 1
      %s3750 = scalar_select %p3749, %s17, 1
      %s3751 = smul.addr %s3750, 8
      %s3752 = smul.addr %s3751, 2
      %s3753 = scalar_lea.vmem %s5, %s3752
      // Predicated region
      $region33: #{binary_classification_forward.4} parent=31 // pred_check
        %p3754 = pneg %p103
      $region34: #{binary_classification_forward.4} parent=31 // pred_check_branch
        %3756 = sbr.rel (%p3754) target = $region36
      $region35: #{binary_classification_forward.4} parent=31 // pred_region
        %s3757 = smul.u32 5, %s17
      $region36: #{binary_classification_forward.4} parent=31 // pred_fallthru
        _
      // Predicated region
      $region37: #{binary_classification_forward.4} parent=31 // pred_check
        %p3758 = pneg %p129
      $region38: #{binary_classification_forward.4} parent=31 // pred_check_branch
        %3760 = sbr.rel (%p3758) target = $region40
      $region39: #{binary_classification_forward.4} parent=31 // pred_region
        _
      $region40: #{binary_classification_forward.4} parent=31 // pred_fallthru
        _
      // Predicated region
      $region41: #{binary_classification_forward.4} parent=31 // pred_check
        %p3761 = pneg %p155
      $region42: #{binary_classification_forward.4} parent=31 // pred_check_branch
        %3763 = sbr.rel (%p3761) target = $region44
      $region43: #{binary_classification_forward.4} parent=31 // pred_region
        _
      $region44: #{binary_classification_forward.4} parent=31 // pred_fallthru
        _
    $region32: #{binary_classification_forward.4} parent=5 // pred_fallthru
      _
    %p3764 = scmp.le.s32.totalorder 2, %s12
    // Predicated region
    $region45: #{binary_classification_forward.4} parent=5 // pred_check
      %p3765 = pneg %p3764
    $region46: #{binary_classification_forward.4} parent=5 // pred_check_branch
      %3767 = sbr.rel (%p3765) target = $region48
    $region47: #{binary_classification_forward.4} parent=5 // pred_region
      %s3768 = ssub.s32 %s12, 2
      // Predicated region
      $region49: #{binary_classification_forward.4} parent=47 // pred_check
        %p3769 = pneg %p109
      $region50: #{binary_classification_forward.4} parent=47 // pred_check_branch
        %3771 = sbr.rel (%p3769) target = $region52
      $region51: #{binary_classification_forward.4} parent=47 // pred_region
        %s3772 = smul.u32 5, %s18
        %p3773 = scmp.lt.s32.totalorder %s3772, 9
        %s3774 = scalar_select %p3773, %s3772, 9
        %s3775 = smul.addr %s3774, 8
        %s3776 = smul.addr %s3775, 8
        %s3777 = scalar_lea.vmem %s3, %s3776
      $region52: #{binary_classification_forward.4} parent=47 // pred_fallthru
        _
      // Predicated region
      $region53: #{binary_classification_forward.4} parent=47 // pred_check
        %p3778 = pneg %p135
      $region54: #{binary_classification_forward.4} parent=47 // pred_check_branch
        %3780 = sbr.rel (%p3778) target = $region56
      $region55: #{binary_classification_forward.4} parent=47 // pred_region
        %p3781 = scmp.lt.s32.totalorder %s18, 1
        %s3782 = scalar_select %p3781, %s18, 1
        %s3783 = smul.addr %s3782, 8
        %s3784 = scalar_lea.vmem %s4, %s3783
      $region56: #{binary_classification_forward.4} parent=47 // pred_fallthru
        _
      // Predicated region
      $region57: #{binary_classification_forward.4} parent=47 // pred_check
        %p3785 = pneg %p161
      $region58: #{binary_classification_forward.4} parent=47 // pred_check_branch
        %3787 = sbr.rel (%p3785) target = $region60
      $region59: #{binary_classification_forward.4} parent=47 // pred_region
        %p3788 = scmp.lt.s32.totalorder %s18, 1
        %s3789 = scalar_select %p3788, %s18, 1
        %s3790 = smul.addr %s3789, 8
        %s3791 = smul.addr %s3790, 2
        %s3792 = scalar_lea.vmem %s5, %s3791
      $region60: #{binary_classification_forward.4} parent=47 // pred_fallthru
        _
    $region48: #{binary_classification_forward.4} parent=5 // pred_fallthru
      _
  $region6: #{binary_classification_forward.4} parent=0 // loop_footer
    %s16 = sadd.s32 1, %s12
  $region7: #{binary_classification_forward.4} parent=0 // loop_footer_branch
    %11 = sbr.rel target = $region3
  $region8: #{binary_classification_forward.4} parent=0 // loop_exit
    _

// kernel: binary_classification_forward.5
$region0: #{binary_classification_forward.5}
  #allocation0 [shape = 'u32[]', space=smem, size = 0x4, offset = 0x4, fixed_abs, tag = 'smem constant byte address 0x4 - core index']
  #allocation1 [shape = 'u32[144,128]{1,0:T(1,128)}', space=vmem, size = 0x12000, scoped, tag = 'internal scratch']
  %s0 = inlined_call_operand.vmem [shape: s8[320,1024], index: 0, kind: input, shape index: {}]
  %s1 = inlined_call_operand.vmem [shape: f32[2,1,1024], index: 1, kind: input, shape index: {}]
  %s2 = inlined_call_operand.vmem [shape: bf16[1024,8], index: 2, kind: input, shape index: {}]
  %s3 = inlined_call_operand.vmem [shape: f32[1,8], index: 3, kind: input, shape index: {}]
  %s4 = inlined_call_operand.vmem [shape: bf16[320,8], index: 4, kind: output, shape index: {0}]
  %s5 = inlined_call_operand.vmem [shape: f32[2,2,8], index: 5, kind: output, shape index: {1}]
  %6 = xla_tuple %s4, %s5
  %s7 = sld [smem:[#allocation0]]
  $region57: #{binary_classification_forward.5} parent=0
    _
  %s9 = ssub.s32 1, %s7
  %s10 = scalar_select 0, %s9, %s7
  loop: start=0, step=1, limit=4
  $region2: #{binary_classification_forward.5} parent=0 // loop_pre_header
    _
  $region3: #{binary_classification_forward.5} parent=0 // loop_header
    %s12 = sphi 0, %s16
    %p13 = scmp.ge.s32.totalorder %s12, 4
    %s22 = sphi 0, %s24
    %s25 = sphi 0, %s22
    %s26 = sphi 0, %s25
    %s42 = sphi 0, %s26
    %s48 = sphi 0, %s50
    %s51 = sphi 0, %s48
    %s52 = sphi 0, %s51
    %s68 = sphi 0, %s52
    %s72 = sphi 0, %s72
    %s74 = sphi 0, %s72
    %s75 = sphi 0, %s74
    %s89 = sphi 0, %s75
    %s93 = sphi 0, %s93
    %s95 = sphi 0, %s93
    %s96 = sphi 0, %s95
    %s110 = sphi 0, %s96
    %s116 = sphi 0, %s118
    %s119 = sphi 0, %s116
    %s120 = sphi 0, %s119
    %s136 = sphi 0, %s120
    %s142 = sphi 0, %s144
    %s145 = sphi 0, %s142
    %s146 = sphi 0, %s145
    %s162 = sphi 0, %s146
  $region4: #{binary_classification_forward.5} parent=0 // loop_header_branch
    %15 = sbr.rel (%p13) target = $region8
  $region5: #{binary_classification_forward.5} parent=0 // loop_body
    %s17 = ssub.s32 %s12, 1
    %s18 = ssub.s32 %s12, 2
    %s19 = sadd.s32 %s12, 1
    %s20 = ssub.s32 %s12, %s19
    %p21 = scmp.eq.s32.totalorder %s20, 0
    %s23 = sadd.s32 %s22, 1
    %s24 = scalar_select %p21, %s22, %s23
    %p27 = pneg %p21
    %p28 = scmp.eq.s32.totalorder %s12, 1
    %p29 = por %p27, %p28
    %p30 = scmp.ne.s32.totalorder %s22, %s25
    %p31 = scmp.eq.s32.totalorder %s12, 0
    %p32 = por %p30, %p31
    %p33 = scmp.ne.s32.totalorder %s22, %s25
    %p34 = scmp.eq.s32.totalorder %s17, 1
    %p35 = por %p33, %p34
    %p36 = scmp.ne.s32.totalorder %s25, %s26
    %p37 = scmp.eq.s32.totalorder %s17, 0
    %p38 = por %p36, %p37
    %p39 = scmp.ne.s32.totalorder %s25, %s26
    %p40 = scmp.eq.s32.totalorder %s18, 1
    %p41 = por %p39, %p40
    %p43 = scmp.ne.s32.totalorder %s26, %s42
    %p44 = scmp.eq.s32.totalorder %s18, 0
    %p45 = por %p43, %p44
    %s46 = ssub.s32 %s12, %s19
    %p47 = scmp.eq.s32.totalorder %s46, 0
    %s49 = sadd.s32 %s48, 1
    %s50 = scalar_select %p47, %s48, %s49
    %p53 = pneg %p47
    %p54 = scmp.eq.s32.totalorder %s12, 1
    %p55 = por %p53, %p54
    %p56 = scmp.ne.s32.totalorder %s48, %s51
    %p57 = scmp.eq.s32.totalorder %s12, 0
    %p58 = por %p56, %p57
    %p59 = scmp.ne.s32.totalorder %s48, %s51
    %p60 = scmp.eq.s32.totalorder %s17, 1
    %p61 = por %p59, %p60
    %p62 = scmp.ne.s32.totalorder %s51, %s52
    %p63 = scmp.eq.s32.totalorder %s17, 0
    %p64 = por %p62, %p63
    %p65 = scmp.ne.s32.totalorder %s51, %s52
    %p66 = scmp.eq.s32.totalorder %s18, 1
    %p67 = por %p65, %p66
    %p69 = scmp.ne.s32.totalorder %s52, %s68
    %p70 = scmp.eq.s32.totalorder %s18, 0
    %p71 = por %p69, %p70
    %s73 = sadd.s32 %s72, 1
    %p76 = scmp.eq.s32.totalorder %s12, 1
    %p77 = scmp.ne.s32.totalorder %s72, %s74
    %p78 = scmp.eq.s32.totalorder %s12, 0
    %p79 = por %p77, %p78
    %p80 = scmp.ne.s32.totalorder %s72, %s74
    %p81 = scmp.eq.s32.totalorder %s17, 1
    %p82 = por %p80, %p81
    %p83 = scmp.ne.s32.totalorder %s74, %s75
    %p84 = scmp.eq.s32.totalorder %s17, 0
    %p85 = por %p83, %p84
    %p86 = scmp.ne.s32.totalorder %s74, %s75
    %p87 = scmp.eq.s32.totalorder %s18, 1
    %p88 = por %p86, %p87
    %p90 = scmp.ne.s32.totalorder %s75, %s89
    %p91 = scmp.eq.s32.totalorder %s18, 0
    %p92 = por %p90, %p91
    %s94 = sadd.s32 %s93, 1
    %p97 = scmp.eq.s32.totalorder %s12, 1
    %p98 = scmp.ne.s32.totalorder %s93, %s95
    %p99 = scmp.eq.s32.totalorder %s12, 0
    %p100 = por %p98, %p99
    %p101 = scmp.ne.s32.totalorder %s93, %s95
    %p102 = scmp.eq.s32.totalorder %s17, 1
    %p103 = por %p101, %p102
    %p104 = scmp.ne.s32.totalorder %s95, %s96
    %p105 = scmp.eq.s32.totalorder %s17, 0
    %p106 = por %p104, %p105
    %p107 = scmp.ne.s32.totalorder %s95, %s96
    %p108 = scmp.eq.s32.totalorder %s18, 1
    %p109 = por %p107, %p108
    %p111 = scmp.ne.s32.totalorder %s96, %s110
    %p112 = scmp.eq.s32.totalorder %s18, 0
    %p113 = por %p111, %p112
    %s114 = ssub.s32 %s12, %s19
    %p115 = scmp.eq.s32.totalorder %s114, 0
    %s117 = sadd.s32 %s116, 1
    %s118 = scalar_select %p115, %s116, %s117
    %p121 = pneg %p115
    %p122 = scmp.eq.s32.totalorder %s12, 1
    %p123 = por %p121, %p122
    %p124 = scmp.ne.s32.totalorder %s116, %s119
    %p125 = scmp.eq.s32.totalorder %s12, 0
    %p126 = por %p124, %p125
    %p127 = scmp.ne.s32.totalorder %s116, %s119
    %p128 = scmp.eq.s32.totalorder %s17, 1
    %p129 = por %p127, %p128
    %p130 = scmp.ne.s32.totalorder %s119, %s120
    %p131 = scmp.eq.s32.totalorder %s17, 0
    %p132 = por %p130, %p131
    %p133 = scmp.ne.s32.totalorder %s119, %s120
    %p134 = scmp.eq.s32.totalorder %s18, 1
    %p135 = por %p133, %p134
    %p137 = scmp.ne.s32.totalorder %s120, %s136
    %p138 = scmp.eq.s32.totalorder %s18, 0
    %p139 = por %p137, %p138
    %s140 = ssub.s32 %s12, %s19
    %p141 = scmp.eq.s32.totalorder %s140, 0
    %s143 = sadd.s32 %s142, 1
    %s144 = scalar_select %p141, %s142, %s143
    %p147 = pneg %p141
    %p148 = scmp.eq.s32.totalorder %s12, 1
    %p149 = por %p147, %p148
    %p150 = scmp.ne.s32.totalorder %s142, %s145
    %p151 = scmp.eq.s32.totalorder %s12, 0
    %p152 = por %p150, %p151
    %p153 = scmp.ne.s32.totalorder %s142, %s145
    %p154 = scmp.eq.s32.totalorder %s17, 1
    %p155 = por %p153, %p154
    %p156 = scmp.ne.s32.totalorder %s145, %s146
    %p157 = scmp.eq.s32.totalorder %s17, 0
    %p158 = por %p156, %p157
    %p159 = scmp.ne.s32.totalorder %s145, %s146
    %p160 = scmp.eq.s32.totalorder %s18, 1
    %p161 = por %p159, %p160
    %p163 = scmp.ne.s32.totalorder %s146, %s162
    %p164 = scmp.eq.s32.totalorder %s18, 0
    %p165 = por %p163, %p164
    %p166 = scmp.le.s32.totalorder 1, %s12
    %p167 = scmp.lt.s32.totalorder %s12, 3
    %p168 = pnand %p166, %p167
    %p169 = pneg %p168
    // Predicated region
    $region9: #{binary_classification_forward.5} parent=5 // pred_check
      _
    $region10: #{binary_classification_forward.5} parent=5 // pred_check_branch
      %171 = sbr.rel (%p168) target = $region12
    $region11: #{binary_classification_forward.5} parent=5 // pred_region
      %s172 = ssub.s32 %s12, 1
      // Predicated region
      $region13: #{binary_classification_forward.5} parent=11 // pred_check
        %p173 = pneg %p85
      $region14: #{binary_classification_forward.5} parent=11 // pred_check_branch
        %175 = sbr.rel (%p173) target = $region16
      $region15: #{binary_classification_forward.5} parent=11 // pred_region
        _
      $region16: #{binary_classification_forward.5} parent=11 // pred_fallthru
        _
      // Predicated region
      $region17: #{binary_classification_forward.5} parent=11 // pred_check
        %p176 = pneg %p106
      $region18: #{binary_classification_forward.5} parent=11 // pred_check_branch
        %178 = sbr.rel (%p176) target = $region20
      $region19: #{binary_classification_forward.5} parent=11 // pred_region
        _
      $region20: #{binary_classification_forward.5} parent=11 // pred_fallthru
        _
    $region12: #{binary_classification_forward.5} parent=5 // pred_fallthru
      _
    %p179 = scmp.lt.s32.totalorder %s12, 2
    // Predicated region
    $region21: #{binary_classification_forward.5} parent=5 // pred_check
      %p180 = pneg %p179
    $region22: #{binary_classification_forward.5} parent=5 // pred_check_branch
      %182 = sbr.rel (%p180) target = $region24
    $region23: #{binary_classification_forward.5} parent=5 // pred_region
      // Predicated region
      $region25: #{binary_classification_forward.5} parent=23 // pred_check
        %p183 = pneg %p32
      $region26: #{binary_classification_forward.5} parent=23 // pred_check_branch
        %185 = sbr.rel (%p183) target = $region28
      $region27: #{binary_classification_forward.5} parent=23 // pred_region
        %s186 = smul.u32 5, %s12
        %p187 = scmp.lt.s32.totalorder %s186, 9
        %s188 = scalar_select %p187, %s186, 9
        %s189 = smul.addr %s188, 8
        %s190 = smul.addr %s189, 8
        %s191 = scalar_lea.vmem %s0, %s190
        %s192 = smul.u32 5, %s12
      $region28: #{binary_classification_forward.5} parent=23 // pred_fallthru
        _
      // Predicated region
      $region29: #{binary_classification_forward.5} parent=23 // pred_check
        %p193 = pneg %p58
      $region30: #{binary_classification_forward.5} parent=23 // pred_check_branch
        %195 = sbr.rel (%p193) target = $region32
      $region31: #{binary_classification_forward.5} parent=23 // pred_region
        %p196 = scmp.lt.s32.totalorder %s12, 1
        %s197 = scalar_select %p196, %s12, 1
        %s198 = smul.addr %s197, 8
        %s199 = scalar_lea.vmem %s1, %s198
      $region32: #{binary_classification_forward.5} parent=23 // pred_fallthru
        _
    $region24: #{binary_classification_forward.5} parent=5 // pred_fallthru
      _
    %p200 = scmp.le.s32.totalorder 1, %s12
    %p201 = scmp.lt.s32.totalorder %s12, 3
    %p202 = pnand %p200, %p201
    %p203 = pneg %p202
    // Predicated region
    $region33: #{binary_classification_forward.5} parent=5 // pred_check
      _
    $region34: #{binary_classification_forward.5} parent=5 // pred_check_branch
      %205 = sbr.rel (%p202) target = $region36
    $region35: #{binary_classification_forward.5} parent=5 // pred_region
      %s206 = ssub.s32 %s12, 1
      %s207 = smul.u32 5, %s17
      %p208 = scmp.lt.s32.totalorder %s207, 9
      %s209 = scalar_select %p208, %s207, 9
      %s210 = smul.addr %s209, 8
      %s211 = smul.addr %s210, 8
      %s212 = scalar_lea.vmem %s0, %s211
      %p213 = pneg %p38
      %p214 = pneg %p35
      %p215 = scmp.lt.s32.totalorder %s17, 1
      %s216 = scalar_select %p215, %s17, 1
      %s217 = smul.addr %s216, 8
      %s218 = scalar_lea.vmem %s1, %s217
      %p219 = pneg %p64
      %p220 = pneg %p61
      %p221 = pneg %p85
      %p222 = pneg %p82
      %p223 = pneg %p106
      %p224 = pneg %p103
      %p225 = pneg %p132
      %p226 = pneg %p129
      %s227 = smul.u32 20, %s17
      %p228 = scmp.lt.s32.totalorder %s227, 39
      %s229 = scalar_select %p228, %s227, 39
      %s230 = smul.addr %s229, 4
      %s231 = scalar_lea.vmem %s4, %s230
      %p232 = pneg %p158
      %p233 = pneg %p155
      %p234 = scmp.lt.s32.totalorder %s17, 1
      %s235 = scalar_select %p234, %s17, 1
      %s236 = smul.addr %s235, 2
      %s237 = scalar_lea.vmem %s5, %s236
      %s238 = smul.u32 5, %s17
      %p239 = scmp.lt.s32.totalorder %s238, 9
      %s240 = scalar_select %p239, %s238, 9
      %s241 = smul.addr %s240, 8
      %s242 = smul.addr %s241, 8
      %s243 = scalar_lea.vmem %s0, %s242
      %s244 = smul.u32 5, %s17
      %p245 = scmp.lt.s32.totalorder %s17, 1
      %s246 = scalar_select %p245, %s17, 1
      %s247 = smul.addr %s246, 8
      %s248 = scalar_lea.vmem %s1, %s247
      %s249 = smul.u32 20, %s17
      %p250 = scmp.lt.s32.totalorder %s249, 39
      %s251 = scalar_select %p250, %s249, 39
      %s252 = smul.addr %s251, 4
      %s253 = scalar_lea.vmem %s4, %s252
      %s254 = smul.u32 20, %s17
      %p255 = scmp.lt.s32.totalorder %s17, 1
      %s256 = scalar_select %p255, %s17, 1
      %s257 = smul.addr %s256, 2
      %s258 = scalar_lea.vmem %s5, %s257
      %v260 = vld [vmem:[%s243] sm:$0xff]
      %v261 = vld [vmem:[%s243 + $0x8] sm:$0xff]
      %v262 = vld [vmem:[%s243 + $0x10] sm:$0xff]
      %v263 = vld [vmem:[%s243 + $0x18] sm:$0xff]
      %v264 = vld [vmem:[%s243 + $0x20] sm:$0xff]
      %v265 = vld [vmem:[%s243 + $0x28] sm:$0xff]
      %v266 = vld [vmem:[%s243 + $0x30] sm:$0xff]
      %v267 = vld [vmem:[%s243 + $0x38] sm:$0xff]
      %v268 = vld [vmem:[%s243 + $0x40] sm:$0xff]
      %v269 = vld [vmem:[%s243 + $0x48] sm:$0xff]
      %v270 = vld [vmem:[%s243 + $0x50] sm:$0xff]
      %v271 = vld [vmem:[%s243 + $0x58] sm:$0xff]
      %v272 = vld [vmem:[%s243 + $0x60] sm:$0xff]
      %v273 = vld [vmem:[%s243 + $0x68] sm:$0xff]
      %v274 = vld [vmem:[%s243 + $0x70] sm:$0xff]
      %v275 = vld [vmem:[%s243 + $0x78] sm:$0xff]
      %v276 = vld [vmem:[%s243 + $0x80] sm:$0xff]
      %v277 = vld [vmem:[%s243 + $0x88] sm:$0xff]
      %v278 = vld [vmem:[%s243 + $0x90] sm:$0xff]
      %v279 = vld [vmem:[%s243 + $0x98] sm:$0xff]
      %v280 = vld [vmem:[%s243 + $0xa0] sm:$0xff]
      %v281 = vld [vmem:[%s243 + $0xa8] sm:$0xff]
      %v282 = vld [vmem:[%s243 + $0xb0] sm:$0xff]
      %v283 = vld [vmem:[%s243 + $0xb8] sm:$0xff]
      %v284 = vld [vmem:[%s243 + $0xc0] sm:$0xff]
      %v285 = vld [vmem:[%s243 + $0xc8] sm:$0xff]
      %v286 = vld [vmem:[%s243 + $0xd0] sm:$0xff]
      %v287 = vld [vmem:[%s243 + $0xd8] sm:$0xff]
      %v288 = vld [vmem:[%s243 + $0xe0] sm:$0xff]
      %v289 = vld [vmem:[%s243 + $0xe8] sm:$0xff]
      %v290 = vld [vmem:[%s243 + $0xf0] sm:$0xff]
      %v291 = vld [vmem:[%s243 + $0xf8] sm:$0xff]
      %v292 = vld [vmem:[%s243 + $0x100] sm:$0xff]
      %v293 = vld [vmem:[%s243 + $0x108] sm:$0xff]
      %v294 = vld [vmem:[%s243 + $0x110] sm:$0xff]
      %v295 = vld [vmem:[%s243 + $0x118] sm:$0xff]
      %v296 = vld [vmem:[%s243 + $0x120] sm:$0xff]
      %v297 = vld [vmem:[%s243 + $0x128] sm:$0xff]
      %v298 = vld [vmem:[%s243 + $0x130] sm:$0xff]
      %v299 = vld [vmem:[%s243 + $0x138] sm:$0xff]
      %v300 = vunpack.c.0.s8 %v260
      %v301 = vunpack.c.0.s8 %v261
      %v302 = vunpack.c.0.s8 %v262
      %v303 = vunpack.c.0.s8 %v263
      %v304 = vunpack.c.0.s8 %v264
      %v305 = vunpack.c.0.s8 %v265
      %v306 = vunpack.c.0.s8 %v266
      %v307 = vunpack.c.0.s8 %v267
      %v308 = vunpack.c.1.s8 %v260
      %v309 = vunpack.c.1.s8 %v261
      %v310 = vunpack.c.1.s8 %v262
      %v311 = vunpack.c.1.s8 %v263
      %v312 = vunpack.c.1.s8 %v264
      %v313 = vunpack.c.1.s8 %v265
      %v314 = vunpack.c.1.s8 %v266
      %v315 = vunpack.c.1.s8 %v267
      %v316 = vunpack.c.2.s8 %v260
      %v317 = vunpack.c.2.s8 %v261
      %v318 = vunpack.c.2.s8 %v262
      %v319 = vunpack.c.2.s8 %v263
      %v320 = vunpack.c.2.s8 %v264
      %v321 = vunpack.c.2.s8 %v265
      %v322 = vunpack.c.2.s8 %v266
      %v323 = vunpack.c.2.s8 %v267
      %v324 = vunpack.c.3.s8 %v260
      %v325 = vunpack.c.3.s8 %v261
      %v326 = vunpack.c.3.s8 %v262
      %v327 = vunpack.c.3.s8 %v263
      %v328 = vunpack.c.3.s8 %v264
      %v329 = vunpack.c.3.s8 %v265
      %v330 = vunpack.c.3.s8 %v266
      %v331 = vunpack.c.3.s8 %v267
      %v332 = vunpack.c.0.s8 %v268
      %v333 = vunpack.c.0.s8 %v269
      %v334 = vunpack.c.0.s8 %v270
      %v335 = vunpack.c.0.s8 %v271
      %v336 = vunpack.c.0.s8 %v272
      %v337 = vunpack.c.0.s8 %v273
      %v338 = vunpack.c.0.s8 %v274
      %v339 = vunpack.c.0.s8 %v275
      %v340 = vunpack.c.1.s8 %v268
      %v341 = vunpack.c.1.s8 %v269
      %v342 = vunpack.c.1.s8 %v270
      %v343 = vunpack.c.1.s8 %v271
      %v344 = vunpack.c.1.s8 %v272
      %v345 = vunpack.c.1.s8 %v273
      %v346 = vunpack.c.1.s8 %v274
      %v347 = vunpack.c.1.s8 %v275
      %v348 = vunpack.c.2.s8 %v268
      %v349 = vunpack.c.2.s8 %v269
      %v350 = vunpack.c.2.s8 %v270
      %v351 = vunpack.c.2.s8 %v271
      %v352 = vunpack.c.2.s8 %v272
      %v353 = vunpack.c.2.s8 %v273
      %v354 = vunpack.c.2.s8 %v274
      %v355 = vunpack.c.2.s8 %v275
      %v356 = vunpack.c.3.s8 %v268
      %v357 = vunpack.c.3.s8 %v269
      %v358 = vunpack.c.3.s8 %v270
      %v359 = vunpack.c.3.s8 %v271
      %v360 = vunpack.c.3.s8 %v272
      %v361 = vunpack.c.3.s8 %v273
      %v362 = vunpack.c.3.s8 %v274
      %v363 = vunpack.c.3.s8 %v275
      %v364 = vunpack.c.0.s8 %v276
      %v365 = vunpack.c.0.s8 %v277
      %v366 = vunpack.c.0.s8 %v278
      %v367 = vunpack.c.0.s8 %v279
      %v368 = vunpack.c.0.s8 %v280
      %v369 = vunpack.c.0.s8 %v281
      %v370 = vunpack.c.0.s8 %v282
      %v371 = vunpack.c.0.s8 %v283
      %v372 = vunpack.c.1.s8 %v276
      %v373 = vunpack.c.1.s8 %v277
      %v374 = vunpack.c.1.s8 %v278
      %v375 = vunpack.c.1.s8 %v279
      %v376 = vunpack.c.1.s8 %v280
      %v377 = vunpack.c.1.s8 %v281
      %v378 = vunpack.c.1.s8 %v282
      %v379 = vunpack.c.1.s8 %v283
      %v380 = vunpack.c.2.s8 %v276
      %v381 = vunpack.c.2.s8 %v277
      %v382 = vunpack.c.2.s8 %v278
      %v383 = vunpack.c.2.s8 %v279
      %v384 = vunpack.c.2.s8 %v280
      %v385 = vunpack.c.2.s8 %v281
      %v386 = vunpack.c.2.s8 %v282
      %v387 = vunpack.c.2.s8 %v283
      %v388 = vunpack.c.3.s8 %v276
      %v389 = vunpack.c.3.s8 %v277
      %v390 = vunpack.c.3.s8 %v278
      %v391 = vunpack.c.3.s8 %v279
      %v392 = vunpack.c.3.s8 %v280
      %v393 = vunpack.c.3.s8 %v281
      %v394 = vunpack.c.3.s8 %v282
      %v395 = vunpack.c.3.s8 %v283
      %v396 = vunpack.c.0.s8 %v284
      %v397 = vunpack.c.0.s8 %v285
      %v398 = vunpack.c.0.s8 %v286
      %v399 = vunpack.c.0.s8 %v287
      %v400 = vunpack.c.0.s8 %v288
      %v401 = vunpack.c.0.s8 %v289
      %v402 = vunpack.c.0.s8 %v290
      %v403 = vunpack.c.0.s8 %v291
      %v404 = vunpack.c.1.s8 %v284
      %v405 = vunpack.c.1.s8 %v285
      %v406 = vunpack.c.1.s8 %v286
      %v407 = vunpack.c.1.s8 %v287
      %v408 = vunpack.c.1.s8 %v288
      %v409 = vunpack.c.1.s8 %v289
      %v410 = vunpack.c.1.s8 %v290
      %v411 = vunpack.c.1.s8 %v291
      %v412 = vunpack.c.2.s8 %v284
      %v413 = vunpack.c.2.s8 %v285
      %v414 = vunpack.c.2.s8 %v286
      %v415 = vunpack.c.2.s8 %v287
      %v416 = vunpack.c.2.s8 %v288
      %v417 = vunpack.c.2.s8 %v289
      %v418 = vunpack.c.2.s8 %v290
      %v419 = vunpack.c.2.s8 %v291
      %v420 = vunpack.c.3.s8 %v284
      %v421 = vunpack.c.3.s8 %v285
      %v422 = vunpack.c.3.s8 %v286
      %v423 = vunpack.c.3.s8 %v287
      %v424 = vunpack.c.3.s8 %v288
      %v425 = vunpack.c.3.s8 %v289
      %v426 = vunpack.c.3.s8 %v290
      %v427 = vunpack.c.3.s8 %v291
      %v428 = vunpack.c.0.s8 %v292
      %v429 = vunpack.c.0.s8 %v293
      %v430 = vunpack.c.0.s8 %v294
      %v431 = vunpack.c.0.s8 %v295
      %v432 = vunpack.c.0.s8 %v296
      %v433 = vunpack.c.0.s8 %v297
      %v434 = vunpack.c.0.s8 %v298
      %v435 = vunpack.c.0.s8 %v299
      %v436 = vunpack.c.1.s8 %v292
      %v437 = vunpack.c.1.s8 %v293
      %v438 = vunpack.c.1.s8 %v294
      %v439 = vunpack.c.1.s8 %v295
      %v440 = vunpack.c.1.s8 %v296
      %v441 = vunpack.c.1.s8 %v297
      %v442 = vunpack.c.1.s8 %v298
      %v443 = vunpack.c.1.s8 %v299
      %v444 = vunpack.c.2.s8 %v292
      %v445 = vunpack.c.2.s8 %v293
      %v446 = vunpack.c.2.s8 %v294
      %v447 = vunpack.c.2.s8 %v295
      %v448 = vunpack.c.2.s8 %v296
      %v449 = vunpack.c.2.s8 %v297
      %v450 = vunpack.c.2.s8 %v298
      %v451 = vunpack.c.2.s8 %v299
      %v452 = vunpack.c.3.s8 %v292
      %v453 = vunpack.c.3.s8 %v293
      %v454 = vunpack.c.3.s8 %v294
      %v455 = vunpack.c.3.s8 %v295
      %v456 = vunpack.c.3.s8 %v296
      %v457 = vunpack.c.3.s8 %v297
      %v458 = vunpack.c.3.s8 %v298
      %v459 = vunpack.c.3.s8 %v299
      %v460 = vcvt.s32.f32 %v300
      %v461 = vcvt.s32.f32 %v301
      %v462 = vcvt.s32.f32 %v302
      %v463 = vcvt.s32.f32 %v303
      %v464 = vcvt.s32.f32 %v304
      %v465 = vcvt.s32.f32 %v305
      %v466 = vcvt.s32.f32 %v306
      %v467 = vcvt.s32.f32 %v307
      %v468 = vcvt.s32.f32 %v308
      %v469 = vcvt.s32.f32 %v309
      %v470 = vcvt.s32.f32 %v310
      %v471 = vcvt.s32.f32 %v311
      %v472 = vcvt.s32.f32 %v312
      %v473 = vcvt.s32.f32 %v313
      %v474 = vcvt.s32.f32 %v314
      %v475 = vcvt.s32.f32 %v315
      %v476 = vcvt.s32.f32 %v316
      %v477 = vcvt.s32.f32 %v317
      %v478 = vcvt.s32.f32 %v318
      %v479 = vcvt.s32.f32 %v319
      %v480 = vcvt.s32.f32 %v320
      %v481 = vcvt.s32.f32 %v321
      %v482 = vcvt.s32.f32 %v322
      %v483 = vcvt.s32.f32 %v323
      %v484 = vcvt.s32.f32 %v324
      %v485 = vcvt.s32.f32 %v325
      %v486 = vcvt.s32.f32 %v326
      %v487 = vcvt.s32.f32 %v327
      %v488 = vcvt.s32.f32 %v328
      %v489 = vcvt.s32.f32 %v329
      %v490 = vcvt.s32.f32 %v330
      %v491 = vcvt.s32.f32 %v331
      %v492 = vcvt.s32.f32 %v332
      %v493 = vcvt.s32.f32 %v333
      %v494 = vcvt.s32.f32 %v334
      %v495 = vcvt.s32.f32 %v335
      %v496 = vcvt.s32.f32 %v336
      %v497 = vcvt.s32.f32 %v337
      %v498 = vcvt.s32.f32 %v338
      %v499 = vcvt.s32.f32 %v339
      %v500 = vcvt.s32.f32 %v340
      %v501 = vcvt.s32.f32 %v341
      %v502 = vcvt.s32.f32 %v342
      %v503 = vcvt.s32.f32 %v343
      %v504 = vcvt.s32.f32 %v344
      %v505 = vcvt.s32.f32 %v345
      %v506 = vcvt.s32.f32 %v346
      %v507 = vcvt.s32.f32 %v347
      %v508 = vcvt.s32.f32 %v348
      %v509 = vcvt.s32.f32 %v349
      %v510 = vcvt.s32.f32 %v350
      %v511 = vcvt.s32.f32 %v351
      %v512 = vcvt.s32.f32 %v352
      %v513 = vcvt.s32.f32 %v353
      %v514 = vcvt.s32.f32 %v354
      %v515 = vcvt.s32.f32 %v355
      %v516 = vcvt.s32.f32 %v356
      %v517 = vcvt.s32.f32 %v357
      %v518 = vcvt.s32.f32 %v358
      %v519 = vcvt.s32.f32 %v359
      %v520 = vcvt.s32.f32 %v360
      %v521 = vcvt.s32.f32 %v361
      %v522 = vcvt.s32.f32 %v362
      %v523 = vcvt.s32.f32 %v363
      %v524 = vcvt.s32.f32 %v364
      %v525 = vcvt.s32.f32 %v365
      %v526 = vcvt.s32.f32 %v366
      %v527 = vcvt.s32.f32 %v367
      %v528 = vcvt.s32.f32 %v368
      %v529 = vcvt.s32.f32 %v369
      %v530 = vcvt.s32.f32 %v370
      %v531 = vcvt.s32.f32 %v371
      %v532 = vcvt.s32.f32 %v372
      %v533 = vcvt.s32.f32 %v373
      %v534 = vcvt.s32.f32 %v374
      %v535 = vcvt.s32.f32 %v375
      %v536 = vcvt.s32.f32 %v376
      %v537 = vcvt.s32.f32 %v377
      %v538 = vcvt.s32.f32 %v378
      %v539 = vcvt.s32.f32 %v379
      %v540 = vcvt.s32.f32 %v380
      %v541 = vcvt.s32.f32 %v381
      %v542 = vcvt.s32.f32 %v382
      %v543 = vcvt.s32.f32 %v383
      %v544 = vcvt.s32.f32 %v384
      %v545 = vcvt.s32.f32 %v385
      %v546 = vcvt.s32.f32 %v386
      %v547 = vcvt.s32.f32 %v387
      %v548 = vcvt.s32.f32 %v388
      %v549 = vcvt.s32.f32 %v389
      %v550 = vcvt.s32.f32 %v390
      %v551 = vcvt.s32.f32 %v391
      %v552 = vcvt.s32.f32 %v392
      %v553 = vcvt.s32.f32 %v393
      %v554 = vcvt.s32.f32 %v394
      %v555 = vcvt.s32.f32 %v395
      %v556 = vcvt.s32.f32 %v396
      %v557 = vcvt.s32.f32 %v397
      %v558 = vcvt.s32.f32 %v398
      %v559 = vcvt.s32.f32 %v399
      %v560 = vcvt.s32.f32 %v400
      %v561 = vcvt.s32.f32 %v401
      %v562 = vcvt.s32.f32 %v402
      %v563 = vcvt.s32.f32 %v403
      %v564 = vcvt.s32.f32 %v404
      %v565 = vcvt.s32.f32 %v405
      %v566 = vcvt.s32.f32 %v406
      %v567 = vcvt.s32.f32 %v407
      %v568 = vcvt.s32.f32 %v408
      %v569 = vcvt.s32.f32 %v409
      %v570 = vcvt.s32.f32 %v410
      %v571 = vcvt.s32.f32 %v411
      %v572 = vcvt.s32.f32 %v412
      %v573 = vcvt.s32.f32 %v413
      %v574 = vcvt.s32.f32 %v414
      %v575 = vcvt.s32.f32 %v415
      %v576 = vcvt.s32.f32 %v416
      %v577 = vcvt.s32.f32 %v417
      %v578 = vcvt.s32.f32 %v418
      %v579 = vcvt.s32.f32 %v419
      %v580 = vcvt.s32.f32 %v420
      %v581 = vcvt.s32.f32 %v421
      %v582 = vcvt.s32.f32 %v422
      %v583 = vcvt.s32.f32 %v423
      %v584 = vcvt.s32.f32 %v424
      %v585 = vcvt.s32.f32 %v425
      %v586 = vcvt.s32.f32 %v426
      %v587 = vcvt.s32.f32 %v427
      %v588 = vcvt.s32.f32 %v428
      %v589 = vcvt.s32.f32 %v429
      %v590 = vcvt.s32.f32 %v430
      %v591 = vcvt.s32.f32 %v431
      %v592 = vcvt.s32.f32 %v432
      %v593 = vcvt.s32.f32 %v433
      %v594 = vcvt.s32.f32 %v434
      %v595 = vcvt.s32.f32 %v435
      %v596 = vcvt.s32.f32 %v436
      %v597 = vcvt.s32.f32 %v437
      %v598 = vcvt.s32.f32 %v438
      %v599 = vcvt.s32.f32 %v439
      %v600 = vcvt.s32.f32 %v440
      %v601 = vcvt.s32.f32 %v441
      %v602 = vcvt.s32.f32 %v442
      %v603 = vcvt.s32.f32 %v443
      %v604 = vcvt.s32.f32 %v444
      %v605 = vcvt.s32.f32 %v445
      %v606 = vcvt.s32.f32 %v446
      %v607 = vcvt.s32.f32 %v447
      %v608 = vcvt.s32.f32 %v448
      %v609 = vcvt.s32.f32 %v449
      %v610 = vcvt.s32.f32 %v450
      %v611 = vcvt.s32.f32 %v451
      %v612 = vcvt.s32.f32 %v452
      %v613 = vcvt.s32.f32 %v453
      %v614 = vcvt.s32.f32 %v454
      %v615 = vcvt.s32.f32 %v455
      %v616 = vcvt.s32.f32 %v456
      %v617 = vcvt.s32.f32 %v457
      %v618 = vcvt.s32.f32 %v458
      %v619 = vcvt.s32.f32 %v459
      %v620 = vld [vmem:[%s248] sm:$0xff]
      %v622 = vlaneseq
      %v623 = vshrl.u32 %v622, 7
      %v624 = vsub.s32 0, %v623
      %v625 = vrot.slane %v620, %v624
      %v626 = vlaneseq
      %v627 = vshrl.u32 %v626, 7
      %v628 = vsub.s32 1, %v627
      %v629 = vrot.slane %v620, %v628
      %v630 = vlaneseq
      %v631 = vshrl.u32 %v630, 7
      %v632 = vsub.s32 2, %v631
      %v633 = vrot.slane %v620, %v632
      %v634 = vlaneseq
      %v635 = vshrl.u32 %v634, 7
      %v636 = vsub.s32 3, %v635
      %v637 = vrot.slane %v620, %v636
      %v638 = vlaneseq
      %v639 = vshrl.u32 %v638, 7
      %v640 = vsub.s32 4, %v639
      %v641 = vrot.slane %v620, %v640
      %v642 = vlaneseq
      %v643 = vshrl.u32 %v642, 7
      %v644 = vsub.s32 5, %v643
      %v645 = vrot.slane %v620, %v644
      %v646 = vlaneseq
      %v647 = vshrl.u32 %v646, 7
      %v648 = vsub.s32 6, %v647
      %v649 = vrot.slane %v620, %v648
      %v650 = vlaneseq
      %v651 = vshrl.u32 %v650, 7
      %v652 = vsub.s32 7, %v651
      %v653 = vrot.slane %v620, %v652
      %v662 = vmul.f32 %v460, %v625
      %v663 = vmul.f32 %v461, %v629
      %v664 = vmul.f32 %v462, %v633
      %v665 = vmul.f32 %v463, %v637
      %v666 = vmul.f32 %v464, %v641
      %v667 = vmul.f32 %v465, %v645
      %v668 = vmul.f32 %v466, %v649
      %v669 = vmul.f32 %v467, %v653
      %v670 = vmul.f32 %v468, %v625
      %v671 = vmul.f32 %v469, %v629
      %v672 = vmul.f32 %v470, %v633
      %v673 = vmul.f32 %v471, %v637
      %v674 = vmul.f32 %v472, %v641
      %v675 = vmul.f32 %v473, %v645
      %v676 = vmul.f32 %v474, %v649
      %v677 = vmul.f32 %v475, %v653
      %v678 = vmul.f32 %v476, %v625
      %v679 = vmul.f32 %v477, %v629
      %v680 = vmul.f32 %v478, %v633
      %v681 = vmul.f32 %v479, %v637
      %v682 = vmul.f32 %v480, %v641
      %v683 = vmul.f32 %v481, %v645
      %v684 = vmul.f32 %v482, %v649
      %v685 = vmul.f32 %v483, %v653
      %v686 = vmul.f32 %v484, %v625
      %v687 = vmul.f32 %v485, %v629
      %v688 = vmul.f32 %v486, %v633
      %v689 = vmul.f32 %v487, %v637
      %v690 = vmul.f32 %v488, %v641
      %v691 = vmul.f32 %v489, %v645
      %v692 = vmul.f32 %v490, %v649
      %v693 = vmul.f32 %v491, %v653
      %v694 = vmul.f32 %v492, %v625
      %v695 = vmul.f32 %v493, %v629
      %v696 = vmul.f32 %v494, %v633
      %v697 = vmul.f32 %v495, %v637
      %v698 = vmul.f32 %v496, %v641
      %v699 = vmul.f32 %v497, %v645
      %v700 = vmul.f32 %v498, %v649
      %v701 = vmul.f32 %v499, %v653
      %v702 = vmul.f32 %v500, %v625
      %v703 = vmul.f32 %v501, %v629
      %v704 = vmul.f32 %v502, %v633
      %v705 = vmul.f32 %v503, %v637
      %v706 = vmul.f32 %v504, %v641
      %v707 = vmul.f32 %v505, %v645
      %v708 = vmul.f32 %v506, %v649
      %v709 = vmul.f32 %v507, %v653
      %v710 = vmul.f32 %v508, %v625
      %v711 = vmul.f32 %v509, %v629
      %v712 = vmul.f32 %v510, %v633
      %v713 = vmul.f32 %v511, %v637
      %v714 = vmul.f32 %v512, %v641
      %v715 = vmul.f32 %v513, %v645
      %v716 = vmul.f32 %v514, %v649
      %v717 = vmul.f32 %v515, %v653
      %v718 = vmul.f32 %v516, %v625
      %v719 = vmul.f32 %v517, %v629
      %v720 = vmul.f32 %v518, %v633
      %v721 = vmul.f32 %v519, %v637
      %v722 = vmul.f32 %v520, %v641
      %v723 = vmul.f32 %v521, %v645
      %v724 = vmul.f32 %v522, %v649
      %v725 = vmul.f32 %v523, %v653
      %v726 = vmul.f32 %v524, %v625
      %v727 = vmul.f32 %v525, %v629
      %v728 = vmul.f32 %v526, %v633
      %v729 = vmul.f32 %v527, %v637
      %v730 = vmul.f32 %v528, %v641
      %v731 = vmul.f32 %v529, %v645
      %v732 = vmul.f32 %v530, %v649
      %v733 = vmul.f32 %v531, %v653
      %v734 = vmul.f32 %v532, %v625
      %v735 = vmul.f32 %v533, %v629
      %v736 = vmul.f32 %v534, %v633
      %v737 = vmul.f32 %v535, %v637
      %v738 = vmul.f32 %v536, %v641
      %v739 = vmul.f32 %v537, %v645
      %v740 = vmul.f32 %v538, %v649
      %v741 = vmul.f32 %v539, %v653
      %v742 = vmul.f32 %v540, %v625
      %v743 = vmul.f32 %v541, %v629
      %v744 = vmul.f32 %v542, %v633
      %v745 = vmul.f32 %v543, %v637
      %v746 = vmul.f32 %v544, %v641
      %v747 = vmul.f32 %v545, %v645
      %v748 = vmul.f32 %v546, %v649
      %v749 = vmul.f32 %v547, %v653
      %v750 = vmul.f32 %v548, %v625
      %v751 = vmul.f32 %v549, %v629
      %v752 = vmul.f32 %v550, %v633
      %v753 = vmul.f32 %v551, %v637
      %v754 = vmul.f32 %v552, %v641
      %v755 = vmul.f32 %v553, %v645
      %v756 = vmul.f32 %v554, %v649
      %v757 = vmul.f32 %v555, %v653
      %v758 = vmul.f32 %v556, %v625
      %v759 = vmul.f32 %v557, %v629
      %v760 = vmul.f32 %v558, %v633
      %v761 = vmul.f32 %v559, %v637
      %v762 = vmul.f32 %v560, %v641
      %v763 = vmul.f32 %v561, %v645
      %v764 = vmul.f32 %v562, %v649
      %v765 = vmul.f32 %v563, %v653
      %v766 = vmul.f32 %v564, %v625
      %v767 = vmul.f32 %v565, %v629
      %v768 = vmul.f32 %v566, %v633
      %v769 = vmul.f32 %v567, %v637
      %v770 = vmul.f32 %v568, %v641
      %v771 = vmul.f32 %v569, %v645
      %v772 = vmul.f32 %v570, %v649
      %v773 = vmul.f32 %v571, %v653
      %v774 = vmul.f32 %v572, %v625
      %v775 = vmul.f32 %v573, %v629
      %v776 = vmul.f32 %v574, %v633
      %v777 = vmul.f32 %v575, %v637
      %v778 = vmul.f32 %v576, %v641
      %v779 = vmul.f32 %v577, %v645
      %v780 = vmul.f32 %v578, %v649
      %v781 = vmul.f32 %v579, %v653
      %v782 = vmul.f32 %v580, %v625
      %v783 = vmul.f32 %v581, %v629
      %v784 = vmul.f32 %v582, %v633
      %v785 = vmul.f32 %v583, %v637
      %v786 = vmul.f32 %v584, %v641
      %v787 = vmul.f32 %v585, %v645
      %v788 = vmul.f32 %v586, %v649
      %v789 = vmul.f32 %v587, %v653
      %v790 = vmul.f32 %v588, %v625
      %v791 = vmul.f32 %v589, %v629
      %v792 = vmul.f32 %v590, %v633
      %v793 = vmul.f32 %v591, %v637
      %v794 = vmul.f32 %v592, %v641
      %v795 = vmul.f32 %v593, %v645
      %v796 = vmul.f32 %v594, %v649
      %v797 = vmul.f32 %v595, %v653
      %v798 = vmul.f32 %v596, %v625
      %v799 = vmul.f32 %v597, %v629
      %v800 = vmul.f32 %v598, %v633
      %v801 = vmul.f32 %v599, %v637
      %v802 = vmul.f32 %v600, %v641
      %v803 = vmul.f32 %v601, %v645
      %v804 = vmul.f32 %v602, %v649
      %v805 = vmul.f32 %v603, %v653
      %v806 = vmul.f32 %v604, %v625
      %v807 = vmul.f32 %v605, %v629
      %v808 = vmul.f32 %v606, %v633
      %v809 = vmul.f32 %v607, %v637
      %v810 = vmul.f32 %v608, %v641
      %v811 = vmul.f32 %v609, %v645
      %v812 = vmul.f32 %v610, %v649
      %v813 = vmul.f32 %v611, %v653
      %v814 = vmul.f32 %v612, %v625
      %v815 = vmul.f32 %v613, %v629
      %v816 = vmul.f32 %v614, %v633
      %v817 = vmul.f32 %v615, %v637
      %v818 = vmul.f32 %v616, %v641
      %v819 = vmul.f32 %v617, %v645
      %v820 = vmul.f32 %v618, %v649
      %v821 = vmul.f32 %v619, %v653
      %v822 = vpack.c.bf16 %v670, %v662
      %v823 = vpack.c.bf16 %v671, %v663
      %v824 = vpack.c.bf16 %v672, %v664
      %v825 = vpack.c.bf16 %v673, %v665
      %v826 = vpack.c.bf16 %v674, %v666
      %v827 = vpack.c.bf16 %v675, %v667
      %v828 = vpack.c.bf16 %v676, %v668
      %v829 = vpack.c.bf16 %v677, %v669
      %v830 = vpack.c.bf16 %v686, %v678
      %v831 = vpack.c.bf16 %v687, %v679
      %v832 = vpack.c.bf16 %v688, %v680
      %v833 = vpack.c.bf16 %v689, %v681
      %v834 = vpack.c.bf16 %v690, %v682
      %v835 = vpack.c.bf16 %v691, %v683
      %v836 = vpack.c.bf16 %v692, %v684
      %v837 = vpack.c.bf16 %v693, %v685
      %v838 = vpack.c.bf16 %v702, %v694
      %v839 = vpack.c.bf16 %v703, %v695
      %v840 = vpack.c.bf16 %v704, %v696
      %v841 = vpack.c.bf16 %v705, %v697
      %v842 = vpack.c.bf16 %v706, %v698
      %v843 = vpack.c.bf16 %v707, %v699
      %v844 = vpack.c.bf16 %v708, %v700
      %v845 = vpack.c.bf16 %v709, %v701
      %v846 = vpack.c.bf16 %v718, %v710
      %v847 = vpack.c.bf16 %v719, %v711
      %v848 = vpack.c.bf16 %v720, %v712
      %v849 = vpack.c.bf16 %v721, %v713
      %v850 = vpack.c.bf16 %v722, %v714
      %v851 = vpack.c.bf16 %v723, %v715
      %v852 = vpack.c.bf16 %v724, %v716
      %v853 = vpack.c.bf16 %v725, %v717
      %v854 = vpack.c.bf16 %v734, %v726
      %v855 = vpack.c.bf16 %v735, %v727
      %v856 = vpack.c.bf16 %v736, %v728
      %v857 = vpack.c.bf16 %v737, %v729
      %v858 = vpack.c.bf16 %v738, %v730
      %v859 = vpack.c.bf16 %v739, %v731
      %v860 = vpack.c.bf16 %v740, %v732
      %v861 = vpack.c.bf16 %v741, %v733
      %v862 = vpack.c.bf16 %v750, %v742
      %v863 = vpack.c.bf16 %v751, %v743
      %v864 = vpack.c.bf16 %v752, %v744
      %v865 = vpack.c.bf16 %v753, %v745
      %v866 = vpack.c.bf16 %v754, %v746
      %v867 = vpack.c.bf16 %v755, %v747
      %v868 = vpack.c.bf16 %v756, %v748
      %v869 = vpack.c.bf16 %v757, %v749
      %v870 = vpack.c.bf16 %v766, %v758
      %v871 = vpack.c.bf16 %v767, %v759
      %v872 = vpack.c.bf16 %v768, %v760
      %v873 = vpack.c.bf16 %v769, %v761
      %v874 = vpack.c.bf16 %v770, %v762
      %v875 = vpack.c.bf16 %v771, %v763
      %v876 = vpack.c.bf16 %v772, %v764
      %v877 = vpack.c.bf16 %v773, %v765
      %v878 = vpack.c.bf16 %v782, %v774
      %v879 = vpack.c.bf16 %v783, %v775
      %v880 = vpack.c.bf16 %v784, %v776
      %v881 = vpack.c.bf16 %v785, %v777
      %v882 = vpack.c.bf16 %v786, %v778
      %v883 = vpack.c.bf16 %v787, %v779
      %v884 = vpack.c.bf16 %v788, %v780
      %v885 = vpack.c.bf16 %v789, %v781
      %v886 = vpack.c.bf16 %v798, %v790
      %v887 = vpack.c.bf16 %v799, %v791
      %v888 = vpack.c.bf16 %v800, %v792
      %v889 = vpack.c.bf16 %v801, %v793
      %v890 = vpack.c.bf16 %v802, %v794
      %v891 = vpack.c.bf16 %v803, %v795
      %v892 = vpack.c.bf16 %v804, %v796
      %v893 = vpack.c.bf16 %v805, %v797
      %v894 = vpack.c.bf16 %v814, %v806
      %v895 = vpack.c.bf16 %v815, %v807
      %v896 = vpack.c.bf16 %v816, %v808
      %v897 = vpack.c.bf16 %v817, %v809
      %v898 = vpack.c.bf16 %v818, %v810
      %v899 = vpack.c.bf16 %v819, %v811
      %v900 = vpack.c.bf16 %v820, %v812
      %v901 = vpack.c.bf16 %v821, %v813
      %v902 = vld [vmem:[%s2] sm:$0xf]
      %v903 = vld [vmem:[%s2 + $0x4] sm:$0xf]
      %v904 = vld [vmem:[%s2 + $0x8] sm:$0xf]
      %v905 = vld [vmem:[%s2 + $0xc] sm:$0xf]
      %v906 = vld [vmem:[%s2 + $0x10] sm:$0xf]
      %v907 = vld [vmem:[%s2 + $0x14] sm:$0xf]
      %v908 = vld [vmem:[%s2 + $0x18] sm:$0xf]
      %v909 = vld [vmem:[%s2 + $0x1c] sm:$0xf]
      %v910 = vld [vmem:[%s2 + $0x20] sm:$0xf]
      %v911 = vld [vmem:[%s2 + $0x24] sm:$0xf]
      %v912 = vld [vmem:[%s2 + $0x28] sm:$0xf]
      %v913 = vld [vmem:[%s2 + $0x2c] sm:$0xf]
      %v914 = vld [vmem:[%s2 + $0x30] sm:$0xf]
      %v915 = vld [vmem:[%s2 + $0x34] sm:$0xf]
      %v916 = vld [vmem:[%s2 + $0x38] sm:$0xf]
      %v917 = vld [vmem:[%s2 + $0x3c] sm:$0xf]
      %v918 = vld [vmem:[%s2 + $0x40] sm:$0xf]
      %v919 = vld [vmem:[%s2 + $0x44] sm:$0xf]
      %v920 = vld [vmem:[%s2 + $0x48] sm:$0xf]
      %v921 = vld [vmem:[%s2 + $0x4c] sm:$0xf]
      %v922 = vld [vmem:[%s2 + $0x50] sm:$0xf]
      %v923 = vld [vmem:[%s2 + $0x54] sm:$0xf]
      %v924 = vld [vmem:[%s2 + $0x58] sm:$0xf]
      %v925 = vld [vmem:[%s2 + $0x5c] sm:$0xf]
      %v926 = vld [vmem:[%s2 + $0x60] sm:$0xf]
      %v927 = vld [vmem:[%s2 + $0x64] sm:$0xf]
      %v928 = vld [vmem:[%s2 + $0x68] sm:$0xf]
      %v929 = vld [vmem:[%s2 + $0x6c] sm:$0xf]
      %v930 = vld [vmem:[%s2 + $0x70] sm:$0xf]
      %v931 = vld [vmem:[%s2 + $0x74] sm:$0xf]
      %v932 = vld [vmem:[%s2 + $0x78] sm:$0xf]
      %v933 = vld [vmem:[%s2 + $0x7c] sm:$0xf]
      %v934 = vld [vmem:[%s2 + $0x80] sm:$0xf]
      %v935 = vld [vmem:[%s2 + $0x84] sm:$0xf]
      %v936 = vld [vmem:[%s2 + $0x88] sm:$0xf]
      %v937 = vld [vmem:[%s2 + $0x8c] sm:$0xf]
      %v938 = vld [vmem:[%s2 + $0x90] sm:$0xf]
      %v939 = vld [vmem:[%s2 + $0x94] sm:$0xf]
      %v940 = vld [vmem:[%s2 + $0x98] sm:$0xf]
      %v941 = vld [vmem:[%s2 + $0x9c] sm:$0xf]
      %v942 = vld [vmem:[%s2 + $0xa0] sm:$0xf]
      %v943 = vld [vmem:[%s2 + $0xa4] sm:$0xf]
      %v944 = vld [vmem:[%s2 + $0xa8] sm:$0xf]
      %v945 = vld [vmem:[%s2 + $0xac] sm:$0xf]
      %v946 = vld [vmem:[%s2 + $0xb0] sm:$0xf]
      %v947 = vld [vmem:[%s2 + $0xb4] sm:$0xf]
      %v948 = vld [vmem:[%s2 + $0xb8] sm:$0xf]
      %v949 = vld [vmem:[%s2 + $0xbc] sm:$0xf]
      %v950 = vld [vmem:[%s2 + $0xc0] sm:$0xf]
      %v951 = vld [vmem:[%s2 + $0xc4] sm:$0xf]
      %v952 = vld [vmem:[%s2 + $0xc8] sm:$0xf]
      %v953 = vld [vmem:[%s2 + $0xcc] sm:$0xf]
      %v954 = vld [vmem:[%s2 + $0xd0] sm:$0xf]
      %v955 = vld [vmem:[%s2 + $0xd4] sm:$0xf]
      %v956 = vld [vmem:[%s2 + $0xd8] sm:$0xf]
      %v957 = vld [vmem:[%s2 + $0xdc] sm:$0xf]
      %v958 = vld [vmem:[%s2 + $0xe0] sm:$0xf]
      %v959 = vld [vmem:[%s2 + $0xe4] sm:$0xf]
      %v960 = vld [vmem:[%s2 + $0xe8] sm:$0xf]
      %v961 = vld [vmem:[%s2 + $0xec] sm:$0xf]
      %v962 = vld [vmem:[%s2 + $0xf0] sm:$0xf]
      %v963 = vld [vmem:[%s2 + $0xf4] sm:$0xf]
      %v964 = vld [vmem:[%s2 + $0xf8] sm:$0xf]
      %v965 = vld [vmem:[%s2 + $0xfc] sm:$0xf]
      %v966 = vld [vmem:[%s2 + $0x100] sm:$0xf]
      %v967 = vld [vmem:[%s2 + $0x104] sm:$0xf]
      %v968 = vld [vmem:[%s2 + $0x108] sm:$0xf]
      %v969 = vld [vmem:[%s2 + $0x10c] sm:$0xf]
      %v970 = vld [vmem:[%s2 + $0x110] sm:$0xf]
      %v971 = vld [vmem:[%s2 + $0x114] sm:$0xf]
      %v972 = vld [vmem:[%s2 + $0x118] sm:$0xf]
      %v973 = vld [vmem:[%s2 + $0x11c] sm:$0xf]
      %v974 = vld [vmem:[%s2 + $0x120] sm:$0xf]
      %v975 = vld [vmem:[%s2 + $0x124] sm:$0xf]
      %v976 = vld [vmem:[%s2 + $0x128] sm:$0xf]
      %v977 = vld [vmem:[%s2 + $0x12c] sm:$0xf]
      %v978 = vld [vmem:[%s2 + $0x130] sm:$0xf]
      %v979 = vld [vmem:[%s2 + $0x134] sm:$0xf]
      %v980 = vld [vmem:[%s2 + $0x138] sm:$0xf]
      %v981 = vld [vmem:[%s2 + $0x13c] sm:$0xf]
      %v982 = vld [vmem:[%s2 + $0x140] sm:$0xf]
      %v983 = vld [vmem:[%s2 + $0x144] sm:$0xf]
      %v984 = vld [vmem:[%s2 + $0x148] sm:$0xf]
      %v985 = vld [vmem:[%s2 + $0x14c] sm:$0xf]
      %v986 = vld [vmem:[%s2 + $0x150] sm:$0xf]
      %v987 = vld [vmem:[%s2 + $0x154] sm:$0xf]
      %v988 = vld [vmem:[%s2 + $0x158] sm:$0xf]
      %v989 = vld [vmem:[%s2 + $0x15c] sm:$0xf]
      %v990 = vld [vmem:[%s2 + $0x160] sm:$0xf]
      %v991 = vld [vmem:[%s2 + $0x164] sm:$0xf]
      %v992 = vld [vmem:[%s2 + $0x168] sm:$0xf]
      %v993 = vld [vmem:[%s2 + $0x16c] sm:$0xf]
      %v994 = vld [vmem:[%s2 + $0x170] sm:$0xf]
      %v995 = vld [vmem:[%s2 + $0x174] sm:$0xf]
      %v996 = vld [vmem:[%s2 + $0x178] sm:$0xf]
      %v997 = vld [vmem:[%s2 + $0x17c] sm:$0xf]
      %v998 = vld [vmem:[%s2 + $0x180] sm:$0xf]
      %v999 = vld [vmem:[%s2 + $0x184] sm:$0xf]
      %v1000 = vld [vmem:[%s2 + $0x188] sm:$0xf]
      %v1001 = vld [vmem:[%s2 + $0x18c] sm:$0xf]
      %v1002 = vld [vmem:[%s2 + $0x190] sm:$0xf]
      %v1003 = vld [vmem:[%s2 + $0x194] sm:$0xf]
      %v1004 = vld [vmem:[%s2 + $0x198] sm:$0xf]
      %v1005 = vld [vmem:[%s2 + $0x19c] sm:$0xf]
      %v1006 = vld [vmem:[%s2 + $0x1a0] sm:$0xf]
      %v1007 = vld [vmem:[%s2 + $0x1a4] sm:$0xf]
      %v1008 = vld [vmem:[%s2 + $0x1a8] sm:$0xf]
      %v1009 = vld [vmem:[%s2 + $0x1ac] sm:$0xf]
      %v1010 = vld [vmem:[%s2 + $0x1b0] sm:$0xf]
      %v1011 = vld [vmem:[%s2 + $0x1b4] sm:$0xf]
      %v1012 = vld [vmem:[%s2 + $0x1b8] sm:$0xf]
      %v1013 = vld [vmem:[%s2 + $0x1bc] sm:$0xf]
      %v1014 = vld [vmem:[%s2 + $0x1c0] sm:$0xf]
      %v1015 = vld [vmem:[%s2 + $0x1c4] sm:$0xf]
      %v1016 = vld [vmem:[%s2 + $0x1c8] sm:$0xf]
      %v1017 = vld [vmem:[%s2 + $0x1cc] sm:$0xf]
      %v1018 = vld [vmem:[%s2 + $0x1d0] sm:$0xf]
      %v1019 = vld [vmem:[%s2 + $0x1d4] sm:$0xf]
      %v1020 = vld [vmem:[%s2 + $0x1d8] sm:$0xf]
      %v1021 = vld [vmem:[%s2 + $0x1dc] sm:$0xf]
      %v1022 = vld [vmem:[%s2 + $0x1e0] sm:$0xf]
      %v1023 = vld [vmem:[%s2 + $0x1e4] sm:$0xf]
      %v1024 = vld [vmem:[%s2 + $0x1e8] sm:$0xf]
      %v1025 = vld [vmem:[%s2 + $0x1ec] sm:$0xf]
      %v1026 = vld [vmem:[%s2 + $0x1f0] sm:$0xf]
      %v1027 = vld [vmem:[%s2 + $0x1f4] sm:$0xf]
      %v1028 = vld [vmem:[%s2 + $0x1f8] sm:$0xf]
      %v1029 = vld [vmem:[%s2 + $0x1fc] sm:$0xf]
      %v1030 = vld [vmem:[%s3] sm:$0x1]
      %v1032 = vlaneseq
      %v1033 = vshrl.u32 %v1032, 7
      %v1034 = vsub.s32 0, %v1033
      %v1035 = vrot.slane %v1030, %v1034
      %v1165 = vunpack.c.l.b16 %v902
      %v1166 = vunpack.c.l.b16 %v903
      %v1167 = vunpack.c.l.b16 %v904
      %v1168 = vunpack.c.l.b16 %v905
      %v1169 = vunpack.c.l.b16 %v906
      %v1170 = vunpack.c.l.b16 %v907
      %v1171 = vunpack.c.l.b16 %v908
      %v1172 = vunpack.c.l.b16 %v909
      %v1173 = vunpack.c.l.b16 %v910
      %v1174 = vunpack.c.l.b16 %v911
      %v1175 = vunpack.c.l.b16 %v912
      %v1176 = vunpack.c.l.b16 %v913
      %v1177 = vunpack.c.l.b16 %v914
      %v1178 = vunpack.c.l.b16 %v915
      %v1179 = vunpack.c.l.b16 %v916
      %v1180 = vunpack.c.l.b16 %v917
      %v1181 = vunpack.c.l.b16 %v918
      %v1182 = vunpack.c.l.b16 %v919
      %v1183 = vunpack.c.l.b16 %v920
      %v1184 = vunpack.c.l.b16 %v921
      %v1185 = vunpack.c.l.b16 %v922
      %v1186 = vunpack.c.l.b16 %v923
      %v1187 = vunpack.c.l.b16 %v924
      %v1188 = vunpack.c.l.b16 %v925
      %v1189 = vunpack.c.l.b16 %v926
      %v1190 = vunpack.c.l.b16 %v927
      %v1191 = vunpack.c.l.b16 %v928
      %v1192 = vunpack.c.l.b16 %v929
      %v1193 = vunpack.c.l.b16 %v930
      %v1194 = vunpack.c.l.b16 %v931
      %v1195 = vunpack.c.l.b16 %v932
      %v1196 = vunpack.c.l.b16 %v933
      %v1197 = vunpack.c.l.b16 %v934
      %v1198 = vunpack.c.l.b16 %v935
      %v1199 = vunpack.c.l.b16 %v936
      %v1200 = vunpack.c.l.b16 %v937
      %v1201 = vunpack.c.l.b16 %v938
      %v1202 = vunpack.c.l.b16 %v939
      %v1203 = vunpack.c.l.b16 %v940
      %v1204 = vunpack.c.l.b16 %v941
      %v1205 = vunpack.c.l.b16 %v942
      %v1206 = vunpack.c.l.b16 %v943
      %v1207 = vunpack.c.l.b16 %v944
      %v1208 = vunpack.c.l.b16 %v945
      %v1209 = vunpack.c.l.b16 %v946
      %v1210 = vunpack.c.l.b16 %v947
      %v1211 = vunpack.c.l.b16 %v948
      %v1212 = vunpack.c.l.b16 %v949
      %v1213 = vunpack.c.l.b16 %v950
      %v1214 = vunpack.c.l.b16 %v951
      %v1215 = vunpack.c.l.b16 %v952
      %v1216 = vunpack.c.l.b16 %v953
      %v1217 = vunpack.c.l.b16 %v954
      %v1218 = vunpack.c.l.b16 %v955
      %v1219 = vunpack.c.l.b16 %v956
      %v1220 = vunpack.c.l.b16 %v957
      %v1221 = vunpack.c.l.b16 %v958
      %v1222 = vunpack.c.l.b16 %v959
      %v1223 = vunpack.c.l.b16 %v960
      %v1224 = vunpack.c.l.b16 %v961
      %v1225 = vunpack.c.l.b16 %v962
      %v1226 = vunpack.c.l.b16 %v963
      %v1227 = vunpack.c.l.b16 %v964
      %v1228 = vunpack.c.l.b16 %v965
      %v1229 = vunpack.c.l.b16 %v966
      %v1230 = vunpack.c.l.b16 %v967
      %v1231 = vunpack.c.l.b16 %v968
      %v1232 = vunpack.c.l.b16 %v969
      %v1233 = vunpack.c.l.b16 %v970
      %v1234 = vunpack.c.l.b16 %v971
      %v1235 = vunpack.c.l.b16 %v972
      %v1236 = vunpack.c.l.b16 %v973
      %v1237 = vunpack.c.l.b16 %v974
      %v1238 = vunpack.c.l.b16 %v975
      %v1239 = vunpack.c.l.b16 %v976
      %v1240 = vunpack.c.l.b16 %v977
      %v1241 = vunpack.c.l.b16 %v978
      %v1242 = vunpack.c.l.b16 %v979
      %v1243 = vunpack.c.l.b16 %v980
      %v1244 = vunpack.c.l.b16 %v981
      %v1245 = vunpack.c.l.b16 %v982
      %v1246 = vunpack.c.l.b16 %v983
      %v1247 = vunpack.c.l.b16 %v984
      %v1248 = vunpack.c.l.b16 %v985
      %v1249 = vunpack.c.l.b16 %v986
      %v1250 = vunpack.c.l.b16 %v987
      %v1251 = vunpack.c.l.b16 %v988
      %v1252 = vunpack.c.l.b16 %v989
      %v1253 = vunpack.c.l.b16 %v990
      %v1254 = vunpack.c.l.b16 %v991
      %v1255 = vunpack.c.l.b16 %v992
      %v1256 = vunpack.c.l.b16 %v993
      %v1257 = vunpack.c.l.b16 %v994
      %v1258 = vunpack.c.l.b16 %v995
      %v1259 = vunpack.c.l.b16 %v996
      %v1260 = vunpack.c.l.b16 %v997
      %v1261 = vunpack.c.l.b16 %v998
      %v1262 = vunpack.c.l.b16 %v999
      %v1263 = vunpack.c.l.b16 %v1000
      %v1264 = vunpack.c.l.b16 %v1001
      %v1265 = vunpack.c.l.b16 %v1002
      %v1266 = vunpack.c.l.b16 %v1003
      %v1267 = vunpack.c.l.b16 %v1004
      %v1268 = vunpack.c.l.b16 %v1005
      %v1269 = vunpack.c.l.b16 %v1006
      %v1270 = vunpack.c.l.b16 %v1007
      %v1271 = vunpack.c.l.b16 %v1008
      %v1272 = vunpack.c.l.b16 %v1009
      %v1273 = vunpack.c.l.b16 %v1010
      %v1274 = vunpack.c.l.b16 %v1011
      %v1275 = vunpack.c.l.b16 %v1012
      %v1276 = vunpack.c.l.b16 %v1013
      %v1277 = vunpack.c.l.b16 %v1014
      %v1278 = vunpack.c.l.b16 %v1015
      %v1279 = vunpack.c.l.b16 %v1016
      %v1280 = vunpack.c.l.b16 %v1017
      %v1281 = vunpack.c.l.b16 %v1018
      %v1282 = vunpack.c.l.b16 %v1019
      %v1283 = vunpack.c.l.b16 %v1020
      %v1284 = vunpack.c.l.b16 %v1021
      %v1285 = vunpack.c.l.b16 %v1022
      %v1286 = vunpack.c.l.b16 %v1023
      %v1287 = vunpack.c.l.b16 %v1024
      %v1288 = vunpack.c.l.b16 %v1025
      %v1289 = vunpack.c.l.b16 %v1026
      %v1290 = vunpack.c.l.b16 %v1027
      %v1291 = vunpack.c.l.b16 %v1028
      %v1292 = vunpack.c.l.b16 %v1029
      %v1293 = vpack.c.b16 %v1166, %v1165
      %v1294 = vpack.c.b16 %v1168, %v1167
      %v1295 = vpack.c.b16 %v1170, %v1169
      %v1296 = vpack.c.b16 %v1172, %v1171
      %v1297 = vpack.c.b16 %v1174, %v1173
      %v1298 = vpack.c.b16 %v1176, %v1175
      %v1299 = vpack.c.b16 %v1178, %v1177
      %v1300 = vpack.c.b16 %v1180, %v1179
      %v1301 = vpack.c.b16 %v1182, %v1181
      %v1302 = vpack.c.b16 %v1184, %v1183
      %v1303 = vpack.c.b16 %v1186, %v1185
      %v1304 = vpack.c.b16 %v1188, %v1187
      %v1305 = vpack.c.b16 %v1190, %v1189
      %v1306 = vpack.c.b16 %v1192, %v1191
      %v1307 = vpack.c.b16 %v1194, %v1193
      %v1308 = vpack.c.b16 %v1196, %v1195
      %v1309 = vpack.c.b16 %v1198, %v1197
      %v1310 = vpack.c.b16 %v1200, %v1199
      %v1311 = vpack.c.b16 %v1202, %v1201
      %v1312 = vpack.c.b16 %v1204, %v1203
      %v1313 = vpack.c.b16 %v1206, %v1205
      %v1314 = vpack.c.b16 %v1208, %v1207
      %v1315 = vpack.c.b16 %v1210, %v1209
      %v1316 = vpack.c.b16 %v1212, %v1211
      %v1317 = vpack.c.b16 %v1214, %v1213
      %v1318 = vpack.c.b16 %v1216, %v1215
      %v1319 = vpack.c.b16 %v1218, %v1217
      %v1320 = vpack.c.b16 %v1220, %v1219
      %v1321 = vpack.c.b16 %v1222, %v1221
      %v1322 = vpack.c.b16 %v1224, %v1223
      %v1323 = vpack.c.b16 %v1226, %v1225
      %v1324 = vpack.c.b16 %v1228, %v1227
      %v1325 = vpack.c.b16 %v1230, %v1229
      %v1326 = vpack.c.b16 %v1232, %v1231
      %v1327 = vpack.c.b16 %v1234, %v1233
      %v1328 = vpack.c.b16 %v1236, %v1235
      %v1329 = vpack.c.b16 %v1238, %v1237
      %v1330 = vpack.c.b16 %v1240, %v1239
      %v1331 = vpack.c.b16 %v1242, %v1241
      %v1332 = vpack.c.b16 %v1244, %v1243
      %v1333 = vpack.c.b16 %v1246, %v1245
      %v1334 = vpack.c.b16 %v1248, %v1247
      %v1335 = vpack.c.b16 %v1250, %v1249
      %v1336 = vpack.c.b16 %v1252, %v1251
      %v1337 = vpack.c.b16 %v1254, %v1253
      %v1338 = vpack.c.b16 %v1256, %v1255
      %v1339 = vpack.c.b16 %v1258, %v1257
      %v1340 = vpack.c.b16 %v1260, %v1259
      %v1341 = vpack.c.b16 %v1262, %v1261
      %v1342 = vpack.c.b16 %v1264, %v1263
      %v1343 = vpack.c.b16 %v1266, %v1265
      %v1344 = vpack.c.b16 %v1268, %v1267
      %v1345 = vpack.c.b16 %v1270, %v1269
      %v1346 = vpack.c.b16 %v1272, %v1271
      %v1347 = vpack.c.b16 %v1274, %v1273
      %v1348 = vpack.c.b16 %v1276, %v1275
      %v1349 = vpack.c.b16 %v1278, %v1277
      %v1350 = vpack.c.b16 %v1280, %v1279
      %v1351 = vpack.c.b16 %v1282, %v1281
      %v1352 = vpack.c.b16 %v1284, %v1283
      %v1353 = vpack.c.b16 %v1286, %v1285
      %v1354 = vpack.c.b16 %v1288, %v1287
      %v1355 = vpack.c.b16 %v1290, %v1289
      %v1356 = vpack.c.b16 %v1292, %v1291
      %1421 = vmatprep.subr.bf16.mxu0 0
      %1422 = vmatpush1.bf16.msra.mxu0 %v1293
      %1423 = vmatprep.subr.bf16.mxu0 0
      %1424 = vmatpush1.bf16.msra.mxu0 %v1294
      %1425 = vmatprep.subr.bf16.mxu0 0
      %1426 = vmatpush1.bf16.msra.mxu0 %v1295
      %1427 = vmatprep.subr.bf16.mxu0 0
      %1428 = vmatpush1.bf16.msra.mxu0 %v1296
      %1429 = vmatprep.subr.bf16.mxu0 0
      %1430 = vmatpush1.bf16.msra.mxu0 %v1297
      %1431 = vmatprep.subr.bf16.mxu0 0
      %1432 = vmatpush1.bf16.msra.mxu0 %v1298
      %1433 = vmatprep.subr.bf16.mxu0 0
      %1434 = vmatpush1.bf16.msra.mxu0 %v1299
      %1435 = vmatprep.subr.bf16.mxu0 0
      %1436 = vmatpush1.bf16.msra.mxu0 %v1300
      %1437 = vmatprep.subr.bf16.mxu0 0
      %1438 = vmatpush1.bf16.msra.mxu0 %v1301
      %1439 = vmatprep.subr.bf16.mxu0 0
      %1440 = vmatpush1.bf16.msra.mxu0 %v1302
      %1441 = vmatprep.subr.bf16.mxu0 0
      %1442 = vmatpush1.bf16.msra.mxu0 %v1303
      %1443 = vmatprep.subr.bf16.mxu0 0
      %1444 = vmatpush1.bf16.msra.mxu0 %v1304
      %1445 = vmatprep.subr.bf16.mxu0 0
      %1446 = vmatpush1.bf16.msra.mxu0 %v1305
      %1447 = vmatprep.subr.bf16.mxu0 0
      %1448 = vmatpush1.bf16.msra.mxu0 %v1306
      %1449 = vmatprep.subr.bf16.mxu0 0
      %1450 = vmatpush1.bf16.msra.mxu0 %v1307
      %1451 = vmatprep.subr.bf16.mxu0 0
      %1452 = vmatpush1.bf16.msra.mxu0 %v1308
      %1453 = vmatprep.mubr.bf16.mxu0 %v823
      %1454 = vmatmul.mubr.bf16.gmra.mrb[0].mxu0 %v822
      %v1455 = vpop.f32.mrb[0].mxu0
      %v1456 = vadd.f32 %v1035, %v1455
      %v1457 = vpop.f32.mrb[0].mxu0
      %v1458 = vpop.f32.mrb[0].mxu0
      %v1459 = vadd.f32 %v1035, %v1458
      %v1460 = vpop.f32.mrb[0].mxu0
      %1461 = vmatprep.mubr.bf16.mxu0 %v831
      %1462 = vmatmul.mubr.bf16.gmra.mrb[0].mxu0 %v830
      %v1463 = vpop.f32.mrb[0].mxu0
      %v1464 = vadd.f32 %v1035, %v1463
      %v1465 = vpop.f32.mrb[0].mxu0
      %v1466 = vpop.f32.mrb[0].mxu0
      %v1467 = vadd.f32 %v1035, %v1466
      %v1468 = vpop.f32.mrb[0].mxu0
      %1469 = vmatprep.mubr.bf16.mxu0 %v839
      %1470 = vmatmul.mubr.bf16.gmra.mrb[0].mxu0 %v838
      %v1471 = vpop.f32.mrb[0].mxu0
      %v1472 = vadd.f32 %v1035, %v1471
      %v1473 = vpop.f32.mrb[0].mxu0
      %v1474 = vpop.f32.mrb[0].mxu0
      %v1475 = vadd.f32 %v1035, %v1474
      %v1476 = vpop.f32.mrb[0].mxu0
      %1477 = vmatprep.mubr.bf16.mxu0 %v847
      %1478 = vmatmul.mubr.bf16.gmra.mrb[0].mxu0 %v846
      %v1479 = vpop.f32.mrb[0].mxu0
      %v1480 = vadd.f32 %v1035, %v1479
      %v1481 = vpop.f32.mrb[0].mxu0
      %v1482 = vpop.f32.mrb[0].mxu0
      %v1483 = vadd.f32 %v1035, %v1482
      %v1484 = vpop.f32.mrb[0].mxu0
      %1485 = vmatprep.mubr.bf16.mxu0 %v855
      %1486 = vmatmul.mubr.bf16.gmra.mrb[0].mxu0 %v854
      %v1487 = vpop.f32.mrb[0].mxu0
      %v1488 = vadd.f32 %v1035, %v1487
      %v1489 = vpop.f32.mrb[0].mxu0
      %v1490 = vpop.f32.mrb[0].mxu0
      %v1491 = vadd.f32 %v1035, %v1490
      %v1492 = vpop.f32.mrb[0].mxu0
      %1493 = vmatprep.mubr.bf16.mxu0 %v863
      %1494 = vmatmul.mubr.bf16.gmra.mrb[0].mxu0 %v862
      %v1495 = vpop.f32.mrb[0].mxu0
      %v1496 = vadd.f32 %v1035, %v1495
      %v1497 = vpop.f32.mrb[0].mxu0
      %v1498 = vpop.f32.mrb[0].mxu0
      %v1499 = vadd.f32 %v1035, %v1498
      %v1500 = vpop.f32.mrb[0].mxu0
      %1501 = vmatprep.mubr.bf16.mxu0 %v871
      %1502 = vmatmul.mubr.bf16.gmra.mrb[0].mxu0 %v870
      %v1503 = vpop.f32.mrb[0].mxu0
      %v1504 = vadd.f32 %v1035, %v1503
      %v1505 = vpop.f32.mrb[0].mxu0
      %v1506 = vpop.f32.mrb[0].mxu0
      %v1507 = vadd.f32 %v1035, %v1506
      %v1508 = vpop.f32.mrb[0].mxu0
      %1509 = vmatprep.mubr.bf16.mxu0 %v879
      %1510 = vmatmul.mubr.bf16.gmra.mrb[0].mxu0 %v878
      %v1511 = vpop.f32.mrb[0].mxu0
      %v1512 = vadd.f32 %v1035, %v1511
      %v1513 = vpop.f32.mrb[0].mxu0
      %v1514 = vpop.f32.mrb[0].mxu0
      %v1515 = vadd.f32 %v1035, %v1514
      %v1516 = vpop.f32.mrb[0].mxu0
      %1517 = vmatprep.mubr.bf16.mxu0 %v887
      %1518 = vmatmul.mubr.bf16.gmra.mrb[0].mxu0 %v886
      %v1519 = vpop.f32.mrb[0].mxu0
      %v1520 = vadd.f32 %v1035, %v1519
      %v1521 = vpop.f32.mrb[0].mxu0
      %v1522 = vpop.f32.mrb[0].mxu0
      %v1523 = vadd.f32 %v1035, %v1522
      %v1524 = vpop.f32.mrb[0].mxu0
      %1525 = vmatprep.mubr.bf16.mxu0 %v895
      %1526 = vmatmul.mubr.bf16.gmra.mrb[0].mxu0 %v894
      %v1527 = vpop.f32.mrb[0].mxu0
      %v1528 = vadd.f32 %v1035, %v1527
      %v1529 = vpop.f32.mrb[0].mxu0
      %v1530 = vpop.f32.mrb[0].mxu0
      %v1531 = vadd.f32 %v1035, %v1530
      %v1532 = vpop.f32.mrb[0].mxu0
      %1533 = vdwg.mxu0
      %1534 = vmatprep.subr.bf16.mxu0 0
      %1535 = vmatpush1.bf16.msra.mxu0 %v1309
      %1536 = vmatprep.subr.bf16.mxu0 0
      %1537 = vmatpush1.bf16.msra.mxu0 %v1310
      %1538 = vmatprep.subr.bf16.mxu0 0
      %1539 = vmatpush1.bf16.msra.mxu0 %v1311
      %1540 = vmatprep.subr.bf16.mxu0 0
      %1541 = vmatpush1.bf16.msra.mxu0 %v1312
      %1542 = vmatprep.subr.bf16.mxu0 0
      %1543 = vmatpush1.bf16.msra.mxu0 %v1313
      %1544 = vmatprep.subr.bf16.mxu0 0
      %1545 = vmatpush1.bf16.msra.mxu0 %v1314
      %1546 = vmatprep.subr.bf16.mxu0 0
      %1547 = vmatpush1.bf16.msra.mxu0 %v1315
      %1548 = vmatprep.subr.bf16.mxu0 0
      %1549 = vmatpush1.bf16.msra.mxu0 %v1316
      %1550 = vmatprep.subr.bf16.mxu0 0
      %1551 = vmatpush1.bf16.msra.mxu0 %v1317
      %1552 = vmatprep.subr.bf16.mxu0 0
      %1553 = vmatpush1.bf16.msra.mxu0 %v1318
      %1554 = vmatprep.subr.bf16.mxu0 0
      %1555 = vmatpush1.bf16.msra.mxu0 %v1319
      %1556 = vmatprep.subr.bf16.mxu0 0
      %1557 = vmatpush1.bf16.msra.mxu0 %v1320
      %1558 = vmatprep.subr.bf16.mxu0 0
      %1559 = vmatpush1.bf16.msra.mxu0 %v1321
      %1560 = vmatprep.subr.bf16.mxu0 0
      %1561 = vmatpush1.bf16.msra.mxu0 %v1322
      %1562 = vmatprep.subr.bf16.mxu0 0
      %1563 = vmatpush1.bf16.msra.mxu0 %v1323
      %1564 = vmatprep.subr.bf16.mxu0 0
      %1565 = vmatpush1.bf16.msra.mxu0 %v1324
      %1566 = vmatprep.mubr.bf16.mxu0 %v825
      %1567 = vmatmul.mubr.bf16.gmra.mrb[0].mxu0 %v824
      %v1568 = vpop.f32.mrb[0].mxu0
      %v1569 = vadd.f32 %v1456, %v1568
      %v1570 = vpop.f32.mrb[0].mxu0
      %v1571 = vpop.f32.mrb[0].mxu0
      %v1572 = vadd.f32 %v1459, %v1571
      %v1573 = vpop.f32.mrb[0].mxu0
      %1574 = vmatprep.mubr.bf16.mxu0 %v833
      %1575 = vmatmul.mubr.bf16.gmra.mrb[0].mxu0 %v832
      %v1576 = vpop.f32.mrb[0].mxu0
      %v1577 = vadd.f32 %v1464, %v1576
      %v1578 = vpop.f32.mrb[0].mxu0
      %v1579 = vpop.f32.mrb[0].mxu0
      %v1580 = vadd.f32 %v1467, %v1579
      %v1581 = vpop.f32.mrb[0].mxu0
      %1582 = vmatprep.mubr.bf16.mxu0 %v841
      %1583 = vmatmul.mubr.bf16.gmra.mrb[0].mxu0 %v840
      %v1584 = vpop.f32.mrb[0].mxu0
      %v1585 = vadd.f32 %v1472, %v1584
      %v1586 = vpop.f32.mrb[0].mxu0
      %v1587 = vpop.f32.mrb[0].mxu0
      %v1588 = vadd.f32 %v1475, %v1587
      %v1589 = vpop.f32.mrb[0].mxu0
      %1590 = vmatprep.mubr.bf16.mxu0 %v849
      %1591 = vmatmul.mubr.bf16.gmra.mrb[0].mxu0 %v848
      %v1592 = vpop.f32.mrb[0].mxu0
      %v1593 = vadd.f32 %v1480, %v1592
      %v1594 = vpop.f32.mrb[0].mxu0
      %v1595 = vpop.f32.mrb[0].mxu0
      %v1596 = vadd.f32 %v1483, %v1595
      %v1597 = vpop.f32.mrb[0].mxu0
      %1598 = vmatprep.mubr.bf16.mxu0 %v857
      %1599 = vmatmul.mubr.bf16.gmra.mrb[0].mxu0 %v856
      %v1600 = vpop.f32.mrb[0].mxu0
      %v1601 = vadd.f32 %v1488, %v1600
      %v1602 = vpop.f32.mrb[0].mxu0
      %v1603 = vpop.f32.mrb[0].mxu0
      %v1604 = vadd.f32 %v1491, %v1603
      %v1605 = vpop.f32.mrb[0].mxu0
      %1606 = vmatprep.mubr.bf16.mxu0 %v865
      %1607 = vmatmul.mubr.bf16.gmra.mrb[0].mxu0 %v864
      %v1608 = vpop.f32.mrb[0].mxu0
      %v1609 = vadd.f32 %v1496, %v1608
      %v1610 = vpop.f32.mrb[0].mxu0
      %v1611 = vpop.f32.mrb[0].mxu0
      %v1612 = vadd.f32 %v1499, %v1611
      %v1613 = vpop.f32.mrb[0].mxu0
      %1614 = vmatprep.mubr.bf16.mxu0 %v873
      %1615 = vmatmul.mubr.bf16.gmra.mrb[0].mxu0 %v872
      %v1616 = vpop.f32.mrb[0].mxu0
      %v1617 = vadd.f32 %v1504, %v1616
      %v1618 = vpop.f32.mrb[0].mxu0
      %v1619 = vpop.f32.mrb[0].mxu0
      %v1620 = vadd.f32 %v1507, %v1619
      %v1621 = vpop.f32.mrb[0].mxu0
      %1622 = vmatprep.mubr.bf16.mxu0 %v881
      %1623 = vmatmul.mubr.bf16.gmra.mrb[0].mxu0 %v880
      %v1624 = vpop.f32.mrb[0].mxu0
      %v1625 = vadd.f32 %v1512, %v1624
      %v1626 = vpop.f32.mrb[0].mxu0
      %v1627 = vpop.f32.mrb[0].mxu0
      %v1628 = vadd.f32 %v1515, %v1627
      %v1629 = vpop.f32.mrb[0].mxu0
      %1630 = vmatprep.mubr.bf16.mxu0 %v889
      %1631 = vmatmul.mubr.bf16.gmra.mrb[0].mxu0 %v888
      %v1632 = vpop.f32.mrb[0].mxu0
      %v1633 = vadd.f32 %v1520, %v1632
      %v1634 = vpop.f32.mrb[0].mxu0
      %v1635 = vpop.f32.mrb[0].mxu0
      %v1636 = vadd.f32 %v1523, %v1635
      %v1637 = vpop.f32.mrb[0].mxu0
      %1638 = vmatprep.mubr.bf16.mxu0 %v897
      %1639 = vmatmul.mubr.bf16.gmra.mrb[0].mxu0 %v896
      %v1640 = vpop.f32.mrb[0].mxu0
      %v1641 = vadd.f32 %v1528, %v1640
      %v1642 = vpop.f32.mrb[0].mxu0
      %v1643 = vpop.f32.mrb[0].mxu0
      %v1644 = vadd.f32 %v1531, %v1643
      %v1645 = vpop.f32.mrb[0].mxu0
      %1646 = vdwg.mxu0
      %1647 = vmatprep.subr.bf16.mxu0 0
      %1648 = vmatpush1.bf16.msra.mxu0 %v1325
      %1649 = vmatprep.subr.bf16.mxu0 0
      %1650 = vmatpush1.bf16.msra.mxu0 %v1326
      %1651 = vmatprep.subr.bf16.mxu0 0
      %1652 = vmatpush1.bf16.msra.mxu0 %v1327
      %1653 = vmatprep.subr.bf16.mxu0 0
      %1654 = vmatpush1.bf16.msra.mxu0 %v1328
      %1655 = vmatprep.subr.bf16.mxu0 0
      %1656 = vmatpush1.bf16.msra.mxu0 %v1329
      %1657 = vmatprep.subr.bf16.mxu0 0
      %1658 = vmatpush1.bf16.msra.mxu0 %v1330
      %1659 = vmatprep.subr.bf16.mxu0 0
      %1660 = vmatpush1.bf16.msra.mxu0 %v1331
      %1661 = vmatprep.subr.bf16.mxu0 0
      %1662 = vmatpush1.bf16.msra.mxu0 %v1332
      %1663 = vmatprep.subr.bf16.mxu0 0
      %1664 = vmatpush1.bf16.msra.mxu0 %v1333
      %1665 = vmatprep.subr.bf16.mxu0 0
      %1666 = vmatpush1.bf16.msra.mxu0 %v1334
      %1667 = vmatprep.subr.bf16.mxu0 0
      %1668 = vmatpush1.bf16.msra.mxu0 %v1335
      %1669 = vmatprep.subr.bf16.mxu0 0
      %1670 = vmatpush1.bf16.msra.mxu0 %v1336
      %1671 = vmatprep.subr.bf16.mxu0 0
      %1672 = vmatpush1.bf16.msra.mxu0 %v1337
      %1673 = vmatprep.subr.bf16.mxu0 0
      %1674 = vmatpush1.bf16.msra.mxu0 %v1338
      %1675 = vmatprep.subr.bf16.mxu0 0
      %1676 = vmatpush1.bf16.msra.mxu0 %v1339
      %1677 = vmatprep.subr.bf16.mxu0 0
      %1678 = vmatpush1.bf16.msra.mxu0 %v1340
      %1679 = vmatprep.mubr.bf16.mxu0 %v827
      %1680 = vmatmul.mubr.bf16.gmra.mrb[0].mxu0 %v826
      %v1681 = vpop.f32.mrb[0].mxu0
      %v1682 = vadd.f32 %v1569, %v1681
      %v1683 = vpop.f32.mrb[0].mxu0
      %v1684 = vpop.f32.mrb[0].mxu0
      %v1685 = vadd.f32 %v1572, %v1684
      %v1686 = vpop.f32.mrb[0].mxu0
      %1687 = vmatprep.mubr.bf16.mxu0 %v835
      %1688 = vmatmul.mubr.bf16.gmra.mrb[0].mxu0 %v834
      %v1689 = vpop.f32.mrb[0].mxu0
      %v1690 = vadd.f32 %v1577, %v1689
      %v1691 = vpop.f32.mrb[0].mxu0
      %v1692 = vpop.f32.mrb[0].mxu0
      %v1693 = vadd.f32 %v1580, %v1692
      %v1694 = vpop.f32.mrb[0].mxu0
      %1695 = vmatprep.mubr.bf16.mxu0 %v843
      %1696 = vmatmul.mubr.bf16.gmra.mrb[0].mxu0 %v842
      %v1697 = vpop.f32.mrb[0].mxu0
      %v1698 = vadd.f32 %v1585, %v1697
      %v1699 = vpop.f32.mrb[0].mxu0
      %v1700 = vpop.f32.mrb[0].mxu0
      %v1701 = vadd.f32 %v1588, %v1700
      %v1702 = vpop.f32.mrb[0].mxu0
      %1703 = vmatprep.mubr.bf16.mxu0 %v851
      %1704 = vmatmul.mubr.bf16.gmra.mrb[0].mxu0 %v850
      %v1705 = vpop.f32.mrb[0].mxu0
      %v1706 = vadd.f32 %v1593, %v1705
      %v1707 = vpop.f32.mrb[0].mxu0
      %v1708 = vpop.f32.mrb[0].mxu0
      %v1709 = vadd.f32 %v1596, %v1708
      %v1710 = vpop.f32.mrb[0].mxu0
      %1711 = vmatprep.mubr.bf16.mxu0 %v859
      %1712 = vmatmul.mubr.bf16.gmra.mrb[0].mxu0 %v858
      %v1713 = vpop.f32.mrb[0].mxu0
      %v1714 = vadd.f32 %v1601, %v1713
      %v1715 = vpop.f32.mrb[0].mxu0
      %v1716 = vpop.f32.mrb[0].mxu0
      %v1717 = vadd.f32 %v1604, %v1716
      %v1718 = vpop.f32.mrb[0].mxu0
      %1719 = vmatprep.mubr.bf16.mxu0 %v867
      %1720 = vmatmul.mubr.bf16.gmra.mrb[0].mxu0 %v866
      %v1721 = vpop.f32.mrb[0].mxu0
      %v1722 = vadd.f32 %v1609, %v1721
      %v1723 = vpop.f32.mrb[0].mxu0
      %v1724 = vpop.f32.mrb[0].mxu0
      %v1725 = vadd.f32 %v1612, %v1724
      %v1726 = vpop.f32.mrb[0].mxu0
      %1727 = vmatprep.mubr.bf16.mxu0 %v875
      %1728 = vmatmul.mubr.bf16.gmra.mrb[0].mxu0 %v874
      %v1729 = vpop.f32.mrb[0].mxu0
      %v1730 = vadd.f32 %v1617, %v1729
      %v1731 = vpop.f32.mrb[0].mxu0
      %v1732 = vpop.f32.mrb[0].mxu0
      %v1733 = vadd.f32 %v1620, %v1732
      %v1734 = vpop.f32.mrb[0].mxu0
      %1735 = vmatprep.mubr.bf16.mxu0 %v883
      %1736 = vmatmul.mubr.bf16.gmra.mrb[0].mxu0 %v882
      %v1737 = vpop.f32.mrb[0].mxu0
      %v1738 = vadd.f32 %v1625, %v1737
      %v1739 = vpop.f32.mrb[0].mxu0
      %v1740 = vpop.f32.mrb[0].mxu0
      %v1741 = vadd.f32 %v1628, %v1740
      %v1742 = vpop.f32.mrb[0].mxu0
      %1743 = vmatprep.mubr.bf16.mxu0 %v891
      %1744 = vmatmul.mubr.bf16.gmra.mrb[0].mxu0 %v890
      %v1745 = vpop.f32.mrb[0].mxu0
      %v1746 = vadd.f32 %v1633, %v1745
      %v1747 = vpop.f32.mrb[0].mxu0
      %v1748 = vpop.f32.mrb[0].mxu0
      %v1749 = vadd.f32 %v1636, %v1748
      %v1750 = vpop.f32.mrb[0].mxu0
      %1751 = vmatprep.mubr.bf16.mxu0 %v899
      %1752 = vmatmul.mubr.bf16.gmra.mrb[0].mxu0 %v898
      %v1753 = vpop.f32.mrb[0].mxu0
      %v1754 = vadd.f32 %v1641, %v1753
      %v1755 = vpop.f32.mrb[0].mxu0
      %v1756 = vpop.f32.mrb[0].mxu0
      %v1757 = vadd.f32 %v1644, %v1756
      %v1758 = vpop.f32.mrb[0].mxu0
      %1759 = vdwg.mxu0
      %1760 = vmatprep.subr.bf16.mxu0 0
      %1761 = vmatpush1.bf16.msra.mxu0 %v1341
      %1762 = vmatprep.subr.bf16.mxu0 0
      %1763 = vmatpush1.bf16.msra.mxu0 %v1342
      %1764 = vmatprep.subr.bf16.mxu0 0
      %1765 = vmatpush1.bf16.msra.mxu0 %v1343
      %1766 = vmatprep.subr.bf16.mxu0 0
      %1767 = vmatpush1.bf16.msra.mxu0 %v1344
      %1768 = vmatprep.subr.bf16.mxu0 0
      %1769 = vmatpush1.bf16.msra.mxu0 %v1345
      %1770 = vmatprep.subr.bf16.mxu0 0
      %1771 = vmatpush1.bf16.msra.mxu0 %v1346
      %1772 = vmatprep.subr.bf16.mxu0 0
      %1773 = vmatpush1.bf16.msra.mxu0 %v1347
      %1774 = vmatprep.subr.bf16.mxu0 0
      %1775 = vmatpush1.bf16.msra.mxu0 %v1348
      %1776 = vmatprep.subr.bf16.mxu0 0
      %1777 = vmatpush1.bf16.msra.mxu0 %v1349
      %1778 = vmatprep.subr.bf16.mxu0 0
      %1779 = vmatpush1.bf16.msra.mxu0 %v1350
      %1780 = vmatprep.subr.bf16.mxu0 0
      %1781 = vmatpush1.bf16.msra.mxu0 %v1351
      %1782 = vmatprep.subr.bf16.mxu0 0
      %1783 = vmatpush1.bf16.msra.mxu0 %v1352
      %1784 = vmatprep.subr.bf16.mxu0 0
      %1785 = vmatpush1.bf16.msra.mxu0 %v1353
      %1786 = vmatprep.subr.bf16.mxu0 0
      %1787 = vmatpush1.bf16.msra.mxu0 %v1354
      %1788 = vmatprep.subr.bf16.mxu0 0
      %1789 = vmatpush1.bf16.msra.mxu0 %v1355
      %1790 = vmatprep.subr.bf16.mxu0 0
      %1791 = vmatpush1.bf16.msra.mxu0 %v1356
      %1792 = vmatprep.mubr.bf16.mxu0 %v829
      %1793 = vmatmul.mubr.bf16.gmra.mrb[0].mxu0 %v828
      %v1794 = vpop.f32.mrb[0].mxu0
      %v1795 = vadd.f32 %v1682, %v1794
      %v1796 = vpop.f32.mrb[0].mxu0
      %v1797 = vpop.f32.mrb[0].mxu0
      %v1798 = vadd.f32 %v1685, %v1797
      %v1799 = vpop.f32.mrb[0].mxu0
      %1800 = vmatprep.mubr.bf16.mxu0 %v837
      %1801 = vmatmul.mubr.bf16.gmra.mrb[0].mxu0 %v836
      %v1802 = vpop.f32.mrb[0].mxu0
      %v1803 = vadd.f32 %v1690, %v1802
      %v1804 = vpop.f32.mrb[0].mxu0
      %v1805 = vpop.f32.mrb[0].mxu0
      %v1806 = vadd.f32 %v1693, %v1805
      %v1807 = vpop.f32.mrb[0].mxu0
      %1808 = vmatprep.mubr.bf16.mxu0 %v845
      %1809 = vmatmul.mubr.bf16.gmra.mrb[0].mxu0 %v844
      %v1810 = vpop.f32.mrb[0].mxu0
      %v1811 = vadd.f32 %v1698, %v1810
      %v1812 = vpop.f32.mrb[0].mxu0
      %v1813 = vpop.f32.mrb[0].mxu0
      %v1814 = vadd.f32 %v1701, %v1813
      %v1815 = vpop.f32.mrb[0].mxu0
      %1816 = vmatprep.mubr.bf16.mxu0 %v853
      %1817 = vmatmul.mubr.bf16.gmra.mrb[0].mxu0 %v852
      %v1818 = vpop.f32.mrb[0].mxu0
      %v1819 = vadd.f32 %v1706, %v1818
      %v1820 = vpop.f32.mrb[0].mxu0
      %v1821 = vpop.f32.mrb[0].mxu0
      %v1822 = vadd.f32 %v1709, %v1821
      %v1823 = vpop.f32.mrb[0].mxu0
      %1824 = vmatprep.mubr.bf16.mxu0 %v861
      %1825 = vmatmul.mubr.bf16.gmra.mrb[0].mxu0 %v860
      %v1826 = vpop.f32.mrb[0].mxu0
      %v1827 = vadd.f32 %v1714, %v1826
      %v1828 = vpop.f32.mrb[0].mxu0
      %v1829 = vpop.f32.mrb[0].mxu0
      %v1830 = vadd.f32 %v1717, %v1829
      %v1831 = vpop.f32.mrb[0].mxu0
      %1832 = vmatprep.mubr.bf16.mxu0 %v869
      %1833 = vmatmul.mubr.bf16.gmra.mrb[0].mxu0 %v868
      %v1834 = vpop.f32.mrb[0].mxu0
      %v1835 = vadd.f32 %v1722, %v1834
      %v1836 = vpop.f32.mrb[0].mxu0
      %v1837 = vpop.f32.mrb[0].mxu0
      %v1838 = vadd.f32 %v1725, %v1837
      %v1839 = vpop.f32.mrb[0].mxu0
      %1840 = vmatprep.mubr.bf16.mxu0 %v877
      %1841 = vmatmul.mubr.bf16.gmra.mrb[0].mxu0 %v876
      %v1842 = vpop.f32.mrb[0].mxu0
      %v1843 = vadd.f32 %v1730, %v1842
      %v1844 = vpop.f32.mrb[0].mxu0
      %v1845 = vpop.f32.mrb[0].mxu0
      %v1846 = vadd.f32 %v1733, %v1845
      %v1847 = vpop.f32.mrb[0].mxu0
      %1848 = vmatprep.mubr.bf16.mxu0 %v885
      %1849 = vmatmul.mubr.bf16.gmra.mrb[0].mxu0 %v884
      %v1850 = vpop.f32.mrb[0].mxu0
      %v1851 = vadd.f32 %v1738, %v1850
      %v1852 = vpop.f32.mrb[0].mxu0
      %v1853 = vpop.f32.mrb[0].mxu0
      %v1854 = vadd.f32 %v1741, %v1853
      %v1855 = vpop.f32.mrb[0].mxu0
      %1856 = vmatprep.mubr.bf16.mxu0 %v893
      %1857 = vmatmul.mubr.bf16.gmra.mrb[0].mxu0 %v892
      %v1858 = vpop.f32.mrb[0].mxu0
      %v1859 = vadd.f32 %v1746, %v1858
      %v1860 = vpop.f32.mrb[0].mxu0
      %v1861 = vpop.f32.mrb[0].mxu0
      %v1862 = vadd.f32 %v1749, %v1861
      %v1863 = vpop.f32.mrb[0].mxu0
      %1864 = vmatprep.mubr.bf16.mxu0 %v901
      %1865 = vmatmul.mubr.bf16.gmra.mrb[0].mxu0 %v900
      %v1866 = vpop.f32.mrb[0].mxu0
      %v1867 = vadd.f32 %v1754, %v1866
      %v1868 = vpop.f32.mrb[0].mxu0
      %v1869 = vpop.f32.mrb[0].mxu0
      %v1870 = vadd.f32 %v1757, %v1869
      %v1871 = vpop.f32.mrb[0].mxu0
      %1872 = vdwg.mxu0
      %v1873 = vmax.f32 %v1795, 0.0
      %v1874 = vmax.f32 %v1798, 0.0
      %v1875 = vmax.f32 %v1803, 0.0
      %v1876 = vmax.f32 %v1806, 0.0
      %v1877 = vmax.f32 %v1811, 0.0
      %v1878 = vmax.f32 %v1814, 0.0
      %v1879 = vmax.f32 %v1819, 0.0
      %v1880 = vmax.f32 %v1822, 0.0
      %v1881 = vmax.f32 %v1827, 0.0
      %v1882 = vmax.f32 %v1830, 0.0
      %v1883 = vmax.f32 %v1835, 0.0
      %v1884 = vmax.f32 %v1838, 0.0
      %v1885 = vmax.f32 %v1843, 0.0
      %v1886 = vmax.f32 %v1846, 0.0
      %v1887 = vmax.f32 %v1851, 0.0
      %v1888 = vmax.f32 %v1854, 0.0
      %v1889 = vmax.f32 %v1859, 0.0
      %v1890 = vmax.f32 %v1862, 0.0
      %v1891 = vmax.f32 %v1867, 0.0
      %v1892 = vmax.f32 %v1870, 0.0
      %s1893 = smul.u32 %s17, 160
      %s1894 = ssub.s32 300, %s1893
      %v1895 = vlaneseq
      %v1896 = vshrl.u32 %v1895, 7
      %v1897 = vadd.s32 %v1896, 8
      %v1898 = vadd.s32 %v1896, 16
      %v1899 = vadd.s32 %v1896, 24
      %v1900 = vadd.s32 %v1896, 32
      %v1901 = vadd.s32 %v1896, 40
      %v1902 = vadd.s32 %v1896, 48
      %v1903 = vadd.s32 %v1896, 56
      %v1904 = vadd.s32 %v1896, 64
      %v1905 = vadd.s32 %v1896, 72
      %v1906 = vadd.s32 %v1896, 80
      %v1907 = vadd.s32 %v1896, 88
      %v1908 = vadd.s32 %v1896, 96
      %v1909 = vadd.s32 %v1896, 104
      %v1910 = vadd.s32 %v1896, 112
      %v1911 = vadd.s32 %v1896, 120
      %v1912 = vadd.s32 %v1896, 128
      %v1913 = vadd.s32 %v1896, 136
      %v1914 = vadd.s32 %v1896, 144
      %v1915 = vadd.s32 %v1896, 152
      %v1916 = vstv %s1894
      %vm1917 = vcmp.lt.s32.totalorder %v1896, %v1916
      %vm1918 = vcmp.lt.s32.totalorder %v1897, %v1916
      %vm1919 = vcmp.lt.s32.totalorder %v1898, %v1916
      %vm1920 = vcmp.lt.s32.totalorder %v1899, %v1916
      %vm1921 = vcmp.lt.s32.totalorder %v1900, %v1916
      %vm1922 = vcmp.lt.s32.totalorder %v1901, %v1916
      %vm1923 = vcmp.lt.s32.totalorder %v1902, %v1916
      %vm1924 = vcmp.lt.s32.totalorder %v1903, %v1916
      %vm1925 = vcmp.lt.s32.totalorder %v1904, %v1916
      %vm1926 = vcmp.lt.s32.totalorder %v1905, %v1916
      %vm1927 = vcmp.lt.s32.totalorder %v1906, %v1916
      %vm1928 = vcmp.lt.s32.totalorder %v1907, %v1916
      %vm1929 = vcmp.lt.s32.totalorder %v1908, %v1916
      %vm1930 = vcmp.lt.s32.totalorder %v1909, %v1916
      %vm1931 = vcmp.lt.s32.totalorder %v1910, %v1916
      %vm1932 = vcmp.lt.s32.totalorder %v1911, %v1916
      %vm1933 = vcmp.lt.s32.totalorder %v1912, %v1916
      %vm1934 = vcmp.lt.s32.totalorder %v1913, %v1916
      %vm1935 = vcmp.lt.s32.totalorder %v1914, %v1916
      %vm1936 = vcmp.lt.s32.totalorder %v1915, %v1916
      %v1937 = vsel %vm1917, 1, 0
      %v1938 = vsel %vm1918, 1, 0
      %v1939 = vsel %vm1919, 1, 0
      %v1940 = vsel %vm1920, 1, 0
      %v1941 = vsel %vm1921, 1, 0
      %v1942 = vsel %vm1922, 1, 0
      %v1943 = vsel %vm1923, 1, 0
      %v1944 = vsel %vm1924, 1, 0
      %v1945 = vsel %vm1925, 1, 0
      %v1946 = vsel %vm1926, 1, 0
      %v1947 = vsel %vm1927, 1, 0
      %v1948 = vsel %vm1928, 1, 0
      %v1949 = vsel %vm1929, 1, 0
      %v1950 = vsel %vm1930, 1, 0
      %v1951 = vsel %vm1931, 1, 0
      %v1952 = vsel %vm1932, 1, 0
      %v1953 = vsel %vm1933, 1, 0
      %v1954 = vsel %vm1934, 1, 0
      %v1955 = vsel %vm1935, 1, 0
      %v1956 = vsel %vm1936, 1, 0
      %vm1957 = vcmp.eq.s32.totalorder %v1937, 1
      %vm1958 = vcmp.eq.s32.totalorder %v1938, 1
      %vm1959 = vcmp.eq.s32.totalorder %v1939, 1
      %vm1960 = vcmp.eq.s32.totalorder %v1940, 1
      %vm1961 = vcmp.eq.s32.totalorder %v1941, 1
      %vm1962 = vcmp.eq.s32.totalorder %v1942, 1
      %vm1963 = vcmp.eq.s32.totalorder %v1943, 1
      %vm1964 = vcmp.eq.s32.totalorder %v1944, 1
      %vm1965 = vcmp.eq.s32.totalorder %v1945, 1
      %vm1966 = vcmp.eq.s32.totalorder %v1946, 1
      %vm1967 = vcmp.eq.s32.totalorder %v1947, 1
      %vm1968 = vcmp.eq.s32.totalorder %v1948, 1
      %vm1969 = vcmp.eq.s32.totalorder %v1949, 1
      %vm1970 = vcmp.eq.s32.totalorder %v1950, 1
      %vm1971 = vcmp.eq.s32.totalorder %v1951, 1
      %vm1972 = vcmp.eq.s32.totalorder %v1952, 1
      %vm1973 = vcmp.eq.s32.totalorder %v1953, 1
      %vm1974 = vcmp.eq.s32.totalorder %v1954, 1
      %vm1975 = vcmp.eq.s32.totalorder %v1955, 1
      %vm1976 = vcmp.eq.s32.totalorder %v1956, 1
      %v1977 = vsel %vm1957, %v1873, 0.0
      %v1978 = vsel %vm1958, %v1874, 0.0
      %v1979 = vsel %vm1959, %v1875, 0.0
      %v1980 = vsel %vm1960, %v1876, 0.0
      %v1981 = vsel %vm1961, %v1877, 0.0
      %v1982 = vsel %vm1962, %v1878, 0.0
      %v1983 = vsel %vm1963, %v1879, 0.0
      %v1984 = vsel %vm1964, %v1880, 0.0
      %v1985 = vsel %vm1965, %v1881, 0.0
      %v1986 = vsel %vm1966, %v1882, 0.0
      %v1987 = vsel %vm1967, %v1883, 0.0
      %v1988 = vsel %vm1968, %v1884, 0.0
      %v1989 = vsel %vm1969, %v1885, 0.0
      %v1990 = vsel %vm1970, %v1886, 0.0
      %v1991 = vsel %vm1971, %v1887, 0.0
      %v1992 = vsel %vm1972, %v1888, 0.0
      %v1993 = vsel %vm1973, %v1889, 0.0
      %v1994 = vsel %vm1974, %v1890, 0.0
      %v1995 = vsel %vm1975, %v1891, 0.0
      %v1996 = vsel %vm1976, %v1892, 0.0
      %p1997 = scmp.lt.s32.totalorder %s1894, 160
      %s1998 = scalar_select %p1997, %s1894, 160
      %p1999 = scmp.gt.s32.totalorder %s1998, 1
      %s2000 = scalar_select %p1999, %s1998, 1
      %s2001 = scvt.s32.f32 %s2000
      %vm2002 = vcmask 64512
      %v2003 = vsel %vm2002, %v1977, 0.0
      %v2004 = vsel %vm2002, %v1978, 0.0
      %v2005 = vadd.f32 %v2003, %v2004
      %v2006 = vsel %vm2002, %v1979, 0.0
      %v2007 = vadd.f32 %v2005, %v2006
      %v2008 = vsel %vm2002, %v1980, 0.0
      %v2009 = vadd.f32 %v2007, %v2008
      %v2010 = vsel %vm2002, %v1981, 0.0
      %v2011 = vadd.f32 %v2009, %v2010
      %v2012 = vsel %vm2002, %v1982, 0.0
      %v2013 = vadd.f32 %v2011, %v2012
      %v2014 = vsel %vm2002, %v1983, 0.0
      %v2015 = vadd.f32 %v2013, %v2014
      %v2016 = vsel %vm2002, %v1984, 0.0
      %v2017 = vadd.f32 %v2015, %v2016
      %v2018 = vsel %vm2002, %v1985, 0.0
      %v2019 = vadd.f32 %v2017, %v2018
      %v2020 = vsel %vm2002, %v1986, 0.0
      %v2021 = vadd.f32 %v2019, %v2020
      %v2022 = vsel %vm2002, %v1987, 0.0
      %v2023 = vadd.f32 %v2021, %v2022
      %v2024 = vsel %vm2002, %v1988, 0.0
      %v2025 = vadd.f32 %v2023, %v2024
      %v2026 = vsel %vm2002, %v1989, 0.0
      %v2027 = vadd.f32 %v2025, %v2026
      %v2028 = vsel %vm2002, %v1990, 0.0
      %v2029 = vadd.f32 %v2027, %v2028
      %v2030 = vsel %vm2002, %v1991, 0.0
      %v2031 = vadd.f32 %v2029, %v2030
      %v2032 = vsel %vm2002, %v1992, 0.0
      %v2033 = vadd.f32 %v2031, %v2032
      %v2034 = vsel %vm2002, %v1993, 0.0
      %v2035 = vadd.f32 %v2033, %v2034
      %v2036 = vsel %vm2002, %v1994, 0.0
      %v2037 = vadd.f32 %v2035, %v2036
      %v2038 = vsel %vm2002, %v1995, 0.0
      %v2039 = vadd.f32 %v2037, %v2038
      %v2040 = vsel %vm2002, %v1996, 0.0
      %v2041 = vadd.f32 %v2039, %v2040
      %v2042 = vrot.slane %v2041, 4
      %v2043 = vadd.f32 %v2041, %v2042
      %v2044 = vrot.slane %v2043, 2
      %v2045 = vadd.f32 %v2043, %v2044
      %v2046 = vrot.slane %v2045, 1
      %v2047 = vadd.f32 %v2045, %v2046
      %v2048 = vstv %s2001
      %v2049 = vrcp.pop %v2048
      %s2050 = vtos %v2049
      %v2051 = vstv %s2050
      %v2052 = vmul.f32 %v2047, %v2051
      %v2053 = vsub.f32 %v1977, %v2052
      %v2054 = vsub.f32 %v1978, %v2052
      %v2055 = vsub.f32 %v1979, %v2052
      %v2056 = vsub.f32 %v1980, %v2052
      %v2057 = vsub.f32 %v1981, %v2052
      %v2058 = vsub.f32 %v1982, %v2052
      %v2059 = vsub.f32 %v1983, %v2052
      %v2060 = vsub.f32 %v1984, %v2052
      %v2061 = vsub.f32 %v1985, %v2052
      %v2062 = vsub.f32 %v1986, %v2052
      %v2063 = vsub.f32 %v1987, %v2052
      %v2064 = vsub.f32 %v1988, %v2052
      %v2065 = vsub.f32 %v1989, %v2052
      %v2066 = vsub.f32 %v1990, %v2052
      %v2067 = vsub.f32 %v1991, %v2052
      %v2068 = vsub.f32 %v1992, %v2052
      %v2069 = vsub.f32 %v1993, %v2052
      %v2070 = vsub.f32 %v1994, %v2052
      %v2071 = vsub.f32 %v1995, %v2052
      %v2072 = vsub.f32 %v1996, %v2052
      %v2073 = vsel %vm1957, %v2053, 0.0
      %v2074 = vsel %vm1958, %v2054, 0.0
      %v2075 = vsel %vm1959, %v2055, 0.0
      %v2076 = vsel %vm1960, %v2056, 0.0
      %v2077 = vsel %vm1961, %v2057, 0.0
      %v2078 = vsel %vm1962, %v2058, 0.0
      %v2079 = vsel %vm1963, %v2059, 0.0
      %v2080 = vsel %vm1964, %v2060, 0.0
      %v2081 = vsel %vm1965, %v2061, 0.0
      %v2082 = vsel %vm1966, %v2062, 0.0
      %v2083 = vsel %vm1967, %v2063, 0.0
      %v2084 = vsel %vm1968, %v2064, 0.0
      %v2085 = vsel %vm1969, %v2065, 0.0
      %v2086 = vsel %vm1970, %v2066, 0.0
      %v2087 = vsel %vm1971, %v2067, 0.0
      %v2088 = vsel %vm1972, %v2068, 0.0
      %v2089 = vsel %vm1973, %v2069, 0.0
      %v2090 = vsel %vm1974, %v2070, 0.0
      %v2091 = vsel %vm1975, %v2071, 0.0
      %v2092 = vsel %vm1976, %v2072, 0.0
      %v2093 = vmul.f32 %v2073, %v2073
      %v2094 = vmul.f32 %v2074, %v2074
      %v2095 = vmul.f32 %v2075, %v2075
      %v2096 = vmul.f32 %v2076, %v2076
      %v2097 = vmul.f32 %v2077, %v2077
      %v2098 = vmul.f32 %v2078, %v2078
      %v2099 = vmul.f32 %v2079, %v2079
      %v2100 = vmul.f32 %v2080, %v2080
      %v2101 = vmul.f32 %v2081, %v2081
      %v2102 = vmul.f32 %v2082, %v2082
      %v2103 = vmul.f32 %v2083, %v2083
      %v2104 = vmul.f32 %v2084, %v2084
      %v2105 = vmul.f32 %v2085, %v2085
      %v2106 = vmul.f32 %v2086, %v2086
      %v2107 = vmul.f32 %v2087, %v2087
      %v2108 = vmul.f32 %v2088, %v2088
      %v2109 = vmul.f32 %v2089, %v2089
      %v2110 = vmul.f32 %v2090, %v2090
      %v2111 = vmul.f32 %v2091, %v2091
      %v2112 = vmul.f32 %v2092, %v2092
      %v2113 = vsel %vm2002, %v2093, 0.0
      %v2114 = vsel %vm2002, %v2094, 0.0
      %v2115 = vadd.f32 %v2113, %v2114
      %v2116 = vsel %vm2002, %v2095, 0.0
      %v2117 = vadd.f32 %v2115, %v2116
      %v2118 = vsel %vm2002, %v2096, 0.0
      %v2119 = vadd.f32 %v2117, %v2118
      %v2120 = vsel %vm2002, %v2097, 0.0
      %v2121 = vadd.f32 %v2119, %v2120
      %v2122 = vsel %vm2002, %v2098, 0.0
      %v2123 = vadd.f32 %v2121, %v2122
      %v2124 = vsel %vm2002, %v2099, 0.0
      %v2125 = vadd.f32 %v2123, %v2124
      %v2126 = vsel %vm2002, %v2100, 0.0
      %v2127 = vadd.f32 %v2125, %v2126
      %v2128 = vsel %vm2002, %v2101, 0.0
      %v2129 = vadd.f32 %v2127, %v2128
      %v2130 = vsel %vm2002, %v2102, 0.0
      %v2131 = vadd.f32 %v2129, %v2130
      %v2132 = vsel %vm2002, %v2103, 0.0
      %v2133 = vadd.f32 %v2131, %v2132
      %v2134 = vsel %vm2002, %v2104, 0.0
      %v2135 = vadd.f32 %v2133, %v2134
      %v2136 = vsel %vm2002, %v2105, 0.0
      %v2137 = vadd.f32 %v2135, %v2136
      %v2138 = vsel %vm2002, %v2106, 0.0
      %v2139 = vadd.f32 %v2137, %v2138
      %v2140 = vsel %vm2002, %v2107, 0.0
      %v2141 = vadd.f32 %v2139, %v2140
      %v2142 = vsel %vm2002, %v2108, 0.0
      %v2143 = vadd.f32 %v2141, %v2142
      %v2144 = vsel %vm2002, %v2109, 0.0
      %v2145 = vadd.f32 %v2143, %v2144
      %v2146 = vsel %vm2002, %v2110, 0.0
      %v2147 = vadd.f32 %v2145, %v2146
      %v2148 = vsel %vm2002, %v2111, 0.0
      %v2149 = vadd.f32 %v2147, %v2148
      %v2150 = vsel %vm2002, %v2112, 0.0
      %v2151 = vadd.f32 %v2149, %v2150
      %v2152 = vrot.slane %v2151, 4
      %v2153 = vadd.f32 %v2151, %v2152
      %v2154 = vrot.slane %v2153, 2
      %v2155 = vadd.f32 %v2153, %v2154
      %v2156 = vrot.slane %v2155, 1
      %v2157 = vadd.f32 %v2155, %v2156
      %vm2158 = vcmask 1040384
      %v2159 = vsel %vm2158, %v2047, %v2157
      %vm2160 = vcmask 58368
      %2161 = vst.msk [vmem:[%s258] sm:$0x3] %vm2160, %v2159
      %v2162 = vpack.c.bf16 %v1978, %v1977
      %v2163 = vpack.c.bf16 %v1980, %v1979
      %v2164 = vpack.c.bf16 %v1982, %v1981
      %v2165 = vpack.c.bf16 %v1984, %v1983
      %v2166 = vpack.c.bf16 %v1986, %v1985
      %v2167 = vpack.c.bf16 %v1988, %v1987
      %v2168 = vpack.c.bf16 %v1990, %v1989
      %v2169 = vpack.c.bf16 %v1992, %v1991
      %v2170 = vpack.c.bf16 %v1994, %v1993
      %v2171 = vpack.c.bf16 %v1996, %v1995
      %v2182 = vunpack.c.l.b16 %v2162
      %v2183 = vunpack.c.h.b16 %v2162
      %v2184 = vunpack.c.l.b16 %v2163
      %v2185 = vunpack.c.h.b16 %v2163
      %v2186 = vunpack.c.l.b16 %v2164
      %v2187 = vunpack.c.h.b16 %v2164
      %v2188 = vunpack.c.l.b16 %v2165
      %v2189 = vunpack.c.h.b16 %v2165
      %v2190 = vunpack.c.l.b16 %v2166
      %v2191 = vunpack.c.h.b16 %v2166
      %v2192 = vunpack.c.l.b16 %v2167
      %v2193 = vunpack.c.h.b16 %v2167
      %v2194 = vunpack.c.l.b16 %v2168
      %v2195 = vunpack.c.h.b16 %v2168
      %v2196 = vunpack.c.l.b16 %v2169
      %v2197 = vunpack.c.h.b16 %v2169
      %v2198 = vunpack.c.l.b16 %v2170
      %v2199 = vunpack.c.h.b16 %v2170
      %v2200 = vunpack.c.l.b16 %v2171
      %v2201 = vunpack.c.h.b16 %v2171
      %v2202 = vpack.c.b16 %v2182, %v2182
      %v2203 = vpack.c.b16 %v2183, %v2183
      %v2204 = vpack.c.b16 %v2184, %v2184
      %v2205 = vpack.c.b16 %v2185, %v2185
      %v2206 = vpack.c.b16 %v2186, %v2186
      %v2207 = vpack.c.b16 %v2187, %v2187
      %v2208 = vpack.c.b16 %v2188, %v2188
      %v2209 = vpack.c.b16 %v2189, %v2189
      %v2210 = vpack.c.b16 %v2190, %v2190
      %v2211 = vpack.c.b16 %v2191, %v2191
      %v2212 = vpack.c.b16 %v2192, %v2192
      %v2213 = vpack.c.b16 %v2193, %v2193
      %v2214 = vpack.c.b16 %v2194, %v2194
      %v2215 = vpack.c.b16 %v2195, %v2195
      %v2216 = vpack.c.b16 %v2196, %v2196
      %v2217 = vpack.c.b16 %v2197, %v2197
      %v2218 = vpack.c.b16 %v2198, %v2198
      %v2219 = vpack.c.b16 %v2199, %v2199
      %v2220 = vpack.c.b16 %v2200, %v2200
      %v2221 = vpack.c.b16 %v2201, %v2201
      %vm2242 = vcmask 60416
      %2243 = vst.msk [vmem:[%s253] sm:$0xf] %vm2242, %v2202
      %2244 = vst.msk [vmem:[%s253 + $0x4] sm:$0xf] %vm2242, %v2203
      %2245 = vst.msk [vmem:[%s253 + $0x8] sm:$0xf] %vm2242, %v2204
      %2246 = vst.msk [vmem:[%s253 + $0xc] sm:$0xf] %vm2242, %v2205
      %2247 = vst.msk [vmem:[%s253 + $0x10] sm:$0xf] %vm2242, %v2206
      %2248 = vst.msk [vmem:[%s253 + $0x14] sm:$0xf] %vm2242, %v2207
      %2249 = vst.msk [vmem:[%s253 + $0x18] sm:$0xf] %vm2242, %v2208
      %2250 = vst.msk [vmem:[%s253 + $0x1c] sm:$0xf] %vm2242, %v2209
      %2251 = vst.msk [vmem:[%s253 + $0x20] sm:$0xf] %vm2242, %v2210
      %2252 = vst.msk [vmem:[%s253 + $0x24] sm:$0xf] %vm2242, %v2211
      %2253 = vst.msk [vmem:[%s253 + $0x28] sm:$0xf] %vm2242, %v2212
      %2254 = vst.msk [vmem:[%s253 + $0x2c] sm:$0xf] %vm2242, %v2213
      %2255 = vst.msk [vmem:[%s253 + $0x30] sm:$0xf] %vm2242, %v2214
      %2256 = vst.msk [vmem:[%s253 + $0x34] sm:$0xf] %vm2242, %v2215
      %2257 = vst.msk [vmem:[%s253 + $0x38] sm:$0xf] %vm2242, %v2216
      %2258 = vst.msk [vmem:[%s253 + $0x3c] sm:$0xf] %vm2242, %v2217
      %2259 = vst.msk [vmem:[%s253 + $0x40] sm:$0xf] %vm2242, %v2218
      %2260 = vst.msk [vmem:[%s253 + $0x44] sm:$0xf] %vm2242, %v2219
      %2261 = vst.msk [vmem:[%s253 + $0x48] sm:$0xf] %vm2242, %v2220
      %2262 = vst.msk [vmem:[%s253 + $0x4c] sm:$0xf] %vm2242, %v2221
      %s2263 = smul.u32 20, %s17
      %p2264 = scmp.lt.s32.totalorder %s2263, 39
      %s2265 = scalar_select %p2264, %s2263, 39
      %s2266 = smul.addr %s2265, 4
      %s2267 = scalar_lea.vmem %s4, %s2266
      %p2268 = scmp.lt.s32.totalorder %s17, 1
      %s2269 = scalar_select %p2268, %s17, 1
      %s2270 = smul.addr %s2269, 2
      %s2271 = scalar_lea.vmem %s5, %s2270
      // Predicated region
      $region37: #{binary_classification_forward.5} parent=35 // pred_check
        %p2272 = pneg %p129
      $region38: #{binary_classification_forward.5} parent=35 // pred_check_branch
        %2274 = sbr.rel (%p2272) target = $region40
      $region39: #{binary_classification_forward.5} parent=35 // pred_region
        %s2275 = smul.u32 20, %s17
      $region40: #{binary_classification_forward.5} parent=35 // pred_fallthru
        _
      // Predicated region
      $region41: #{binary_classification_forward.5} parent=35 // pred_check
        %p2276 = pneg %p155
      $region42: #{binary_classification_forward.5} parent=35 // pred_check_branch
        %2278 = sbr.rel (%p2276) target = $region44
      $region43: #{binary_classification_forward.5} parent=35 // pred_region
        _
      $region44: #{binary_classification_forward.5} parent=35 // pred_fallthru
        _
    $region36: #{binary_classification_forward.5} parent=5 // pred_fallthru
      _
    %p2279 = scmp.le.s32.totalorder 2, %s12
    // Predicated region
    $region45: #{binary_classification_forward.5} parent=5 // pred_check
      %p2280 = pneg %p2279
    $region46: #{binary_classification_forward.5} parent=5 // pred_check_branch
      %2282 = sbr.rel (%p2280) target = $region48
    $region47: #{binary_classification_forward.5} parent=5 // pred_region
      %s2283 = ssub.s32 %s12, 2
      // Predicated region
      $region49: #{binary_classification_forward.5} parent=47 // pred_check
        %p2284 = pneg %p135
      $region50: #{binary_classification_forward.5} parent=47 // pred_check_branch
        %2286 = sbr.rel (%p2284) target = $region52
      $region51: #{binary_classification_forward.5} parent=47 // pred_region
        %s2287 = smul.u32 20, %s18
        %p2288 = scmp.lt.s32.totalorder %s2287, 39
        %s2289 = scalar_select %p2288, %s2287, 39
        %s2290 = smul.addr %s2289, 4
        %s2291 = scalar_lea.vmem %s4, %s2290
      $region52: #{binary_classification_forward.5} parent=47 // pred_fallthru
        _
      // Predicated region
      $region53: #{binary_classification_forward.5} parent=47 // pred_check
        %p2292 = pneg %p161
      $region54: #{binary_classification_forward.5} parent=47 // pred_check_branch
        %2294 = sbr.rel (%p2292) target = $region56
      $region55: #{binary_classification_forward.5} parent=47 // pred_region
        %p2295 = scmp.lt.s32.totalorder %s18, 1
        %s2296 = scalar_select %p2295, %s18, 1
        %s2297 = smul.addr %s2296, 2
        %s2298 = scalar_lea.vmem %s5, %s2297
      $region56: #{binary_classification_forward.5} parent=47 // pred_fallthru
        _
    $region48: #{binary_classification_forward.5} parent=5 // pred_fallthru
      _
  $region6: #{binary_classification_forward.5} parent=0 // loop_footer
    %s16 = sadd.s32 1, %s12
  $region7: #{binary_classification_forward.5} parent=0 // loop_footer_branch
    %11 = sbr.rel target = $region3
  $region8: #{binary_classification_forward.5} parent=0 // loop_exit
    _

</llo_original>
